<compile_context>
chip_gen: v6e
topology: v6e:2x2x1
jax: 0.10.0
libtpu: 0.0.40
codegen_flags: <defaults>
</compile_context>

<pallas_src>
import numpy as np

import jax
import jax.numpy as jnp
from jax.experimental import pallas as pl
from jax.experimental.pallas import tpu as pltpu


TD = 32    # destination rows per tile (multiple of 8 sublanes)
TS = 128   # source rows per tile (lane-dense score tiles)


def round_up(x, m):
    return (x + m - 1) // m * m


# ----------------------------------------------------------------------------
# Fused per-layer kernel: for each vtype (grid axis 0), BN(src/dst) ->
# fc_q/fc_k/fc_v -> masked edge-softmax attention (online over src tiles) ->
# u_mul_e_sum -> linear_agg + linear_self -> PReLU -> residual add.
# ----------------------------------------------------------------------------
def seframe_layer_kernel(cnt_ref,                                   # SMEM scalar prefetch
                         src_ref, dst_ref, adj_ref,
                         bns_scale_ref, bns_shift_ref, bnd_scale_ref, bnd_shift_ref,
                         wqv_ref, bq_ref, wk_ref, attn_e_ref,
                         w_as_ref, bagg_ref, alpha_ref,
                         out_ref,
                         k_sc, m_sc, l_sc, acc_sc):
    v = pl.program_id(0)
    i = pl.program_id(1)
    s = pl.program_id(2)
    n_s = pl.num_programs(2)
    d = out_ref.shape[-1]

    @pl.when(s == 0)
    def _init():
        # k = fc_k(BN_dst(ft_dst)) -- computed once per (vtype, dst tile), reused
        # across all src tiles of the online-softmax sweep.
        ft_dst_bn = dst_ref[...] * bnd_scale_ref[...] + bnd_shift_ref[...]
        k_sc[...] = jnp.dot(ft_dst_bn.astype(jnp.bfloat16), wk_ref[...],
                            preferred_element_type=jnp.float32)
        m_sc[...] = jnp.full(m_sc.shape, -1e30, dtype=m_sc.dtype)
        l_sc[...] = jnp.zeros(l_sc.shape, dtype=l_sc.dtype)
        acc_sc[...] = jnp.zeros(acc_sc.shape, dtype=acc_sc.dtype)

    # Skip src tiles that contain no edges into this dst tile (scalar-prefetched count).
    @pl.when(cnt_ref[v, i, s] > 0)
    def _accumulate():
        # BN on the src tile, then merged [q | v] matmul on the MXU.
        ft_src_bn = (src_ref[...].astype(jnp.float32) * bns_scale_ref[...]
                     + bns_shift_ref[...])
        qv = jnp.dot(ft_src_bn.astype(jnp.bfloat16), wqv_ref[...],
                     preferred_element_type=jnp.float32)              # [TS, 2D]
        q = qv[:, :d] + bq_ref[...]                                    # [TS, D]
        val = qv[:, d:]                                                # [TS, D]

        # scores[d', s'] = sum_f attn_e[f] * sigmoid(k[d', f] + q[s', f])
        pair = k_sc[...][:, None, :] + q[None, :, :]                   # [TD, TS, D] f32
        scores = jnp.sum(jax.nn.sigmoid(pair) * attn_e_ref[...][None, :, :],
                         axis=-1)                                      # [TD, TS]

        adj = adj_ref[...]                                             # [TD, TS] 0/1 mask
        masked = jnp.where(adj > 0, scores, -1e30)

        # Online (flash-style) masked softmax accumulation over src tiles.
        m_prev = m_sc[...]
        m_new = jnp.maximum(m_prev, jnp.max(masked, axis=-1, keepdims=True))
        corr = jnp.exp(m_prev - m_new)
        p = jnp.exp(masked - m_new) * adj
        l_sc[...] = corr * l_sc[...] + jnp.sum(p, axis=-1, keepdims=True)
        acc_sc[...] = corr * acc_sc[...] + jnp.dot(
            p.astype(jnp.bfloat16), val.astype(jnp.bfloat16),
            preferred_element_type=jnp.float32)                        # [TD, D]
        m_sc[...] = m_new

    @pl.when(s == n_s - 1)
    def _finalize():
        # denom >= 1 whenever a dst row has >= 1 edge, so the floor only affects
        # isolated/padded rows, which then yield agg = 0 (matching DGL's u_mul_e_sum).
        inv = pl.reciprocal(jnp.maximum(l_sc[...], 1e-6), approx=True)
        agg = acc_sc[...] * inv                                        # [TD, D]

        ft_dst_bn = dst_ref[...] * bnd_scale_ref[...] + bnd_shift_ref[...]
        xin = jnp.concatenate([agg.astype(jnp.bfloat16),
                               ft_dst_bn.astype(jnp.bfloat16)], axis=-1)  # [TD, 2D]
        lin = (jnp.dot(xin, w_as_ref[...], preferred_element_type=jnp.float32)
               + bagg_ref[...])
        act = jnp.where(lin >= 0, lin, alpha_ref[...] * lin)           # PReLU(D)
        out_ref[...] = act + dst_ref[...]                              # residual (pre-BN dst)


# ----------------------------------------------------------------------------
# Wrapper: one fused pallas_call per KGE layer (both vtypes stacked on axis 0).
# ----------------------------------------------------------------------------
def bn_fold(bn, eps=1e-5):
    scale = bn['gamma'] * jax.lax.rsqrt(bn['var'] + eps)
    shift = bn['beta'] - bn['mean'] * scale
    return scale, shift


def kge_layer_pallas(feats, adj_stack, tile_cnt, lp, n_dst_pad, n_src_pad):
    d = feats['user'].shape[1]

    # vtype order: 0 -> dst=item (src=user, etype 'ui'); 1 -> dst=user (src=item, 'iu').
    src_bf16 = jnp.stack([feats['user'], feats['item']]).astype(jnp.bfloat16)
    dst_f32 = jnp.stack([feats['item'][:n_dst_pad], feats['user'][:n_dst_pad]])

    bn_u = bn_fold(lp['bn']['user'])
    bn_i = bn_fold(lp['bn']['item'])
    bns_scale = jnp.stack([bn_u[0], bn_i[0]])
    bns_shift = jnp.stack([bn_u[1], bn_i[1]])
    bnd_scale = jnp.stack([bn_i[0], bn_u[0]])
    bnd_shift = jnp.stack([bn_i[1], bn_u[1]])

    def etp(p):
        return (jnp.concatenate([p['wq'], p['wv']], axis=1).astype(jnp.bfloat16),
                p['bq'], p['wk'].astype(jnp.bfloat16), p['attn_e'])

    wqv_ui, bq_ui, wk_ui, ae_ui = etp(lp['ui'])
    wqv_iu, bq_iu, wk_iu, ae_iu = etp(lp['iu'])
    wqv = jnp.stack([wqv_ui, wqv_iu])
    bq = jnp.stack([bq_ui, bq_iu])
    wk = jnp.stack([wk_ui, wk_iu])
    attn_e = jnp.stack([ae_ui, ae_iu])

    def vtp(p):
        return (jnp.concatenate([p['wagg'], p['wself']], axis=0).astype(jnp.bfloat16),
                p['bagg'], p['alpha'])

    w_as_i, bagg_i, alpha_i = vtp(lp['item'])
    w_as_u, bagg_u, alpha_u = vtp(lp['user'])
    w_as = jnp.stack([w_as_i, w_as_u])
    bagg = jnp.stack([bagg_i, bagg_u])
    alpha = jnp.stack([alpha_i, alpha_u])

    nd_t = n_dst_pad // TD
    ns_t = n_src_pad // TS

    def vec_spec():
        return pl.BlockSpec((None, 1, d), lambda v, i, s, cnt: (v, 0, 0))

    grid_spec = pltpu.PrefetchScalarGridSpec(
        num_scalar_prefetch=1,
        grid=(2, nd_t, ns_t),
        in_specs=[
            pl.BlockSpec((None, TS, d), lambda v, i, s, cnt: (v, s, 0)),   # src (bf16)
            pl.BlockSpec((None, TD, d), lambda v, i, s, cnt: (v, i, 0)),   # dst (f32)
            pl.BlockSpec((None, TD, TS), lambda v, i, s, cnt: (v, i, s)),  # adj mask
            vec_spec(), vec_spec(), vec_spec(), vec_spec(),                # BN scale/shift
            pl.BlockSpec((None, d, 2 * d), lambda v, i, s, cnt: (v, 0, 0)),  # [Wq|Wv]
            vec_spec(),                                                    # bq
            pl.BlockSpec((None, d, d), lambda v, i, s, cnt: (v, 0, 0)),    # Wk
            vec_spec(),                                                    # attn_e
            pl.BlockSpec((None, 2 * d, d), lambda v, i, s, cnt: (v, 0, 0)),  # [Wagg;Wself]
            vec_spec(), vec_spec(),                                        # bagg, alpha
        ],
        out_specs=pl.BlockSpec((None, TD, d), lambda v, i, s, cnt: (v, i, 0)),
        scratch_shapes=[
            pltpu.VMEM((TD, d), jnp.float32),   # k (per dst tile)
            pltpu.VMEM((TD, 1), jnp.float32),   # running max m
            pltpu.VMEM((TD, 1), jnp.float32),   # running denom l
            pltpu.VMEM((TD, d), jnp.float32),   # running weighted sum acc
        ],
    )

    return pl.pallas_call(
        seframe_layer_kernel,
        out_shape=jax.ShapeDtypeStruct((2, n_dst_pad, d), jnp.float32),
        grid_spec=grid_spec,
        compiler_params=pltpu.CompilerParams(
            dimension_semantics=("parallel", "parallel", "arbitrary")),
    )(tile_cnt, src_bf16, dst_f32, adj_stack,
      bns_scale, bns_shift, bnd_scale, bnd_shift,
      wqv, bq, wk, attn_e, w_as, bagg, alpha)


# ----------------------------------------------------------------------------
# Plain-JAX glue: embeddings (max_norm=1), padding, layer loop.
# ----------------------------------------------------------------------------
def embedding_max_norm(table, idx, max_norm=1.0):
    e = jnp.take(table, idx, axis=0)
    n = jnp.sqrt(jnp.sum(e * e, axis=-1, keepdims=True))
    scale = jnp.where(n > max_norm, max_norm / (n + 1e-7), 1.0)
    return e * scale


def pad_rows(x, n):
    return jnp.pad(x, ((0, n - x.shape[0]), (0, 0)))


def seframe_forward(params, used_user, used_item, adj_item, adj_user):
    d = params['user_emb'].shape[1]
    nu, ni = used_user.shape[0], used_item.shape[0]
    n_src_pad = round_up(max(nu, ni), TS)
    n_dst_pad = round_up(max(nu, ni), TD)

    # feats = {'user': user_embedding(used['user']), 'item': item_embedding(used['item'])}
    feats = {
        'user': pad_rows(embedding_max_norm(params['user_emb'], used_user), n_src_pad),
        'item': pad_rows(embedding_max_norm(params['item_emb'], used_item), n_src_pad),
    }

    # Dense padded adjacency, stacked per vtype: [2, Nd_pad, Ns_pad].
    adj_i = jnp.zeros((n_dst_pad, n_src_pad), jnp.float32).at[:ni, :nu].set(adj_item)
    adj_u = jnp.zeros((n_dst_pad, n_src_pad), jnp.float32).at[:nu, :ni].set(adj_user)
    adj_stack = jnp.stack([adj_i, adj_u])

    nd_t, ns_t = n_dst_pad // TD, n_src_pad // TS
    tile_cnt = (adj_stack.reshape(2, nd_t, TD, ns_t, TS).sum(axis=(2, 4)) > 0
                ).astype(jnp.int32)                                    # [2, nd_t, ns_t]

    # KnowledgeGraphEmbeddingLayer with residual connections (residual added in-kernel).
    for lp in params['layers']:
        out = kge_layer_pallas(feats, adj_stack, tile_cnt, lp, n_dst_pad, n_src_pad)
        feats = {'item': pad_rows(out[0, :ni], n_src_pad),
                 'user': pad_rows(out[1, :nu], n_src_pad)}

    return {'user': feats['user'][:nu], 'item': feats['item'][:ni]}


# ----------------------------------------------------------------------------
# Deterministic parameter / graph construction (synthetic; no checkpoint loading).
# ----------------------------------------------------------------------------
def init_params(key, num_users, num_items, d, num_layers):
    keys = iter(jax.random.split(key, 4 + num_layers * 16))
    nk = lambda: next(keys)

    def linear_w(k):      # stored as [D_in, D_out] (= PyTorch weight.T)
        return (0.1 * jax.random.normal(k, (d, d))).astype(jnp.float32)

    def etype_params():
        return {'wq': linear_w(nk()),
                'bq': jnp.zeros((1, d), jnp.float32),
                'wk': linear_w(nk()),
                'wv': linear_w(nk()),
                'attn_e': jax.random.normal(nk(), (1, d)).astype(jnp.float32)}

    def vtype_params():
        return {'wagg': linear_w(nk()),
                'bagg': jnp.zeros((1, d), jnp.float32),
                'wself': linear_w(nk()),
                'alpha': jnp.full((1, d), 0.25, jnp.float32)}   # PReLU init

    def bn_params():
        return {'gamma': jnp.ones((1, d), jnp.float32),
                'beta': jnp.zeros((1, d), jnp.float32),
                'mean': jnp.zeros((1, d), jnp.float32),
                'var': jnp.ones((1, d), jnp.float32)}

    layers = []
    for _ in range(num_layers):
        layers.append({'ui': etype_params(),        # etype user -> item
                       'iu': etype_params(),        # etype item -> user
                       'item': vtype_params(),
                       'user': vtype_params(),
                       'bn': {'user': bn_params(), 'item': bn_params()}})

    return {'user_emb': jax.random.normal(nk(), (num_users, d)).astype(jnp.float32),
            'item_emb': jax.random.normal(nk(), (num_items, d)).astype(jnp.float32),
            'layers': layers}


def build_adjacency(num_users, num_items):
    # Deterministic bipartite KG: user u connects to items (3u, 3u+1, 3u+2) mod num_items.
    cols = np.repeat(np.arange(num_users), 3)
    rows = (3 * cols + np.tile(np.arange(3), num_users)) % num_items
    adj_item = np.zeros((num_items, num_users), np.float32)   # dst=item, src=user
    adj_item[rows, cols] = 1.0
    return jnp.asarray(adj_item), jnp.asarray(adj_item.T)     # and reverse (dst=user)


if __name__ == "__main__":
    num_users, num_items, embedding_dim, num_layers = 96, 160, 128, 2

    key = jax.random.PRNGKey(0)
    params = init_params(key, num_users, num_items, embedding_dim, num_layers)
    adj_item, adj_user = build_adjacency(num_users, num_items)

    # forward(inputs) with inputs = (graphs, used_nodes); used_nodes = all nodes here.
    used_user = jnp.arange(num_users, dtype=jnp.int32)
    used_item = jnp.arange(num_items, dtype=jnp.int32)

    fwd = jax.jit(seframe_forward)
    out = fwd(params, used_user, used_item, adj_item, adj_user)
    out = jax.tree_util.tree_map(jax.block_until_ready, out)

    assert out['user'].shape == (num_users, embedding_dim)
    assert out['item'].shape == (num_items, embedding_dim)
    assert bool(jnp.all(jnp.isfinite(out['user']))) and bool(jnp.all(jnp.isfinite(out['item'])))
    print("KERNEL_OK")
</pallas_src>

<mosaic_0001>
module attributes {stable_mosaic.version = 11 : i64} {
  func.func @seframe_layer_kernel(%arg0: i32, %arg1: i32, %arg2: i32, %arg3: memref<2x5x2xi32, #tpu.memory_space<smem>>, %arg4: memref<1x128x128xbf16, #tpu.memory_space<vmem>>, %arg5: memref<1x32x128xf32, #tpu.memory_space<vmem>>, %arg6: memref<1x32x128xf32, #tpu.memory_space<vmem>>, %arg7: memref<1x1x128xf32, #tpu.memory_space<vmem>>, %arg8: memref<1x1x128xf32, #tpu.memory_space<vmem>>, %arg9: memref<1x1x128xf32, #tpu.memory_space<vmem>>, %arg10: memref<1x1x128xf32, #tpu.memory_space<vmem>>, %arg11: memref<1x128x256xbf16, #tpu.memory_space<vmem>>, %arg12: memref<1x1x128xf32, #tpu.memory_space<vmem>>, %arg13: memref<1x128x128xbf16, #tpu.memory_space<vmem>>, %arg14: memref<1x1x128xf32, #tpu.memory_space<vmem>>, %arg15: memref<1x256x128xbf16, #tpu.memory_space<vmem>>, %arg16: memref<1x1x128xf32, #tpu.memory_space<vmem>>, %arg17: memref<1x1x128xf32, #tpu.memory_space<vmem>>, %arg18: memref<1x32x128xf32, #tpu.memory_space<vmem>>, %arg19: memref<32x128xf32, #tpu.memory_space<vmem>>, %arg20: memref<32x1xf32, #tpu.memory_space<vmem>>, %arg21: memref<32x1xf32, #tpu.memory_space<vmem>>, %arg22: memref<32x128xf32, #tpu.memory_space<vmem>>) attributes {dimension_semantics = [#tpu.dimension_semantics<parallel>, #tpu.dimension_semantics<parallel>, #tpu.dimension_semantics<arbitrary>], iteration_bounds = array<i64: 2, 5, 2>, scalar_prefetch = 1 : i64, scratch_operands = 4 : i64, tpu.core_type = #tpu.core_type<tc>, window_params = [{transform_indices = @transform_0, window_bounds = array<i64: 1, 128, 128>}, {transform_indices = @transform_1, window_bounds = array<i64: 1, 32, 128>}, {transform_indices = @transform_2, window_bounds = array<i64: 1, 32, 128>}, {transform_indices = @transform_3, window_bounds = array<i64: 1, 1, 128>}, {transform_indices = @transform_4, window_bounds = array<i64: 1, 1, 128>}, {transform_indices = @transform_5, window_bounds = array<i64: 1, 1, 128>}, {transform_indices = @transform_6, window_bounds = array<i64: 1, 1, 128>}, {transform_indices = @transform_7, window_bounds = array<i64: 1, 128, 256>}, {transform_indices = @transform_8, window_bounds = array<i64: 1, 1, 128>}, {transform_indices = @transform_9, window_bounds = array<i64: 1, 128, 128>}, {transform_indices = @transform_10, window_bounds = array<i64: 1, 1, 128>}, {transform_indices = @transform_11, window_bounds = array<i64: 1, 256, 128>}, {transform_indices = @transform_12, window_bounds = array<i64: 1, 1, 128>}, {transform_indices = @transform_13, window_bounds = array<i64: 1, 1, 128>}, {transform_indices = @transform_14, window_bounds = array<i64: 1, 32, 128>}]} {
    %c0_i32 = arith.constant 0 : i32
    %0 = arith.cmpi eq, %arg2, %c0_i32 : i32
    %1 = arith.extui %0 : i1 to i32
    %c0_i32_0 = arith.constant 0 : i32
    %2 = arith.cmpi ne, %1, %c0_i32_0 : i32
    scf.if %2 {
      %c0 = arith.constant 0 : index
      %c0_4 = arith.constant 0 : index
      %c0_5 = arith.constant 0 : index
      %13 = vector.load %arg5[%c0, %c0_4, %c0_5] : memref<1x32x128xf32, #tpu.memory_space<vmem>>, vector<1x32x128xf32>
      %14 = vector.shape_cast %13 : vector<1x32x128xf32> to vector<32x128xf32>
      %c0_6 = arith.constant 0 : index
      %c0_7 = arith.constant 0 : index
      %c0_8 = arith.constant 0 : index
      %15 = vector.load %arg9[%c0_6, %c0_7, %c0_8] : memref<1x1x128xf32, #tpu.memory_space<vmem>>, vector<1x1x128xf32>
      %16 = vector.shape_cast %15 : vector<1x1x128xf32> to vector<1x128xf32>
      %17 = vector.broadcast %16 : vector<1x128xf32> to vector<32x128xf32>
      %18 = arith.mulf %14, %17 : vector<32x128xf32>
      %c0_9 = arith.constant 0 : index
      %c0_10 = arith.constant 0 : index
      %c0_11 = arith.constant 0 : index
      %19 = vector.load %arg10[%c0_9, %c0_10, %c0_11] : memref<1x1x128xf32, #tpu.memory_space<vmem>>, vector<1x1x128xf32>
      %20 = vector.shape_cast %19 : vector<1x1x128xf32> to vector<1x128xf32>
      %21 = vector.broadcast %20 : vector<1x128xf32> to vector<32x128xf32>
      %22 = arith.addf %18, %21 : vector<32x128xf32>
      %23 = arith.truncf %22 : vector<32x128xf32> to vector<32x128xbf16>
      %c0_12 = arith.constant 0 : index
      %c0_13 = arith.constant 0 : index
      %c0_14 = arith.constant 0 : index
      %24 = vector.load %arg13[%c0_12, %c0_13, %c0_14] : memref<1x128x128xbf16, #tpu.memory_space<vmem>>, vector<1x128x128xbf16>
      %25 = vector.shape_cast %24 : vector<1x128x128xbf16> to vector<128x128xbf16>
      %cst = arith.constant dense<0.000000e+00> : vector<32x128xf32>
      %26 = tpu.matmul %23, %25, %cst {dimension_numbers = #tpu.dot_dimension_numbers<[1], [0], [0], [1], [0, 0, 1, 1], [], []>} : vector<32x128xbf16>, vector<128x128xbf16>, vector<32x128xf32> -> vector<32x128xf32>
      %c0_15 = arith.constant 0 : index
      %c0_16 = arith.constant 0 : index
      %27 = vector.load %arg19[%c0_15, %c0_16] : memref<32x128xf32, #tpu.memory_space<vmem>>, vector<32x128xf32>
      tpu.vector_store %arg19[%c0_15, %c0_16], %26 {strides = array<i32>} : memref<32x128xf32, #tpu.memory_space<vmem>>, vector<32x128xf32>,
      %cst_17 = arith.constant -1.000000e+30 : f32
      %28 = vector.broadcast %cst_17 : f32 to vector<32x1xf32>
      %c0_18 = arith.constant 0 : index
      %c0_19 = arith.constant 0 : index
      %29 = vector.load %arg20[%c0_18, %c0_19] : memref<32x1xf32, #tpu.memory_space<vmem>>, vector<32x1xf32>
      tpu.vector_store %arg20[%c0_18, %c0_19], %28 {strides = array<i32>} : memref<32x1xf32, #tpu.memory_space<vmem>>, vector<32x1xf32>,
      %cst_20 = arith.constant 0.000000e+00 : f32
      %30 = vector.broadcast %cst_20 : f32 to vector<32x1xf32>
      %c0_21 = arith.constant 0 : index
      %c0_22 = arith.constant 0 : index
      %31 = vector.load %arg21[%c0_21, %c0_22] : memref<32x1xf32, #tpu.memory_space<vmem>>, vector<32x1xf32>
      tpu.vector_store %arg21[%c0_21, %c0_22], %30 {strides = array<i32>} : memref<32x1xf32, #tpu.memory_space<vmem>>, vector<32x1xf32>,
      %cst_23 = arith.constant 0.000000e+00 : f32
      %32 = vector.broadcast %cst_23 : f32 to vector<32x128xf32>
      %c0_24 = arith.constant 0 : index
      %c0_25 = arith.constant 0 : index
      %33 = vector.load %arg22[%c0_24, %c0_25] : memref<32x128xf32, #tpu.memory_space<vmem>>, vector<32x128xf32>
      tpu.vector_store %arg22[%c0_24, %c0_25], %32 {strides = array<i32>} : memref<32x128xf32, #tpu.memory_space<vmem>>, vector<32x128xf32>,
    } else {
    }
    %3 = arith.index_cast %arg0 : i32 to index
    %4 = arith.index_cast %arg1 : i32 to index
    %5 = arith.index_cast %arg2 : i32 to index
    %6 = memref.load %arg3[%3, %4, %5] : memref<2x5x2xi32, #tpu.memory_space<smem>>
    %c0_i32_1 = arith.constant 0 : i32
    %7 = arith.cmpi sgt, %6, %c0_i32_1 : i32
    %8 = arith.extui %7 : i1 to i32
    %c0_i32_2 = arith.constant 0 : i32
    %9 = arith.cmpi ne, %8, %c0_i32_2 : i32
    scf.if %9 {
      %c0 = arith.constant 0 : index
      %c0_4 = arith.constant 0 : index
      %c0_5 = arith.constant 0 : index
      %13 = vector.load %arg4[%c0, %c0_4, %c0_5] : memref<1x128x128xbf16, #tpu.memory_space<vmem>>, vector<1x128x128xbf16>
      %14 = vector.shape_cast %13 : vector<1x128x128xbf16> to vector<128x128xbf16>
      %15 = arith.extf %14 : vector<128x128xbf16> to vector<128x128xf32>
      %c0_6 = arith.constant 0 : index
      %c0_7 = arith.constant 0 : index
      %c0_8 = arith.constant 0 : index
      %16 = vector.load %arg7[%c0_6, %c0_7, %c0_8] : memref<1x1x128xf32, #tpu.memory_space<vmem>>, vector<1x1x128xf32>
      %17 = vector.shape_cast %16 : vector<1x1x128xf32> to vector<1x128xf32>
      %18 = vector.broadcast %17 : vector<1x128xf32> to vector<128x128xf32>
      %19 = arith.mulf %15, %18 : vector<128x128xf32>
      %c0_9 = arith.constant 0 : index
      %c0_10 = arith.constant 0 : index
      %c0_11 = arith.constant 0 : index
      %20 = vector.load %arg8[%c0_9, %c0_10, %c0_11] : memref<1x1x128xf32, #tpu.memory_space<vmem>>, vector<1x1x128xf32>
      %21 = vector.shape_cast %20 : vector<1x1x128xf32> to vector<1x128xf32>
      %22 = vector.broadcast %21 : vector<1x128xf32> to vector<128x128xf32>
      %23 = arith.addf %19, %22 : vector<128x128xf32>
      %24 = arith.truncf %23 : vector<128x128xf32> to vector<128x128xbf16>
      %c0_12 = arith.constant 0 : index
      %c0_13 = arith.constant 0 : index
      %c0_14 = arith.constant 0 : index
      %25 = vector.load %arg11[%c0_12, %c0_13, %c0_14] : memref<1x128x256xbf16, #tpu.memory_space<vmem>>, vector<1x128x256xbf16>
      %26 = vector.shape_cast %25 : vector<1x128x256xbf16> to vector<128x256xbf16>
      %cst = arith.constant dense<0.000000e+00> : vector<128x256xf32>
      %27 = tpu.matmul %24, %26, %cst {dimension_numbers = #tpu.dot_dimension_numbers<[1], [0], [0], [1], [0, 0, 1, 1], [], []>} : vector<128x128xbf16>, vector<128x256xbf16>, vector<128x256xf32> -> vector<128x256xf32>
      %28 = vector.extract_strided_slice %27 {offsets = [0, 0], sizes = [128, 128], strides = [1, 1]} : vector<128x256xf32> to vector<128x128xf32>
      %c0_15 = arith.constant 0 : index
      %c0_16 = arith.constant 0 : index
      %c0_17 = arith.constant 0 : index
      %29 = vector.load %arg12[%c0_15, %c0_16, %c0_17] : memref<1x1x128xf32, #tpu.memory_space<vmem>>, vector<1x1x128xf32>
      %30 = vector.shape_cast %29 : vector<1x1x128xf32> to vector<1x128xf32>
      %31 = vector.broadcast %30 : vector<1x128xf32> to vector<128x128xf32>
      %32 = arith.addf %28, %31 : vector<128x128xf32>
      %33 = vector.extract_strided_slice %27 {offsets = [0, 128], sizes = [128, 128], strides = [1, 1]} : vector<128x256xf32> to vector<128x128xf32>
      %c0_18 = arith.constant 0 : index
      %c0_19 = arith.constant 0 : index
      %34 = vector.load %arg19[%c0_18, %c0_19] : memref<32x128xf32, #tpu.memory_space<vmem>>, vector<32x128xf32>
      %35 = vector.shape_cast %34 : vector<32x128xf32> to vector<32x1x128xf32>
      %36 = vector.shape_cast %32 : vector<128x128xf32> to vector<1x128x128xf32>
      %37 = vector.broadcast %35 : vector<32x1x128xf32> to vector<32x128x128xf32>
      %38 = vector.broadcast %36 : vector<1x128x128xf32> to vector<32x128x128xf32>
      %39 = arith.addf %37, %38 : vector<32x128x128xf32>
      %40 = arith.negf %39 : vector<32x128x128xf32>
      %41 = math.exp %40 : vector<32x128x128xf32>
      %cst_20 = arith.constant 1.000000e+00 : f32
      %42 = vector.broadcast %cst_20 : f32 to vector<32x128x128xf32>
      %43 = arith.addf %42, %41 : vector<32x128x128xf32>
      %44 = arith.divf %42, %43 : vector<32x128x128xf32>
      %c0_21 = arith.constant 0 : index
      %c0_22 = arith.constant 0 : index
      %c0_23 = arith.constant 0 : index
      %45 = vector.load %arg14[%c0_21, %c0_22, %c0_23] : memref<1x1x128xf32, #tpu.memory_space<vmem>>, vector<1x1x128xf32>
      %46 = vector.shape_cast %45 : vector<1x1x128xf32> to vector<1x128xf32>
      %47 = vector.shape_cast %46 : vector<1x128xf32> to vector<1x1x128xf32>
      %48 = vector.broadcast %47 : vector<1x1x128xf32> to vector<32x128x128xf32>
      %49 = arith.mulf %44, %48 : vector<32x128x128xf32>
      %cst_24 = arith.constant dense<0.000000e+00> : vector<32x128xf32>
      %50 = vector.multi_reduction <add>, %49, %cst_24 [2] : vector<32x128x128xf32> to vector<32x128xf32>
      %c0_25 = arith.constant 0 : index
      %c0_26 = arith.constant 0 : index
      %c0_27 = arith.constant 0 : index
      %51 = vector.load %arg6[%c0_25, %c0_26, %c0_27] : memref<1x32x128xf32, #tpu.memory_space<vmem>>, vector<1x32x128xf32>
      %52 = vector.shape_cast %51 : vector<1x32x128xf32> to vector<32x128xf32>
      %cst_28 = arith.constant 0.000000e+00 : f32
      %53 = vector.broadcast %cst_28 : f32 to vector<32x128xf32>
      %54 = arith.cmpf ogt, %52, %53 : vector<32x128xf32>
      %cst_29 = arith.constant -1.000000e+30 : f32
      %55 = vector.broadcast %cst_29 : f32 to vector<32x128xf32>
      %56 = arith.select %54, %50, %55 : vector<32x128xi1>, vector<32x128xf32>
      %c0_30 = arith.constant 0 : index
      %c0_31 = arith.constant 0 : index
      %57 = vector.load %arg20[%c0_30, %c0_31] : memref<32x1xf32, #tpu.memory_space<vmem>>, vector<32x1xf32>
      %cst_32 = arith.constant dense<0xFF800000> : vector<32xf32>
      %58 = vector.multi_reduction <maximumf>, %56, %cst_32 [1] : vector<32x128xf32> to vector<32xf32>
      %59 = vector.shape_cast %58 : vector<32xf32> to vector<32x1xf32>
      %60 = arith.maximumf %57, %59 : vector<32x1xf32>
      %61 = arith.subf %57, %60 : vector<32x1xf32>
      %62 = math.exp %61 : vector<32x1xf32>
      %63 = vector.broadcast %60 : vector<32x1xf32> to vector<32x128xf32>
      %64 = arith.subf %56, %63 : vector<32x128xf32>
      %65 = math.exp %64 : vector<32x128xf32>
      %66 = arith.mulf %65, %52 : vector<32x128xf32>
      %c0_33 = arith.constant 0 : index
      %c0_34 = arith.constant 0 : index
      %67 = vector.load %arg21[%c0_33, %c0_34] : memref<32x1xf32, #tpu.memory_space<vmem>>, vector<32x1xf32>
      %68 = arith.mulf %62, %67 : vector<32x1xf32>
      %cst_35 = arith.constant dense<0.000000e+00> : vector<32xf32>
      %69 = vector.multi_reduction <add>, %66, %cst_35 [1] : vector<32x128xf32> to vector<32xf32>
      %70 = vector.shape_cast %69 : vector<32xf32> to vector<32x1xf32>
      %71 = arith.addf %68, %70 : vector<32x1xf32>
      %c0_36 = arith.constant 0 : index
      %c0_37 = arith.constant 0 : index
      %72 = vector.load %arg21[%c0_36, %c0_37] : memref<32x1xf32, #tpu.memory_space<vmem>>, vector<32x1xf32>
      tpu.vector_store %arg21[%c0_36, %c0_37], %71 {strides = array<i32>} : memref<32x1xf32, #tpu.memory_space<vmem>>, vector<32x1xf32>,
      %c0_38 = arith.constant 0 : index
      %c0_39 = arith.constant 0 : index
      %73 = vector.load %arg22[%c0_38, %c0_39] : memref<32x128xf32, #tpu.memory_space<vmem>>, vector<32x128xf32>
      %74 = vector.broadcast %62 : vector<32x1xf32> to vector<32x128xf32>
      %75 = arith.mulf %74, %73 : vector<32x128xf32>
      %76 = arith.truncf %66 : vector<32x128xf32> to vector<32x128xbf16>
      %77 = arith.truncf %33 : vector<128x128xf32> to vector<128x128xbf16>
      %cst_40 = arith.constant dense<0.000000e+00> : vector<32x128xf32>
      %78 = tpu.matmul %76, %77, %cst_40 {dimension_numbers = #tpu.dot_dimension_numbers<[1], [0], [0], [1], [0, 0, 1, 1], [], []>} : vector<32x128xbf16>, vector<128x128xbf16>, vector<32x128xf32> -> vector<32x128xf32>
      %79 = arith.addf %75, %78 : vector<32x128xf32>
      %c0_41 = arith.constant 0 : index
      %c0_42 = arith.constant 0 : index
      %80 = vector.load %arg22[%c0_41, %c0_42] : memref<32x128xf32, #tpu.memory_space<vmem>>, vector<32x128xf32>
      tpu.vector_store %arg22[%c0_41, %c0_42], %79 {strides = array<i32>} : memref<32x128xf32, #tpu.memory_space<vmem>>, vector<32x128xf32>,
      %c0_43 = arith.constant 0 : index
      %c0_44 = arith.constant 0 : index
      %81 = vector.load %arg20[%c0_43, %c0_44] : memref<32x1xf32, #tpu.memory_space<vmem>>, vector<32x1xf32>
      tpu.vector_store %arg20[%c0_43, %c0_44], %60 {strides = array<i32>} : memref<32x1xf32, #tpu.memory_space<vmem>>, vector<32x1xf32>,
    } else {
    }
    %c1_i32 = arith.constant 1 : i32
    %10 = arith.cmpi eq, %arg2, %c1_i32 : i32
    %11 = arith.extui %10 : i1 to i32
    %c0_i32_3 = arith.constant 0 : i32
    %12 = arith.cmpi ne, %11, %c0_i32_3 : i32
    scf.if %12 {
      %c0 = arith.constant 0 : index
      %c0_4 = arith.constant 0 : index
      %13 = vector.load %arg21[%c0, %c0_4] : memref<32x1xf32, #tpu.memory_space<vmem>>, vector<32x1xf32>
      %cst = arith.constant 9.99999997E-7 : f32
      %14 = vector.broadcast %cst : f32 to vector<32x1xf32>
      %15 = arith.maximumf %13, %14 : vector<32x1xf32>
      %16 = tpu.reciprocal %15 {approx = true} : vector<32x1xf32> -> vector<32x1xf32>
      %c0_5 = arith.constant 0 : index
      %c0_6 = arith.constant 0 : index
      %17 = vector.load %arg22[%c0_5, %c0_6] : memref<32x128xf32, #tpu.memory_space<vmem>>, vector<32x128xf32>
      %18 = vector.broadcast %16 : vector<32x1xf32> to vector<32x128xf32>
      %19 = arith.mulf %17, %18 : vector<32x128xf32>
      %c0_7 = arith.constant 0 : index
      %c0_8 = arith.constant 0 : index
      %c0_9 = arith.constant 0 : index
      %20 = vector.load %arg5[%c0_7, %c0_8, %c0_9] : memref<1x32x128xf32, #tpu.memory_space<vmem>>, vector<1x32x128xf32>
      %21 = vector.shape_cast %20 : vector<1x32x128xf32> to vector<32x128xf32>
      %c0_10 = arith.constant 0 : index
      %c0_11 = arith.constant 0 : index
      %c0_12 = arith.constant 0 : index
      %22 = vector.load %arg9[%c0_10, %c0_11, %c0_12] : memref<1x1x128xf32, #tpu.memory_space<vmem>>, vector<1x1x128xf32>
      %23 = vector.shape_cast %22 : vector<1x1x128xf32> to vector<1x128xf32>
      %24 = vector.broadcast %23 : vector<1x128xf32> to vector<32x128xf32>
      %25 = arith.mulf %21, %24 : vector<32x128xf32>
      %c0_13 = arith.constant 0 : index
      %c0_14 = arith.constant 0 : index
      %c0_15 = arith.constant 0 : index
      %26 = vector.load %arg10[%c0_13, %c0_14, %c0_15] : memref<1x1x128xf32, #tpu.memory_space<vmem>>, vector<1x1x128xf32>
      %27 = vector.shape_cast %26 : vector<1x1x128xf32> to vector<1x128xf32>
      %28 = vector.broadcast %27 : vector<1x128xf32> to vector<32x128xf32>
      %29 = arith.addf %25, %28 : vector<32x128xf32>
      %30 = arith.truncf %19 : vector<32x128xf32> to vector<32x128xbf16>
      %31 = arith.truncf %29 : vector<32x128xf32> to vector<32x128xbf16>
      %32 = tpu.concatenate %30, %31 in 1 : vector<32x128xbf16>, vector<32x128xbf16> -> vector<32x256xbf16>
      %c0_16 = arith.constant 0 : index
      %c0_17 = arith.constant 0 : index
      %c0_18 = arith.constant 0 : index
      %33 = vector.load %arg15[%c0_16, %c0_17, %c0_18] : memref<1x256x128xbf16, #tpu.memory_space<vmem>>, vector<1x256x128xbf16>
      %34 = vector.shape_cast %33 : vector<1x256x128xbf16> to vector<256x128xbf16>
      %cst_19 = arith.constant dense<0.000000e+00> : vector<32x128xf32>
      %35 = tpu.matmul %32, %34, %cst_19 {dimension_numbers = #tpu.dot_dimension_numbers<[1], [0], [0], [1], [0, 0, 1, 1], [], []>} : vector<32x256xbf16>, vector<256x128xbf16>, vector<32x128xf32> -> vector<32x128xf32>
      %c0_20 = arith.constant 0 : index
      %c0_21 = arith.constant 0 : index
      %c0_22 = arith.constant 0 : index
      %36 = vector.load %arg16[%c0_20, %c0_21, %c0_22] : memref<1x1x128xf32, #tpu.memory_space<vmem>>, vector<1x1x128xf32>
      %37 = vector.shape_cast %36 : vector<1x1x128xf32> to vector<1x128xf32>
      %38 = vector.broadcast %37 : vector<1x128xf32> to vector<32x128xf32>
      %39 = arith.addf %35, %38 : vector<32x128xf32>
      %cst_23 = arith.constant 0.000000e+00 : f32
      %40 = vector.broadcast %cst_23 : f32 to vector<32x128xf32>
      %41 = arith.cmpf oge, %39, %40 : vector<32x128xf32>
      %c0_24 = arith.constant 0 : index
      %c0_25 = arith.constant 0 : index
      %c0_26 = arith.constant 0 : index
      %42 = vector.load %arg17[%c0_24, %c0_25, %c0_26] : memref<1x1x128xf32, #tpu.memory_space<vmem>>, vector<1x1x128xf32>
      %43 = vector.shape_cast %42 : vector<1x1x128xf32> to vector<1x128xf32>
      %44 = vector.broadcast %43 : vector<1x128xf32> to vector<32x128xf32>
      %45 = arith.mulf %44, %39 : vector<32x128xf32>
      %46 = arith.select %41, %39, %45 : vector<32x128xi1>, vector<32x128xf32>
      %c0_27 = arith.constant 0 : index
      %c0_28 = arith.constant 0 : index
      %c0_29 = arith.constant 0 : index
      %47 = vector.load %arg5[%c0_27, %c0_28, %c0_29] : memref<1x32x128xf32, #tpu.memory_space<vmem>>, vector<1x32x128xf32>
      %48 = vector.shape_cast %47 : vector<1x32x128xf32> to vector<32x128xf32>
      %49 = arith.addf %46, %48 : vector<32x128xf32>
      %c0_30 = arith.constant 0 : index
      %c0_31 = arith.constant 0 : index
      %c0_32 = arith.constant 0 : index
      %50 = vector.load %arg18[%c0_30, %c0_31, %c0_32] : memref<1x32x128xf32, #tpu.memory_space<vmem>>, vector<1x32x128xf32>
      %51 = vector.shape_cast %50 : vector<1x32x128xf32> to vector<32x128xf32>
      %52 = vector.shape_cast %49 : vector<32x128xf32> to vector<1x32x128xf32>
      tpu.vector_store %arg18[%c0_30, %c0_31, %c0_32], %52 {strides = array<i32>} : memref<1x32x128xf32, #tpu.memory_space<vmem>>, vector<1x32x128xf32>,
    } else {
    }
    return
  }
  func.func @transform_0(%arg0: i32, %arg1: i32, %arg2: i32, %arg3: memref<2x5x2xi32, #tpu.memory_space<smem>>) -> (i32, i32, i32) {
    %c0_i32 = arith.constant 0 : i32
    %c0_i32_0 = arith.constant 0 : i32
    return %arg0, %arg2, %c0_i32 : i32, i32, i32
  }
  func.func @transform_1(%arg0: i32, %arg1: i32, %arg2: i32, %arg3: memref<2x5x2xi32, #tpu.memory_space<smem>>) -> (i32, i32, i32) {
    %c0_i32 = arith.constant 0 : i32
    %c0_i32_0 = arith.constant 0 : i32
    return %arg0, %arg1, %c0_i32 : i32, i32, i32
  }
  func.func @transform_2(%arg0: i32, %arg1: i32, %arg2: i32, %arg3: memref<2x5x2xi32, #tpu.memory_space<smem>>) -> (i32, i32, i32) {
    %c0_i32 = arith.constant 0 : i32
    return %arg0, %arg1, %arg2 : i32, i32, i32
  }
  func.func @transform_3(%arg0: i32, %arg1: i32, %arg2: i32, %arg3: memref<2x5x2xi32, #tpu.memory_space<smem>>) -> (i32, i32, i32) {
    %c0_i32 = arith.constant 0 : i32
    %c0_i32_0 = arith.constant 0 : i32
    %c0_i32_1 = arith.constant 0 : i32
    return %arg0, %c0_i32, %c0_i32_0 : i32, i32, i32
  }
  func.func @transform_4(%arg0: i32, %arg1: i32, %arg2: i32, %arg3: memref<2x5x2xi32, #tpu.memory_space<smem>>) -> (i32, i32, i32) {
    %c0_i32 = arith.constant 0 : i32
    %c0_i32_0 = arith.constant 0 : i32
    %c0_i32_1 = arith.constant 0 : i32
    return %arg0, %c0_i32, %c0_i32_0 : i32, i32, i32
  }
  func.func @transform_5(%arg0: i32, %arg1: i32, %arg2: i32, %arg3: memref<2x5x2xi32, #tpu.memory_space<smem>>) -> (i32, i32, i32) {
    %c0_i32 = arith.constant 0 : i32
    %c0_i32_0 = arith.constant 0 : i32
    %c0_i32_1 = arith.constant 0 : i32
    return %arg0, %c0_i32, %c0_i32_0 : i32, i32, i32
  }
  func.func @transform_6(%arg0: i32, %arg1: i32, %arg2: i32, %arg3: memref<2x5x2xi32, #tpu.memory_space<smem>>) -> (i32, i32, i32) {
    %c0_i32 = arith.constant 0 : i32
    %c0_i32_0 = arith.constant 0 : i32
    %c0_i32_1 = arith.constant 0 : i32
    return %arg0, %c0_i32, %c0_i32_0 : i32, i32, i32
  }
  func.func @transform_7(%arg0: i32, %arg1: i32, %arg2: i32, %arg3: memref<2x5x2xi32, #tpu.memory_space<smem>>) -> (i32, i32, i32) {
    %c0_i32 = arith.constant 0 : i32
    %c0_i32_0 = arith.constant 0 : i32
    %c0_i32_1 = arith.constant 0 : i32
    return %arg0, %c0_i32, %c0_i32_0 : i32, i32, i32
  }
  func.func @transform_8(%arg0: i32, %arg1: i32, %arg2: i32, %arg3: memref<2x5x2xi32, #tpu.memory_space<smem>>) -> (i32, i32, i32) {
    %c0_i32 = arith.constant 0 : i32
    %c0_i32_0 = arith.constant 0 : i32
    %c0_i32_1 = arith.constant 0 : i32
    return %arg0, %c0_i32, %c0_i32_0 : i32, i32, i32
  }
  func.func @transform_9(%arg0: i32, %arg1: i32, %arg2: i32, %arg3: memref<2x5x2xi32, #tpu.memory_space<smem>>) -> (i32, i32, i32) {
    %c0_i32 = arith.constant 0 : i32
    %c0_i32_0 = arith.constant 0 : i32
    %c0_i32_1 = arith.constant 0 : i32
    return %arg0, %c0_i32, %c0_i32_0 : i32, i32, i32
  }
  func.func @transform_10(%arg0: i32, %arg1: i32, %arg2: i32, %arg3: memref<2x5x2xi32, #tpu.memory_space<smem>>) -> (i32, i32, i32) {
    %c0_i32 = arith.constant 0 : i32
    %c0_i32_0 = arith.constant 0 : i32
    %c0_i32_1 = arith.constant 0 : i32
    return %arg0, %c0_i32, %c0_i32_0 : i32, i32, i32
  }
  func.func @transform_11(%arg0: i32, %arg1: i32, %arg2: i32, %arg3: memref<2x5x2xi32, #tpu.memory_space<smem>>) -> (i32, i32, i32) {
    %c0_i32 = arith.constant 0 : i32
    %c0_i32_0 = arith.constant 0 : i32
    %c0_i32_1 = arith.constant 0 : i32
    return %arg0, %c0_i32, %c0_i32_0 : i32, i32, i32
  }
  func.func @transform_12(%arg0: i32, %arg1: i32, %arg2: i32, %arg3: memref<2x5x2xi32, #tpu.memory_space<smem>>) -> (i32, i32, i32) {
    %c0_i32 = arith.constant 0 : i32
    %c0_i32_0 = arith.constant 0 : i32
    %c0_i32_1 = arith.constant 0 : i32
    return %arg0, %c0_i32, %c0_i32_0 : i32, i32, i32
  }
  func.func @transform_13(%arg0: i32, %arg1: i32, %arg2: i32, %arg3: memref<2x5x2xi32, #tpu.memory_space<smem>>) -> (i32, i32, i32) {
    %c0_i32 = arith.constant 0 : i32
    %c0_i32_0 = arith.constant 0 : i32
    %c0_i32_1 = arith.constant 0 : i32
    return %arg0, %c0_i32, %c0_i32_0 : i32, i32, i32
  }
  func.func @transform_14(%arg0: i32, %arg1: i32, %arg2: i32, %arg3: memref<2x5x2xi32, #tpu.memory_space<smem>>) -> (i32, i32, i32) {
    %c0_i32 = arith.constant 0 : i32
    %c0_i32_0 = arith.constant 0 : i32
    return %arg0, %arg1, %c0_i32 : i32, i32, i32
  }
}

</mosaic_0001>

<llo_original>
// kernel: seframe_forward.2
$region0: #{seframe_forward.2}
  #allocation0 [shape = 'u32[]', space=smem, size = 0x4, offset = 0x4, fixed_abs, tag = 'smem constant byte address 0x4 - core index']
  #allocation1 [shape = 'u32[144,128]{1,0:T(1,128)}', space=vmem, size = 0x12000, scoped, tag = 'internal scratch']
  #allocation2 [shape = 'f32[32,128]{1,0:T(8,128)}', space=vmem, size = 0x4000, scoped, tag = 'scratch operand']
  #allocation3 [shape = 'f32[32,1]{1,0:T(8,128)}', space=vmem, size = 0x4000, scoped, tag = 'scratch operand']
  #allocation4 [shape = 'f32[32,1]{1,0:T(8,128)}', space=vmem, size = 0x4000, scoped, tag = 'scratch operand']
  #allocation5 [shape = 'f32[32,128]{1,0:T(8,128)}', space=vmem, size = 0x4000, scoped, tag = 'scratch operand']
  #allocation6 [shape = 's32[1]{0}', space=sflag, size = 0x4, scoped, tag = 'scoped memory for seframe_forward.2']
  #allocation7 [shape = 'u8[8192]{0}', space=smem, size = 0x2000, scoped, tag = 'prefetched SMEM operand 0']
  %s0 = inlined_call_operand.vmem [shape: s32[2,5,2], index: 0, kind: input, shape index: {}]
  %s1 = inlined_call_operand.vmem [shape: bf16[2,256,128], index: 1, kind: input, shape index: {}]
  %s2 = inlined_call_operand.vmem [shape: f32[2,160,128], index: 2, kind: input, shape index: {}]
  %s3 = inlined_call_operand.vmem [shape: f32[2,160,256], index: 3, kind: input, shape index: {}]
  %s4 = inlined_call_operand.vmem [shape: f32[2,1,128], index: 4, kind: input, shape index: {}]
  %s5 = inlined_call_operand.vmem [shape: f32[2,1,128], index: 5, kind: input, shape index: {}]
  %s6 = inlined_call_operand.vmem [shape: f32[2,1,128], index: 6, kind: input, shape index: {}]
  %s7 = inlined_call_operand.vmem [shape: f32[2,1,128], index: 7, kind: input, shape index: {}]
  %s8 = inlined_call_operand.vmem [shape: bf16[2,128,256], index: 8, kind: input, shape index: {}]
  %s9 = inlined_call_operand.vmem [shape: f32[2,1,128], index: 9, kind: input, shape index: {}]
  %s10 = inlined_call_operand.vmem [shape: bf16[2,128,128], index: 10, kind: input, shape index: {}]
  %s11 = inlined_call_operand.vmem [shape: f32[2,1,128], index: 11, kind: input, shape index: {}]
  %s12 = inlined_call_operand.vmem [shape: bf16[2,256,128], index: 12, kind: input, shape index: {}]
  %s13 = inlined_call_operand.vmem [shape: f32[2,1,128], index: 13, kind: input, shape index: {}]
  %s14 = inlined_call_operand.vmem [shape: f32[2,1,128], index: 14, kind: input, shape index: {}]
  %s15 = inlined_call_operand.vmem [shape: f32[2,160,128], index: 15, kind: output, shape index: {}]
  %s16 = sld [smem:[#allocation0]]
  $region139: #{seframe_forward.2} parent=0
    _
  %s18 = ssub.s32 1, %s16
  %s19 = scalar_select 0, %s18, %s16
  %s20 = sshll.u32 %s0, 4
  %s21 = int_to_ptr.vmem [resolvable:$true] %s20
  %23 = dma.vmem_to_smem %s21, 256, [#allocation7], [#allocation6]
  %24 = dma.done [#allocation6], 256
  %25 = sfence
  $region1: #{seframe_forward.2} parent=0
    #allocation8 [shape = 'u8[32768]{0}', space=vmem, size = 0x8000, scoped, tag = 'input window, operand 3']
    loop: start=0, step=1, limit=22
    $region2: #{seframe_forward.2} parent=1 // loop_pre_header
      _
    $region3: #{seframe_forward.2} parent=1 // loop_header
      %s27 = sphi 0, %s31
      %p28 = scmp.ge.s32.totalorder %s27, 22
      %s34 = sphi 0, %s53
      %s35 = sphi 0, %s49
      %s36 = sphi 0, %s45
      %s37 = sphi 0, %s34
      %s38 = sphi 0, %s35
      %s39 = sphi 0, %s36
      %s40 = sphi 0, %s37
      %s41 = sphi 0, %s38
      %s42 = sphi 0, %s39
      %s58 = sphi 0, %s60
      %s61 = sphi 0, %s58
      %s62 = sphi 0, %s61
      %s78 = sphi 0, %s62
      %s86 = sphi 0, %s88
      %s89 = sphi 0, %s86
      %s90 = sphi 0, %s89
      %s106 = sphi 0, %s90
      %s116 = sphi 0, %s118
      %s119 = sphi 0, %s116
      %s120 = sphi 0, %s119
      %s136 = sphi 0, %s120
      %s142 = sphi 0, %s144
      %s145 = sphi 0, %s142
      %s146 = sphi 0, %s145
      %s162 = sphi 0, %s146
      %s168 = sphi 0, %s170
      %s171 = sphi 0, %s168
      %s172 = sphi 0, %s171
      %s188 = sphi 0, %s172
      %s194 = sphi 0, %s196
      %s197 = sphi 0, %s194
      %s198 = sphi 0, %s197
      %s214 = sphi 0, %s198
      %s220 = sphi 0, %s222
      %s223 = sphi 0, %s220
      %s224 = sphi 0, %s223
      %s240 = sphi 0, %s224
      %s246 = sphi 0, %s248
      %s249 = sphi 0, %s246
      %s250 = sphi 0, %s249
      %s266 = sphi 0, %s250
      %s272 = sphi 0, %s274
      %s275 = sphi 0, %s272
      %s276 = sphi 0, %s275
      %s292 = sphi 0, %s276
      %s298 = sphi 0, %s300
      %s301 = sphi 0, %s298
      %s302 = sphi 0, %s301
      %s318 = sphi 0, %s302
      %s324 = sphi 0, %s326
      %s327 = sphi 0, %s324
      %s328 = sphi 0, %s327
      %s344 = sphi 0, %s328
      %s350 = sphi 0, %s352
      %s353 = sphi 0, %s350
      %s354 = sphi 0, %s353
      %s370 = sphi 0, %s354
      %s376 = sphi 0, %s378
      %s379 = sphi 0, %s376
      %s380 = sphi 0, %s379
      %s396 = sphi 0, %s380
      %s402 = sphi 0, %s404
      %s405 = sphi 0, %s402
      %s406 = sphi 0, %s405
      %s422 = sphi 0, %s406
      %s430 = sphi 0, %s432
      %s433 = sphi 0, %s430
      %s434 = sphi 0, %s433
      %s450 = sphi 0, %s434
    $region4: #{seframe_forward.2} parent=1 // loop_header_branch
      %30 = sbr.rel (%p28) target = $region8
    $region5: #{seframe_forward.2} parent=1 // loop_body
      %s32 = ssub.s32 %s27, 1
      %s33 = ssub.s32 %s27, 2
      %s43 = sadd.s32 1, %s36
      %p44 = scmp.ge.s32.totalorder %s43, 2
      %s45 = scalar_select %p44, 0, %s43
      %s46 = sadd.s32 1, %s35
      %s47 = scalar_select %p44, %s46, %s35
      %p48 = scmp.ge.s32.totalorder %s47, 5
      %s49 = scalar_select %p48, 0, %s47
      %s50 = sadd.s32 1, %s34
      %s51 = scalar_select %p48, %s50, %s34
      %p52 = scmp.ge.s32.totalorder %s51, 2
      %s53 = scalar_select %p52, 0, %s51
      %s54 = ssub.s32 %s34, %s53
      %s55 = ssub.s32 %s36, %s45
      %s56 = sor.u32 %s54, %s55
      %p57 = scmp.eq.s32.totalorder %s56, 0
      %s59 = sadd.s32 %s58, 1
      %s60 = scalar_select %p57, %s58, %s59
      %p63 = pneg %p57
      %p64 = scmp.eq.s32.totalorder %s27, 19
      %p65 = por %p63, %p64
      %p66 = scmp.ne.s32.totalorder %s58, %s61
      %p67 = scmp.eq.s32.totalorder %s27, 0
      %p68 = por %p66, %p67
      %p69 = scmp.ne.s32.totalorder %s58, %s61
      %p70 = scmp.eq.s32.totalorder %s32, 19
      %p71 = por %p69, %p70
      %p72 = scmp.ne.s32.totalorder %s61, %s62
      %p73 = scmp.eq.s32.totalorder %s32, 0
      %p74 = por %p72, %p73
      %p75 = scmp.ne.s32.totalorder %s61, %s62
      %p76 = scmp.eq.s32.totalorder %s33, 19
      %p77 = por %p75, %p76
      %p79 = scmp.ne.s32.totalorder %s62, %s78
      %p80 = scmp.eq.s32.totalorder %s33, 0
      %p81 = por %p79, %p80
      %s82 = ssub.s32 %s34, %s53
      %s83 = ssub.s32 %s35, %s49
      %s84 = sor.u32 %s82, %s83
      %p85 = scmp.eq.s32.totalorder %s84, 0
      %s87 = sadd.s32 %s86, 1
      %s88 = scalar_select %p85, %s86, %s87
      %p91 = pneg %p85
      %p92 = scmp.eq.s32.totalorder %s27, 19
      %p93 = por %p91, %p92
      %p94 = scmp.ne.s32.totalorder %s86, %s89
      %p95 = scmp.eq.s32.totalorder %s27, 0
      %p96 = por %p94, %p95
      %p97 = scmp.ne.s32.totalorder %s86, %s89
      %p98 = scmp.eq.s32.totalorder %s32, 19
      %p99 = por %p97, %p98
      %p100 = scmp.ne.s32.totalorder %s89, %s90
      %p101 = scmp.eq.s32.totalorder %s32, 0
      %p102 = por %p100, %p101
      %p103 = scmp.ne.s32.totalorder %s89, %s90
      %p104 = scmp.eq.s32.totalorder %s33, 19
      %p105 = por %p103, %p104
      %p107 = scmp.ne.s32.totalorder %s90, %s106
      %p108 = scmp.eq.s32.totalorder %s33, 0
      %p109 = por %p107, %p108
      %s110 = ssub.s32 %s34, %s53
      %s111 = ssub.s32 %s35, %s49
      %s112 = sor.u32 %s110, %s111
      %s113 = ssub.s32 %s36, %s45
      %s114 = sor.u32 %s112, %s113
      %p115 = scmp.eq.s32.totalorder %s114, 0
      %s117 = sadd.s32 %s116, 1
      %s118 = scalar_select %p115, %s116, %s117
      %p121 = pneg %p115
      %p122 = scmp.eq.s32.totalorder %s27, 19
      %p123 = por %p121, %p122
      %p124 = scmp.ne.s32.totalorder %s116, %s119
      %p125 = scmp.eq.s32.totalorder %s27, 0
      %p126 = por %p124, %p125
      %p127 = scmp.ne.s32.totalorder %s116, %s119
      %p128 = scmp.eq.s32.totalorder %s32, 19
      %p129 = por %p127, %p128
      %p130 = scmp.ne.s32.totalorder %s119, %s120
      %p131 = scmp.eq.s32.totalorder %s32, 0
      %p132 = por %p130, %p131
      %p133 = scmp.ne.s32.totalorder %s119, %s120
      %p134 = scmp.eq.s32.totalorder %s33, 19
      %p135 = por %p133, %p134
      %p137 = scmp.ne.s32.totalorder %s120, %s136
      %p138 = scmp.eq.s32.totalorder %s33, 0
      %p139 = por %p137, %p138
      %s140 = ssub.s32 %s34, %s53
      %p141 = scmp.eq.s32.totalorder %s140, 0
      %s143 = sadd.s32 %s142, 1
      %s144 = scalar_select %p141, %s142, %s143
      %p147 = pneg %p141
      %p148 = scmp.eq.s32.totalorder %s27, 19
      %p149 = por %p147, %p148
      %p150 = scmp.ne.s32.totalorder %s142, %s145
      %p151 = scmp.eq.s32.totalorder %s27, 0
      %p152 = por %p150, %p151
      %p153 = scmp.ne.s32.totalorder %s142, %s145
      %p154 = scmp.eq.s32.totalorder %s32, 19
      %p155 = por %p153, %p154
      %p156 = scmp.ne.s32.totalorder %s145, %s146
      %p157 = scmp.eq.s32.totalorder %s32, 0
      %p158 = por %p156, %p157
      %p159 = scmp.ne.s32.totalorder %s145, %s146
      %p160 = scmp.eq.s32.totalorder %s33, 19
      %p161 = por %p159, %p160
      %p163 = scmp.ne.s32.totalorder %s146, %s162
      %p164 = scmp.eq.s32.totalorder %s33, 0
      %p165 = por %p163, %p164
      %s166 = ssub.s32 %s34, %s53
      %p167 = scmp.eq.s32.totalorder %s166, 0
      %s169 = sadd.s32 %s168, 1
      %s170 = scalar_select %p167, %s168, %s169
      %p173 = pneg %p167
      %p174 = scmp.eq.s32.totalorder %s27, 19
      %p175 = por %p173, %p174
      %p176 = scmp.ne.s32.totalorder %s168, %s171
      %p177 = scmp.eq.s32.totalorder %s27, 0
      %p178 = por %p176, %p177
      %p179 = scmp.ne.s32.totalorder %s168, %s171
      %p180 = scmp.eq.s32.totalorder %s32, 19
      %p181 = por %p179, %p180
      %p182 = scmp.ne.s32.totalorder %s171, %s172
      %p183 = scmp.eq.s32.totalorder %s32, 0
      %p184 = por %p182, %p183
      %p185 = scmp.ne.s32.totalorder %s171, %s172
      %p186 = scmp.eq.s32.totalorder %s33, 19
      %p187 = por %p185, %p186
      %p189 = scmp.ne.s32.totalorder %s172, %s188
      %p190 = scmp.eq.s32.totalorder %s33, 0
      %p191 = por %p189, %p190
      %s192 = ssub.s32 %s34, %s53
      %p193 = scmp.eq.s32.totalorder %s192, 0
      %s195 = sadd.s32 %s194, 1
      %s196 = scalar_select %p193, %s194, %s195
      %p199 = pneg %p193
      %p200 = scmp.eq.s32.totalorder %s27, 19
      %p201 = por %p199, %p200
      %p202 = scmp.ne.s32.totalorder %s194, %s197
      %p203 = scmp.eq.s32.totalorder %s27, 0
      %p204 = por %p202, %p203
      %p205 = scmp.ne.s32.totalorder %s194, %s197
      %p206 = scmp.eq.s32.totalorder %s32, 19
      %p207 = por %p205, %p206
      %p208 = scmp.ne.s32.totalorder %s197, %s198
      %p209 = scmp.eq.s32.totalorder %s32, 0
      %p210 = por %p208, %p209
      %p211 = scmp.ne.s32.totalorder %s197, %s198
      %p212 = scmp.eq.s32.totalorder %s33, 19
      %p213 = por %p211, %p212
      %p215 = scmp.ne.s32.totalorder %s198, %s214
      %p216 = scmp.eq.s32.totalorder %s33, 0
      %p217 = por %p215, %p216
      %s218 = ssub.s32 %s34, %s53
      %p219 = scmp.eq.s32.totalorder %s218, 0
      %s221 = sadd.s32 %s220, 1
      %s222 = scalar_select %p219, %s220, %s221
      %p225 = pneg %p219
      %p226 = scmp.eq.s32.totalorder %s27, 19
      %p227 = por %p225, %p226
      %p228 = scmp.ne.s32.totalorder %s220, %s223
      %p229 = scmp.eq.s32.totalorder %s27, 0
      %p230 = por %p228, %p229
      %p231 = scmp.ne.s32.totalorder %s220, %s223
      %p232 = scmp.eq.s32.totalorder %s32, 19
      %p233 = por %p231, %p232
      %p234 = scmp.ne.s32.totalorder %s223, %s224
      %p235 = scmp.eq.s32.totalorder %s32, 0
      %p236 = por %p234, %p235
      %p237 = scmp.ne.s32.totalorder %s223, %s224
      %p238 = scmp.eq.s32.totalorder %s33, 19
      %p239 = por %p237, %p238
      %p241 = scmp.ne.s32.totalorder %s224, %s240
      %p242 = scmp.eq.s32.totalorder %s33, 0
      %p243 = por %p241, %p242
      %s244 = ssub.s32 %s34, %s53
      %p245 = scmp.eq.s32.totalorder %s244, 0
      %s247 = sadd.s32 %s246, 1
      %s248 = scalar_select %p245, %s246, %s247
      %p251 = pneg %p245
      %p252 = scmp.eq.s32.totalorder %s27, 19
      %p253 = por %p251, %p252
      %p254 = scmp.ne.s32.totalorder %s246, %s249
      %p255 = scmp.eq.s32.totalorder %s27, 0
      %p256 = por %p254, %p255
      %p257 = scmp.ne.s32.totalorder %s246, %s249
      %p258 = scmp.eq.s32.totalorder %s32, 19
      %p259 = por %p257, %p258
      %p260 = scmp.ne.s32.totalorder %s249, %s250
      %p261 = scmp.eq.s32.totalorder %s32, 0
      %p262 = por %p260, %p261
      %p263 = scmp.ne.s32.totalorder %s249, %s250
      %p264 = scmp.eq.s32.totalorder %s33, 19
      %p265 = por %p263, %p264
      %p267 = scmp.ne.s32.totalorder %s250, %s266
      %p268 = scmp.eq.s32.totalorder %s33, 0
      %p269 = por %p267, %p268
      %s270 = ssub.s32 %s34, %s53
      %p271 = scmp.eq.s32.totalorder %s270, 0
      %s273 = sadd.s32 %s272, 1
      %s274 = scalar_select %p271, %s272, %s273
      %p277 = pneg %p271
      %p278 = scmp.eq.s32.totalorder %s27, 19
      %p279 = por %p277, %p278
      %p280 = scmp.ne.s32.totalorder %s272, %s275
      %p281 = scmp.eq.s32.totalorder %s27, 0
      %p282 = por %p280, %p281
      %p283 = scmp.ne.s32.totalorder %s272, %s275
      %p284 = scmp.eq.s32.totalorder %s32, 19
      %p285 = por %p283, %p284
      %p286 = scmp.ne.s32.totalorder %s275, %s276
      %p287 = scmp.eq.s32.totalorder %s32, 0
      %p288 = por %p286, %p287
      %p289 = scmp.ne.s32.totalorder %s275, %s276
      %p290 = scmp.eq.s32.totalorder %s33, 19
      %p291 = por %p289, %p290
      %p293 = scmp.ne.s32.totalorder %s276, %s292
      %p294 = scmp.eq.s32.totalorder %s33, 0
      %p295 = por %p293, %p294
      %s296 = ssub.s32 %s34, %s53
      %p297 = scmp.eq.s32.totalorder %s296, 0
      %s299 = sadd.s32 %s298, 1
      %s300 = scalar_select %p297, %s298, %s299
      %p303 = pneg %p297
      %p304 = scmp.eq.s32.totalorder %s27, 19
      %p305 = por %p303, %p304
      %p306 = scmp.ne.s32.totalorder %s298, %s301
      %p307 = scmp.eq.s32.totalorder %s27, 0
      %p308 = por %p306, %p307
      %p309 = scmp.ne.s32.totalorder %s298, %s301
      %p310 = scmp.eq.s32.totalorder %s32, 19
      %p311 = por %p309, %p310
      %p312 = scmp.ne.s32.totalorder %s301, %s302
      %p313 = scmp.eq.s32.totalorder %s32, 0
      %p314 = por %p312, %p313
      %p315 = scmp.ne.s32.totalorder %s301, %s302
      %p316 = scmp.eq.s32.totalorder %s33, 19
      %p317 = por %p315, %p316
      %p319 = scmp.ne.s32.totalorder %s302, %s318
      %p320 = scmp.eq.s32.totalorder %s33, 0
      %p321 = por %p319, %p320
      %s322 = ssub.s32 %s34, %s53
      %p323 = scmp.eq.s32.totalorder %s322, 0
      %s325 = sadd.s32 %s324, 1
      %s326 = scalar_select %p323, %s324, %s325
      %p329 = pneg %p323
      %p330 = scmp.eq.s32.totalorder %s27, 19
      %p331 = por %p329, %p330
      %p332 = scmp.ne.s32.totalorder %s324, %s327
      %p333 = scmp.eq.s32.totalorder %s27, 0
      %p334 = por %p332, %p333
      %p335 = scmp.ne.s32.totalorder %s324, %s327
      %p336 = scmp.eq.s32.totalorder %s32, 19
      %p337 = por %p335, %p336
      %p338 = scmp.ne.s32.totalorder %s327, %s328
      %p339 = scmp.eq.s32.totalorder %s32, 0
      %p340 = por %p338, %p339
      %p341 = scmp.ne.s32.totalorder %s327, %s328
      %p342 = scmp.eq.s32.totalorder %s33, 19
      %p343 = por %p341, %p342
      %p345 = scmp.ne.s32.totalorder %s328, %s344
      %p346 = scmp.eq.s32.totalorder %s33, 0
      %p347 = por %p345, %p346
      %s348 = ssub.s32 %s34, %s53
      %p349 = scmp.eq.s32.totalorder %s348, 0
      %s351 = sadd.s32 %s350, 1
      %s352 = scalar_select %p349, %s350, %s351
      %p355 = pneg %p349
      %p356 = scmp.eq.s32.totalorder %s27, 19
      %p357 = por %p355, %p356
      %p358 = scmp.ne.s32.totalorder %s350, %s353
      %p359 = scmp.eq.s32.totalorder %s27, 0
      %p360 = por %p358, %p359
      %p361 = scmp.ne.s32.totalorder %s350, %s353
      %p362 = scmp.eq.s32.totalorder %s32, 19
      %p363 = por %p361, %p362
      %p364 = scmp.ne.s32.totalorder %s353, %s354
      %p365 = scmp.eq.s32.totalorder %s32, 0
      %p366 = por %p364, %p365
      %p367 = scmp.ne.s32.totalorder %s353, %s354
      %p368 = scmp.eq.s32.totalorder %s33, 19
      %p369 = por %p367, %p368
      %p371 = scmp.ne.s32.totalorder %s354, %s370
      %p372 = scmp.eq.s32.totalorder %s33, 0
      %p373 = por %p371, %p372
      %s374 = ssub.s32 %s34, %s53
      %p375 = scmp.eq.s32.totalorder %s374, 0
      %s377 = sadd.s32 %s376, 1
      %s378 = scalar_select %p375, %s376, %s377
      %p381 = pneg %p375
      %p382 = scmp.eq.s32.totalorder %s27, 19
      %p383 = por %p381, %p382
      %p384 = scmp.ne.s32.totalorder %s376, %s379
      %p385 = scmp.eq.s32.totalorder %s27, 0
      %p386 = por %p384, %p385
      %p387 = scmp.ne.s32.totalorder %s376, %s379
      %p388 = scmp.eq.s32.totalorder %s32, 19
      %p389 = por %p387, %p388
      %p390 = scmp.ne.s32.totalorder %s379, %s380
      %p391 = scmp.eq.s32.totalorder %s32, 0
      %p392 = por %p390, %p391
      %p393 = scmp.ne.s32.totalorder %s379, %s380
      %p394 = scmp.eq.s32.totalorder %s33, 19
      %p395 = por %p393, %p394
      %p397 = scmp.ne.s32.totalorder %s380, %s396
      %p398 = scmp.eq.s32.totalorder %s33, 0
      %p399 = por %p397, %p398
      %s400 = ssub.s32 %s34, %s53
      %p401 = scmp.eq.s32.totalorder %s400, 0
      %s403 = sadd.s32 %s402, 1
      %s404 = scalar_select %p401, %s402, %s403
      %p407 = pneg %p401
      %p408 = scmp.eq.s32.totalorder %s27, 19
      %p409 = por %p407, %p408
      %p410 = scmp.ne.s32.totalorder %s402, %s405
      %p411 = scmp.eq.s32.totalorder %s27, 0
      %p412 = por %p410, %p411
      %p413 = scmp.ne.s32.totalorder %s402, %s405
      %p414 = scmp.eq.s32.totalorder %s32, 19
      %p415 = por %p413, %p414
      %p416 = scmp.ne.s32.totalorder %s405, %s406
      %p417 = scmp.eq.s32.totalorder %s32, 0
      %p418 = por %p416, %p417
      %p419 = scmp.ne.s32.totalorder %s405, %s406
      %p420 = scmp.eq.s32.totalorder %s33, 19
      %p421 = por %p419, %p420
      %p423 = scmp.ne.s32.totalorder %s406, %s422
      %p424 = scmp.eq.s32.totalorder %s33, 0
      %p425 = por %p423, %p424
      %s426 = ssub.s32 %s34, %s53
      %s427 = ssub.s32 %s35, %s49
      %s428 = sor.u32 %s426, %s427
      %p429 = scmp.eq.s32.totalorder %s428, 0
      %s431 = sadd.s32 %s430, 1
      %s432 = scalar_select %p429, %s430, %s431
      %p435 = pneg %p429
      %p436 = scmp.eq.s32.totalorder %s27, 19
      %p437 = por %p435, %p436
      %p438 = scmp.ne.s32.totalorder %s430, %s433
      %p439 = scmp.eq.s32.totalorder %s27, 0
      %p440 = por %p438, %p439
      %p441 = scmp.ne.s32.totalorder %s430, %s433
      %p442 = scmp.eq.s32.totalorder %s32, 19
      %p443 = por %p441, %p442
      %p444 = scmp.ne.s32.totalorder %s433, %s434
      %p445 = scmp.eq.s32.totalorder %s32, 0
      %p446 = por %p444, %p445
      %p447 = scmp.ne.s32.totalorder %s433, %s434
      %p448 = scmp.eq.s32.totalorder %s33, 19
      %p449 = por %p447, %p448
      %p451 = scmp.ne.s32.totalorder %s434, %s450
      %p452 = scmp.eq.s32.totalorder %s33, 0
      %p453 = por %p451, %p452
      %p454 = scmp.le.s32.totalorder 1, %s27
      %p455 = scmp.lt.s32.totalorder %s27, 21
      %p456 = pnand %p454, %p455
      %p457 = pneg %p456
      // Predicated region
      $region9: #{seframe_forward.2} parent=5 // pred_check
        _
      $region10: #{seframe_forward.2} parent=5 // pred_check_branch
        %459 = sbr.rel (%p456) target = $region12
      $region11: #{seframe_forward.2} parent=5 // pred_region
        %s460 = ssub.s32 %s27, 1
      $region12: #{seframe_forward.2} parent=5 // pred_fallthru
        _
      %p461 = scmp.lt.s32.totalorder %s27, 20
      // Predicated region
      $region13: #{seframe_forward.2} parent=5 // pred_check
        %p462 = pneg %p461
      $region14: #{seframe_forward.2} parent=5 // pred_check_branch
        %464 = sbr.rel (%p462) target = $region16
      $region15: #{seframe_forward.2} parent=5 // pred_region
        // Predicated region
        $region17: #{seframe_forward.2} parent=15 // pred_check
          %p465 = pneg %p68
        $region18: #{seframe_forward.2} parent=15 // pred_check_branch
          %467 = sbr.rel (%p465) target = $region20
        $region19: #{seframe_forward.2} parent=15 // pred_region
          %s468 = smul.u32 16, %s36
          %p469 = scmp.lt.s32.totalorder %s34, 1
          %s470 = scalar_select %p469, %s34, 1
          %p471 = scmp.lt.s32.totalorder %s468, 31
          %s472 = scalar_select %p471, %s468, 31
          %s473 = smul.addr %s470, 32
          %s474 = sadd.s32 %s472, %s473
          %s475 = smul.addr %s474, 4
          %s476 = scalar_lea.vmem %s1, %s475
          %s477 = smul.u32 16, %s36
        $region20: #{seframe_forward.2} parent=15 // pred_fallthru
          _
        // Predicated region
        $region21: #{seframe_forward.2} parent=15 // pred_check
          %p478 = pneg %p96
        $region22: #{seframe_forward.2} parent=15 // pred_check_branch
          %480 = sbr.rel (%p478) target = $region24
        $region23: #{seframe_forward.2} parent=15 // pred_region
          %s481 = smul.u32 4, %s35
          %p482 = scmp.lt.s32.totalorder %s34, 1
          %s483 = scalar_select %p482, %s34, 1
          %p484 = scmp.lt.s32.totalorder %s481, 19
          %s485 = scalar_select %p484, %s481, 19
          %s486 = smul.addr %s483, 20
          %s487 = sadd.s32 %s485, %s486
          %s488 = smul.addr %s487, 8
          %s489 = scalar_lea.vmem %s2, %s488
          %s490 = smul.u32 4, %s35
        $region24: #{seframe_forward.2} parent=15 // pred_fallthru
          _
        // Predicated region
        $region25: #{seframe_forward.2} parent=15 // pred_check
          %p491 = pneg %p126
        $region26: #{seframe_forward.2} parent=15 // pred_check_branch
          %493 = sbr.rel (%p491) target = $region28
        $region27: #{seframe_forward.2} parent=15 // pred_region
          %s494 = sand.u32 %s116, 1
          %s495 = sand.u32 %s116, 1
          %s496 = smul.addr %s495, 32
          %s497 = scalar_lea.vmem [#allocation8], %s496
          %s498 = smul.u32 4, %s35
          %s499 = smul.addr %s498, 2
          %s500 = sadd.s32 %s36, %s499
          %s501 = smul.addr %s34, 40
          %s502 = sadd.s32 %s500, %s501
          %s503 = smul.addr %s502, 8
          %s504 = scalar_lea.vmem %s3, %s503
          // Predicated region
          $region29: #{seframe_forward.2} parent=27 // pred_check
            _
          $region30: #{seframe_forward.2} parent=27 // pred_check_branch
            %506 = sbr.rel (0) target = $region32
          $region31: #{seframe_forward.2} parent=27 // pred_region
            // Predicated region
            $region33: #{seframe_forward.2} parent=31 // pred_check
              _
            $region34: #{seframe_forward.2} parent=31 // pred_check_branch
              %508 = sbr.rel (0) target = $region36
            $region35: #{seframe_forward.2} parent=31 // pred_region
              // Predicated region
              $region48: #{seframe_forward.2} parent=35 // pred_check
                _
              $region49: #{seframe_forward.2} parent=35 // pred_check_branch
                %530 = sbr.rel (0) target = $region51
              $region50: #{seframe_forward.2} parent=35 // pred_region
                loop: start=0, step=1, limit=1
                $region52: #{seframe_forward.2} parent=50 // loop_pre_header
                  _
                $region53: #{seframe_forward.2} parent=50 // loop_header
                  %s532 = sphi 0, %s536
                  %p533 = scmp.ge.s32.totalorder %s532, 1
                  %s537 = sphi %s504, %s504
                  %s538 = sphi %s497, %s497
                $region54: #{seframe_forward.2} parent=50 // loop_header_branch
                  %535 = sbr.rel (%p533) target = $region58
                $region55: #{seframe_forward.2} parent=50 // loop_body
                  %v539 = vld [vmem:[%s537] sm:$0xff]
                  %540 = vst [vmem:[%s538] sm:$0xff] %v539
                  %v541 = vld [vmem:[%s537 + $0x10] sm:$0xff]
                  %542 = vst [vmem:[%s538 + $0x8] sm:$0xff] %v541
                  %v543 = vld [vmem:[%s537 + $0x20] sm:$0xff]
                  %544 = vst [vmem:[%s538 + $0x10] sm:$0xff] %v543
                  %v545 = vld [vmem:[%s537 + $0x30] sm:$0xff]
                  %546 = vst [vmem:[%s538 + $0x18] sm:$0xff] %v545
                $region56: #{seframe_forward.2} parent=50 // loop_footer
                  %s536 = sadd.s32 1, %s532
                $region57: #{seframe_forward.2} parent=50 // loop_footer_branch
                  %531 = sbr.rel target = $region53
                $region58: #{seframe_forward.2} parent=50 // loop_exit
                  _
              $region51: #{seframe_forward.2} parent=35 // pred_fallthru
                _
              // Predicated region
              $region59: #{seframe_forward.2} parent=35 // pred_check
                _
              $region60: #{seframe_forward.2} parent=35 // pred_check_branch
                %548 = sbr.rel target = $region62
              $region61: #{seframe_forward.2} parent=35 // pred_region
                _
              $region62: #{seframe_forward.2} parent=35 // pred_fallthru
                _
            $region36: #{seframe_forward.2} parent=31 // pred_fallthru
              _
            // Predicated region
            $region37: #{seframe_forward.2} parent=31 // pred_check
              _
            $region38: #{seframe_forward.2} parent=31 // pred_check_branch
              %510 = sbr.rel target = $region40
            $region39: #{seframe_forward.2} parent=31 // pred_region
              %s512 = ssub.s32 256, 1
              loop: start=0, step=1, limit=1
              $region41: #{seframe_forward.2} parent=39 // loop_pre_header
                _
              $region42: #{seframe_forward.2} parent=39 // loop_header
                %s514 = sphi 0, %s518
                %p515 = scmp.ge.s32.totalorder %s514, 1
                %s519 = sphi %s504, %s504
                %s520 = sphi %s497, %s497
              $region43: #{seframe_forward.2} parent=39 // loop_header_branch
                %517 = sbr.rel (%p515) target = $region47
              $region44: #{seframe_forward.2} parent=39 // loop_body
                %v521 = vld [vmem:[%s519] sm:%s512]
                %522 = vst [vmem:[%s520] sm:%s512] %v521
                %v523 = vld [vmem:[%s519 + $0x10] sm:%s512]
                %524 = vst [vmem:[%s520 + $0x8] sm:%s512] %v523
                %v525 = vld [vmem:[%s519 + $0x20] sm:%s512]
                %526 = vst [vmem:[%s520 + $0x10] sm:%s512] %v525
                %v527 = vld [vmem:[%s519 + $0x30] sm:%s512]
                %528 = vst [vmem:[%s520 + $0x18] sm:%s512] %v527
              $region45: #{seframe_forward.2} parent=39 // loop_footer
                %s518 = sadd.s32 1, %s514
              $region46: #{seframe_forward.2} parent=39 // loop_footer_branch
                %513 = sbr.rel target = $region42
              $region47: #{seframe_forward.2} parent=39 // loop_exit
                _
            $region40: #{seframe_forward.2} parent=31 // pred_fallthru
              _
          $region32: #{seframe_forward.2} parent=27 // pred_fallthru
            _
          %549 = vnop
        $region28: #{seframe_forward.2} parent=15 // pred_fallthru
          _
        // Predicated region
        $region63: #{seframe_forward.2} parent=15 // pred_check
          %p550 = pneg %p152
        $region64: #{seframe_forward.2} parent=15 // pred_check_branch
          %552 = sbr.rel (%p550) target = $region66
        $region65: #{seframe_forward.2} parent=15 // pred_region
          %p553 = scmp.lt.s32.totalorder %s34, 1
          %s554 = scalar_select %p553, %s34, 1
          %s555 = scalar_lea.vmem %s4, %s554
        $region66: #{seframe_forward.2} parent=15 // pred_fallthru
          _
        // Predicated region
        $region67: #{seframe_forward.2} parent=15 // pred_check
          %p556 = pneg %p178
        $region68: #{seframe_forward.2} parent=15 // pred_check_branch
          %558 = sbr.rel (%p556) target = $region70
        $region69: #{seframe_forward.2} parent=15 // pred_region
          %p559 = scmp.lt.s32.totalorder %s34, 1
          %s560 = scalar_select %p559, %s34, 1
          %s561 = scalar_lea.vmem %s5, %s560
        $region70: #{seframe_forward.2} parent=15 // pred_fallthru
          _
        // Predicated region
        $region71: #{seframe_forward.2} parent=15 // pred_check
          %p562 = pneg %p204
        $region72: #{seframe_forward.2} parent=15 // pred_check_branch
          %564 = sbr.rel (%p562) target = $region74
        $region73: #{seframe_forward.2} parent=15 // pred_region
          %p565 = scmp.lt.s32.totalorder %s34, 1
          %s566 = scalar_select %p565, %s34, 1
          %s567 = scalar_lea.vmem %s6, %s566
        $region74: #{seframe_forward.2} parent=15 // pred_fallthru
          _
        // Predicated region
        $region75: #{seframe_forward.2} parent=15 // pred_check
          %p568 = pneg %p230
        $region76: #{seframe_forward.2} parent=15 // pred_check_branch
          %570 = sbr.rel (%p568) target = $region78
        $region77: #{seframe_forward.2} parent=15 // pred_region
          %p571 = scmp.lt.s32.totalorder %s34, 1
          %s572 = scalar_select %p571, %s34, 1
          %s573 = scalar_lea.vmem %s7, %s572
        $region78: #{seframe_forward.2} parent=15 // pred_fallthru
          _
        // Predicated region
        $region79: #{seframe_forward.2} parent=15 // pred_check
          %p574 = pneg %p256
        $region80: #{seframe_forward.2} parent=15 // pred_check_branch
          %576 = sbr.rel (%p574) target = $region82
        $region81: #{seframe_forward.2} parent=15 // pred_region
          %p577 = scmp.lt.s32.totalorder %s34, 1
          %s578 = scalar_select %p577, %s34, 1
          %s579 = smul.addr %s578, 32
          %s580 = smul.addr %s579, 4
          %s581 = scalar_lea.vmem %s8, %s580
        $region82: #{seframe_forward.2} parent=15 // pred_fallthru
          _
        // Predicated region
        $region83: #{seframe_forward.2} parent=15 // pred_check
          %p582 = pneg %p282
        $region84: #{seframe_forward.2} parent=15 // pred_check_branch
          %584 = sbr.rel (%p582) target = $region86
        $region85: #{seframe_forward.2} parent=15 // pred_region
          %p585 = scmp.lt.s32.totalorder %s34, 1
          %s586 = scalar_select %p585, %s34, 1
          %s587 = scalar_lea.vmem %s9, %s586
        $region86: #{seframe_forward.2} parent=15 // pred_fallthru
          _
        // Predicated region
        $region87: #{seframe_forward.2} parent=15 // pred_check
          %p588 = pneg %p308
        $region88: #{seframe_forward.2} parent=15 // pred_check_branch
          %590 = sbr.rel (%p588) target = $region90
        $region89: #{seframe_forward.2} parent=15 // pred_region
          %p591 = scmp.lt.s32.totalorder %s34, 1
          %s592 = scalar_select %p591, %s34, 1
          %s593 = smul.addr %s592, 16
          %s594 = smul.addr %s593, 4
          %s595 = scalar_lea.vmem %s10, %s594
        $region90: #{seframe_forward.2} parent=15 // pred_fallthru
          _
        // Predicated region
        $region91: #{seframe_forward.2} parent=15 // pred_check
          %p596 = pneg %p334
        $region92: #{seframe_forward.2} parent=15 // pred_check_branch
          %598 = sbr.rel (%p596) target = $region94
        $region93: #{seframe_forward.2} parent=15 // pred_region
          %p599 = scmp.lt.s32.totalorder %s34, 1
          %s600 = scalar_select %p599, %s34, 1
          %s601 = scalar_lea.vmem %s11, %s600
        $region94: #{seframe_forward.2} parent=15 // pred_fallthru
          _
        // Predicated region
        $region95: #{seframe_forward.2} parent=15 // pred_check
          %p602 = pneg %p360
        $region96: #{seframe_forward.2} parent=15 // pred_check_branch
          %604 = sbr.rel (%p602) target = $region98
        $region97: #{seframe_forward.2} parent=15 // pred_region
          %p605 = scmp.lt.s32.totalorder %s34, 1
          %s606 = scalar_select %p605, %s34, 1
          %s607 = smul.addr %s606, 32
          %s608 = smul.addr %s607, 4
          %s609 = scalar_lea.vmem %s12, %s608
        $region98: #{seframe_forward.2} parent=15 // pred_fallthru
          _
        // Predicated region
        $region99: #{seframe_forward.2} parent=15 // pred_check
          %p610 = pneg %p386
        $region100: #{seframe_forward.2} parent=15 // pred_check_branch
          %612 = sbr.rel (%p610) target = $region102
        $region101: #{seframe_forward.2} parent=15 // pred_region
          %p613 = scmp.lt.s32.totalorder %s34, 1
          %s614 = scalar_select %p613, %s34, 1
          %s615 = scalar_lea.vmem %s13, %s614
        $region102: #{seframe_forward.2} parent=15 // pred_fallthru
          _
        // Predicated region
        $region103: #{seframe_forward.2} parent=15 // pred_check
          %p616 = pneg %p412
        $region104: #{seframe_forward.2} parent=15 // pred_check_branch
          %618 = sbr.rel (%p616) target = $region106
        $region105: #{seframe_forward.2} parent=15 // pred_region
          %p619 = scmp.lt.s32.totalorder %s34, 1
          %s620 = scalar_select %p619, %s34, 1
          %s621 = scalar_lea.vmem %s14, %s620
        $region106: #{seframe_forward.2} parent=15 // pred_fallthru
          _
      $region16: #{seframe_forward.2} parent=5 // pred_fallthru
        _
      %p622 = scmp.le.s32.totalorder 1, %s27
      %p623 = scmp.lt.s32.totalorder %s27, 21
      %p624 = pnand %p622, %p623
      %p625 = pneg %p624
      // Predicated region
      $region107: #{seframe_forward.2} parent=5 // pred_check
        _
      $region108: #{seframe_forward.2} parent=5 // pred_check_branch
        %627 = sbr.rel (%p624) target = $region110
      $region109: #{seframe_forward.2} parent=5 // pred_region
        %s628 = ssub.s32 %s27, 1
        %s629 = sand.u32 %s119, 1
        %s630 = sand.u32 %s119, 1
        %s631 = smul.addr %s630, 32
        %s632 = scalar_lea.vmem [#allocation8], %s631
        // Predicated region
        $region111: #{seframe_forward.2} parent=109 // pred_check
          %p633 = pneg %p132
        $region112: #{seframe_forward.2} parent=109 // pred_check_branch
          %635 = sbr.rel (%p633) target = $region114
        $region113: #{seframe_forward.2} parent=109 // pred_region
          _
        $region114: #{seframe_forward.2} parent=109 // pred_fallthru
          _
        %s636 = smul.u32 16, %s39
        %p637 = scmp.lt.s32.totalorder %s37, 1
        %s638 = scalar_select %p637, %s37, 1
        %p639 = scmp.lt.s32.totalorder %s636, 31
        %s640 = scalar_select %p639, %s636, 31
        %s641 = smul.addr %s638, 32
        %s642 = sadd.s32 %s640, %s641
        %s643 = smul.addr %s642, 4
        %s644 = scalar_lea.vmem %s1, %s643
        %p645 = pneg %p74
        %p646 = pneg %p71
        %s647 = smul.u32 4, %s38
        %p648 = scmp.lt.s32.totalorder %s37, 1
        %s649 = scalar_select %p648, %s37, 1
        %p650 = scmp.lt.s32.totalorder %s647, 19
        %s651 = scalar_select %p650, %s647, 19
        %s652 = smul.addr %s649, 20
        %s653 = sadd.s32 %s651, %s652
        %s654 = smul.addr %s653, 8
        %s655 = scalar_lea.vmem %s2, %s654
        %p656 = pneg %p102
        %p657 = pneg %p99
        %s658 = sand.u32 %s119, 1
        %s659 = sand.u32 %s119, 1
        %s660 = smul.addr %s659, 32
        %s661 = scalar_lea.vmem [#allocation8], %s660
        %p662 = pneg %p132
        %p663 = pneg %p129
        %p664 = scmp.lt.s32.totalorder %s37, 1
        %s665 = scalar_select %p664, %s37, 1
        %s666 = scalar_lea.vmem %s4, %s665
        %p667 = pneg %p158
        %p668 = pneg %p155
        %p669 = scmp.lt.s32.totalorder %s37, 1
        %s670 = scalar_select %p669, %s37, 1
        %s671 = scalar_lea.vmem %s5, %s670
        %p672 = pneg %p184
        %p673 = pneg %p181
        %p674 = scmp.lt.s32.totalorder %s37, 1
        %s675 = scalar_select %p674, %s37, 1
        %s676 = scalar_lea.vmem %s6, %s675
        %p677 = pneg %p210
        %p678 = pneg %p207
        %p679 = scmp.lt.s32.totalorder %s37, 1
        %s680 = scalar_select %p679, %s37, 1
        %s681 = scalar_lea.vmem %s7, %s680
        %p682 = pneg %p236
        %p683 = pneg %p233
        %p684 = scmp.lt.s32.totalorder %s37, 1
        %s685 = scalar_select %p684, %s37, 1
        %s686 = smul.addr %s685, 32
        %s687 = smul.addr %s686, 4
        %s688 = scalar_lea.vmem %s8, %s687
        %p689 = pneg %p262
        %p690 = pneg %p259
        %p691 = scmp.lt.s32.totalorder %s37, 1
        %s692 = scalar_select %p691, %s37, 1
        %s693 = scalar_lea.vmem %s9, %s692
        %p694 = pneg %p288
        %p695 = pneg %p285
        %p696 = scmp.lt.s32.totalorder %s37, 1
        %s697 = scalar_select %p696, %s37, 1
        %s698 = smul.addr %s697, 16
        %s699 = smul.addr %s698, 4
        %s700 = scalar_lea.vmem %s10, %s699
        %p701 = pneg %p314
        %p702 = pneg %p311
        %p703 = scmp.lt.s32.totalorder %s37, 1
        %s704 = scalar_select %p703, %s37, 1
        %s705 = scalar_lea.vmem %s11, %s704
        %p706 = pneg %p340
        %p707 = pneg %p337
        %p708 = scmp.lt.s32.totalorder %s37, 1
        %s709 = scalar_select %p708, %s37, 1
        %s710 = smul.addr %s709, 32
        %s711 = smul.addr %s710, 4
        %s712 = scalar_lea.vmem %s12, %s711
        %p713 = pneg %p366
        %p714 = pneg %p363
        %p715 = scmp.lt.s32.totalorder %s37, 1
        %s716 = scalar_select %p715, %s37, 1
        %s717 = scalar_lea.vmem %s13, %s716
        %p718 = pneg %p392
        %p719 = pneg %p389
        %p720 = scmp.lt.s32.totalorder %s37, 1
        %s721 = scalar_select %p720, %s37, 1
        %s722 = scalar_lea.vmem %s14, %s721
        %p723 = pneg %p418
        %p724 = pneg %p415
        %p725 = pneg %p446
        %p726 = pneg %p443
        %s727 = smul.u32 4, %s38
        %p728 = scmp.lt.s32.totalorder %s37, 1
        %s729 = scalar_select %p728, %s37, 1
        %p730 = scmp.lt.s32.totalorder %s727, 19
        %s731 = scalar_select %p730, %s727, 19
        %s732 = smul.addr %s729, 20
        %s733 = sadd.s32 %s731, %s732
        %s734 = smul.addr %s733, 8
        %s735 = scalar_lea.vmem %s15, %s734
        %s736 = smul.u32 16, %s39
        %p737 = scmp.lt.s32.totalorder %s37, 1
        %s738 = scalar_select %p737, %s37, 1
        %p739 = scmp.lt.s32.totalorder %s736, 31
        %s740 = scalar_select %p739, %s736, 31
        %s741 = smul.addr %s738, 32
        %s742 = sadd.s32 %s740, %s741
        %s743 = smul.addr %s742, 4
        %s744 = scalar_lea.vmem %s1, %s743
        %s745 = smul.u32 16, %s39
        %s746 = smul.u32 4, %s38
        %p747 = scmp.lt.s32.totalorder %s37, 1
        %s748 = scalar_select %p747, %s37, 1
        %p749 = scmp.lt.s32.totalorder %s746, 19
        %s750 = scalar_select %p749, %s746, 19
        %s751 = smul.addr %s748, 20
        %s752 = sadd.s32 %s750, %s751
        %s753 = smul.addr %s752, 8
        %s754 = scalar_lea.vmem %s2, %s753
        %s755 = smul.u32 4, %s38
        %s756 = smul.u32 4, %s38
        %p757 = scmp.lt.s32.totalorder %s37, 1
        %s758 = scalar_select %p757, %s37, 1
        %s759 = scalar_lea.vmem %s4, %s758
        %p760 = scmp.lt.s32.totalorder %s37, 1
        %s761 = scalar_select %p760, %s37, 1
        %s762 = scalar_lea.vmem %s5, %s761
        %p763 = scmp.lt.s32.totalorder %s37, 1
        %s764 = scalar_select %p763, %s37, 1
        %s765 = scalar_lea.vmem %s6, %s764
        %p766 = scmp.lt.s32.totalorder %s37, 1
        %s767 = scalar_select %p766, %s37, 1
        %s768 = scalar_lea.vmem %s7, %s767
        %p769 = scmp.lt.s32.totalorder %s37, 1
        %s770 = scalar_select %p769, %s37, 1
        %s771 = smul.addr %s770, 32
        %s772 = smul.addr %s771, 4
        %s773 = scalar_lea.vmem %s8, %s772
        %p774 = scmp.lt.s32.totalorder %s37, 1
        %s775 = scalar_select %p774, %s37, 1
        %s776 = scalar_lea.vmem %s9, %s775
        %p777 = scmp.lt.s32.totalorder %s37, 1
        %s778 = scalar_select %p777, %s37, 1
        %s779 = smul.addr %s778, 16
        %s780 = smul.addr %s779, 4
        %s781 = scalar_lea.vmem %s10, %s780
        %p782 = scmp.lt.s32.totalorder %s37, 1
        %s783 = scalar_select %p782, %s37, 1
        %s784 = scalar_lea.vmem %s11, %s783
        %p785 = scmp.lt.s32.totalorder %s37, 1
        %s786 = scalar_select %p785, %s37, 1
        %s787 = smul.addr %s786, 32
        %s788 = smul.addr %s787, 4
        %s789 = scalar_lea.vmem %s12, %s788
        %p790 = scmp.lt.s32.totalorder %s37, 1
        %s791 = scalar_select %p790, %s37, 1
        %s792 = scalar_lea.vmem %s13, %s791
        %p793 = scmp.lt.s32.totalorder %s37, 1
        %s794 = scalar_select %p793, %s37, 1
        %s795 = scalar_lea.vmem %s14, %s794
        %s796 = smul.u32 4, %s38
        %p797 = scmp.lt.s32.totalorder %s37, 1
        %s798 = scalar_select %p797, %s37, 1
        %p799 = scmp.lt.s32.totalorder %s796, 19
        %s800 = scalar_select %p799, %s796, 19
        %s801 = smul.addr %s798, 20
        %s802 = sadd.s32 %s800, %s801
        %s803 = smul.addr %s802, 8
        %s804 = scalar_lea.vmem %s15, %s803
        %s805 = smul.u32 4, %s38
        %p807 = scmp.eq.s32.totalorder %s39, 0
        // Predicated region
        $region115: #{seframe_forward.2} parent=109 // pred_check
          %p808 = pneg %p807
        $region116: #{seframe_forward.2} parent=109 // pred_check_branch
          %810 = sbr.rel (%p808) target = $region118
        $region117: #{seframe_forward.2} parent=109 // pred_region
          %v811 = vld [vmem:[%s754] sm:$0xff]
          %v812 = vld [vmem:[%s754 + $0x8] sm:$0xff]
          %v813 = vld [vmem:[%s754 + $0x10] sm:$0xff]
          %v814 = vld [vmem:[%s754 + $0x18] sm:$0xff]
          %v815 = vld [vmem:[%s765] sm:$0x1]
          %v817 = vlaneseq
          %v818 = vshrl.u32 %v817, 7
          %v819 = vsub.s32 0, %v818
          %v820 = vrot.slane %v815, %v819
          %v822 = vmul.f32 %v811, %v820
          %v823 = vmul.f32 %v812, %v820
          %v824 = vmul.f32 %v813, %v820
          %v825 = vmul.f32 %v814, %v820
          %v826 = vld [vmem:[%s768] sm:$0x1]
          %v828 = vlaneseq
          %v829 = vshrl.u32 %v828, 7
          %v830 = vsub.s32 0, %v829
          %v831 = vrot.slane %v826, %v830
          %v833 = vadd.f32 %v822, %v831
          %v834 = vadd.f32 %v823, %v831
          %v835 = vadd.f32 %v824, %v831
          %v836 = vadd.f32 %v825, %v831
          %v837 = vpack.c.bf16 %v834, %v833
          %v838 = vpack.c.bf16 %v836, %v835
          %v839 = vld [vmem:[%s781] sm:$0xf]
          %v840 = vld [vmem:[%s781 + $0x4] sm:$0xf]
          %v841 = vld [vmem:[%s781 + $0x8] sm:$0xf]
          %v842 = vld [vmem:[%s781 + $0xc] sm:$0xf]
          %v843 = vld [vmem:[%s781 + $0x10] sm:$0xf]
          %v844 = vld [vmem:[%s781 + $0x14] sm:$0xf]
          %v845 = vld [vmem:[%s781 + $0x18] sm:$0xf]
          %v846 = vld [vmem:[%s781 + $0x1c] sm:$0xf]
          %v847 = vld [vmem:[%s781 + $0x20] sm:$0xf]
          %v848 = vld [vmem:[%s781 + $0x24] sm:$0xf]
          %v849 = vld [vmem:[%s781 + $0x28] sm:$0xf]
          %v850 = vld [vmem:[%s781 + $0x2c] sm:$0xf]
          %v851 = vld [vmem:[%s781 + $0x30] sm:$0xf]
          %v852 = vld [vmem:[%s781 + $0x34] sm:$0xf]
          %v853 = vld [vmem:[%s781 + $0x38] sm:$0xf]
          %v854 = vld [vmem:[%s781 + $0x3c] sm:$0xf]
          %v871 = vunpack.c.l.b16 %v839
          %v872 = vunpack.c.l.b16 %v840
          %v873 = vunpack.c.l.b16 %v841
          %v874 = vunpack.c.l.b16 %v842
          %v875 = vunpack.c.l.b16 %v843
          %v876 = vunpack.c.l.b16 %v844
          %v877 = vunpack.c.l.b16 %v845
          %v878 = vunpack.c.l.b16 %v846
          %v879 = vunpack.c.l.b16 %v847
          %v880 = vunpack.c.l.b16 %v848
          %v881 = vunpack.c.l.b16 %v849
          %v882 = vunpack.c.l.b16 %v850
          %v883 = vunpack.c.l.b16 %v851
          %v884 = vunpack.c.l.b16 %v852
          %v885 = vunpack.c.l.b16 %v853
          %v886 = vunpack.c.l.b16 %v854
          %v887 = vpack.c.b16 %v872, %v871
          %v888 = vpack.c.b16 %v874, %v873
          %v889 = vpack.c.b16 %v876, %v875
          %v890 = vpack.c.b16 %v878, %v877
          %v891 = vpack.c.b16 %v880, %v879
          %v892 = vpack.c.b16 %v882, %v881
          %v893 = vpack.c.b16 %v884, %v883
          %v894 = vpack.c.b16 %v886, %v885
          %903 = vmatprep.subr.bf16.mxu0 0
          %904 = vmatpush1.bf16.msra.mxu0 %v894
          %905 = vmatprep.subr.bf16.mxu0 0
          %906 = vmatpush1.bf16.msra.mxu0 %v893
          %907 = vmatprep.subr.bf16.mxu0 0
          %908 = vmatpush1.bf16.msra.mxu0 %v892
          %909 = vmatprep.subr.bf16.mxu0 0
          %910 = vmatpush1.bf16.msra.mxu0 %v891
          %911 = vmatprep.subr.bf16.mxu0 0
          %912 = vmatpush1.bf16.msra.mxu0 %v890
          %913 = vmatprep.subr.bf16.mxu0 0
          %914 = vmatpush1.bf16.msra.mxu0 %v889
          %915 = vmatprep.subr.bf16.mxu0 0
          %916 = vmatpush1.bf16.msra.mxu0 %v888
          %917 = vmatprep.subr.bf16.mxu0 0
          %918 = vmatpush1.bf16.msra.mxu0 %v887
          %919 = vmatprep.subr.bf16.mxu0 0
          %920 = vmatpush2.bf16.msra.mxu0 0
          %921 = vmatprep.subr.bf16.mxu0 0
          %922 = vmatpush2.bf16.msra.mxu0 0
          %923 = vmatprep.subr.bf16.mxu0 0
          %924 = vmatpush2.bf16.msra.mxu0 0
          %925 = vmatprep.subr.bf16.mxu0 0
          %926 = vmatpush2.bf16.msra.mxu0 0
          %927 = vmatprep.subr.bf16.mxu0 0
          %928 = vmatpush2.bf16.msra.mxu0 0
          %929 = vmatprep.subr.bf16.mxu0 0
          %930 = vmatpush2.bf16.msra.mxu0 0
          %931 = vmatprep.subr.bf16.mxu0 0
          %932 = vmatpush2.bf16.msra.mxu0 0
          %933 = vmatprep.subr.bf16.mxu0 0
          %934 = vmatpush2.bf16.msra.mxu0 0
          %935 = vmatprep.mubr.bf16.mxu0 0
          %936 = vmatmul.mubr.bf16.gmra.mxu0 %v837
          %v937 = vpop.f32.mrf.mxu0
          %v938 = vadd.f32 0.0, %v937
          %v939 = vpop.f32.mrf.mxu0
          %v940 = vpop.f32.mrf.mxu0
          %v941 = vadd.f32 0.0, %v940
          %v942 = vpop.f32.mrf.mxu0
          %943 = vmatprep.mubr.bf16.mxu0 0
          %944 = vmatmul.mubr.bf16.gmra.mxu0 %v838
          %v945 = vpop.f32.mrf.mxu0
          %v946 = vadd.f32 0.0, %v945
          %v947 = vpop.f32.mrf.mxu0
          %v948 = vpop.f32.mrf.mxu0
          %v949 = vadd.f32 0.0, %v948
          %v950 = vpop.f32.mrf.mxu0
          %951 = vdwg.mxu0
          %952 = vst [vmem:[#allocation2] sm:$0xff] %v938
          %953 = vst [vmem:[#allocation2 + $0x8] sm:$0xff] %v941
          %954 = vst [vmem:[#allocation2 + $0x10] sm:$0xff] %v946
          %955 = vst [vmem:[#allocation2 + $0x18] sm:$0xff] %v949
          %vm956 = vcmask 7168
          %957 = vst.msk [vmem:[#allocation3] sm:$0xff] %vm956, -1e+30
          %958 = vst.msk [vmem:[#allocation3 + $0x8] sm:$0xff] %vm956, -1e+30
          %959 = vst.msk [vmem:[#allocation3 + $0x10] sm:$0xff] %vm956, -1e+30
          %960 = vst.msk [vmem:[#allocation3 + $0x18] sm:$0xff] %vm956, -1e+30
          %961 = vst.msk [vmem:[#allocation4] sm:$0xff] %vm956, 0.0
          %962 = vst.msk [vmem:[#allocation4 + $0x8] sm:$0xff] %vm956, 0.0
          %963 = vst.msk [vmem:[#allocation4 + $0x10] sm:$0xff] %vm956, 0.0
          %964 = vst.msk [vmem:[#allocation4 + $0x18] sm:$0xff] %vm956, 0.0
          %965 = vst [vmem:[#allocation5] sm:$0xff] 0.0
          %966 = vst [vmem:[#allocation5 + $0x8] sm:$0xff] 0.0
          %967 = vst [vmem:[#allocation5 + $0x10] sm:$0xff] 0.0
          %968 = vst [vmem:[#allocation5 + $0x18] sm:$0xff] 0.0
        $region118: #{seframe_forward.2} parent=109 // pred_fallthru
          _
        %s969 = sshra.s32 %s39, 7
        %s970 = sand.u32 %s39, 127
        %s971 = sadd.s32 %s969, %s38
        %s972 = smul.u32 %s37, 8
        %s973 = sadd.s32 %s971, %s972
        %s974 = smul.u32 %s973, 128
        %s975 = sshra.s32 %s39, 7
        %s976 = sand.u32 %s39, 127
        %s977 = sadd.s32 %s974, %s976
        %s978 = sld [smem:[#allocation7 + %s977]]
        %p979 = scmp.gt.s32.totalorder %s978, 0
        // Predicated region
        $region119: #{seframe_forward.2} parent=109 // pred_check
          %p980 = pneg %p979
        $region120: #{seframe_forward.2} parent=109 // pred_check_branch
          %982 = sbr.rel (%p980) target = $region122
        $region121: #{seframe_forward.2} parent=109 // pred_region
          %v983 = vld [vmem:[%s744] sm:$0xf]
          %v984 = vld [vmem:[%s744 + $0x4] sm:$0xf]
          %v985 = vld [vmem:[%s744 + $0x8] sm:$0xf]
          %v986 = vld [vmem:[%s744 + $0xc] sm:$0xf]
          %v987 = vld [vmem:[%s744 + $0x10] sm:$0xf]
          %v988 = vld [vmem:[%s744 + $0x14] sm:$0xf]
          %v989 = vld [vmem:[%s744 + $0x18] sm:$0xf]
          %v990 = vld [vmem:[%s744 + $0x1c] sm:$0xf]
          %v991 = vld [vmem:[%s744 + $0x20] sm:$0xf]
          %v992 = vld [vmem:[%s744 + $0x24] sm:$0xf]
          %v993 = vld [vmem:[%s744 + $0x28] sm:$0xf]
          %v994 = vld [vmem:[%s744 + $0x2c] sm:$0xf]
          %v995 = vld [vmem:[%s744 + $0x30] sm:$0xf]
          %v996 = vld [vmem:[%s744 + $0x34] sm:$0xf]
          %v997 = vld [vmem:[%s744 + $0x38] sm:$0xf]
          %v998 = vld [vmem:[%s744 + $0x3c] sm:$0xf]
          %v999 = vunpack.c.l.bf16 %v983
          %v1000 = vunpack.c.l.bf16 %v984
          %v1001 = vunpack.c.l.bf16 %v985
          %v1002 = vunpack.c.l.bf16 %v986
          %v1003 = vunpack.c.l.bf16 %v987
          %v1004 = vunpack.c.l.bf16 %v988
          %v1005 = vunpack.c.l.bf16 %v989
          %v1006 = vunpack.c.l.bf16 %v990
          %v1007 = vunpack.c.l.bf16 %v991
          %v1008 = vunpack.c.l.bf16 %v992
          %v1009 = vunpack.c.l.bf16 %v993
          %v1010 = vunpack.c.l.bf16 %v994
          %v1011 = vunpack.c.l.bf16 %v995
          %v1012 = vunpack.c.l.bf16 %v996
          %v1013 = vunpack.c.l.bf16 %v997
          %v1014 = vunpack.c.l.bf16 %v998
          %v1015 = vld [vmem:[%s759] sm:$0x1]
          %v1017 = vlaneseq
          %v1018 = vshrl.u32 %v1017, 7
          %v1019 = vsub.s32 0, %v1018
          %v1020 = vrot.slane %v1015, %v1019
          %v1022 = vmul.f32 %v999, %v1020
          %v1023 = vmul.f32 %v1000, %v1020
          %v1024 = vmul.f32 %v1001, %v1020
          %v1025 = vmul.f32 %v1002, %v1020
          %v1026 = vmul.f32 %v1003, %v1020
          %v1027 = vmul.f32 %v1004, %v1020
          %v1028 = vmul.f32 %v1005, %v1020
          %v1029 = vmul.f32 %v1006, %v1020
          %v1030 = vmul.f32 %v1007, %v1020
          %v1031 = vmul.f32 %v1008, %v1020
          %v1032 = vmul.f32 %v1009, %v1020
          %v1033 = vmul.f32 %v1010, %v1020
          %v1034 = vmul.f32 %v1011, %v1020
          %v1035 = vmul.f32 %v1012, %v1020
          %v1036 = vmul.f32 %v1013, %v1020
          %v1037 = vmul.f32 %v1014, %v1020
          %v1038 = vld [vmem:[%s762] sm:$0x1]
          %v1040 = vlaneseq
          %v1041 = vshrl.u32 %v1040, 7
          %v1042 = vsub.s32 0, %v1041
          %v1043 = vrot.slane %v1038, %v1042
          %v1045 = vadd.f32 %v1022, %v1043
          %v1046 = vadd.f32 %v1023, %v1043
          %v1047 = vadd.f32 %v1024, %v1043
          %v1048 = vadd.f32 %v1025, %v1043
          %v1049 = vadd.f32 %v1026, %v1043
          %v1050 = vadd.f32 %v1027, %v1043
          %v1051 = vadd.f32 %v1028, %v1043
          %v1052 = vadd.f32 %v1029, %v1043
          %v1053 = vadd.f32 %v1030, %v1043
          %v1054 = vadd.f32 %v1031, %v1043
          %v1055 = vadd.f32 %v1032, %v1043
          %v1056 = vadd.f32 %v1033, %v1043
          %v1057 = vadd.f32 %v1034, %v1043
          %v1058 = vadd.f32 %v1035, %v1043
          %v1059 = vadd.f32 %v1036, %v1043
          %v1060 = vadd.f32 %v1037, %v1043
          %v1061 = vpack.c.bf16 %v1046, %v1045
          %v1062 = vpack.c.bf16 %v1048, %v1047
          %v1063 = vpack.c.bf16 %v1050, %v1049
          %v1064 = vpack.c.bf16 %v1052, %v1051
          %v1065 = vpack.c.bf16 %v1054, %v1053
          %v1066 = vpack.c.bf16 %v1056, %v1055
          %v1067 = vpack.c.bf16 %v1058, %v1057
          %v1068 = vpack.c.bf16 %v1060, %v1059
          %v1069 = vld [vmem:[%s773] sm:$0xff]
          %v1070 = vld [vmem:[%s773 + $0x8] sm:$0xff]
          %v1071 = vld [vmem:[%s773 + $0x10] sm:$0xff]
          %v1072 = vld [vmem:[%s773 + $0x18] sm:$0xff]
          %v1073 = vld [vmem:[%s773 + $0x20] sm:$0xff]
          %v1074 = vld [vmem:[%s773 + $0x28] sm:$0xff]
          %v1075 = vld [vmem:[%s773 + $0x30] sm:$0xff]
          %v1076 = vld [vmem:[%s773 + $0x38] sm:$0xff]
          %v1077 = vld [vmem:[%s773 + $0x40] sm:$0xff]
          %v1078 = vld [vmem:[%s773 + $0x48] sm:$0xff]
          %v1079 = vld [vmem:[%s773 + $0x50] sm:$0xff]
          %v1080 = vld [vmem:[%s773 + $0x58] sm:$0xff]
          %v1081 = vld [vmem:[%s773 + $0x60] sm:$0xff]
          %v1082 = vld [vmem:[%s773 + $0x68] sm:$0xff]
          %v1083 = vld [vmem:[%s773 + $0x70] sm:$0xff]
          %v1084 = vld [vmem:[%s773 + $0x78] sm:$0xff]
          %v1101 = vunpack.c.l.b16 %v1069
          %v1102 = vunpack.c.h.b16 %v1069
          %v1103 = vunpack.c.l.b16 %v1070
          %v1104 = vunpack.c.h.b16 %v1070
          %v1105 = vunpack.c.l.b16 %v1071
          %v1106 = vunpack.c.h.b16 %v1071
          %v1107 = vunpack.c.l.b16 %v1072
          %v1108 = vunpack.c.h.b16 %v1072
          %v1109 = vunpack.c.l.b16 %v1073
          %v1110 = vunpack.c.h.b16 %v1073
          %v1111 = vunpack.c.l.b16 %v1074
          %v1112 = vunpack.c.h.b16 %v1074
          %v1113 = vunpack.c.l.b16 %v1075
          %v1114 = vunpack.c.h.b16 %v1075
          %v1115 = vunpack.c.l.b16 %v1076
          %v1116 = vunpack.c.h.b16 %v1076
          %v1117 = vunpack.c.l.b16 %v1077
          %v1118 = vunpack.c.h.b16 %v1077
          %v1119 = vunpack.c.l.b16 %v1078
          %v1120 = vunpack.c.h.b16 %v1078
          %v1121 = vunpack.c.l.b16 %v1079
          %v1122 = vunpack.c.h.b16 %v1079
          %v1123 = vunpack.c.l.b16 %v1080
          %v1124 = vunpack.c.h.b16 %v1080
          %v1125 = vunpack.c.l.b16 %v1081
          %v1126 = vunpack.c.h.b16 %v1081
          %v1127 = vunpack.c.l.b16 %v1082
          %v1128 = vunpack.c.h.b16 %v1082
          %v1129 = vunpack.c.l.b16 %v1083
          %v1130 = vunpack.c.h.b16 %v1083
          %v1131 = vunpack.c.l.b16 %v1084
          %v1132 = vunpack.c.h.b16 %v1084
          %v1133 = vpack.c.b16 %v1103, %v1101
          %v1134 = vpack.c.b16 %v1104, %v1102
          %v1135 = vpack.c.b16 %v1107, %v1105
          %v1136 = vpack.c.b16 %v1108, %v1106
          %v1137 = vpack.c.b16 %v1111, %v1109
          %v1138 = vpack.c.b16 %v1112, %v1110
          %v1139 = vpack.c.b16 %v1115, %v1113
          %v1140 = vpack.c.b16 %v1116, %v1114
          %v1141 = vpack.c.b16 %v1119, %v1117
          %v1142 = vpack.c.b16 %v1120, %v1118
          %v1143 = vpack.c.b16 %v1123, %v1121
          %v1144 = vpack.c.b16 %v1124, %v1122
          %v1145 = vpack.c.b16 %v1127, %v1125
          %v1146 = vpack.c.b16 %v1128, %v1126
          %v1147 = vpack.c.b16 %v1131, %v1129
          %v1148 = vpack.c.b16 %v1132, %v1130
          %1165 = vmatprep.subr.bf16.mxu0 %v1148
          %1166 = vmatpush1.bf16.msra.mxu0 %v1147
          %1167 = vmatprep.subr.bf16.mxu0 %v1146
          %1168 = vmatpush1.bf16.msra.mxu0 %v1145
          %1169 = vmatprep.subr.bf16.mxu0 %v1144
          %1170 = vmatpush1.bf16.msra.mxu0 %v1143
          %1171 = vmatprep.subr.bf16.mxu0 %v1142
          %1172 = vmatpush1.bf16.msra.mxu0 %v1141
          %1173 = vmatprep.subr.bf16.mxu0 %v1140
          %1174 = vmatpush1.bf16.msra.mxu0 %v1139
          %1175 = vmatprep.subr.bf16.mxu0 %v1138
          %1176 = vmatpush1.bf16.msra.mxu0 %v1137
          %1177 = vmatprep.subr.bf16.mxu0 %v1136
          %1178 = vmatpush1.bf16.msra.mxu0 %v1135
          %1179 = vmatprep.subr.bf16.mxu0 %v1134
          %1180 = vmatpush1.bf16.msra.mxu0 %v1133
          %1181 = vmatprep.subr.bf16.mxu0 0
          %1182 = vmatpush2.bf16.msra.mxu0 0
          %1183 = vmatprep.subr.bf16.mxu0 0
          %1184 = vmatpush2.bf16.msra.mxu0 0
          %1185 = vmatprep.subr.bf16.mxu0 0
          %1186 = vmatpush2.bf16.msra.mxu0 0
          %1187 = vmatprep.subr.bf16.mxu0 0
          %1188 = vmatpush2.bf16.msra.mxu0 0
          %1189 = vmatprep.subr.bf16.mxu0 0
          %1190 = vmatpush2.bf16.msra.mxu0 0
          %1191 = vmatprep.subr.bf16.mxu0 0
          %1192 = vmatpush2.bf16.msra.mxu0 0
          %1193 = vmatprep.subr.bf16.mxu0 0
          %1194 = vmatpush2.bf16.msra.mxu0 0
          %1195 = vmatprep.subr.bf16.mxu0 0
          %1196 = vmatpush2.bf16.msra.mxu0 0
          %1197 = vmatprep.mubr.bf16.mxu0 0
          %1198 = vmatmul.mubr.bf16.gmra.mxu0 %v1061
          %v1199 = vpop.f32.mrf.mxu0
          %v1200 = vadd.f32 0.0, %v1199
          %v1201 = vpop.f32.mrf.mxu0
          %v1202 = vadd.f32 0.0, %v1201
          %v1203 = vpop.f32.mrf.mxu0
          %v1204 = vadd.f32 0.0, %v1203
          %v1205 = vpop.f32.mrf.mxu0
          %v1206 = vadd.f32 0.0, %v1205
          %1207 = vmatprep.mubr.bf16.mxu0 0
          %1208 = vmatmul.mubr.bf16.gmra.mxu0 %v1062
          %v1209 = vpop.f32.mrf.mxu0
          %v1210 = vadd.f32 0.0, %v1209
          %v1211 = vpop.f32.mrf.mxu0
          %v1212 = vadd.f32 0.0, %v1211
          %v1213 = vpop.f32.mrf.mxu0
          %v1214 = vadd.f32 0.0, %v1213
          %v1215 = vpop.f32.mrf.mxu0
          %v1216 = vadd.f32 0.0, %v1215
          %1217 = vmatprep.mubr.bf16.mxu0 0
          %1218 = vmatmul.mubr.bf16.gmra.mxu0 %v1063
          %v1219 = vpop.f32.mrf.mxu0
          %v1220 = vadd.f32 0.0, %v1219
          %v1221 = vpop.f32.mrf.mxu0
          %v1222 = vadd.f32 0.0, %v1221
          %v1223 = vpop.f32.mrf.mxu0
          %v1224 = vadd.f32 0.0, %v1223
          %v1225 = vpop.f32.mrf.mxu0
          %v1226 = vadd.f32 0.0, %v1225
          %1227 = vmatprep.mubr.bf16.mxu0 0
          %1228 = vmatmul.mubr.bf16.gmra.mxu0 %v1064
          %v1229 = vpop.f32.mrf.mxu0
          %v1230 = vadd.f32 0.0, %v1229
          %v1231 = vpop.f32.mrf.mxu0
          %v1232 = vadd.f32 0.0, %v1231
          %v1233 = vpop.f32.mrf.mxu0
          %v1234 = vadd.f32 0.0, %v1233
          %v1235 = vpop.f32.mrf.mxu0
          %v1236 = vadd.f32 0.0, %v1235
          %1237 = vmatprep.mubr.bf16.mxu0 0
          %1238 = vmatmul.mubr.bf16.gmra.mxu0 %v1065
          %v1239 = vpop.f32.mrf.mxu0
          %v1240 = vadd.f32 0.0, %v1239
          %v1241 = vpop.f32.mrf.mxu0
          %v1242 = vadd.f32 0.0, %v1241
          %v1243 = vpop.f32.mrf.mxu0
          %v1244 = vadd.f32 0.0, %v1243
          %v1245 = vpop.f32.mrf.mxu0
          %v1246 = vadd.f32 0.0, %v1245
          %1247 = vmatprep.mubr.bf16.mxu0 0
          %1248 = vmatmul.mubr.bf16.gmra.mxu0 %v1066
          %v1249 = vpop.f32.mrf.mxu0
          %v1250 = vadd.f32 0.0, %v1249
          %v1251 = vpop.f32.mrf.mxu0
          %v1252 = vadd.f32 0.0, %v1251
          %v1253 = vpop.f32.mrf.mxu0
          %v1254 = vadd.f32 0.0, %v1253
          %v1255 = vpop.f32.mrf.mxu0
          %v1256 = vadd.f32 0.0, %v1255
          %1257 = vmatprep.mubr.bf16.mxu0 0
          %1258 = vmatmul.mubr.bf16.gmra.mxu0 %v1067
          %v1259 = vpop.f32.mrf.mxu0
          %v1260 = vadd.f32 0.0, %v1259
          %v1261 = vpop.f32.mrf.mxu0
          %v1262 = vadd.f32 0.0, %v1261
          %v1263 = vpop.f32.mrf.mxu0
          %v1264 = vadd.f32 0.0, %v1263
          %v1265 = vpop.f32.mrf.mxu0
          %v1266 = vadd.f32 0.0, %v1265
          %1267 = vmatprep.mubr.bf16.mxu0 0
          %1268 = vmatmul.mubr.bf16.gmra.mxu0 %v1068
          %v1269 = vpop.f32.mrf.mxu0
          %v1270 = vadd.f32 0.0, %v1269
          %v1271 = vpop.f32.mrf.mxu0
          %v1272 = vadd.f32 0.0, %v1271
          %v1273 = vpop.f32.mrf.mxu0
          %v1274 = vadd.f32 0.0, %v1273
          %v1275 = vpop.f32.mrf.mxu0
          %v1276 = vadd.f32 0.0, %v1275
          %1277 = vdwg.mxu0
          %v1278 = vld [vmem:[%s776] sm:$0x1]
          %v1280 = vlaneseq
          %v1281 = vshrl.u32 %v1280, 7
          %v1282 = vsub.s32 0, %v1281
          %v1283 = vrot.slane %v1278, %v1282
          %v1285 = vadd.f32 %v1200, %v1283
          %v1286 = vadd.f32 %v1204, %v1283
          %v1287 = vadd.f32 %v1210, %v1283
          %v1288 = vadd.f32 %v1214, %v1283
          %v1289 = vadd.f32 %v1220, %v1283
          %v1290 = vadd.f32 %v1224, %v1283
          %v1291 = vadd.f32 %v1230, %v1283
          %v1292 = vadd.f32 %v1234, %v1283
          %v1293 = vadd.f32 %v1240, %v1283
          %v1294 = vadd.f32 %v1244, %v1283
          %v1295 = vadd.f32 %v1250, %v1283
          %v1296 = vadd.f32 %v1254, %v1283
          %v1297 = vadd.f32 %v1260, %v1283
          %v1298 = vadd.f32 %v1264, %v1283
          %v1299 = vadd.f32 %v1270, %v1283
          %v1300 = vadd.f32 %v1274, %v1283
          %v1301 = vld [vmem:[#allocation2] sm:$0xff]
          %v1302 = vld [vmem:[#allocation2 + $0x8] sm:$0xff]
          %v1303 = vld [vmem:[#allocation2 + $0x10] sm:$0xff]
          %v1304 = vld [vmem:[#allocation2 + $0x18] sm:$0xff]
          %v1309 = vcombine.high %v1301, %v1301
          %v1311 = vunpack.c.l.s4 1966171168
          %v1312 = vunpack.c.0.s8 %v1311
          %v1313 = vlaneseq
          %v1314 = vshrl.u32 %v1313, 7
          %v1315 = vsub.s32 %v1312, %v1314
          %v1316 = vrot.slane %v1301, %v1315
          %v1318 = vunpack.c.l.s4 1966171168
          %v1319 = vunpack.c.0.s8 %v1318
          %v1320 = vlaneseq
          %v1321 = vshrl.u32 %v1320, 7
          %v1322 = vsub.s32 %v1319, %v1321
          %v1323 = vrot.slane %v1309, %v1322
          %v1324 = vcombine.high %v1316, %v1316
          %v1325 = vcombine.high %v1323, %v1323
          %v1327 = vunpack.c.l.s4 1966171168
          %v1328 = vunpack.c.0.s8 %v1327
          %v1329 = vlaneseq
          %v1330 = vshrl.u32 %v1329, 7
          %v1331 = vsub.s32 %v1328, %v1330
          %v1332 = vrot.slane %v1316, %v1331
          %v1334 = vunpack.c.l.s4 1966171168
          %v1335 = vunpack.c.0.s8 %v1334
          %v1336 = vlaneseq
          %v1337 = vshrl.u32 %v1336, 7
          %v1338 = vsub.s32 %v1335, %v1337
          %v1339 = vrot.slane %v1323, %v1338
          %v1341 = vunpack.c.l.s4 1966171168
          %v1342 = vunpack.c.0.s8 %v1341
          %v1343 = vlaneseq
          %v1344 = vshrl.u32 %v1343, 7
          %v1345 = vsub.s32 %v1342, %v1344
          %v1346 = vrot.slane %v1324, %v1345
          %v1348 = vunpack.c.l.s4 1966171168
          %v1349 = vunpack.c.0.s8 %v1348
          %v1350 = vlaneseq
          %v1351 = vshrl.u32 %v1350, 7
          %v1352 = vsub.s32 %v1349, %v1351
          %v1353 = vrot.slane %v1325, %v1352
          %v1354 = vcombine.high %v1332, %v1332
          %v1355 = vcombine.high %v1339, %v1339
          %v1356 = vcombine.high %v1346, %v1346
          %v1357 = vcombine.high %v1353, %v1353
          %v1358 = vcombine.high %v1302, %v1302
          %v1360 = vunpack.c.l.s4 1966171168
          %v1361 = vunpack.c.0.s8 %v1360
          %v1362 = vlaneseq
          %v1363 = vshrl.u32 %v1362, 7
          %v1364 = vsub.s32 %v1361, %v1363
          %v1365 = vrot.slane %v1302, %v1364
          %v1367 = vunpack.c.l.s4 1966171168
          %v1368 = vunpack.c.0.s8 %v1367
          %v1369 = vlaneseq
          %v1370 = vshrl.u32 %v1369, 7
          %v1371 = vsub.s32 %v1368, %v1370
          %v1372 = vrot.slane %v1358, %v1371
          %v1373 = vcombine.high %v1365, %v1365
          %v1374 = vcombine.high %v1372, %v1372
          %v1376 = vunpack.c.l.s4 1966171168
          %v1377 = vunpack.c.0.s8 %v1376
          %v1378 = vlaneseq
          %v1379 = vshrl.u32 %v1378, 7
          %v1380 = vsub.s32 %v1377, %v1379
          %v1381 = vrot.slane %v1365, %v1380
          %v1383 = vunpack.c.l.s4 1966171168
          %v1384 = vunpack.c.0.s8 %v1383
          %v1385 = vlaneseq
          %v1386 = vshrl.u32 %v1385, 7
          %v1387 = vsub.s32 %v1384, %v1386
          %v1388 = vrot.slane %v1372, %v1387
          %v1390 = vunpack.c.l.s4 1966171168
          %v1391 = vunpack.c.0.s8 %v1390
          %v1392 = vlaneseq
          %v1393 = vshrl.u32 %v1392, 7
          %v1394 = vsub.s32 %v1391, %v1393
          %v1395 = vrot.slane %v1373, %v1394
          %v1397 = vunpack.c.l.s4 1966171168
          %v1398 = vunpack.c.0.s8 %v1397
          %v1399 = vlaneseq
          %v1400 = vshrl.u32 %v1399, 7
          %v1401 = vsub.s32 %v1398, %v1400
          %v1402 = vrot.slane %v1374, %v1401
          %v1403 = vcombine.high %v1381, %v1381
          %v1404 = vcombine.high %v1388, %v1388
          %v1405 = vcombine.high %v1395, %v1395
          %v1406 = vcombine.high %v1402, %v1402
          %v1407 = vcombine.high %v1303, %v1303
          %v1409 = vunpack.c.l.s4 1966171168
          %v1410 = vunpack.c.0.s8 %v1409
          %v1411 = vlaneseq
          %v1412 = vshrl.u32 %v1411, 7
          %v1413 = vsub.s32 %v1410, %v1412
          %v1414 = vrot.slane %v1303, %v1413
          %v1416 = vunpack.c.l.s4 1966171168
          %v1417 = vunpack.c.0.s8 %v1416
          %v1418 = vlaneseq
          %v1419 = vshrl.u32 %v1418, 7
          %v1420 = vsub.s32 %v1417, %v1419
          %v1421 = vrot.slane %v1407, %v1420
          %v1422 = vcombine.high %v1414, %v1414
          %v1423 = vcombine.high %v1421, %v1421
          %v1425 = vunpack.c.l.s4 1966171168
          %v1426 = vunpack.c.0.s8 %v1425
          %v1427 = vlaneseq
          %v1428 = vshrl.u32 %v1427, 7
          %v1429 = vsub.s32 %v1426, %v1428
          %v1430 = vrot.slane %v1414, %v1429
          %v1432 = vunpack.c.l.s4 1966171168
          %v1433 = vunpack.c.0.s8 %v1432
          %v1434 = vlaneseq
          %v1435 = vshrl.u32 %v1434, 7
          %v1436 = vsub.s32 %v1433, %v1435
          %v1437 = vrot.slane %v1421, %v1436
          %v1439 = vunpack.c.l.s4 1966171168
          %v1440 = vunpack.c.0.s8 %v1439
          %v1441 = vlaneseq
          %v1442 = vshrl.u32 %v1441, 7
          %v1443 = vsub.s32 %v1440, %v1442
          %v1444 = vrot.slane %v1422, %v1443
          %v1446 = vunpack.c.l.s4 1966171168
          %v1447 = vunpack.c.0.s8 %v1446
          %v1448 = vlaneseq
          %v1449 = vshrl.u32 %v1448, 7
          %v1450 = vsub.s32 %v1447, %v1449
          %v1451 = vrot.slane %v1423, %v1450
          %v1452 = vcombine.high %v1430, %v1430
          %v1453 = vcombine.high %v1437, %v1437
          %v1454 = vcombine.high %v1444, %v1444
          %v1455 = vcombine.high %v1451, %v1451
          %v1456 = vcombine.high %v1304, %v1304
          %v1458 = vunpack.c.l.s4 1966171168
          %v1459 = vunpack.c.0.s8 %v1458
          %v1460 = vlaneseq
          %v1461 = vshrl.u32 %v1460, 7
          %v1462 = vsub.s32 %v1459, %v1461
          %v1463 = vrot.slane %v1304, %v1462
          %v1465 = vunpack.c.l.s4 1966171168
          %v1466 = vunpack.c.0.s8 %v1465
          %v1467 = vlaneseq
          %v1468 = vshrl.u32 %v1467, 7
          %v1469 = vsub.s32 %v1466, %v1468
          %v1470 = vrot.slane %v1456, %v1469
          %v1471 = vcombine.high %v1463, %v1463
          %v1472 = vcombine.high %v1470, %v1470
          %v1474 = vunpack.c.l.s4 1966171168
          %v1475 = vunpack.c.0.s8 %v1474
          %v1476 = vlaneseq
          %v1477 = vshrl.u32 %v1476, 7
          %v1478 = vsub.s32 %v1475, %v1477
          %v1479 = vrot.slane %v1463, %v1478
          %v1481 = vunpack.c.l.s4 1966171168
          %v1482 = vunpack.c.0.s8 %v1481
          %v1483 = vlaneseq
          %v1484 = vshrl.u32 %v1483, 7
          %v1485 = vsub.s32 %v1482, %v1484
          %v1486 = vrot.slane %v1470, %v1485
          %v1488 = vunpack.c.l.s4 1966171168
          %v1489 = vunpack.c.0.s8 %v1488
          %v1490 = vlaneseq
          %v1491 = vshrl.u32 %v1490, 7
          %v1492 = vsub.s32 %v1489, %v1491
          %v1493 = vrot.slane %v1471, %v1492
          %v1495 = vunpack.c.l.s4 1966171168
          %v1496 = vunpack.c.0.s8 %v1495
          %v1497 = vlaneseq
          %v1498 = vshrl.u32 %v1497, 7
          %v1499 = vsub.s32 %v1496, %v1498
          %v1500 = vrot.slane %v1472, %v1499
          %v1501 = vcombine.high %v1479, %v1479
          %v1502 = vcombine.high %v1486, %v1486
          %v1503 = vcombine.high %v1493, %v1493
          %v1504 = vcombine.high %v1500, %v1500
          %v1505 = vlaneseq
          %v1506 = vshrl.u32 %v1505, 7
          %v1507 = vsub.s32 0, %v1506
          %v1508 = vrot.slane %v1332, %v1507
          %v1509 = vlaneseq
          %v1510 = vshrl.u32 %v1509, 7
          %v1511 = vsub.s32 0, %v1510
          %v1512 = vrot.slane %v1346, %v1511
          %v1513 = vlaneseq
          %v1514 = vshrl.u32 %v1513, 7
          %v1515 = vsub.s32 0, %v1514
          %v1516 = vrot.slane %v1354, %v1515
          %v1517 = vlaneseq
          %v1518 = vshrl.u32 %v1517, 7
          %v1519 = vsub.s32 0, %v1518
          %v1520 = vrot.slane %v1356, %v1519
          %v1521 = vlaneseq
          %v1522 = vshrl.u32 %v1521, 7
          %v1523 = vsub.s32 0, %v1522
          %v1524 = vrot.slane %v1339, %v1523
          %v1525 = vlaneseq
          %v1526 = vshrl.u32 %v1525, 7
          %v1527 = vsub.s32 0, %v1526
          %v1528 = vrot.slane %v1353, %v1527
          %v1529 = vlaneseq
          %v1530 = vshrl.u32 %v1529, 7
          %v1531 = vsub.s32 0, %v1530
          %v1532 = vrot.slane %v1355, %v1531
          %v1533 = vlaneseq
          %v1534 = vshrl.u32 %v1533, 7
          %v1535 = vsub.s32 0, %v1534
          %v1536 = vrot.slane %v1357, %v1535
          %v1537 = vlaneseq
          %v1538 = vshrl.u32 %v1537, 7
          %v1539 = vsub.s32 0, %v1538
          %v1540 = vrot.slane %v1381, %v1539
          %v1541 = vlaneseq
          %v1542 = vshrl.u32 %v1541, 7
          %v1543 = vsub.s32 0, %v1542
          %v1544 = vrot.slane %v1395, %v1543
          %v1545 = vlaneseq
          %v1546 = vshrl.u32 %v1545, 7
          %v1547 = vsub.s32 0, %v1546
          %v1548 = vrot.slane %v1403, %v1547
          %v1549 = vlaneseq
          %v1550 = vshrl.u32 %v1549, 7
          %v1551 = vsub.s32 0, %v1550
          %v1552 = vrot.slane %v1405, %v1551
          %v1553 = vlaneseq
          %v1554 = vshrl.u32 %v1553, 7
          %v1555 = vsub.s32 0, %v1554
          %v1556 = vrot.slane %v1388, %v1555
          %v1557 = vlaneseq
          %v1558 = vshrl.u32 %v1557, 7
          %v1559 = vsub.s32 0, %v1558
          %v1560 = vrot.slane %v1402, %v1559
          %v1561 = vlaneseq
          %v1562 = vshrl.u32 %v1561, 7
          %v1563 = vsub.s32 0, %v1562
          %v1564 = vrot.slane %v1404, %v1563
          %v1565 = vlaneseq
          %v1566 = vshrl.u32 %v1565, 7
          %v1567 = vsub.s32 0, %v1566
          %v1568 = vrot.slane %v1406, %v1567
          %v1569 = vlaneseq
          %v1570 = vshrl.u32 %v1569, 7
          %v1571 = vsub.s32 0, %v1570
          %v1572 = vrot.slane %v1430, %v1571
          %v1573 = vlaneseq
          %v1574 = vshrl.u32 %v1573, 7
          %v1575 = vsub.s32 0, %v1574
          %v1576 = vrot.slane %v1444, %v1575
          %v1577 = vlaneseq
          %v1578 = vshrl.u32 %v1577, 7
          %v1579 = vsub.s32 0, %v1578
          %v1580 = vrot.slane %v1452, %v1579
          %v1581 = vlaneseq
          %v1582 = vshrl.u32 %v1581, 7
          %v1583 = vsub.s32 0, %v1582
          %v1584 = vrot.slane %v1454, %v1583
          %v1585 = vlaneseq
          %v1586 = vshrl.u32 %v1585, 7
          %v1587 = vsub.s32 0, %v1586
          %v1588 = vrot.slane %v1437, %v1587
          %v1589 = vlaneseq
          %v1590 = vshrl.u32 %v1589, 7
          %v1591 = vsub.s32 0, %v1590
          %v1592 = vrot.slane %v1451, %v1591
          %v1593 = vlaneseq
          %v1594 = vshrl.u32 %v1593, 7
          %v1595 = vsub.s32 0, %v1594
          %v1596 = vrot.slane %v1453, %v1595
          %v1597 = vlaneseq
          %v1598 = vshrl.u32 %v1597, 7
          %v1599 = vsub.s32 0, %v1598
          %v1600 = vrot.slane %v1455, %v1599
          %v1601 = vlaneseq
          %v1602 = vshrl.u32 %v1601, 7
          %v1603 = vsub.s32 0, %v1602
          %v1604 = vrot.slane %v1479, %v1603
          %v1605 = vlaneseq
          %v1606 = vshrl.u32 %v1605, 7
          %v1607 = vsub.s32 0, %v1606
          %v1608 = vrot.slane %v1493, %v1607
          %v1609 = vlaneseq
          %v1610 = vshrl.u32 %v1609, 7
          %v1611 = vsub.s32 0, %v1610
          %v1612 = vrot.slane %v1501, %v1611
          %v1613 = vlaneseq
          %v1614 = vshrl.u32 %v1613, 7
          %v1615 = vsub.s32 0, %v1614
          %v1616 = vrot.slane %v1503, %v1615
          %v1617 = vlaneseq
          %v1618 = vshrl.u32 %v1617, 7
          %v1619 = vsub.s32 0, %v1618
          %v1620 = vrot.slane %v1486, %v1619
          %v1621 = vlaneseq
          %v1622 = vshrl.u32 %v1621, 7
          %v1623 = vsub.s32 0, %v1622
          %v1624 = vrot.slane %v1500, %v1623
          %v1625 = vlaneseq
          %v1626 = vshrl.u32 %v1625, 7
          %v1627 = vsub.s32 0, %v1626
          %v1628 = vrot.slane %v1502, %v1627
          %v1629 = vlaneseq
          %v1630 = vshrl.u32 %v1629, 7
          %v1631 = vsub.s32 0, %v1630
          %v1632 = vrot.slane %v1504, %v1631
          %v1665 = vadd.f32 %v1508, %v1285
          %v1666 = vadd.f32 %v1508, %v1286
          %v1667 = vadd.f32 %v1508, %v1287
          %v1668 = vadd.f32 %v1508, %v1288
          %v1669 = vadd.f32 %v1508, %v1289
          %v1670 = vadd.f32 %v1508, %v1290
          %v1671 = vadd.f32 %v1508, %v1291
          %v1672 = vadd.f32 %v1508, %v1292
          %v1673 = vadd.f32 %v1508, %v1293
          %v1674 = vadd.f32 %v1508, %v1294
          %v1675 = vadd.f32 %v1508, %v1295
          %v1676 = vadd.f32 %v1508, %v1296
          %v1677 = vadd.f32 %v1508, %v1297
          %v1678 = vadd.f32 %v1508, %v1298
          %v1679 = vadd.f32 %v1508, %v1299
          %v1680 = vadd.f32 %v1508, %v1300
          %v1681 = vadd.f32 %v1512, %v1285
          %v1682 = vadd.f32 %v1512, %v1286
          %v1683 = vadd.f32 %v1512, %v1287
          %v1684 = vadd.f32 %v1512, %v1288
          %v1685 = vadd.f32 %v1512, %v1289
          %v1686 = vadd.f32 %v1512, %v1290
          %v1687 = vadd.f32 %v1512, %v1291
          %v1688 = vadd.f32 %v1512, %v1292
          %v1689 = vadd.f32 %v1512, %v1293
          %v1690 = vadd.f32 %v1512, %v1294
          %v1691 = vadd.f32 %v1512, %v1295
          %v1692 = vadd.f32 %v1512, %v1296
          %v1693 = vadd.f32 %v1512, %v1297
          %v1694 = vadd.f32 %v1512, %v1298
          %v1695 = vadd.f32 %v1512, %v1299
          %v1696 = vadd.f32 %v1512, %v1300
          %v1697 = vadd.f32 %v1516, %v1285
          %v1698 = vadd.f32 %v1516, %v1286
          %v1699 = vadd.f32 %v1516, %v1287
          %v1700 = vadd.f32 %v1516, %v1288
          %v1701 = vadd.f32 %v1516, %v1289
          %v1702 = vadd.f32 %v1516, %v1290
          %v1703 = vadd.f32 %v1516, %v1291
          %v1704 = vadd.f32 %v1516, %v1292
          %v1705 = vadd.f32 %v1516, %v1293
          %v1706 = vadd.f32 %v1516, %v1294
          %v1707 = vadd.f32 %v1516, %v1295
          %v1708 = vadd.f32 %v1516, %v1296
          %v1709 = vadd.f32 %v1516, %v1297
          %v1710 = vadd.f32 %v1516, %v1298
          %v1711 = vadd.f32 %v1516, %v1299
          %v1712 = vadd.f32 %v1516, %v1300
          %v1713 = vadd.f32 %v1520, %v1285
          %v1714 = vadd.f32 %v1520, %v1286
          %v1715 = vadd.f32 %v1520, %v1287
          %v1716 = vadd.f32 %v1520, %v1288
          %v1717 = vadd.f32 %v1520, %v1289
          %v1718 = vadd.f32 %v1520, %v1290
          %v1719 = vadd.f32 %v1520, %v1291
          %v1720 = vadd.f32 %v1520, %v1292
          %v1721 = vadd.f32 %v1520, %v1293
          %v1722 = vadd.f32 %v1520, %v1294
          %v1723 = vadd.f32 %v1520, %v1295
          %v1724 = vadd.f32 %v1520, %v1296
          %v1725 = vadd.f32 %v1520, %v1297
          %v1726 = vadd.f32 %v1520, %v1298
          %v1727 = vadd.f32 %v1520, %v1299
          %v1728 = vadd.f32 %v1520, %v1300
          %v1729 = vadd.f32 %v1524, %v1285
          %v1730 = vadd.f32 %v1524, %v1286
          %v1731 = vadd.f32 %v1524, %v1287
          %v1732 = vadd.f32 %v1524, %v1288
          %v1733 = vadd.f32 %v1524, %v1289
          %v1734 = vadd.f32 %v1524, %v1290
          %v1735 = vadd.f32 %v1524, %v1291
          %v1736 = vadd.f32 %v1524, %v1292
          %v1737 = vadd.f32 %v1524, %v1293
          %v1738 = vadd.f32 %v1524, %v1294
          %v1739 = vadd.f32 %v1524, %v1295
          %v1740 = vadd.f32 %v1524, %v1296
          %v1741 = vadd.f32 %v1524, %v1297
          %v1742 = vadd.f32 %v1524, %v1298
          %v1743 = vadd.f32 %v1524, %v1299
          %v1744 = vadd.f32 %v1524, %v1300
          %v1745 = vadd.f32 %v1528, %v1285
          %v1746 = vadd.f32 %v1528, %v1286
          %v1747 = vadd.f32 %v1528, %v1287
          %v1748 = vadd.f32 %v1528, %v1288
          %v1749 = vadd.f32 %v1528, %v1289
          %v1750 = vadd.f32 %v1528, %v1290
          %v1751 = vadd.f32 %v1528, %v1291
          %v1752 = vadd.f32 %v1528, %v1292
          %v1753 = vadd.f32 %v1528, %v1293
          %v1754 = vadd.f32 %v1528, %v1294
          %v1755 = vadd.f32 %v1528, %v1295
          %v1756 = vadd.f32 %v1528, %v1296
          %v1757 = vadd.f32 %v1528, %v1297
          %v1758 = vadd.f32 %v1528, %v1298
          %v1759 = vadd.f32 %v1528, %v1299
          %v1760 = vadd.f32 %v1528, %v1300
          %v1761 = vadd.f32 %v1532, %v1285
          %v1762 = vadd.f32 %v1532, %v1286
          %v1763 = vadd.f32 %v1532, %v1287
          %v1764 = vadd.f32 %v1532, %v1288
          %v1765 = vadd.f32 %v1532, %v1289
          %v1766 = vadd.f32 %v1532, %v1290
          %v1767 = vadd.f32 %v1532, %v1291
          %v1768 = vadd.f32 %v1532, %v1292
          %v1769 = vadd.f32 %v1532, %v1293
          %v1770 = vadd.f32 %v1532, %v1294
          %v1771 = vadd.f32 %v1532, %v1295
          %v1772 = vadd.f32 %v1532, %v1296
          %v1773 = vadd.f32 %v1532, %v1297
          %v1774 = vadd.f32 %v1532, %v1298
          %v1775 = vadd.f32 %v1532, %v1299
          %v1776 = vadd.f32 %v1532, %v1300
          %v1777 = vadd.f32 %v1536, %v1285
          %v1778 = vadd.f32 %v1536, %v1286
          %v1779 = vadd.f32 %v1536, %v1287
          %v1780 = vadd.f32 %v1536, %v1288
          %v1781 = vadd.f32 %v1536, %v1289
          %v1782 = vadd.f32 %v1536, %v1290
          %v1783 = vadd.f32 %v1536, %v1291
          %v1784 = vadd.f32 %v1536, %v1292
          %v1785 = vadd.f32 %v1536, %v1293
          %v1786 = vadd.f32 %v1536, %v1294
          %v1787 = vadd.f32 %v1536, %v1295
          %v1788 = vadd.f32 %v1536, %v1296
          %v1789 = vadd.f32 %v1536, %v1297
          %v1790 = vadd.f32 %v1536, %v1298
          %v1791 = vadd.f32 %v1536, %v1299
          %v1792 = vadd.f32 %v1536, %v1300
          %v1793 = vadd.f32 %v1540, %v1285
          %v1794 = vadd.f32 %v1540, %v1286
          %v1795 = vadd.f32 %v1540, %v1287
          %v1796 = vadd.f32 %v1540, %v1288
          %v1797 = vadd.f32 %v1540, %v1289
          %v1798 = vadd.f32 %v1540, %v1290
          %v1799 = vadd.f32 %v1540, %v1291
          %v1800 = vadd.f32 %v1540, %v1292
          %v1801 = vadd.f32 %v1540, %v1293
          %v1802 = vadd.f32 %v1540, %v1294
          %v1803 = vadd.f32 %v1540, %v1295
          %v1804 = vadd.f32 %v1540, %v1296
          %v1805 = vadd.f32 %v1540, %v1297
          %v1806 = vadd.f32 %v1540, %v1298
          %v1807 = vadd.f32 %v1540, %v1299
          %v1808 = vadd.f32 %v1540, %v1300
          %v1809 = vadd.f32 %v1544, %v1285
          %v1810 = vadd.f32 %v1544, %v1286
          %v1811 = vadd.f32 %v1544, %v1287
          %v1812 = vadd.f32 %v1544, %v1288
          %v1813 = vadd.f32 %v1544, %v1289
          %v1814 = vadd.f32 %v1544, %v1290
          %v1815 = vadd.f32 %v1544, %v1291
          %v1816 = vadd.f32 %v1544, %v1292
          %v1817 = vadd.f32 %v1544, %v1293
          %v1818 = vadd.f32 %v1544, %v1294
          %v1819 = vadd.f32 %v1544, %v1295
          %v1820 = vadd.f32 %v1544, %v1296
          %v1821 = vadd.f32 %v1544, %v1297
          %v1822 = vadd.f32 %v1544, %v1298
          %v1823 = vadd.f32 %v1544, %v1299
          %v1824 = vadd.f32 %v1544, %v1300
          %v1825 = vadd.f32 %v1548, %v1285
          %v1826 = vadd.f32 %v1548, %v1286
          %v1827 = vadd.f32 %v1548, %v1287
          %v1828 = vadd.f32 %v1548, %v1288
          %v1829 = vadd.f32 %v1548, %v1289
          %v1830 = vadd.f32 %v1548, %v1290
          %v1831 = vadd.f32 %v1548, %v1291
          %v1832 = vadd.f32 %v1548, %v1292
          %v1833 = vadd.f32 %v1548, %v1293
          %v1834 = vadd.f32 %v1548, %v1294
          %v1835 = vadd.f32 %v1548, %v1295
          %v1836 = vadd.f32 %v1548, %v1296
          %v1837 = vadd.f32 %v1548, %v1297
          %v1838 = vadd.f32 %v1548, %v1298
          %v1839 = vadd.f32 %v1548, %v1299
          %v1840 = vadd.f32 %v1548, %v1300
          %v1841 = vadd.f32 %v1552, %v1285
          %v1842 = vadd.f32 %v1552, %v1286
          %v1843 = vadd.f32 %v1552, %v1287
          %v1844 = vadd.f32 %v1552, %v1288
          %v1845 = vadd.f32 %v1552, %v1289
          %v1846 = vadd.f32 %v1552, %v1290
          %v1847 = vadd.f32 %v1552, %v1291
          %v1848 = vadd.f32 %v1552, %v1292
          %v1849 = vadd.f32 %v1552, %v1293
          %v1850 = vadd.f32 %v1552, %v1294
          %v1851 = vadd.f32 %v1552, %v1295
          %v1852 = vadd.f32 %v1552, %v1296
          %v1853 = vadd.f32 %v1552, %v1297
          %v1854 = vadd.f32 %v1552, %v1298
          %v1855 = vadd.f32 %v1552, %v1299
          %v1856 = vadd.f32 %v1552, %v1300
          %v1857 = vadd.f32 %v1556, %v1285
          %v1858 = vadd.f32 %v1556, %v1286
          %v1859 = vadd.f32 %v1556, %v1287
          %v1860 = vadd.f32 %v1556, %v1288
          %v1861 = vadd.f32 %v1556, %v1289
          %v1862 = vadd.f32 %v1556, %v1290
          %v1863 = vadd.f32 %v1556, %v1291
          %v1864 = vadd.f32 %v1556, %v1292
          %v1865 = vadd.f32 %v1556, %v1293
          %v1866 = vadd.f32 %v1556, %v1294
          %v1867 = vadd.f32 %v1556, %v1295
          %v1868 = vadd.f32 %v1556, %v1296
          %v1869 = vadd.f32 %v1556, %v1297
          %v1870 = vadd.f32 %v1556, %v1298
          %v1871 = vadd.f32 %v1556, %v1299
          %v1872 = vadd.f32 %v1556, %v1300
          %v1873 = vadd.f32 %v1560, %v1285
          %v1874 = vadd.f32 %v1560, %v1286
          %v1875 = vadd.f32 %v1560, %v1287
          %v1876 = vadd.f32 %v1560, %v1288
          %v1877 = vadd.f32 %v1560, %v1289
          %v1878 = vadd.f32 %v1560, %v1290
          %v1879 = vadd.f32 %v1560, %v1291
          %v1880 = vadd.f32 %v1560, %v1292
          %v1881 = vadd.f32 %v1560, %v1293
          %v1882 = vadd.f32 %v1560, %v1294
          %v1883 = vadd.f32 %v1560, %v1295
          %v1884 = vadd.f32 %v1560, %v1296
          %v1885 = vadd.f32 %v1560, %v1297
          %v1886 = vadd.f32 %v1560, %v1298
          %v1887 = vadd.f32 %v1560, %v1299
          %v1888 = vadd.f32 %v1560, %v1300
          %v1889 = vadd.f32 %v1564, %v1285
          %v1890 = vadd.f32 %v1564, %v1286
          %v1891 = vadd.f32 %v1564, %v1287
          %v1892 = vadd.f32 %v1564, %v1288
          %v1893 = vadd.f32 %v1564, %v1289
          %v1894 = vadd.f32 %v1564, %v1290
          %v1895 = vadd.f32 %v1564, %v1291
          %v1896 = vadd.f32 %v1564, %v1292
          %v1897 = vadd.f32 %v1564, %v1293
          %v1898 = vadd.f32 %v1564, %v1294
          %v1899 = vadd.f32 %v1564, %v1295
          %v1900 = vadd.f32 %v1564, %v1296
          %v1901 = vadd.f32 %v1564, %v1297
          %v1902 = vadd.f32 %v1564, %v1298
          %v1903 = vadd.f32 %v1564, %v1299
          %v1904 = vadd.f32 %v1564, %v1300
          %v1905 = vadd.f32 %v1568, %v1285
          %v1906 = vadd.f32 %v1568, %v1286
          %v1907 = vadd.f32 %v1568, %v1287
          %v1908 = vadd.f32 %v1568, %v1288
          %v1909 = vadd.f32 %v1568, %v1289
          %v1910 = vadd.f32 %v1568, %v1290
          %v1911 = vadd.f32 %v1568, %v1291
          %v1912 = vadd.f32 %v1568, %v1292
          %v1913 = vadd.f32 %v1568, %v1293
          %v1914 = vadd.f32 %v1568, %v1294
          %v1915 = vadd.f32 %v1568, %v1295
          %v1916 = vadd.f32 %v1568, %v1296
          %v1917 = vadd.f32 %v1568, %v1297
          %v1918 = vadd.f32 %v1568, %v1298
          %v1919 = vadd.f32 %v1568, %v1299
          %v1920 = vadd.f32 %v1568, %v1300
          %v1921 = vadd.f32 %v1572, %v1285
          %v1922 = vadd.f32 %v1572, %v1286
          %v1923 = vadd.f32 %v1572, %v1287
          %v1924 = vadd.f32 %v1572, %v1288
          %v1925 = vadd.f32 %v1572, %v1289
          %v1926 = vadd.f32 %v1572, %v1290
          %v1927 = vadd.f32 %v1572, %v1291
          %v1928 = vadd.f32 %v1572, %v1292
          %v1929 = vadd.f32 %v1572, %v1293
          %v1930 = vadd.f32 %v1572, %v1294
          %v1931 = vadd.f32 %v1572, %v1295
          %v1932 = vadd.f32 %v1572, %v1296
          %v1933 = vadd.f32 %v1572, %v1297
          %v1934 = vadd.f32 %v1572, %v1298
          %v1935 = vadd.f32 %v1572, %v1299
          %v1936 = vadd.f32 %v1572, %v1300
          %v1937 = vadd.f32 %v1576, %v1285
          %v1938 = vadd.f32 %v1576, %v1286
          %v1939 = vadd.f32 %v1576, %v1287
          %v1940 = vadd.f32 %v1576, %v1288
          %v1941 = vadd.f32 %v1576, %v1289
          %v1942 = vadd.f32 %v1576, %v1290
          %v1943 = vadd.f32 %v1576, %v1291
          %v1944 = vadd.f32 %v1576, %v1292
          %v1945 = vadd.f32 %v1576, %v1293
          %v1946 = vadd.f32 %v1576, %v1294
          %v1947 = vadd.f32 %v1576, %v1295
          %v1948 = vadd.f32 %v1576, %v1296
          %v1949 = vadd.f32 %v1576, %v1297
          %v1950 = vadd.f32 %v1576, %v1298
          %v1951 = vadd.f32 %v1576, %v1299
          %v1952 = vadd.f32 %v1576, %v1300
          %v1953 = vadd.f32 %v1580, %v1285
          %v1954 = vadd.f32 %v1580, %v1286
          %v1955 = vadd.f32 %v1580, %v1287
          %v1956 = vadd.f32 %v1580, %v1288
          %v1957 = vadd.f32 %v1580, %v1289
          %v1958 = vadd.f32 %v1580, %v1290
          %v1959 = vadd.f32 %v1580, %v1291
          %v1960 = vadd.f32 %v1580, %v1292
          %v1961 = vadd.f32 %v1580, %v1293
          %v1962 = vadd.f32 %v1580, %v1294
          %v1963 = vadd.f32 %v1580, %v1295
          %v1964 = vadd.f32 %v1580, %v1296
          %v1965 = vadd.f32 %v1580, %v1297
          %v1966 = vadd.f32 %v1580, %v1298
          %v1967 = vadd.f32 %v1580, %v1299
          %v1968 = vadd.f32 %v1580, %v1300
          %v1969 = vadd.f32 %v1584, %v1285
          %v1970 = vadd.f32 %v1584, %v1286
          %v1971 = vadd.f32 %v1584, %v1287
          %v1972 = vadd.f32 %v1584, %v1288
          %v1973 = vadd.f32 %v1584, %v1289
          %v1974 = vadd.f32 %v1584, %v1290
          %v1975 = vadd.f32 %v1584, %v1291
          %v1976 = vadd.f32 %v1584, %v1292
          %v1977 = vadd.f32 %v1584, %v1293
          %v1978 = vadd.f32 %v1584, %v1294
          %v1979 = vadd.f32 %v1584, %v1295
          %v1980 = vadd.f32 %v1584, %v1296
          %v1981 = vadd.f32 %v1584, %v1297
          %v1982 = vadd.f32 %v1584, %v1298
          %v1983 = vadd.f32 %v1584, %v1299
          %v1984 = vadd.f32 %v1584, %v1300
          %v1985 = vadd.f32 %v1588, %v1285
          %v1986 = vadd.f32 %v1588, %v1286
          %v1987 = vadd.f32 %v1588, %v1287
          %v1988 = vadd.f32 %v1588, %v1288
          %v1989 = vadd.f32 %v1588, %v1289
          %v1990 = vadd.f32 %v1588, %v1290
          %v1991 = vadd.f32 %v1588, %v1291
          %v1992 = vadd.f32 %v1588, %v1292
          %v1993 = vadd.f32 %v1588, %v1293
          %v1994 = vadd.f32 %v1588, %v1294
          %v1995 = vadd.f32 %v1588, %v1295
          %v1996 = vadd.f32 %v1588, %v1296
          %v1997 = vadd.f32 %v1588, %v1297
          %v1998 = vadd.f32 %v1588, %v1298
          %v1999 = vadd.f32 %v1588, %v1299
          %v2000 = vadd.f32 %v1588, %v1300
          %v2001 = vadd.f32 %v1592, %v1285
          %v2002 = vadd.f32 %v1592, %v1286
          %v2003 = vadd.f32 %v1592, %v1287
          %v2004 = vadd.f32 %v1592, %v1288
          %v2005 = vadd.f32 %v1592, %v1289
          %v2006 = vadd.f32 %v1592, %v1290
          %v2007 = vadd.f32 %v1592, %v1291
          %v2008 = vadd.f32 %v1592, %v1292
          %v2009 = vadd.f32 %v1592, %v1293
          %v2010 = vadd.f32 %v1592, %v1294
          %v2011 = vadd.f32 %v1592, %v1295
          %v2012 = vadd.f32 %v1592, %v1296
          %v2013 = vadd.f32 %v1592, %v1297
          %v2014 = vadd.f32 %v1592, %v1298
          %v2015 = vadd.f32 %v1592, %v1299
          %v2016 = vadd.f32 %v1592, %v1300
          %v2017 = vadd.f32 %v1596, %v1285
          %v2018 = vadd.f32 %v1596, %v1286
          %v2019 = vadd.f32 %v1596, %v1287
          %v2020 = vadd.f32 %v1596, %v1288
          %v2021 = vadd.f32 %v1596, %v1289
          %v2022 = vadd.f32 %v1596, %v1290
          %v2023 = vadd.f32 %v1596, %v1291
          %v2024 = vadd.f32 %v1596, %v1292
          %v2025 = vadd.f32 %v1596, %v1293
          %v2026 = vadd.f32 %v1596, %v1294
          %v2027 = vadd.f32 %v1596, %v1295
          %v2028 = vadd.f32 %v1596, %v1296
          %v2029 = vadd.f32 %v1596, %v1297
          %v2030 = vadd.f32 %v1596, %v1298
          %v2031 = vadd.f32 %v1596, %v1299
          %v2032 = vadd.f32 %v1596, %v1300
          %v2033 = vadd.f32 %v1600, %v1285
          %v2034 = vadd.f32 %v1600, %v1286
          %v2035 = vadd.f32 %v1600, %v1287
          %v2036 = vadd.f32 %v1600, %v1288
          %v2037 = vadd.f32 %v1600, %v1289
          %v2038 = vadd.f32 %v1600, %v1290
          %v2039 = vadd.f32 %v1600, %v1291
          %v2040 = vadd.f32 %v1600, %v1292
          %v2041 = vadd.f32 %v1600, %v1293
          %v2042 = vadd.f32 %v1600, %v1294
          %v2043 = vadd.f32 %v1600, %v1295
          %v2044 = vadd.f32 %v1600, %v1296
          %v2045 = vadd.f32 %v1600, %v1297
          %v2046 = vadd.f32 %v1600, %v1298
          %v2047 = vadd.f32 %v1600, %v1299
          %v2048 = vadd.f32 %v1600, %v1300
          %v2049 = vadd.f32 %v1604, %v1285
          %v2050 = vadd.f32 %v1604, %v1286
          %v2051 = vadd.f32 %v1604, %v1287
          %v2052 = vadd.f32 %v1604, %v1288
          %v2053 = vadd.f32 %v1604, %v1289
          %v2054 = vadd.f32 %v1604, %v1290
          %v2055 = vadd.f32 %v1604, %v1291
          %v2056 = vadd.f32 %v1604, %v1292
          %v2057 = vadd.f32 %v1604, %v1293
          %v2058 = vadd.f32 %v1604, %v1294
          %v2059 = vadd.f32 %v1604, %v1295
          %v2060 = vadd.f32 %v1604, %v1296
          %v2061 = vadd.f32 %v1604, %v1297
          %v2062 = vadd.f32 %v1604, %v1298
          %v2063 = vadd.f32 %v1604, %v1299
          %v2064 = vadd.f32 %v1604, %v1300
          %v2065 = vadd.f32 %v1608, %v1285
          %v2066 = vadd.f32 %v1608, %v1286
          %v2067 = vadd.f32 %v1608, %v1287
          %v2068 = vadd.f32 %v1608, %v1288
          %v2069 = vadd.f32 %v1608, %v1289
          %v2070 = vadd.f32 %v1608, %v1290
          %v2071 = vadd.f32 %v1608, %v1291
          %v2072 = vadd.f32 %v1608, %v1292
          %v2073 = vadd.f32 %v1608, %v1293
          %v2074 = vadd.f32 %v1608, %v1294
          %v2075 = vadd.f32 %v1608, %v1295
          %v2076 = vadd.f32 %v1608, %v1296
          %v2077 = vadd.f32 %v1608, %v1297
          %v2078 = vadd.f32 %v1608, %v1298
          %v2079 = vadd.f32 %v1608, %v1299
          %v2080 = vadd.f32 %v1608, %v1300
          %v2081 = vadd.f32 %v1612, %v1285
          %v2082 = vadd.f32 %v1612, %v1286
          %v2083 = vadd.f32 %v1612, %v1287
          %v2084 = vadd.f32 %v1612, %v1288
          %v2085 = vadd.f32 %v1612, %v1289
          %v2086 = vadd.f32 %v1612, %v1290
          %v2087 = vadd.f32 %v1612, %v1291
          %v2088 = vadd.f32 %v1612, %v1292
          %v2089 = vadd.f32 %v1612, %v1293
          %v2090 = vadd.f32 %v1612, %v1294
          %v2091 = vadd.f32 %v1612, %v1295
          %v2092 = vadd.f32 %v1612, %v1296
          %v2093 = vadd.f32 %v1612, %v1297
          %v2094 = vadd.f32 %v1612, %v1298
          %v2095 = vadd.f32 %v1612, %v1299
          %v2096 = vadd.f32 %v1612, %v1300
          %v2097 = vadd.f32 %v1616, %v1285
          %v2098 = vadd.f32 %v1616, %v1286
          %v2099 = vadd.f32 %v1616, %v1287
          %v2100 = vadd.f32 %v1616, %v1288
          %v2101 = vadd.f32 %v1616, %v1289
          %v2102 = vadd.f32 %v1616, %v1290
          %v2103 = vadd.f32 %v1616, %v1291
          %v2104 = vadd.f32 %v1616, %v1292
          %v2105 = vadd.f32 %v1616, %v1293
          %v2106 = vadd.f32 %v1616, %v1294
          %v2107 = vadd.f32 %v1616, %v1295
          %v2108 = vadd.f32 %v1616, %v1296
          %v2109 = vadd.f32 %v1616, %v1297
          %v2110 = vadd.f32 %v1616, %v1298
          %v2111 = vadd.f32 %v1616, %v1299
          %v2112 = vadd.f32 %v1616, %v1300
          %v2113 = vadd.f32 %v1620, %v1285
          %v2114 = vadd.f32 %v1620, %v1286
          %v2115 = vadd.f32 %v1620, %v1287
          %v2116 = vadd.f32 %v1620, %v1288
          %v2117 = vadd.f32 %v1620, %v1289
          %v2118 = vadd.f32 %v1620, %v1290
          %v2119 = vadd.f32 %v1620, %v1291
          %v2120 = vadd.f32 %v1620, %v1292
          %v2121 = vadd.f32 %v1620, %v1293
          %v2122 = vadd.f32 %v1620, %v1294
          %v2123 = vadd.f32 %v1620, %v1295
          %v2124 = vadd.f32 %v1620, %v1296
          %v2125 = vadd.f32 %v1620, %v1297
          %v2126 = vadd.f32 %v1620, %v1298
          %v2127 = vadd.f32 %v1620, %v1299
          %v2128 = vadd.f32 %v1620, %v1300
          %v2129 = vadd.f32 %v1624, %v1285
          %v2130 = vadd.f32 %v1624, %v1286
          %v2131 = vadd.f32 %v1624, %v1287
          %v2132 = vadd.f32 %v1624, %v1288
          %v2133 = vadd.f32 %v1624, %v1289
          %v2134 = vadd.f32 %v1624, %v1290
          %v2135 = vadd.f32 %v1624, %v1291
          %v2136 = vadd.f32 %v1624, %v1292
          %v2137 = vadd.f32 %v1624, %v1293
          %v2138 = vadd.f32 %v1624, %v1294
          %v2139 = vadd.f32 %v1624, %v1295
          %v2140 = vadd.f32 %v1624, %v1296
          %v2141 = vadd.f32 %v1624, %v1297
          %v2142 = vadd.f32 %v1624, %v1298
          %v2143 = vadd.f32 %v1624, %v1299
          %v2144 = vadd.f32 %v1624, %v1300
          %v2145 = vadd.f32 %v1628, %v1285
          %v2146 = vadd.f32 %v1628, %v1286
          %v2147 = vadd.f32 %v1628, %v1287
          %v2148 = vadd.f32 %v1628, %v1288
          %v2149 = vadd.f32 %v1628, %v1289
          %v2150 = vadd.f32 %v1628, %v1290
          %v2151 = vadd.f32 %v1628, %v1291
          %v2152 = vadd.f32 %v1628, %v1292
          %v2153 = vadd.f32 %v1628, %v1293
          %v2154 = vadd.f32 %v1628, %v1294
          %v2155 = vadd.f32 %v1628, %v1295
          %v2156 = vadd.f32 %v1628, %v1296
          %v2157 = vadd.f32 %v1628, %v1297
          %v2158 = vadd.f32 %v1628, %v1298
          %v2159 = vadd.f32 %v1628, %v1299
          %v2160 = vadd.f32 %v1628, %v1300
          %v2161 = vadd.f32 %v1632, %v1285
          %v2162 = vadd.f32 %v1632, %v1286
          %v2163 = vadd.f32 %v1632, %v1287
          %v2164 = vadd.f32 %v1632, %v1288
          %v2165 = vadd.f32 %v1632, %v1289
          %v2166 = vadd.f32 %v1632, %v1290
          %v2167 = vadd.f32 %v1632, %v1291
          %v2168 = vadd.f32 %v1632, %v1292
          %v2169 = vadd.f32 %v1632, %v1293
          %v2170 = vadd.f32 %v1632, %v1294
          %v2171 = vadd.f32 %v1632, %v1295
          %v2172 = vadd.f32 %v1632, %v1296
          %v2173 = vadd.f32 %v1632, %v1297
          %v2174 = vadd.f32 %v1632, %v1298
          %v2175 = vadd.f32 %v1632, %v1299
          %v2176 = vadd.f32 %v1632, %v1300
          %v2177 = vxor.u32 %v1665, 2147483648
          %v2178 = vxor.u32 %v1666, 2147483648
          %v2179 = vxor.u32 %v1667, 2147483648
          %v2180 = vxor.u32 %v1668, 2147483648
          %v2181 = vxor.u32 %v1669, 2147483648
          %v2182 = vxor.u32 %v1670, 2147483648
          %v2183 = vxor.u32 %v1671, 2147483648
          %v2184 = vxor.u32 %v1672, 2147483648
          %v2185 = vxor.u32 %v1673, 2147483648
          %v2186 = vxor.u32 %v1674, 2147483648
          %v2187 = vxor.u32 %v1675, 2147483648
          %v2188 = vxor.u32 %v1676, 2147483648
          %v2189 = vxor.u32 %v1677, 2147483648
          %v2190 = vxor.u32 %v1678, 2147483648
          %v2191 = vxor.u32 %v1679, 2147483648
          %v2192 = vxor.u32 %v1680, 2147483648
          %v2193 = vxor.u32 %v1681, 2147483648
          %v2194 = vxor.u32 %v1682, 2147483648
          %v2195 = vxor.u32 %v1683, 2147483648
          %v2196 = vxor.u32 %v1684, 2147483648
          %v2197 = vxor.u32 %v1685, 2147483648
          %v2198 = vxor.u32 %v1686, 2147483648
          %v2199 = vxor.u32 %v1687, 2147483648
          %v2200 = vxor.u32 %v1688, 2147483648
          %v2201 = vxor.u32 %v1689, 2147483648
          %v2202 = vxor.u32 %v1690, 2147483648
          %v2203 = vxor.u32 %v1691, 2147483648
          %v2204 = vxor.u32 %v1692, 2147483648
          %v2205 = vxor.u32 %v1693, 2147483648
          %v2206 = vxor.u32 %v1694, 2147483648
          %v2207 = vxor.u32 %v1695, 2147483648
          %v2208 = vxor.u32 %v1696, 2147483648
          %v2209 = vxor.u32 %v1697, 2147483648
          %v2210 = vxor.u32 %v1698, 2147483648
          %v2211 = vxor.u32 %v1699, 2147483648
          %v2212 = vxor.u32 %v1700, 2147483648
          %v2213 = vxor.u32 %v1701, 2147483648
          %v2214 = vxor.u32 %v1702, 2147483648
          %v2215 = vxor.u32 %v1703, 2147483648
          %v2216 = vxor.u32 %v1704, 2147483648
          %v2217 = vxor.u32 %v1705, 2147483648
          %v2218 = vxor.u32 %v1706, 2147483648
          %v2219 = vxor.u32 %v1707, 2147483648
          %v2220 = vxor.u32 %v1708, 2147483648
          %v2221 = vxor.u32 %v1709, 2147483648
          %v2222 = vxor.u32 %v1710, 2147483648
          %v2223 = vxor.u32 %v1711, 2147483648
          %v2224 = vxor.u32 %v1712, 2147483648
          %v2225 = vxor.u32 %v1713, 2147483648
          %v2226 = vxor.u32 %v1714, 2147483648
          %v2227 = vxor.u32 %v1715, 2147483648
          %v2228 = vxor.u32 %v1716, 2147483648
          %v2229 = vxor.u32 %v1717, 2147483648
          %v2230 = vxor.u32 %v1718, 2147483648
          %v2231 = vxor.u32 %v1719, 2147483648
          %v2232 = vxor.u32 %v1720, 2147483648
          %v2233 = vxor.u32 %v1721, 2147483648
          %v2234 = vxor.u32 %v1722, 2147483648
          %v2235 = vxor.u32 %v1723, 2147483648
          %v2236 = vxor.u32 %v1724, 2147483648
          %v2237 = vxor.u32 %v1725, 2147483648
          %v2238 = vxor.u32 %v1726, 2147483648
          %v2239 = vxor.u32 %v1727, 2147483648
          %v2240 = vxor.u32 %v1728, 2147483648
          %v2241 = vxor.u32 %v1729, 2147483648
          %v2242 = vxor.u32 %v1730, 2147483648
          %v2243 = vxor.u32 %v1731, 2147483648
          %v2244 = vxor.u32 %v1732, 2147483648
          %v2245 = vxor.u32 %v1733, 2147483648
          %v2246 = vxor.u32 %v1734, 2147483648
          %v2247 = vxor.u32 %v1735, 2147483648
          %v2248 = vxor.u32 %v1736, 2147483648
          %v2249 = vxor.u32 %v1737, 2147483648
          %v2250 = vxor.u32 %v1738, 2147483648
          %v2251 = vxor.u32 %v1739, 2147483648
          %v2252 = vxor.u32 %v1740, 2147483648
          %v2253 = vxor.u32 %v1741, 2147483648
          %v2254 = vxor.u32 %v1742, 2147483648
          %v2255 = vxor.u32 %v1743, 2147483648
          %v2256 = vxor.u32 %v1744, 2147483648
          %v2257 = vxor.u32 %v1745, 2147483648
          %v2258 = vxor.u32 %v1746, 2147483648
          %v2259 = vxor.u32 %v1747, 2147483648
          %v2260 = vxor.u32 %v1748, 2147483648
          %v2261 = vxor.u32 %v1749, 2147483648
          %v2262 = vxor.u32 %v1750, 2147483648
          %v2263 = vxor.u32 %v1751, 2147483648
          %v2264 = vxor.u32 %v1752, 2147483648
          %v2265 = vxor.u32 %v1753, 2147483648
          %v2266 = vxor.u32 %v1754, 2147483648
          %v2267 = vxor.u32 %v1755, 2147483648
          %v2268 = vxor.u32 %v1756, 2147483648
          %v2269 = vxor.u32 %v1757, 2147483648
          %v2270 = vxor.u32 %v1758, 2147483648
          %v2271 = vxor.u32 %v1759, 2147483648
          %v2272 = vxor.u32 %v1760, 2147483648
          %v2273 = vxor.u32 %v1761, 2147483648
          %v2274 = vxor.u32 %v1762, 2147483648
          %v2275 = vxor.u32 %v1763, 2147483648
          %v2276 = vxor.u32 %v1764, 2147483648
          %v2277 = vxor.u32 %v1765, 2147483648
          %v2278 = vxor.u32 %v1766, 2147483648
          %v2279 = vxor.u32 %v1767, 2147483648
          %v2280 = vxor.u32 %v1768, 2147483648
          %v2281 = vxor.u32 %v1769, 2147483648
          %v2282 = vxor.u32 %v1770, 2147483648
          %v2283 = vxor.u32 %v1771, 2147483648
          %v2284 = vxor.u32 %v1772, 2147483648
          %v2285 = vxor.u32 %v1773, 2147483648
          %v2286 = vxor.u32 %v1774, 2147483648
          %v2287 = vxor.u32 %v1775, 2147483648
          %v2288 = vxor.u32 %v1776, 2147483648
          %v2289 = vxor.u32 %v1777, 2147483648
          %v2290 = vxor.u32 %v1778, 2147483648
          %v2291 = vxor.u32 %v1779, 2147483648
          %v2292 = vxor.u32 %v1780, 2147483648
          %v2293 = vxor.u32 %v1781, 2147483648
          %v2294 = vxor.u32 %v1782, 2147483648
          %v2295 = vxor.u32 %v1783, 2147483648
          %v2296 = vxor.u32 %v1784, 2147483648
          %v2297 = vxor.u32 %v1785, 2147483648
          %v2298 = vxor.u32 %v1786, 2147483648
          %v2299 = vxor.u32 %v1787, 2147483648
          %v2300 = vxor.u32 %v1788, 2147483648
          %v2301 = vxor.u32 %v1789, 2147483648
          %v2302 = vxor.u32 %v1790, 2147483648
          %v2303 = vxor.u32 %v1791, 2147483648
          %v2304 = vxor.u32 %v1792, 2147483648
          %v2305 = vxor.u32 %v1793, 2147483648
          %v2306 = vxor.u32 %v1794, 2147483648
          %v2307 = vxor.u32 %v1795, 2147483648
          %v2308 = vxor.u32 %v1796, 2147483648
          %v2309 = vxor.u32 %v1797, 2147483648
          %v2310 = vxor.u32 %v1798, 2147483648
          %v2311 = vxor.u32 %v1799, 2147483648
          %v2312 = vxor.u32 %v1800, 2147483648
          %v2313 = vxor.u32 %v1801, 2147483648
          %v2314 = vxor.u32 %v1802, 2147483648
          %v2315 = vxor.u32 %v1803, 2147483648
          %v2316 = vxor.u32 %v1804, 2147483648
          %v2317 = vxor.u32 %v1805, 2147483648
          %v2318 = vxor.u32 %v1806, 2147483648
          %v2319 = vxor.u32 %v1807, 2147483648
          %v2320 = vxor.u32 %v1808, 2147483648
          %v2321 = vxor.u32 %v1809, 2147483648
          %v2322 = vxor.u32 %v1810, 2147483648
          %v2323 = vxor.u32 %v1811, 2147483648
          %v2324 = vxor.u32 %v1812, 2147483648
          %v2325 = vxor.u32 %v1813, 2147483648
          %v2326 = vxor.u32 %v1814, 2147483648
          %v2327 = vxor.u32 %v1815, 2147483648
          %v2328 = vxor.u32 %v1816, 2147483648
          %v2329 = vxor.u32 %v1817, 2147483648
          %v2330 = vxor.u32 %v1818, 2147483648
          %v2331 = vxor.u32 %v1819, 2147483648
          %v2332 = vxor.u32 %v1820, 2147483648
          %v2333 = vxor.u32 %v1821, 2147483648
          %v2334 = vxor.u32 %v1822, 2147483648
          %v2335 = vxor.u32 %v1823, 2147483648
          %v2336 = vxor.u32 %v1824, 2147483648
          %v2337 = vxor.u32 %v1825, 2147483648
          %v2338 = vxor.u32 %v1826, 2147483648
          %v2339 = vxor.u32 %v1827, 2147483648
          %v2340 = vxor.u32 %v1828, 2147483648
          %v2341 = vxor.u32 %v1829, 2147483648
          %v2342 = vxor.u32 %v1830, 2147483648
          %v2343 = vxor.u32 %v1831, 2147483648
          %v2344 = vxor.u32 %v1832, 2147483648
          %v2345 = vxor.u32 %v1833, 2147483648
          %v2346 = vxor.u32 %v1834, 2147483648
          %v2347 = vxor.u32 %v1835, 2147483648
          %v2348 = vxor.u32 %v1836, 2147483648
          %v2349 = vxor.u32 %v1837, 2147483648
          %v2350 = vxor.u32 %v1838, 2147483648
          %v2351 = vxor.u32 %v1839, 2147483648
          %v2352 = vxor.u32 %v1840, 2147483648
          %v2353 = vxor.u32 %v1841, 2147483648
          %v2354 = vxor.u32 %v1842, 2147483648
          %v2355 = vxor.u32 %v1843, 2147483648
          %v2356 = vxor.u32 %v1844, 2147483648
          %v2357 = vxor.u32 %v1845, 2147483648
          %v2358 = vxor.u32 %v1846, 2147483648
          %v2359 = vxor.u32 %v1847, 2147483648
          %v2360 = vxor.u32 %v1848, 2147483648
          %v2361 = vxor.u32 %v1849, 2147483648
          %v2362 = vxor.u32 %v1850, 2147483648
          %v2363 = vxor.u32 %v1851, 2147483648
          %v2364 = vxor.u32 %v1852, 2147483648
          %v2365 = vxor.u32 %v1853, 2147483648
          %v2366 = vxor.u32 %v1854, 2147483648
          %v2367 = vxor.u32 %v1855, 2147483648
          %v2368 = vxor.u32 %v1856, 2147483648
          %v2369 = vxor.u32 %v1857, 2147483648
          %v2370 = vxor.u32 %v1858, 2147483648
          %v2371 = vxor.u32 %v1859, 2147483648
          %v2372 = vxor.u32 %v1860, 2147483648
          %v2373 = vxor.u32 %v1861, 2147483648
          %v2374 = vxor.u32 %v1862, 2147483648
          %v2375 = vxor.u32 %v1863, 2147483648
          %v2376 = vxor.u32 %v1864, 2147483648
          %v2377 = vxor.u32 %v1865, 2147483648
          %v2378 = vxor.u32 %v1866, 2147483648
          %v2379 = vxor.u32 %v1867, 2147483648
          %v2380 = vxor.u32 %v1868, 2147483648
          %v2381 = vxor.u32 %v1869, 2147483648
          %v2382 = vxor.u32 %v1870, 2147483648
          %v2383 = vxor.u32 %v1871, 2147483648
          %v2384 = vxor.u32 %v1872, 2147483648
          %v2385 = vxor.u32 %v1873, 2147483648
          %v2386 = vxor.u32 %v1874, 2147483648
          %v2387 = vxor.u32 %v1875, 2147483648
          %v2388 = vxor.u32 %v1876, 2147483648
          %v2389 = vxor.u32 %v1877, 2147483648
          %v2390 = vxor.u32 %v1878, 2147483648
          %v2391 = vxor.u32 %v1879, 2147483648
          %v2392 = vxor.u32 %v1880, 2147483648
          %v2393 = vxor.u32 %v1881, 2147483648
          %v2394 = vxor.u32 %v1882, 2147483648
          %v2395 = vxor.u32 %v1883, 2147483648
          %v2396 = vxor.u32 %v1884, 2147483648
          %v2397 = vxor.u32 %v1885, 2147483648
          %v2398 = vxor.u32 %v1886, 2147483648
          %v2399 = vxor.u32 %v1887, 2147483648
          %v2400 = vxor.u32 %v1888, 2147483648
          %v2401 = vxor.u32 %v1889, 2147483648
          %v2402 = vxor.u32 %v1890, 2147483648
          %v2403 = vxor.u32 %v1891, 2147483648
          %v2404 = vxor.u32 %v1892, 2147483648
          %v2405 = vxor.u32 %v1893, 2147483648
          %v2406 = vxor.u32 %v1894, 2147483648
          %v2407 = vxor.u32 %v1895, 2147483648
          %v2408 = vxor.u32 %v1896, 2147483648
          %v2409 = vxor.u32 %v1897, 2147483648
          %v2410 = vxor.u32 %v1898, 2147483648
          %v2411 = vxor.u32 %v1899, 2147483648
          %v2412 = vxor.u32 %v1900, 2147483648
          %v2413 = vxor.u32 %v1901, 2147483648
          %v2414 = vxor.u32 %v1902, 2147483648
          %v2415 = vxor.u32 %v1903, 2147483648
          %v2416 = vxor.u32 %v1904, 2147483648
          %v2417 = vxor.u32 %v1905, 2147483648
          %v2418 = vxor.u32 %v1906, 2147483648
          %v2419 = vxor.u32 %v1907, 2147483648
          %v2420 = vxor.u32 %v1908, 2147483648
          %v2421 = vxor.u32 %v1909, 2147483648
          %v2422 = vxor.u32 %v1910, 2147483648
          %v2423 = vxor.u32 %v1911, 2147483648
          %v2424 = vxor.u32 %v1912, 2147483648
          %v2425 = vxor.u32 %v1913, 2147483648
          %v2426 = vxor.u32 %v1914, 2147483648
          %v2427 = vxor.u32 %v1915, 2147483648
          %v2428 = vxor.u32 %v1916, 2147483648
          %v2429 = vxor.u32 %v1917, 2147483648
          %v2430 = vxor.u32 %v1918, 2147483648
          %v2431 = vxor.u32 %v1919, 2147483648
          %v2432 = vxor.u32 %v1920, 2147483648
          %v2433 = vxor.u32 %v1921, 2147483648
          %v2434 = vxor.u32 %v1922, 2147483648
          %v2435 = vxor.u32 %v1923, 2147483648
          %v2436 = vxor.u32 %v1924, 2147483648
          %v2437 = vxor.u32 %v1925, 2147483648
          %v2438 = vxor.u32 %v1926, 2147483648
          %v2439 = vxor.u32 %v1927, 2147483648
          %v2440 = vxor.u32 %v1928, 2147483648
          %v2441 = vxor.u32 %v1929, 2147483648
          %v2442 = vxor.u32 %v1930, 2147483648
          %v2443 = vxor.u32 %v1931, 2147483648
          %v2444 = vxor.u32 %v1932, 2147483648
          %v2445 = vxor.u32 %v1933, 2147483648
          %v2446 = vxor.u32 %v1934, 2147483648
          %v2447 = vxor.u32 %v1935, 2147483648
          %v2448 = vxor.u32 %v1936, 2147483648
          %v2449 = vxor.u32 %v1937, 2147483648
          %v2450 = vxor.u32 %v1938, 2147483648
          %v2451 = vxor.u32 %v1939, 2147483648
          %v2452 = vxor.u32 %v1940, 2147483648
          %v2453 = vxor.u32 %v1941, 2147483648
          %v2454 = vxor.u32 %v1942, 2147483648
          %v2455 = vxor.u32 %v1943, 2147483648
          %v2456 = vxor.u32 %v1944, 2147483648
          %v2457 = vxor.u32 %v1945, 2147483648
          %v2458 = vxor.u32 %v1946, 2147483648
          %v2459 = vxor.u32 %v1947, 2147483648
          %v2460 = vxor.u32 %v1948, 2147483648
          %v2461 = vxor.u32 %v1949, 2147483648
          %v2462 = vxor.u32 %v1950, 2147483648
          %v2463 = vxor.u32 %v1951, 2147483648
          %v2464 = vxor.u32 %v1952, 2147483648
          %v2465 = vxor.u32 %v1953, 2147483648
          %v2466 = vxor.u32 %v1954, 2147483648
          %v2467 = vxor.u32 %v1955, 2147483648
          %v2468 = vxor.u32 %v1956, 2147483648
          %v2469 = vxor.u32 %v1957, 2147483648
          %v2470 = vxor.u32 %v1958, 2147483648
          %v2471 = vxor.u32 %v1959, 2147483648
          %v2472 = vxor.u32 %v1960, 2147483648
          %v2473 = vxor.u32 %v1961, 2147483648
          %v2474 = vxor.u32 %v1962, 2147483648
          %v2475 = vxor.u32 %v1963, 2147483648
          %v2476 = vxor.u32 %v1964, 2147483648
          %v2477 = vxor.u32 %v1965, 2147483648
          %v2478 = vxor.u32 %v1966, 2147483648
          %v2479 = vxor.u32 %v1967, 2147483648
          %v2480 = vxor.u32 %v1968, 2147483648
          %v2481 = vxor.u32 %v1969, 2147483648
          %v2482 = vxor.u32 %v1970, 2147483648
          %v2483 = vxor.u32 %v1971, 2147483648
          %v2484 = vxor.u32 %v1972, 2147483648
          %v2485 = vxor.u32 %v1973, 2147483648
          %v2486 = vxor.u32 %v1974, 2147483648
          %v2487 = vxor.u32 %v1975, 2147483648
          %v2488 = vxor.u32 %v1976, 2147483648
          %v2489 = vxor.u32 %v1977, 2147483648
          %v2490 = vxor.u32 %v1978, 2147483648
          %v2491 = vxor.u32 %v1979, 2147483648
          %v2492 = vxor.u32 %v1980, 2147483648
          %v2493 = vxor.u32 %v1981, 2147483648
          %v2494 = vxor.u32 %v1982, 2147483648
          %v2495 = vxor.u32 %v1983, 2147483648
          %v2496 = vxor.u32 %v1984, 2147483648
          %v2497 = vxor.u32 %v1985, 2147483648
          %v2498 = vxor.u32 %v1986, 2147483648
          %v2499 = vxor.u32 %v1987, 2147483648
          %v2500 = vxor.u32 %v1988, 2147483648
          %v2501 = vxor.u32 %v1989, 2147483648
          %v2502 = vxor.u32 %v1990, 2147483648
          %v2503 = vxor.u32 %v1991, 2147483648
          %v2504 = vxor.u32 %v1992, 2147483648
          %v2505 = vxor.u32 %v1993, 2147483648
          %v2506 = vxor.u32 %v1994, 2147483648
          %v2507 = vxor.u32 %v1995, 2147483648
          %v2508 = vxor.u32 %v1996, 2147483648
          %v2509 = vxor.u32 %v1997, 2147483648
          %v2510 = vxor.u32 %v1998, 2147483648
          %v2511 = vxor.u32 %v1999, 2147483648
          %v2512 = vxor.u32 %v2000, 2147483648
          %v2513 = vxor.u32 %v2001, 2147483648
          %v2514 = vxor.u32 %v2002, 2147483648
          %v2515 = vxor.u32 %v2003, 2147483648
          %v2516 = vxor.u32 %v2004, 2147483648
          %v2517 = vxor.u32 %v2005, 2147483648
          %v2518 = vxor.u32 %v2006, 2147483648
          %v2519 = vxor.u32 %v2007, 2147483648
          %v2520 = vxor.u32 %v2008, 2147483648
          %v2521 = vxor.u32 %v2009, 2147483648
          %v2522 = vxor.u32 %v2010, 2147483648
          %v2523 = vxor.u32 %v2011, 2147483648
          %v2524 = vxor.u32 %v2012, 2147483648
          %v2525 = vxor.u32 %v2013, 2147483648
          %v2526 = vxor.u32 %v2014, 2147483648
          %v2527 = vxor.u32 %v2015, 2147483648
          %v2528 = vxor.u32 %v2016, 2147483648
          %v2529 = vxor.u32 %v2017, 2147483648
          %v2530 = vxor.u32 %v2018, 2147483648
          %v2531 = vxor.u32 %v2019, 2147483648
          %v2532 = vxor.u32 %v2020, 2147483648
          %v2533 = vxor.u32 %v2021, 2147483648
          %v2534 = vxor.u32 %v2022, 2147483648
          %v2535 = vxor.u32 %v2023, 2147483648
          %v2536 = vxor.u32 %v2024, 2147483648
          %v2537 = vxor.u32 %v2025, 2147483648
          %v2538 = vxor.u32 %v2026, 2147483648
          %v2539 = vxor.u32 %v2027, 2147483648
          %v2540 = vxor.u32 %v2028, 2147483648
          %v2541 = vxor.u32 %v2029, 2147483648
          %v2542 = vxor.u32 %v2030, 2147483648
          %v2543 = vxor.u32 %v2031, 2147483648
          %v2544 = vxor.u32 %v2032, 2147483648
          %v2545 = vxor.u32 %v2033, 2147483648
          %v2546 = vxor.u32 %v2034, 2147483648
          %v2547 = vxor.u32 %v2035, 2147483648
          %v2548 = vxor.u32 %v2036, 2147483648
          %v2549 = vxor.u32 %v2037, 2147483648
          %v2550 = vxor.u32 %v2038, 2147483648
          %v2551 = vxor.u32 %v2039, 2147483648
          %v2552 = vxor.u32 %v2040, 2147483648
          %v2553 = vxor.u32 %v2041, 2147483648
          %v2554 = vxor.u32 %v2042, 2147483648
          %v2555 = vxor.u32 %v2043, 2147483648
          %v2556 = vxor.u32 %v2044, 2147483648
          %v2557 = vxor.u32 %v2045, 2147483648
          %v2558 = vxor.u32 %v2046, 2147483648
          %v2559 = vxor.u32 %v2047, 2147483648
          %v2560 = vxor.u32 %v2048, 2147483648
          %v2561 = vxor.u32 %v2049, 2147483648
          %v2562 = vxor.u32 %v2050, 2147483648
          %v2563 = vxor.u32 %v2051, 2147483648
          %v2564 = vxor.u32 %v2052, 2147483648
          %v2565 = vxor.u32 %v2053, 2147483648
          %v2566 = vxor.u32 %v2054, 2147483648
          %v2567 = vxor.u32 %v2055, 2147483648
          %v2568 = vxor.u32 %v2056, 2147483648
          %v2569 = vxor.u32 %v2057, 2147483648
          %v2570 = vxor.u32 %v2058, 2147483648
          %v2571 = vxor.u32 %v2059, 2147483648
          %v2572 = vxor.u32 %v2060, 2147483648
          %v2573 = vxor.u32 %v2061, 2147483648
          %v2574 = vxor.u32 %v2062, 2147483648
          %v2575 = vxor.u32 %v2063, 2147483648
          %v2576 = vxor.u32 %v2064, 2147483648
          %v2577 = vxor.u32 %v2065, 2147483648
          %v2578 = vxor.u32 %v2066, 2147483648
          %v2579 = vxor.u32 %v2067, 2147483648
          %v2580 = vxor.u32 %v2068, 2147483648
          %v2581 = vxor.u32 %v2069, 2147483648
          %v2582 = vxor.u32 %v2070, 2147483648
          %v2583 = vxor.u32 %v2071, 2147483648
          %v2584 = vxor.u32 %v2072, 2147483648
          %v2585 = vxor.u32 %v2073, 2147483648
          %v2586 = vxor.u32 %v2074, 2147483648
          %v2587 = vxor.u32 %v2075, 2147483648
          %v2588 = vxor.u32 %v2076, 2147483648
          %v2589 = vxor.u32 %v2077, 2147483648
          %v2590 = vxor.u32 %v2078, 2147483648
          %v2591 = vxor.u32 %v2079, 2147483648
          %v2592 = vxor.u32 %v2080, 2147483648
          %v2593 = vxor.u32 %v2081, 2147483648
          %v2594 = vxor.u32 %v2082, 2147483648
          %v2595 = vxor.u32 %v2083, 2147483648
          %v2596 = vxor.u32 %v2084, 2147483648
          %v2597 = vxor.u32 %v2085, 2147483648
          %v2598 = vxor.u32 %v2086, 2147483648
          %v2599 = vxor.u32 %v2087, 2147483648
          %v2600 = vxor.u32 %v2088, 2147483648
          %v2601 = vxor.u32 %v2089, 2147483648
          %v2602 = vxor.u32 %v2090, 2147483648
          %v2603 = vxor.u32 %v2091, 2147483648
          %v2604 = vxor.u32 %v2092, 2147483648
          %v2605 = vxor.u32 %v2093, 2147483648
          %v2606 = vxor.u32 %v2094, 2147483648
          %v2607 = vxor.u32 %v2095, 2147483648
          %v2608 = vxor.u32 %v2096, 2147483648
          %v2609 = vxor.u32 %v2097, 2147483648
          %v2610 = vxor.u32 %v2098, 2147483648
          %v2611 = vxor.u32 %v2099, 2147483648
          %v2612 = vxor.u32 %v2100, 2147483648
          %v2613 = vxor.u32 %v2101, 2147483648
          %v2614 = vxor.u32 %v2102, 2147483648
          %v2615 = vxor.u32 %v2103, 2147483648
          %v2616 = vxor.u32 %v2104, 2147483648
          %v2617 = vxor.u32 %v2105, 2147483648
          %v2618 = vxor.u32 %v2106, 2147483648
          %v2619 = vxor.u32 %v2107, 2147483648
          %v2620 = vxor.u32 %v2108, 2147483648
          %v2621 = vxor.u32 %v2109, 2147483648
          %v2622 = vxor.u32 %v2110, 2147483648
          %v2623 = vxor.u32 %v2111, 2147483648
          %v2624 = vxor.u32 %v2112, 2147483648
          %v2625 = vxor.u32 %v2113, 2147483648
          %v2626 = vxor.u32 %v2114, 2147483648
          %v2627 = vxor.u32 %v2115, 2147483648
          %v2628 = vxor.u32 %v2116, 2147483648
          %v2629 = vxor.u32 %v2117, 2147483648
          %v2630 = vxor.u32 %v2118, 2147483648
          %v2631 = vxor.u32 %v2119, 2147483648
          %v2632 = vxor.u32 %v2120, 2147483648
          %v2633 = vxor.u32 %v2121, 2147483648
          %v2634 = vxor.u32 %v2122, 2147483648
          %v2635 = vxor.u32 %v2123, 2147483648
          %v2636 = vxor.u32 %v2124, 2147483648
          %v2637 = vxor.u32 %v2125, 2147483648
          %v2638 = vxor.u32 %v2126, 2147483648
          %v2639 = vxor.u32 %v2127, 2147483648
          %v2640 = vxor.u32 %v2128, 2147483648
          %v2641 = vxor.u32 %v2129, 2147483648
          %v2642 = vxor.u32 %v2130, 2147483648
          %v2643 = vxor.u32 %v2131, 2147483648
          %v2644 = vxor.u32 %v2132, 2147483648
          %v2645 = vxor.u32 %v2133, 2147483648
          %v2646 = vxor.u32 %v2134, 2147483648
          %v2647 = vxor.u32 %v2135, 2147483648
          %v2648 = vxor.u32 %v2136, 2147483648
          %v2649 = vxor.u32 %v2137, 2147483648
          %v2650 = vxor.u32 %v2138, 2147483648
          %v2651 = vxor.u32 %v2139, 2147483648
          %v2652 = vxor.u32 %v2140, 2147483648
          %v2653 = vxor.u32 %v2141, 2147483648
          %v2654 = vxor.u32 %v2142, 2147483648
          %v2655 = vxor.u32 %v2143, 2147483648
          %v2656 = vxor.u32 %v2144, 2147483648
          %v2657 = vxor.u32 %v2145, 2147483648
          %v2658 = vxor.u32 %v2146, 2147483648
          %v2659 = vxor.u32 %v2147, 2147483648
          %v2660 = vxor.u32 %v2148, 2147483648
          %v2661 = vxor.u32 %v2149, 2147483648
          %v2662 = vxor.u32 %v2150, 2147483648
          %v2663 = vxor.u32 %v2151, 2147483648
          %v2664 = vxor.u32 %v2152, 2147483648
          %v2665 = vxor.u32 %v2153, 2147483648
          %v2666 = vxor.u32 %v2154, 2147483648
          %v2667 = vxor.u32 %v2155, 2147483648
          %v2668 = vxor.u32 %v2156, 2147483648
          %v2669 = vxor.u32 %v2157, 2147483648
          %v2670 = vxor.u32 %v2158, 2147483648
          %v2671 = vxor.u32 %v2159, 2147483648
          %v2672 = vxor.u32 %v2160, 2147483648
          %v2673 = vxor.u32 %v2161, 2147483648
          %v2674 = vxor.u32 %v2162, 2147483648
          %v2675 = vxor.u32 %v2163, 2147483648
          %v2676 = vxor.u32 %v2164, 2147483648
          %v2677 = vxor.u32 %v2165, 2147483648
          %v2678 = vxor.u32 %v2166, 2147483648
          %v2679 = vxor.u32 %v2167, 2147483648
          %v2680 = vxor.u32 %v2168, 2147483648
          %v2681 = vxor.u32 %v2169, 2147483648
          %v2682 = vxor.u32 %v2170, 2147483648
          %v2683 = vxor.u32 %v2171, 2147483648
          %v2684 = vxor.u32 %v2172, 2147483648
          %v2685 = vxor.u32 %v2173, 2147483648
          %v2686 = vxor.u32 %v2174, 2147483648
          %v2687 = vxor.u32 %v2175, 2147483648
          %v2688 = vxor.u32 %v2176, 2147483648
          %v2689 = vmul.f32 %v2177, 1.442695
          %v2690 = vpow.pop %v2689
          %v2691 = vmul.f32 %v2178, 1.442695
          %v2692 = vpow.pop %v2691
          %v2693 = vmul.f32 %v2179, 1.442695
          %v2694 = vpow.pop %v2693
          %v2695 = vmul.f32 %v2180, 1.442695
          %v2696 = vpow.pop %v2695
          %v2697 = vmul.f32 %v2181, 1.442695
          %v2698 = vpow.pop %v2697
          %v2699 = vmul.f32 %v2182, 1.442695
          %v2700 = vpow.pop %v2699
          %v2701 = vmul.f32 %v2183, 1.442695
          %v2702 = vpow.pop %v2701
          %v2703 = vmul.f32 %v2184, 1.442695
          %v2704 = vpow.pop %v2703
          %v2705 = vmul.f32 %v2185, 1.442695
          %v2706 = vpow.pop %v2705
          %v2707 = vmul.f32 %v2186, 1.442695
          %v2708 = vpow.pop %v2707
          %v2709 = vmul.f32 %v2187, 1.442695
          %v2710 = vpow.pop %v2709
          %v2711 = vmul.f32 %v2188, 1.442695
          %v2712 = vpow.pop %v2711
          %v2713 = vmul.f32 %v2189, 1.442695
          %v2714 = vpow.pop %v2713
          %v2715 = vmul.f32 %v2190, 1.442695
          %v2716 = vpow.pop %v2715
          %v2717 = vmul.f32 %v2191, 1.442695
          %v2718 = vpow.pop %v2717
          %v2719 = vmul.f32 %v2192, 1.442695
          %v2720 = vpow.pop %v2719
          %v2721 = vmul.f32 %v2193, 1.442695
          %v2722 = vpow.pop %v2721
          %v2723 = vmul.f32 %v2194, 1.442695
          %v2724 = vpow.pop %v2723
          %v2725 = vmul.f32 %v2195, 1.442695
          %v2726 = vpow.pop %v2725
          %v2727 = vmul.f32 %v2196, 1.442695
          %v2728 = vpow.pop %v2727
          %v2729 = vmul.f32 %v2197, 1.442695
          %v2730 = vpow.pop %v2729
          %v2731 = vmul.f32 %v2198, 1.442695
          %v2732 = vpow.pop %v2731
          %v2733 = vmul.f32 %v2199, 1.442695
          %v2734 = vpow.pop %v2733
          %v2735 = vmul.f32 %v2200, 1.442695
          %v2736 = vpow.pop %v2735
          %v2737 = vmul.f32 %v2201, 1.442695
          %v2738 = vpow.pop %v2737
          %v2739 = vmul.f32 %v2202, 1.442695
          %v2740 = vpow.pop %v2739
          %v2741 = vmul.f32 %v2203, 1.442695
          %v2742 = vpow.pop %v2741
          %v2743 = vmul.f32 %v2204, 1.442695
          %v2744 = vpow.pop %v2743
          %v2745 = vmul.f32 %v2205, 1.442695
          %v2746 = vpow.pop %v2745
          %v2747 = vmul.f32 %v2206, 1.442695
          %v2748 = vpow.pop %v2747
          %v2749 = vmul.f32 %v2207, 1.442695
          %v2750 = vpow.pop %v2749
          %v2751 = vmul.f32 %v2208, 1.442695
          %v2752 = vpow.pop %v2751
          %v2753 = vmul.f32 %v2209, 1.442695
          %v2754 = vpow.pop %v2753
          %v2755 = vmul.f32 %v2210, 1.442695
          %v2756 = vpow.pop %v2755
          %v2757 = vmul.f32 %v2211, 1.442695
          %v2758 = vpow.pop %v2757
          %v2759 = vmul.f32 %v2212, 1.442695
          %v2760 = vpow.pop %v2759
          %v2761 = vmul.f32 %v2213, 1.442695
          %v2762 = vpow.pop %v2761
          %v2763 = vmul.f32 %v2214, 1.442695
          %v2764 = vpow.pop %v2763
          %v2765 = vmul.f32 %v2215, 1.442695
          %v2766 = vpow.pop %v2765
          %v2767 = vmul.f32 %v2216, 1.442695
          %v2768 = vpow.pop %v2767
          %v2769 = vmul.f32 %v2217, 1.442695
          %v2770 = vpow.pop %v2769
          %v2771 = vmul.f32 %v2218, 1.442695
          %v2772 = vpow.pop %v2771
          %v2773 = vmul.f32 %v2219, 1.442695
          %v2774 = vpow.pop %v2773
          %v2775 = vmul.f32 %v2220, 1.442695
          %v2776 = vpow.pop %v2775
          %v2777 = vmul.f32 %v2221, 1.442695
          %v2778 = vpow.pop %v2777
          %v2779 = vmul.f32 %v2222, 1.442695
          %v2780 = vpow.pop %v2779
          %v2781 = vmul.f32 %v2223, 1.442695
          %v2782 = vpow.pop %v2781
          %v2783 = vmul.f32 %v2224, 1.442695
          %v2784 = vpow.pop %v2783
          %v2785 = vmul.f32 %v2225, 1.442695
          %v2786 = vpow.pop %v2785
          %v2787 = vmul.f32 %v2226, 1.442695
          %v2788 = vpow.pop %v2787
          %v2789 = vmul.f32 %v2227, 1.442695
          %v2790 = vpow.pop %v2789
          %v2791 = vmul.f32 %v2228, 1.442695
          %v2792 = vpow.pop %v2791
          %v2793 = vmul.f32 %v2229, 1.442695
          %v2794 = vpow.pop %v2793
          %v2795 = vmul.f32 %v2230, 1.442695
          %v2796 = vpow.pop %v2795
          %v2797 = vmul.f32 %v2231, 1.442695
          %v2798 = vpow.pop %v2797
          %v2799 = vmul.f32 %v2232, 1.442695
          %v2800 = vpow.pop %v2799
          %v2801 = vmul.f32 %v2233, 1.442695
          %v2802 = vpow.pop %v2801
          %v2803 = vmul.f32 %v2234, 1.442695
          %v2804 = vpow.pop %v2803
          %v2805 = vmul.f32 %v2235, 1.442695
          %v2806 = vpow.pop %v2805
          %v2807 = vmul.f32 %v2236, 1.442695
          %v2808 = vpow.pop %v2807
          %v2809 = vmul.f32 %v2237, 1.442695
          %v2810 = vpow.pop %v2809
          %v2811 = vmul.f32 %v2238, 1.442695
          %v2812 = vpow.pop %v2811
          %v2813 = vmul.f32 %v2239, 1.442695
          %v2814 = vpow.pop %v2813
          %v2815 = vmul.f32 %v2240, 1.442695
          %v2816 = vpow.pop %v2815
          %v2817 = vmul.f32 %v2241, 1.442695
          %v2818 = vpow.pop %v2817
          %v2819 = vmul.f32 %v2242, 1.442695
          %v2820 = vpow.pop %v2819
          %v2821 = vmul.f32 %v2243, 1.442695
          %v2822 = vpow.pop %v2821
          %v2823 = vmul.f32 %v2244, 1.442695
          %v2824 = vpow.pop %v2823
          %v2825 = vmul.f32 %v2245, 1.442695
          %v2826 = vpow.pop %v2825
          %v2827 = vmul.f32 %v2246, 1.442695
          %v2828 = vpow.pop %v2827
          %v2829 = vmul.f32 %v2247, 1.442695
          %v2830 = vpow.pop %v2829
          %v2831 = vmul.f32 %v2248, 1.442695
          %v2832 = vpow.pop %v2831
          %v2833 = vmul.f32 %v2249, 1.442695
          %v2834 = vpow.pop %v2833
          %v2835 = vmul.f32 %v2250, 1.442695
          %v2836 = vpow.pop %v2835
          %v2837 = vmul.f32 %v2251, 1.442695
          %v2838 = vpow.pop %v2837
          %v2839 = vmul.f32 %v2252, 1.442695
          %v2840 = vpow.pop %v2839
          %v2841 = vmul.f32 %v2253, 1.442695
          %v2842 = vpow.pop %v2841
          %v2843 = vmul.f32 %v2254, 1.442695
          %v2844 = vpow.pop %v2843
          %v2845 = vmul.f32 %v2255, 1.442695
          %v2846 = vpow.pop %v2845
          %v2847 = vmul.f32 %v2256, 1.442695
          %v2848 = vpow.pop %v2847
          %v2849 = vmul.f32 %v2257, 1.442695
          %v2850 = vpow.pop %v2849
          %v2851 = vmul.f32 %v2258, 1.442695
          %v2852 = vpow.pop %v2851
          %v2853 = vmul.f32 %v2259, 1.442695
          %v2854 = vpow.pop %v2853
          %v2855 = vmul.f32 %v2260, 1.442695
          %v2856 = vpow.pop %v2855
          %v2857 = vmul.f32 %v2261, 1.442695
          %v2858 = vpow.pop %v2857
          %v2859 = vmul.f32 %v2262, 1.442695
          %v2860 = vpow.pop %v2859
          %v2861 = vmul.f32 %v2263, 1.442695
          %v2862 = vpow.pop %v2861
          %v2863 = vmul.f32 %v2264, 1.442695
          %v2864 = vpow.pop %v2863
          %v2865 = vmul.f32 %v2265, 1.442695
          %v2866 = vpow.pop %v2865
          %v2867 = vmul.f32 %v2266, 1.442695
          %v2868 = vpow.pop %v2867
          %v2869 = vmul.f32 %v2267, 1.442695
          %v2870 = vpow.pop %v2869
          %v2871 = vmul.f32 %v2268, 1.442695
          %v2872 = vpow.pop %v2871
          %v2873 = vmul.f32 %v2269, 1.442695
          %v2874 = vpow.pop %v2873
          %v2875 = vmul.f32 %v2270, 1.442695
          %v2876 = vpow.pop %v2875
          %v2877 = vmul.f32 %v2271, 1.442695
          %v2878 = vpow.pop %v2877
          %v2879 = vmul.f32 %v2272, 1.442695
          %v2880 = vpow.pop %v2879
          %v2881 = vmul.f32 %v2273, 1.442695
          %v2882 = vpow.pop %v2881
          %v2883 = vmul.f32 %v2274, 1.442695
          %v2884 = vpow.pop %v2883
          %v2885 = vmul.f32 %v2275, 1.442695
          %v2886 = vpow.pop %v2885
          %v2887 = vmul.f32 %v2276, 1.442695
          %v2888 = vpow.pop %v2887
          %v2889 = vmul.f32 %v2277, 1.442695
          %v2890 = vpow.pop %v2889
          %v2891 = vmul.f32 %v2278, 1.442695
          %v2892 = vpow.pop %v2891
          %v2893 = vmul.f32 %v2279, 1.442695
          %v2894 = vpow.pop %v2893
          %v2895 = vmul.f32 %v2280, 1.442695
          %v2896 = vpow.pop %v2895
          %v2897 = vmul.f32 %v2281, 1.442695
          %v2898 = vpow.pop %v2897
          %v2899 = vmul.f32 %v2282, 1.442695
          %v2900 = vpow.pop %v2899
          %v2901 = vmul.f32 %v2283, 1.442695
          %v2902 = vpow.pop %v2901
          %v2903 = vmul.f32 %v2284, 1.442695
          %v2904 = vpow.pop %v2903
          %v2905 = vmul.f32 %v2285, 1.442695
          %v2906 = vpow.pop %v2905
          %v2907 = vmul.f32 %v2286, 1.442695
          %v2908 = vpow.pop %v2907
          %v2909 = vmul.f32 %v2287, 1.442695
          %v2910 = vpow.pop %v2909
          %v2911 = vmul.f32 %v2288, 1.442695
          %v2912 = vpow.pop %v2911
          %v2913 = vmul.f32 %v2289, 1.442695
          %v2914 = vpow.pop %v2913
          %v2915 = vmul.f32 %v2290, 1.442695
          %v2916 = vpow.pop %v2915
          %v2917 = vmul.f32 %v2291, 1.442695
          %v2918 = vpow.pop %v2917
          %v2919 = vmul.f32 %v2292, 1.442695
          %v2920 = vpow.pop %v2919
          %v2921 = vmul.f32 %v2293, 1.442695
          %v2922 = vpow.pop %v2921
          %v2923 = vmul.f32 %v2294, 1.442695
          %v2924 = vpow.pop %v2923
          %v2925 = vmul.f32 %v2295, 1.442695
          %v2926 = vpow.pop %v2925
          %v2927 = vmul.f32 %v2296, 1.442695
          %v2928 = vpow.pop %v2927
          %v2929 = vmul.f32 %v2297, 1.442695
          %v2930 = vpow.pop %v2929
          %v2931 = vmul.f32 %v2298, 1.442695
          %v2932 = vpow.pop %v2931
          %v2933 = vmul.f32 %v2299, 1.442695
          %v2934 = vpow.pop %v2933
          %v2935 = vmul.f32 %v2300, 1.442695
          %v2936 = vpow.pop %v2935
          %v2937 = vmul.f32 %v2301, 1.442695
          %v2938 = vpow.pop %v2937
          %v2939 = vmul.f32 %v2302, 1.442695
          %v2940 = vpow.pop %v2939
          %v2941 = vmul.f32 %v2303, 1.442695
          %v2942 = vpow.pop %v2941
          %v2943 = vmul.f32 %v2304, 1.442695
          %v2944 = vpow.pop %v2943
          %v2945 = vmul.f32 %v2305, 1.442695
          %v2946 = vpow.pop %v2945
          %v2947 = vmul.f32 %v2306, 1.442695
          %v2948 = vpow.pop %v2947
          %v2949 = vmul.f32 %v2307, 1.442695
          %v2950 = vpow.pop %v2949
          %v2951 = vmul.f32 %v2308, 1.442695
          %v2952 = vpow.pop %v2951
          %v2953 = vmul.f32 %v2309, 1.442695
          %v2954 = vpow.pop %v2953
          %v2955 = vmul.f32 %v2310, 1.442695
          %v2956 = vpow.pop %v2955
          %v2957 = vmul.f32 %v2311, 1.442695
          %v2958 = vpow.pop %v2957
          %v2959 = vmul.f32 %v2312, 1.442695
          %v2960 = vpow.pop %v2959
          %v2961 = vmul.f32 %v2313, 1.442695
          %v2962 = vpow.pop %v2961
          %v2963 = vmul.f32 %v2314, 1.442695
          %v2964 = vpow.pop %v2963
          %v2965 = vmul.f32 %v2315, 1.442695
          %v2966 = vpow.pop %v2965
          %v2967 = vmul.f32 %v2316, 1.442695
          %v2968 = vpow.pop %v2967
          %v2969 = vmul.f32 %v2317, 1.442695
          %v2970 = vpow.pop %v2969
          %v2971 = vmul.f32 %v2318, 1.442695
          %v2972 = vpow.pop %v2971
          %v2973 = vmul.f32 %v2319, 1.442695
          %v2974 = vpow.pop %v2973
          %v2975 = vmul.f32 %v2320, 1.442695
          %v2976 = vpow.pop %v2975
          %v2977 = vmul.f32 %v2321, 1.442695
          %v2978 = vpow.pop %v2977
          %v2979 = vmul.f32 %v2322, 1.442695
          %v2980 = vpow.pop %v2979
          %v2981 = vmul.f32 %v2323, 1.442695
          %v2982 = vpow.pop %v2981
          %v2983 = vmul.f32 %v2324, 1.442695
          %v2984 = vpow.pop %v2983
          %v2985 = vmul.f32 %v2325, 1.442695
          %v2986 = vpow.pop %v2985
          %v2987 = vmul.f32 %v2326, 1.442695
          %v2988 = vpow.pop %v2987
          %v2989 = vmul.f32 %v2327, 1.442695
          %v2990 = vpow.pop %v2989
          %v2991 = vmul.f32 %v2328, 1.442695
          %v2992 = vpow.pop %v2991
          %v2993 = vmul.f32 %v2329, 1.442695
          %v2994 = vpow.pop %v2993
          %v2995 = vmul.f32 %v2330, 1.442695
          %v2996 = vpow.pop %v2995
          %v2997 = vmul.f32 %v2331, 1.442695
          %v2998 = vpow.pop %v2997
          %v2999 = vmul.f32 %v2332, 1.442695
          %v3000 = vpow.pop %v2999
          %v3001 = vmul.f32 %v2333, 1.442695
          %v3002 = vpow.pop %v3001
          %v3003 = vmul.f32 %v2334, 1.442695
          %v3004 = vpow.pop %v3003
          %v3005 = vmul.f32 %v2335, 1.442695
          %v3006 = vpow.pop %v3005
          %v3007 = vmul.f32 %v2336, 1.442695
          %v3008 = vpow.pop %v3007
          %v3009 = vmul.f32 %v2337, 1.442695
          %v3010 = vpow.pop %v3009
          %v3011 = vmul.f32 %v2338, 1.442695
          %v3012 = vpow.pop %v3011
          %v3013 = vmul.f32 %v2339, 1.442695
          %v3014 = vpow.pop %v3013
          %v3015 = vmul.f32 %v2340, 1.442695
          %v3016 = vpow.pop %v3015
          %v3017 = vmul.f32 %v2341, 1.442695
          %v3018 = vpow.pop %v3017
          %v3019 = vmul.f32 %v2342, 1.442695
          %v3020 = vpow.pop %v3019
          %v3021 = vmul.f32 %v2343, 1.442695
          %v3022 = vpow.pop %v3021
          %v3023 = vmul.f32 %v2344, 1.442695
          %v3024 = vpow.pop %v3023
          %v3025 = vmul.f32 %v2345, 1.442695
          %v3026 = vpow.pop %v3025
          %v3027 = vmul.f32 %v2346, 1.442695
          %v3028 = vpow.pop %v3027
          %v3029 = vmul.f32 %v2347, 1.442695
          %v3030 = vpow.pop %v3029
          %v3031 = vmul.f32 %v2348, 1.442695
          %v3032 = vpow.pop %v3031
          %v3033 = vmul.f32 %v2349, 1.442695
          %v3034 = vpow.pop %v3033
          %v3035 = vmul.f32 %v2350, 1.442695
          %v3036 = vpow.pop %v3035
          %v3037 = vmul.f32 %v2351, 1.442695
          %v3038 = vpow.pop %v3037
          %v3039 = vmul.f32 %v2352, 1.442695
          %v3040 = vpow.pop %v3039
          %v3041 = vmul.f32 %v2353, 1.442695
          %v3042 = vpow.pop %v3041
          %v3043 = vmul.f32 %v2354, 1.442695
          %v3044 = vpow.pop %v3043
          %v3045 = vmul.f32 %v2355, 1.442695
          %v3046 = vpow.pop %v3045
          %v3047 = vmul.f32 %v2356, 1.442695
          %v3048 = vpow.pop %v3047
          %v3049 = vmul.f32 %v2357, 1.442695
          %v3050 = vpow.pop %v3049
          %v3051 = vmul.f32 %v2358, 1.442695
          %v3052 = vpow.pop %v3051
          %v3053 = vmul.f32 %v2359, 1.442695
          %v3054 = vpow.pop %v3053
          %v3055 = vmul.f32 %v2360, 1.442695
          %v3056 = vpow.pop %v3055
          %v3057 = vmul.f32 %v2361, 1.442695
          %v3058 = vpow.pop %v3057
          %v3059 = vmul.f32 %v2362, 1.442695
          %v3060 = vpow.pop %v3059
          %v3061 = vmul.f32 %v2363, 1.442695
          %v3062 = vpow.pop %v3061
          %v3063 = vmul.f32 %v2364, 1.442695
          %v3064 = vpow.pop %v3063
          %v3065 = vmul.f32 %v2365, 1.442695
          %v3066 = vpow.pop %v3065
          %v3067 = vmul.f32 %v2366, 1.442695
          %v3068 = vpow.pop %v3067
          %v3069 = vmul.f32 %v2367, 1.442695
          %v3070 = vpow.pop %v3069
          %v3071 = vmul.f32 %v2368, 1.442695
          %v3072 = vpow.pop %v3071
          %v3073 = vmul.f32 %v2369, 1.442695
          %v3074 = vpow.pop %v3073
          %v3075 = vmul.f32 %v2370, 1.442695
          %v3076 = vpow.pop %v3075
          %v3077 = vmul.f32 %v2371, 1.442695
          %v3078 = vpow.pop %v3077
          %v3079 = vmul.f32 %v2372, 1.442695
          %v3080 = vpow.pop %v3079
          %v3081 = vmul.f32 %v2373, 1.442695
          %v3082 = vpow.pop %v3081
          %v3083 = vmul.f32 %v2374, 1.442695
          %v3084 = vpow.pop %v3083
          %v3085 = vmul.f32 %v2375, 1.442695
          %v3086 = vpow.pop %v3085
          %v3087 = vmul.f32 %v2376, 1.442695
          %v3088 = vpow.pop %v3087
          %v3089 = vmul.f32 %v2377, 1.442695
          %v3090 = vpow.pop %v3089
          %v3091 = vmul.f32 %v2378, 1.442695
          %v3092 = vpow.pop %v3091
          %v3093 = vmul.f32 %v2379, 1.442695
          %v3094 = vpow.pop %v3093
          %v3095 = vmul.f32 %v2380, 1.442695
          %v3096 = vpow.pop %v3095
          %v3097 = vmul.f32 %v2381, 1.442695
          %v3098 = vpow.pop %v3097
          %v3099 = vmul.f32 %v2382, 1.442695
          %v3100 = vpow.pop %v3099
          %v3101 = vmul.f32 %v2383, 1.442695
          %v3102 = vpow.pop %v3101
          %v3103 = vmul.f32 %v2384, 1.442695
          %v3104 = vpow.pop %v3103
          %v3105 = vmul.f32 %v2385, 1.442695
          %v3106 = vpow.pop %v3105
          %v3107 = vmul.f32 %v2386, 1.442695
          %v3108 = vpow.pop %v3107
          %v3109 = vmul.f32 %v2387, 1.442695
          %v3110 = vpow.pop %v3109
          %v3111 = vmul.f32 %v2388, 1.442695
          %v3112 = vpow.pop %v3111
          %v3113 = vmul.f32 %v2389, 1.442695
          %v3114 = vpow.pop %v3113
          %v3115 = vmul.f32 %v2390, 1.442695
          %v3116 = vpow.pop %v3115
          %v3117 = vmul.f32 %v2391, 1.442695
          %v3118 = vpow.pop %v3117
          %v3119 = vmul.f32 %v2392, 1.442695
          %v3120 = vpow.pop %v3119
          %v3121 = vmul.f32 %v2393, 1.442695
          %v3122 = vpow.pop %v3121
          %v3123 = vmul.f32 %v2394, 1.442695
          %v3124 = vpow.pop %v3123
          %v3125 = vmul.f32 %v2395, 1.442695
          %v3126 = vpow.pop %v3125
          %v3127 = vmul.f32 %v2396, 1.442695
          %v3128 = vpow.pop %v3127
          %v3129 = vmul.f32 %v2397, 1.442695
          %v3130 = vpow.pop %v3129
          %v3131 = vmul.f32 %v2398, 1.442695
          %v3132 = vpow.pop %v3131
          %v3133 = vmul.f32 %v2399, 1.442695
          %v3134 = vpow.pop %v3133
          %v3135 = vmul.f32 %v2400, 1.442695
          %v3136 = vpow.pop %v3135
          %v3137 = vmul.f32 %v2401, 1.442695
          %v3138 = vpow.pop %v3137
          %v3139 = vmul.f32 %v2402, 1.442695
          %v3140 = vpow.pop %v3139
          %v3141 = vmul.f32 %v2403, 1.442695
          %v3142 = vpow.pop %v3141
          %v3143 = vmul.f32 %v2404, 1.442695
          %v3144 = vpow.pop %v3143
          %v3145 = vmul.f32 %v2405, 1.442695
          %v3146 = vpow.pop %v3145
          %v3147 = vmul.f32 %v2406, 1.442695
          %v3148 = vpow.pop %v3147
          %v3149 = vmul.f32 %v2407, 1.442695
          %v3150 = vpow.pop %v3149
          %v3151 = vmul.f32 %v2408, 1.442695
          %v3152 = vpow.pop %v3151
          %v3153 = vmul.f32 %v2409, 1.442695
          %v3154 = vpow.pop %v3153
          %v3155 = vmul.f32 %v2410, 1.442695
          %v3156 = vpow.pop %v3155
          %v3157 = vmul.f32 %v2411, 1.442695
          %v3158 = vpow.pop %v3157
          %v3159 = vmul.f32 %v2412, 1.442695
          %v3160 = vpow.pop %v3159
          %v3161 = vmul.f32 %v2413, 1.442695
          %v3162 = vpow.pop %v3161
          %v3163 = vmul.f32 %v2414, 1.442695
          %v3164 = vpow.pop %v3163
          %v3165 = vmul.f32 %v2415, 1.442695
          %v3166 = vpow.pop %v3165
          %v3167 = vmul.f32 %v2416, 1.442695
          %v3168 = vpow.pop %v3167
          %v3169 = vmul.f32 %v2417, 1.442695
          %v3170 = vpow.pop %v3169
          %v3171 = vmul.f32 %v2418, 1.442695
          %v3172 = vpow.pop %v3171
          %v3173 = vmul.f32 %v2419, 1.442695
          %v3174 = vpow.pop %v3173
          %v3175 = vmul.f32 %v2420, 1.442695
          %v3176 = vpow.pop %v3175
          %v3177 = vmul.f32 %v2421, 1.442695
          %v3178 = vpow.pop %v3177
          %v3179 = vmul.f32 %v2422, 1.442695
          %v3180 = vpow.pop %v3179
          %v3181 = vmul.f32 %v2423, 1.442695
          %v3182 = vpow.pop %v3181
          %v3183 = vmul.f32 %v2424, 1.442695
          %v3184 = vpow.pop %v3183
          %v3185 = vmul.f32 %v2425, 1.442695
          %v3186 = vpow.pop %v3185
          %v3187 = vmul.f32 %v2426, 1.442695
          %v3188 = vpow.pop %v3187
          %v3189 = vmul.f32 %v2427, 1.442695
          %v3190 = vpow.pop %v3189
          %v3191 = vmul.f32 %v2428, 1.442695
          %v3192 = vpow.pop %v3191
          %v3193 = vmul.f32 %v2429, 1.442695
          %v3194 = vpow.pop %v3193
          %v3195 = vmul.f32 %v2430, 1.442695
          %v3196 = vpow.pop %v3195
          %v3197 = vmul.f32 %v2431, 1.442695
          %v3198 = vpow.pop %v3197
          %v3199 = vmul.f32 %v2432, 1.442695
          %v3200 = vpow.pop %v3199
          %v3201 = vmul.f32 %v2433, 1.442695
          %v3202 = vpow.pop %v3201
          %v3203 = vmul.f32 %v2434, 1.442695
          %v3204 = vpow.pop %v3203
          %v3205 = vmul.f32 %v2435, 1.442695
          %v3206 = vpow.pop %v3205
          %v3207 = vmul.f32 %v2436, 1.442695
          %v3208 = vpow.pop %v3207
          %v3209 = vmul.f32 %v2437, 1.442695
          %v3210 = vpow.pop %v3209
          %v3211 = vmul.f32 %v2438, 1.442695
          %v3212 = vpow.pop %v3211
          %v3213 = vmul.f32 %v2439, 1.442695
          %v3214 = vpow.pop %v3213
          %v3215 = vmul.f32 %v2440, 1.442695
          %v3216 = vpow.pop %v3215
          %v3217 = vmul.f32 %v2441, 1.442695
          %v3218 = vpow.pop %v3217
          %v3219 = vmul.f32 %v2442, 1.442695
          %v3220 = vpow.pop %v3219
          %v3221 = vmul.f32 %v2443, 1.442695
          %v3222 = vpow.pop %v3221
          %v3223 = vmul.f32 %v2444, 1.442695
          %v3224 = vpow.pop %v3223
          %v3225 = vmul.f32 %v2445, 1.442695
          %v3226 = vpow.pop %v3225
          %v3227 = vmul.f32 %v2446, 1.442695
          %v3228 = vpow.pop %v3227
          %v3229 = vmul.f32 %v2447, 1.442695
          %v3230 = vpow.pop %v3229
          %v3231 = vmul.f32 %v2448, 1.442695
          %v3232 = vpow.pop %v3231
          %v3233 = vmul.f32 %v2449, 1.442695
          %v3234 = vpow.pop %v3233
          %v3235 = vmul.f32 %v2450, 1.442695
          %v3236 = vpow.pop %v3235
          %v3237 = vmul.f32 %v2451, 1.442695
          %v3238 = vpow.pop %v3237
          %v3239 = vmul.f32 %v2452, 1.442695
          %v3240 = vpow.pop %v3239
          %v3241 = vmul.f32 %v2453, 1.442695
          %v3242 = vpow.pop %v3241
          %v3243 = vmul.f32 %v2454, 1.442695
          %v3244 = vpow.pop %v3243
          %v3245 = vmul.f32 %v2455, 1.442695
          %v3246 = vpow.pop %v3245
          %v3247 = vmul.f32 %v2456, 1.442695
          %v3248 = vpow.pop %v3247
          %v3249 = vmul.f32 %v2457, 1.442695
          %v3250 = vpow.pop %v3249
          %v3251 = vmul.f32 %v2458, 1.442695
          %v3252 = vpow.pop %v3251
          %v3253 = vmul.f32 %v2459, 1.442695
          %v3254 = vpow.pop %v3253
          %v3255 = vmul.f32 %v2460, 1.442695
          %v3256 = vpow.pop %v3255
          %v3257 = vmul.f32 %v2461, 1.442695
          %v3258 = vpow.pop %v3257
          %v3259 = vmul.f32 %v2462, 1.442695
          %v3260 = vpow.pop %v3259
          %v3261 = vmul.f32 %v2463, 1.442695
          %v3262 = vpow.pop %v3261
          %v3263 = vmul.f32 %v2464, 1.442695
          %v3264 = vpow.pop %v3263
          %v3265 = vmul.f32 %v2465, 1.442695
          %v3266 = vpow.pop %v3265
          %v3267 = vmul.f32 %v2466, 1.442695
          %v3268 = vpow.pop %v3267
          %v3269 = vmul.f32 %v2467, 1.442695
          %v3270 = vpow.pop %v3269
          %v3271 = vmul.f32 %v2468, 1.442695
          %v3272 = vpow.pop %v3271
          %v3273 = vmul.f32 %v2469, 1.442695
          %v3274 = vpow.pop %v3273
          %v3275 = vmul.f32 %v2470, 1.442695
          %v3276 = vpow.pop %v3275
          %v3277 = vmul.f32 %v2471, 1.442695
          %v3278 = vpow.pop %v3277
          %v3279 = vmul.f32 %v2472, 1.442695
          %v3280 = vpow.pop %v3279
          %v3281 = vmul.f32 %v2473, 1.442695
          %v3282 = vpow.pop %v3281
          %v3283 = vmul.f32 %v2474, 1.442695
          %v3284 = vpow.pop %v3283
          %v3285 = vmul.f32 %v2475, 1.442695
          %v3286 = vpow.pop %v3285
          %v3287 = vmul.f32 %v2476, 1.442695
          %v3288 = vpow.pop %v3287
          %v3289 = vmul.f32 %v2477, 1.442695
          %v3290 = vpow.pop %v3289
          %v3291 = vmul.f32 %v2478, 1.442695
          %v3292 = vpow.pop %v3291
          %v3293 = vmul.f32 %v2479, 1.442695
          %v3294 = vpow.pop %v3293
          %v3295 = vmul.f32 %v2480, 1.442695
          %v3296 = vpow.pop %v3295
          %v3297 = vmul.f32 %v2481, 1.442695
          %v3298 = vpow.pop %v3297
          %v3299 = vmul.f32 %v2482, 1.442695
          %v3300 = vpow.pop %v3299
          %v3301 = vmul.f32 %v2483, 1.442695
          %v3302 = vpow.pop %v3301
          %v3303 = vmul.f32 %v2484, 1.442695
          %v3304 = vpow.pop %v3303
          %v3305 = vmul.f32 %v2485, 1.442695
          %v3306 = vpow.pop %v3305
          %v3307 = vmul.f32 %v2486, 1.442695
          %v3308 = vpow.pop %v3307
          %v3309 = vmul.f32 %v2487, 1.442695
          %v3310 = vpow.pop %v3309
          %v3311 = vmul.f32 %v2488, 1.442695
          %v3312 = vpow.pop %v3311
          %v3313 = vmul.f32 %v2489, 1.442695
          %v3314 = vpow.pop %v3313
          %v3315 = vmul.f32 %v2490, 1.442695
          %v3316 = vpow.pop %v3315
          %v3317 = vmul.f32 %v2491, 1.442695
          %v3318 = vpow.pop %v3317
          %v3319 = vmul.f32 %v2492, 1.442695
          %v3320 = vpow.pop %v3319
          %v3321 = vmul.f32 %v2493, 1.442695
          %v3322 = vpow.pop %v3321
          %v3323 = vmul.f32 %v2494, 1.442695
          %v3324 = vpow.pop %v3323
          %v3325 = vmul.f32 %v2495, 1.442695
          %v3326 = vpow.pop %v3325
          %v3327 = vmul.f32 %v2496, 1.442695
          %v3328 = vpow.pop %v3327
          %v3329 = vmul.f32 %v2497, 1.442695
          %v3330 = vpow.pop %v3329
          %v3331 = vmul.f32 %v2498, 1.442695
          %v3332 = vpow.pop %v3331
          %v3333 = vmul.f32 %v2499, 1.442695
          %v3334 = vpow.pop %v3333
          %v3335 = vmul.f32 %v2500, 1.442695
          %v3336 = vpow.pop %v3335
          %v3337 = vmul.f32 %v2501, 1.442695
          %v3338 = vpow.pop %v3337
          %v3339 = vmul.f32 %v2502, 1.442695
          %v3340 = vpow.pop %v3339
          %v3341 = vmul.f32 %v2503, 1.442695
          %v3342 = vpow.pop %v3341
          %v3343 = vmul.f32 %v2504, 1.442695
          %v3344 = vpow.pop %v3343
          %v3345 = vmul.f32 %v2505, 1.442695
          %v3346 = vpow.pop %v3345
          %v3347 = vmul.f32 %v2506, 1.442695
          %v3348 = vpow.pop %v3347
          %v3349 = vmul.f32 %v2507, 1.442695
          %v3350 = vpow.pop %v3349
          %v3351 = vmul.f32 %v2508, 1.442695
          %v3352 = vpow.pop %v3351
          %v3353 = vmul.f32 %v2509, 1.442695
          %v3354 = vpow.pop %v3353
          %v3355 = vmul.f32 %v2510, 1.442695
          %v3356 = vpow.pop %v3355
          %v3357 = vmul.f32 %v2511, 1.442695
          %v3358 = vpow.pop %v3357
          %v3359 = vmul.f32 %v2512, 1.442695
          %v3360 = vpow.pop %v3359
          %v3361 = vmul.f32 %v2513, 1.442695
          %v3362 = vpow.pop %v3361
          %v3363 = vmul.f32 %v2514, 1.442695
          %v3364 = vpow.pop %v3363
          %v3365 = vmul.f32 %v2515, 1.442695
          %v3366 = vpow.pop %v3365
          %v3367 = vmul.f32 %v2516, 1.442695
          %v3368 = vpow.pop %v3367
          %v3369 = vmul.f32 %v2517, 1.442695
          %v3370 = vpow.pop %v3369
          %v3371 = vmul.f32 %v2518, 1.442695
          %v3372 = vpow.pop %v3371
          %v3373 = vmul.f32 %v2519, 1.442695
          %v3374 = vpow.pop %v3373
          %v3375 = vmul.f32 %v2520, 1.442695
          %v3376 = vpow.pop %v3375
          %v3377 = vmul.f32 %v2521, 1.442695
          %v3378 = vpow.pop %v3377
          %v3379 = vmul.f32 %v2522, 1.442695
          %v3380 = vpow.pop %v3379
          %v3381 = vmul.f32 %v2523, 1.442695
          %v3382 = vpow.pop %v3381
          %v3383 = vmul.f32 %v2524, 1.442695
          %v3384 = vpow.pop %v3383
          %v3385 = vmul.f32 %v2525, 1.442695
          %v3386 = vpow.pop %v3385
          %v3387 = vmul.f32 %v2526, 1.442695
          %v3388 = vpow.pop %v3387
          %v3389 = vmul.f32 %v2527, 1.442695
          %v3390 = vpow.pop %v3389
          %v3391 = vmul.f32 %v2528, 1.442695
          %v3392 = vpow.pop %v3391
          %v3393 = vmul.f32 %v2529, 1.442695
          %v3394 = vpow.pop %v3393
          %v3395 = vmul.f32 %v2530, 1.442695
          %v3396 = vpow.pop %v3395
          %v3397 = vmul.f32 %v2531, 1.442695
          %v3398 = vpow.pop %v3397
          %v3399 = vmul.f32 %v2532, 1.442695
          %v3400 = vpow.pop %v3399
          %v3401 = vmul.f32 %v2533, 1.442695
          %v3402 = vpow.pop %v3401
          %v3403 = vmul.f32 %v2534, 1.442695
          %v3404 = vpow.pop %v3403
          %v3405 = vmul.f32 %v2535, 1.442695
          %v3406 = vpow.pop %v3405
          %v3407 = vmul.f32 %v2536, 1.442695
          %v3408 = vpow.pop %v3407
          %v3409 = vmul.f32 %v2537, 1.442695
          %v3410 = vpow.pop %v3409
          %v3411 = vmul.f32 %v2538, 1.442695
          %v3412 = vpow.pop %v3411
          %v3413 = vmul.f32 %v2539, 1.442695
          %v3414 = vpow.pop %v3413
          %v3415 = vmul.f32 %v2540, 1.442695
          %v3416 = vpow.pop %v3415
          %v3417 = vmul.f32 %v2541, 1.442695
          %v3418 = vpow.pop %v3417
          %v3419 = vmul.f32 %v2542, 1.442695
          %v3420 = vpow.pop %v3419
          %v3421 = vmul.f32 %v2543, 1.442695
          %v3422 = vpow.pop %v3421
          %v3423 = vmul.f32 %v2544, 1.442695
          %v3424 = vpow.pop %v3423
          %v3425 = vmul.f32 %v2545, 1.442695
          %v3426 = vpow.pop %v3425
          %v3427 = vmul.f32 %v2546, 1.442695
          %v3428 = vpow.pop %v3427
          %v3429 = vmul.f32 %v2547, 1.442695
          %v3430 = vpow.pop %v3429
          %v3431 = vmul.f32 %v2548, 1.442695
          %v3432 = vpow.pop %v3431
          %v3433 = vmul.f32 %v2549, 1.442695
          %v3434 = vpow.pop %v3433
          %v3435 = vmul.f32 %v2550, 1.442695
          %v3436 = vpow.pop %v3435
          %v3437 = vmul.f32 %v2551, 1.442695
          %v3438 = vpow.pop %v3437
          %v3439 = vmul.f32 %v2552, 1.442695
          %v3440 = vpow.pop %v3439
          %v3441 = vmul.f32 %v2553, 1.442695
          %v3442 = vpow.pop %v3441
          %v3443 = vmul.f32 %v2554, 1.442695
          %v3444 = vpow.pop %v3443
          %v3445 = vmul.f32 %v2555, 1.442695
          %v3446 = vpow.pop %v3445
          %v3447 = vmul.f32 %v2556, 1.442695
          %v3448 = vpow.pop %v3447
          %v3449 = vmul.f32 %v2557, 1.442695
          %v3450 = vpow.pop %v3449
          %v3451 = vmul.f32 %v2558, 1.442695
          %v3452 = vpow.pop %v3451
          %v3453 = vmul.f32 %v2559, 1.442695
          %v3454 = vpow.pop %v3453
          %v3455 = vmul.f32 %v2560, 1.442695
          %v3456 = vpow.pop %v3455
          %v3457 = vmul.f32 %v2561, 1.442695
          %v3458 = vpow.pop %v3457
          %v3459 = vmul.f32 %v2562, 1.442695
          %v3460 = vpow.pop %v3459
          %v3461 = vmul.f32 %v2563, 1.442695
          %v3462 = vpow.pop %v3461
          %v3463 = vmul.f32 %v2564, 1.442695
          %v3464 = vpow.pop %v3463
          %v3465 = vmul.f32 %v2565, 1.442695
          %v3466 = vpow.pop %v3465
          %v3467 = vmul.f32 %v2566, 1.442695
          %v3468 = vpow.pop %v3467
          %v3469 = vmul.f32 %v2567, 1.442695
          %v3470 = vpow.pop %v3469
          %v3471 = vmul.f32 %v2568, 1.442695
          %v3472 = vpow.pop %v3471
          %v3473 = vmul.f32 %v2569, 1.442695
          %v3474 = vpow.pop %v3473
          %v3475 = vmul.f32 %v2570, 1.442695
          %v3476 = vpow.pop %v3475
          %v3477 = vmul.f32 %v2571, 1.442695
          %v3478 = vpow.pop %v3477
          %v3479 = vmul.f32 %v2572, 1.442695
          %v3480 = vpow.pop %v3479
          %v3481 = vmul.f32 %v2573, 1.442695
          %v3482 = vpow.pop %v3481
          %v3483 = vmul.f32 %v2574, 1.442695
          %v3484 = vpow.pop %v3483
          %v3485 = vmul.f32 %v2575, 1.442695
          %v3486 = vpow.pop %v3485
          %v3487 = vmul.f32 %v2576, 1.442695
          %v3488 = vpow.pop %v3487
          %v3489 = vmul.f32 %v2577, 1.442695
          %v3490 = vpow.pop %v3489
          %v3491 = vmul.f32 %v2578, 1.442695
          %v3492 = vpow.pop %v3491
          %v3493 = vmul.f32 %v2579, 1.442695
          %v3494 = vpow.pop %v3493
          %v3495 = vmul.f32 %v2580, 1.442695
          %v3496 = vpow.pop %v3495
          %v3497 = vmul.f32 %v2581, 1.442695
          %v3498 = vpow.pop %v3497
          %v3499 = vmul.f32 %v2582, 1.442695
          %v3500 = vpow.pop %v3499
          %v3501 = vmul.f32 %v2583, 1.442695
          %v3502 = vpow.pop %v3501
          %v3503 = vmul.f32 %v2584, 1.442695
          %v3504 = vpow.pop %v3503
          %v3505 = vmul.f32 %v2585, 1.442695
          %v3506 = vpow.pop %v3505
          %v3507 = vmul.f32 %v2586, 1.442695
          %v3508 = vpow.pop %v3507
          %v3509 = vmul.f32 %v2587, 1.442695
          %v3510 = vpow.pop %v3509
          %v3511 = vmul.f32 %v2588, 1.442695
          %v3512 = vpow.pop %v3511
          %v3513 = vmul.f32 %v2589, 1.442695
          %v3514 = vpow.pop %v3513
          %v3515 = vmul.f32 %v2590, 1.442695
          %v3516 = vpow.pop %v3515
          %v3517 = vmul.f32 %v2591, 1.442695
          %v3518 = vpow.pop %v3517
          %v3519 = vmul.f32 %v2592, 1.442695
          %v3520 = vpow.pop %v3519
          %v3521 = vmul.f32 %v2593, 1.442695
          %v3522 = vpow.pop %v3521
          %v3523 = vmul.f32 %v2594, 1.442695
          %v3524 = vpow.pop %v3523
          %v3525 = vmul.f32 %v2595, 1.442695
          %v3526 = vpow.pop %v3525
          %v3527 = vmul.f32 %v2596, 1.442695
          %v3528 = vpow.pop %v3527
          %v3529 = vmul.f32 %v2597, 1.442695
          %v3530 = vpow.pop %v3529
          %v3531 = vmul.f32 %v2598, 1.442695
          %v3532 = vpow.pop %v3531
          %v3533 = vmul.f32 %v2599, 1.442695
          %v3534 = vpow.pop %v3533
          %v3535 = vmul.f32 %v2600, 1.442695
          %v3536 = vpow.pop %v3535
          %v3537 = vmul.f32 %v2601, 1.442695
          %v3538 = vpow.pop %v3537
          %v3539 = vmul.f32 %v2602, 1.442695
          %v3540 = vpow.pop %v3539
          %v3541 = vmul.f32 %v2603, 1.442695
          %v3542 = vpow.pop %v3541
          %v3543 = vmul.f32 %v2604, 1.442695
          %v3544 = vpow.pop %v3543
          %v3545 = vmul.f32 %v2605, 1.442695
          %v3546 = vpow.pop %v3545
          %v3547 = vmul.f32 %v2606, 1.442695
          %v3548 = vpow.pop %v3547
          %v3549 = vmul.f32 %v2607, 1.442695
          %v3550 = vpow.pop %v3549
          %v3551 = vmul.f32 %v2608, 1.442695
          %v3552 = vpow.pop %v3551
          %v3553 = vmul.f32 %v2609, 1.442695
          %v3554 = vpow.pop %v3553
          %v3555 = vmul.f32 %v2610, 1.442695
          %v3556 = vpow.pop %v3555
          %v3557 = vmul.f32 %v2611, 1.442695
          %v3558 = vpow.pop %v3557
          %v3559 = vmul.f32 %v2612, 1.442695
          %v3560 = vpow.pop %v3559
          %v3561 = vmul.f32 %v2613, 1.442695
          %v3562 = vpow.pop %v3561
          %v3563 = vmul.f32 %v2614, 1.442695
          %v3564 = vpow.pop %v3563
          %v3565 = vmul.f32 %v2615, 1.442695
          %v3566 = vpow.pop %v3565
          %v3567 = vmul.f32 %v2616, 1.442695
          %v3568 = vpow.pop %v3567
          %v3569 = vmul.f32 %v2617, 1.442695
          %v3570 = vpow.pop %v3569
          %v3571 = vmul.f32 %v2618, 1.442695
          %v3572 = vpow.pop %v3571
          %v3573 = vmul.f32 %v2619, 1.442695
          %v3574 = vpow.pop %v3573
          %v3575 = vmul.f32 %v2620, 1.442695
          %v3576 = vpow.pop %v3575
          %v3577 = vmul.f32 %v2621, 1.442695
          %v3578 = vpow.pop %v3577
          %v3579 = vmul.f32 %v2622, 1.442695
          %v3580 = vpow.pop %v3579
          %v3581 = vmul.f32 %v2623, 1.442695
          %v3582 = vpow.pop %v3581
          %v3583 = vmul.f32 %v2624, 1.442695
          %v3584 = vpow.pop %v3583
          %v3585 = vmul.f32 %v2625, 1.442695
          %v3586 = vpow.pop %v3585
          %v3587 = vmul.f32 %v2626, 1.442695
          %v3588 = vpow.pop %v3587
          %v3589 = vmul.f32 %v2627, 1.442695
          %v3590 = vpow.pop %v3589
          %v3591 = vmul.f32 %v2628, 1.442695
          %v3592 = vpow.pop %v3591
          %v3593 = vmul.f32 %v2629, 1.442695
          %v3594 = vpow.pop %v3593
          %v3595 = vmul.f32 %v2630, 1.442695
          %v3596 = vpow.pop %v3595
          %v3597 = vmul.f32 %v2631, 1.442695
          %v3598 = vpow.pop %v3597
          %v3599 = vmul.f32 %v2632, 1.442695
          %v3600 = vpow.pop %v3599
          %v3601 = vmul.f32 %v2633, 1.442695
          %v3602 = vpow.pop %v3601
          %v3603 = vmul.f32 %v2634, 1.442695
          %v3604 = vpow.pop %v3603
          %v3605 = vmul.f32 %v2635, 1.442695
          %v3606 = vpow.pop %v3605
          %v3607 = vmul.f32 %v2636, 1.442695
          %v3608 = vpow.pop %v3607
          %v3609 = vmul.f32 %v2637, 1.442695
          %v3610 = vpow.pop %v3609
          %v3611 = vmul.f32 %v2638, 1.442695
          %v3612 = vpow.pop %v3611
          %v3613 = vmul.f32 %v2639, 1.442695
          %v3614 = vpow.pop %v3613
          %v3615 = vmul.f32 %v2640, 1.442695
          %v3616 = vpow.pop %v3615
          %v3617 = vmul.f32 %v2641, 1.442695
          %v3618 = vpow.pop %v3617
          %v3619 = vmul.f32 %v2642, 1.442695
          %v3620 = vpow.pop %v3619
          %v3621 = vmul.f32 %v2643, 1.442695
          %v3622 = vpow.pop %v3621
          %v3623 = vmul.f32 %v2644, 1.442695
          %v3624 = vpow.pop %v3623
          %v3625 = vmul.f32 %v2645, 1.442695
          %v3626 = vpow.pop %v3625
          %v3627 = vmul.f32 %v2646, 1.442695
          %v3628 = vpow.pop %v3627
          %v3629 = vmul.f32 %v2647, 1.442695
          %v3630 = vpow.pop %v3629
          %v3631 = vmul.f32 %v2648, 1.442695
          %v3632 = vpow.pop %v3631
          %v3633 = vmul.f32 %v2649, 1.442695
          %v3634 = vpow.pop %v3633
          %v3635 = vmul.f32 %v2650, 1.442695
          %v3636 = vpow.pop %v3635
          %v3637 = vmul.f32 %v2651, 1.442695
          %v3638 = vpow.pop %v3637
          %v3639 = vmul.f32 %v2652, 1.442695
          %v3640 = vpow.pop %v3639
          %v3641 = vmul.f32 %v2653, 1.442695
          %v3642 = vpow.pop %v3641
          %v3643 = vmul.f32 %v2654, 1.442695
          %v3644 = vpow.pop %v3643
          %v3645 = vmul.f32 %v2655, 1.442695
          %v3646 = vpow.pop %v3645
          %v3647 = vmul.f32 %v2656, 1.442695
          %v3648 = vpow.pop %v3647
          %v3649 = vmul.f32 %v2657, 1.442695
          %v3650 = vpow.pop %v3649
          %v3651 = vmul.f32 %v2658, 1.442695
          %v3652 = vpow.pop %v3651
          %v3653 = vmul.f32 %v2659, 1.442695
          %v3654 = vpow.pop %v3653
          %v3655 = vmul.f32 %v2660, 1.442695
          %v3656 = vpow.pop %v3655
          %v3657 = vmul.f32 %v2661, 1.442695
          %v3658 = vpow.pop %v3657
          %v3659 = vmul.f32 %v2662, 1.442695
          %v3660 = vpow.pop %v3659
          %v3661 = vmul.f32 %v2663, 1.442695
          %v3662 = vpow.pop %v3661
          %v3663 = vmul.f32 %v2664, 1.442695
          %v3664 = vpow.pop %v3663
          %v3665 = vmul.f32 %v2665, 1.442695
          %v3666 = vpow.pop %v3665
          %v3667 = vmul.f32 %v2666, 1.442695
          %v3668 = vpow.pop %v3667
          %v3669 = vmul.f32 %v2667, 1.442695
          %v3670 = vpow.pop %v3669
          %v3671 = vmul.f32 %v2668, 1.442695
          %v3672 = vpow.pop %v3671
          %v3673 = vmul.f32 %v2669, 1.442695
          %v3674 = vpow.pop %v3673
          %v3675 = vmul.f32 %v2670, 1.442695
          %v3676 = vpow.pop %v3675
          %v3677 = vmul.f32 %v2671, 1.442695
          %v3678 = vpow.pop %v3677
          %v3679 = vmul.f32 %v2672, 1.442695
          %v3680 = vpow.pop %v3679
          %v3681 = vmul.f32 %v2673, 1.442695
          %v3682 = vpow.pop %v3681
          %v3683 = vmul.f32 %v2674, 1.442695
          %v3684 = vpow.pop %v3683
          %v3685 = vmul.f32 %v2675, 1.442695
          %v3686 = vpow.pop %v3685
          %v3687 = vmul.f32 %v2676, 1.442695
          %v3688 = vpow.pop %v3687
          %v3689 = vmul.f32 %v2677, 1.442695
          %v3690 = vpow.pop %v3689
          %v3691 = vmul.f32 %v2678, 1.442695
          %v3692 = vpow.pop %v3691
          %v3693 = vmul.f32 %v2679, 1.442695
          %v3694 = vpow.pop %v3693
          %v3695 = vmul.f32 %v2680, 1.442695
          %v3696 = vpow.pop %v3695
          %v3697 = vmul.f32 %v2681, 1.442695
          %v3698 = vpow.pop %v3697
          %v3699 = vmul.f32 %v2682, 1.442695
          %v3700 = vpow.pop %v3699
          %v3701 = vmul.f32 %v2683, 1.442695
          %v3702 = vpow.pop %v3701
          %v3703 = vmul.f32 %v2684, 1.442695
          %v3704 = vpow.pop %v3703
          %v3705 = vmul.f32 %v2685, 1.442695
          %v3706 = vpow.pop %v3705
          %v3707 = vmul.f32 %v2686, 1.442695
          %v3708 = vpow.pop %v3707
          %v3709 = vmul.f32 %v2687, 1.442695
          %v3710 = vpow.pop %v3709
          %v3711 = vmul.f32 %v2688, 1.442695
          %v3712 = vpow.pop %v3711
          %v3713 = vadd.f32 %v2690, 1.0
          %v3714 = vadd.f32 %v2692, 1.0
          %v3715 = vadd.f32 %v2694, 1.0
          %v3716 = vadd.f32 %v2696, 1.0
          %v3717 = vadd.f32 %v2698, 1.0
          %v3718 = vadd.f32 %v2700, 1.0
          %v3719 = vadd.f32 %v2702, 1.0
          %v3720 = vadd.f32 %v2704, 1.0
          %v3721 = vadd.f32 %v2706, 1.0
          %v3722 = vadd.f32 %v2708, 1.0
          %v3723 = vadd.f32 %v2710, 1.0
          %v3724 = vadd.f32 %v2712, 1.0
          %v3725 = vadd.f32 %v2714, 1.0
          %v3726 = vadd.f32 %v2716, 1.0
          %v3727 = vadd.f32 %v2718, 1.0
          %v3728 = vadd.f32 %v2720, 1.0
          %v3729 = vadd.f32 %v2722, 1.0
          %v3730 = vadd.f32 %v2724, 1.0
          %v3731 = vadd.f32 %v2726, 1.0
          %v3732 = vadd.f32 %v2728, 1.0
          %v3733 = vadd.f32 %v2730, 1.0
          %v3734 = vadd.f32 %v2732, 1.0
          %v3735 = vadd.f32 %v2734, 1.0
          %v3736 = vadd.f32 %v2736, 1.0
          %v3737 = vadd.f32 %v2738, 1.0
          %v3738 = vadd.f32 %v2740, 1.0
          %v3739 = vadd.f32 %v2742, 1.0
          %v3740 = vadd.f32 %v2744, 1.0
          %v3741 = vadd.f32 %v2746, 1.0
          %v3742 = vadd.f32 %v2748, 1.0
          %v3743 = vadd.f32 %v2750, 1.0
          %v3744 = vadd.f32 %v2752, 1.0
          %v3745 = vadd.f32 %v2754, 1.0
          %v3746 = vadd.f32 %v2756, 1.0
          %v3747 = vadd.f32 %v2758, 1.0
          %v3748 = vadd.f32 %v2760, 1.0
          %v3749 = vadd.f32 %v2762, 1.0
          %v3750 = vadd.f32 %v2764, 1.0
          %v3751 = vadd.f32 %v2766, 1.0
          %v3752 = vadd.f32 %v2768, 1.0
          %v3753 = vadd.f32 %v2770, 1.0
          %v3754 = vadd.f32 %v2772, 1.0
          %v3755 = vadd.f32 %v2774, 1.0
          %v3756 = vadd.f32 %v2776, 1.0
          %v3757 = vadd.f32 %v2778, 1.0
          %v3758 = vadd.f32 %v2780, 1.0
          %v3759 = vadd.f32 %v2782, 1.0
          %v3760 = vadd.f32 %v2784, 1.0
          %v3761 = vadd.f32 %v2786, 1.0
          %v3762 = vadd.f32 %v2788, 1.0
          %v3763 = vadd.f32 %v2790, 1.0
          %v3764 = vadd.f32 %v2792, 1.0
          %v3765 = vadd.f32 %v2794, 1.0
          %v3766 = vadd.f32 %v2796, 1.0
          %v3767 = vadd.f32 %v2798, 1.0
          %v3768 = vadd.f32 %v2800, 1.0
          %v3769 = vadd.f32 %v2802, 1.0
          %v3770 = vadd.f32 %v2804, 1.0
          %v3771 = vadd.f32 %v2806, 1.0
          %v3772 = vadd.f32 %v2808, 1.0
          %v3773 = vadd.f32 %v2810, 1.0
          %v3774 = vadd.f32 %v2812, 1.0
          %v3775 = vadd.f32 %v2814, 1.0
          %v3776 = vadd.f32 %v2816, 1.0
          %v3777 = vadd.f32 %v2818, 1.0
          %v3778 = vadd.f32 %v2820, 1.0
          %v3779 = vadd.f32 %v2822, 1.0
          %v3780 = vadd.f32 %v2824, 1.0
          %v3781 = vadd.f32 %v2826, 1.0
          %v3782 = vadd.f32 %v2828, 1.0
          %v3783 = vadd.f32 %v2830, 1.0
          %v3784 = vadd.f32 %v2832, 1.0
          %v3785 = vadd.f32 %v2834, 1.0
          %v3786 = vadd.f32 %v2836, 1.0
          %v3787 = vadd.f32 %v2838, 1.0
          %v3788 = vadd.f32 %v2840, 1.0
          %v3789 = vadd.f32 %v2842, 1.0
          %v3790 = vadd.f32 %v2844, 1.0
          %v3791 = vadd.f32 %v2846, 1.0
          %v3792 = vadd.f32 %v2848, 1.0
          %v3793 = vadd.f32 %v2850, 1.0
          %v3794 = vadd.f32 %v2852, 1.0
          %v3795 = vadd.f32 %v2854, 1.0
          %v3796 = vadd.f32 %v2856, 1.0
          %v3797 = vadd.f32 %v2858, 1.0
          %v3798 = vadd.f32 %v2860, 1.0
          %v3799 = vadd.f32 %v2862, 1.0
          %v3800 = vadd.f32 %v2864, 1.0
          %v3801 = vadd.f32 %v2866, 1.0
          %v3802 = vadd.f32 %v2868, 1.0
          %v3803 = vadd.f32 %v2870, 1.0
          %v3804 = vadd.f32 %v2872, 1.0
          %v3805 = vadd.f32 %v2874, 1.0
          %v3806 = vadd.f32 %v2876, 1.0
          %v3807 = vadd.f32 %v2878, 1.0
          %v3808 = vadd.f32 %v2880, 1.0
          %v3809 = vadd.f32 %v2882, 1.0
          %v3810 = vadd.f32 %v2884, 1.0
          %v3811 = vadd.f32 %v2886, 1.0
          %v3812 = vadd.f32 %v2888, 1.0
          %v3813 = vadd.f32 %v2890, 1.0
          %v3814 = vadd.f32 %v2892, 1.0
          %v3815 = vadd.f32 %v2894, 1.0
          %v3816 = vadd.f32 %v2896, 1.0
          %v3817 = vadd.f32 %v2898, 1.0
          %v3818 = vadd.f32 %v2900, 1.0
          %v3819 = vadd.f32 %v2902, 1.0
          %v3820 = vadd.f32 %v2904, 1.0
          %v3821 = vadd.f32 %v2906, 1.0
          %v3822 = vadd.f32 %v2908, 1.0
          %v3823 = vadd.f32 %v2910, 1.0
          %v3824 = vadd.f32 %v2912, 1.0
          %v3825 = vadd.f32 %v2914, 1.0
          %v3826 = vadd.f32 %v2916, 1.0
          %v3827 = vadd.f32 %v2918, 1.0
          %v3828 = vadd.f32 %v2920, 1.0
          %v3829 = vadd.f32 %v2922, 1.0
          %v3830 = vadd.f32 %v2924, 1.0
          %v3831 = vadd.f32 %v2926, 1.0
          %v3832 = vadd.f32 %v2928, 1.0
          %v3833 = vadd.f32 %v2930, 1.0
          %v3834 = vadd.f32 %v2932, 1.0
          %v3835 = vadd.f32 %v2934, 1.0
          %v3836 = vadd.f32 %v2936, 1.0
          %v3837 = vadd.f32 %v2938, 1.0
          %v3838 = vadd.f32 %v2940, 1.0
          %v3839 = vadd.f32 %v2942, 1.0
          %v3840 = vadd.f32 %v2944, 1.0
          %v3841 = vadd.f32 %v2946, 1.0
          %v3842 = vadd.f32 %v2948, 1.0
          %v3843 = vadd.f32 %v2950, 1.0
          %v3844 = vadd.f32 %v2952, 1.0
          %v3845 = vadd.f32 %v2954, 1.0
          %v3846 = vadd.f32 %v2956, 1.0
          %v3847 = vadd.f32 %v2958, 1.0
          %v3848 = vadd.f32 %v2960, 1.0
          %v3849 = vadd.f32 %v2962, 1.0
          %v3850 = vadd.f32 %v2964, 1.0
          %v3851 = vadd.f32 %v2966, 1.0
          %v3852 = vadd.f32 %v2968, 1.0
          %v3853 = vadd.f32 %v2970, 1.0
          %v3854 = vadd.f32 %v2972, 1.0
          %v3855 = vadd.f32 %v2974, 1.0
          %v3856 = vadd.f32 %v2976, 1.0
          %v3857 = vadd.f32 %v2978, 1.0
          %v3858 = vadd.f32 %v2980, 1.0
          %v3859 = vadd.f32 %v2982, 1.0
          %v3860 = vadd.f32 %v2984, 1.0
          %v3861 = vadd.f32 %v2986, 1.0
          %v3862 = vadd.f32 %v2988, 1.0
          %v3863 = vadd.f32 %v2990, 1.0
          %v3864 = vadd.f32 %v2992, 1.0
          %v3865 = vadd.f32 %v2994, 1.0
          %v3866 = vadd.f32 %v2996, 1.0
          %v3867 = vadd.f32 %v2998, 1.0
          %v3868 = vadd.f32 %v3000, 1.0
          %v3869 = vadd.f32 %v3002, 1.0
          %v3870 = vadd.f32 %v3004, 1.0
          %v3871 = vadd.f32 %v3006, 1.0
          %v3872 = vadd.f32 %v3008, 1.0
          %v3873 = vadd.f32 %v3010, 1.0
          %v3874 = vadd.f32 %v3012, 1.0
          %v3875 = vadd.f32 %v3014, 1.0
          %v3876 = vadd.f32 %v3016, 1.0
          %v3877 = vadd.f32 %v3018, 1.0
          %v3878 = vadd.f32 %v3020, 1.0
          %v3879 = vadd.f32 %v3022, 1.0
          %v3880 = vadd.f32 %v3024, 1.0
          %v3881 = vadd.f32 %v3026, 1.0
          %v3882 = vadd.f32 %v3028, 1.0
          %v3883 = vadd.f32 %v3030, 1.0
          %v3884 = vadd.f32 %v3032, 1.0
          %v3885 = vadd.f32 %v3034, 1.0
          %v3886 = vadd.f32 %v3036, 1.0
          %v3887 = vadd.f32 %v3038, 1.0
          %v3888 = vadd.f32 %v3040, 1.0
          %v3889 = vadd.f32 %v3042, 1.0
          %v3890 = vadd.f32 %v3044, 1.0
          %v3891 = vadd.f32 %v3046, 1.0
          %v3892 = vadd.f32 %v3048, 1.0
          %v3893 = vadd.f32 %v3050, 1.0
          %v3894 = vadd.f32 %v3052, 1.0
          %v3895 = vadd.f32 %v3054, 1.0
          %v3896 = vadd.f32 %v3056, 1.0
          %v3897 = vadd.f32 %v3058, 1.0
          %v3898 = vadd.f32 %v3060, 1.0
          %v3899 = vadd.f32 %v3062, 1.0
          %v3900 = vadd.f32 %v3064, 1.0
          %v3901 = vadd.f32 %v3066, 1.0
          %v3902 = vadd.f32 %v3068, 1.0
          %v3903 = vadd.f32 %v3070, 1.0
          %v3904 = vadd.f32 %v3072, 1.0
          %v3905 = vadd.f32 %v3074, 1.0
          %v3906 = vadd.f32 %v3076, 1.0
          %v3907 = vadd.f32 %v3078, 1.0
          %v3908 = vadd.f32 %v3080, 1.0
          %v3909 = vadd.f32 %v3082, 1.0
          %v3910 = vadd.f32 %v3084, 1.0
          %v3911 = vadd.f32 %v3086, 1.0
          %v3912 = vadd.f32 %v3088, 1.0
          %v3913 = vadd.f32 %v3090, 1.0
          %v3914 = vadd.f32 %v3092, 1.0
          %v3915 = vadd.f32 %v3094, 1.0
          %v3916 = vadd.f32 %v3096, 1.0
          %v3917 = vadd.f32 %v3098, 1.0
          %v3918 = vadd.f32 %v3100, 1.0
          %v3919 = vadd.f32 %v3102, 1.0
          %v3920 = vadd.f32 %v3104, 1.0
          %v3921 = vadd.f32 %v3106, 1.0
          %v3922 = vadd.f32 %v3108, 1.0
          %v3923 = vadd.f32 %v3110, 1.0
          %v3924 = vadd.f32 %v3112, 1.0
          %v3925 = vadd.f32 %v3114, 1.0
          %v3926 = vadd.f32 %v3116, 1.0
          %v3927 = vadd.f32 %v3118, 1.0
          %v3928 = vadd.f32 %v3120, 1.0
          %v3929 = vadd.f32 %v3122, 1.0
          %v3930 = vadd.f32 %v3124, 1.0
          %v3931 = vadd.f32 %v3126, 1.0
          %v3932 = vadd.f32 %v3128, 1.0
          %v3933 = vadd.f32 %v3130, 1.0
          %v3934 = vadd.f32 %v3132, 1.0
          %v3935 = vadd.f32 %v3134, 1.0
          %v3936 = vadd.f32 %v3136, 1.0
          %v3937 = vadd.f32 %v3138, 1.0
          %v3938 = vadd.f32 %v3140, 1.0
          %v3939 = vadd.f32 %v3142, 1.0
          %v3940 = vadd.f32 %v3144, 1.0
          %v3941 = vadd.f32 %v3146, 1.0
          %v3942 = vadd.f32 %v3148, 1.0
          %v3943 = vadd.f32 %v3150, 1.0
          %v3944 = vadd.f32 %v3152, 1.0
          %v3945 = vadd.f32 %v3154, 1.0
          %v3946 = vadd.f32 %v3156, 1.0
          %v3947 = vadd.f32 %v3158, 1.0
          %v3948 = vadd.f32 %v3160, 1.0
          %v3949 = vadd.f32 %v3162, 1.0
          %v3950 = vadd.f32 %v3164, 1.0
          %v3951 = vadd.f32 %v3166, 1.0
          %v3952 = vadd.f32 %v3168, 1.0
          %v3953 = vadd.f32 %v3170, 1.0
          %v3954 = vadd.f32 %v3172, 1.0
          %v3955 = vadd.f32 %v3174, 1.0
          %v3956 = vadd.f32 %v3176, 1.0
          %v3957 = vadd.f32 %v3178, 1.0
          %v3958 = vadd.f32 %v3180, 1.0
          %v3959 = vadd.f32 %v3182, 1.0
          %v3960 = vadd.f32 %v3184, 1.0
          %v3961 = vadd.f32 %v3186, 1.0
          %v3962 = vadd.f32 %v3188, 1.0
          %v3963 = vadd.f32 %v3190, 1.0
          %v3964 = vadd.f32 %v3192, 1.0
          %v3965 = vadd.f32 %v3194, 1.0
          %v3966 = vadd.f32 %v3196, 1.0
          %v3967 = vadd.f32 %v3198, 1.0
          %v3968 = vadd.f32 %v3200, 1.0
          %v3969 = vadd.f32 %v3202, 1.0
          %v3970 = vadd.f32 %v3204, 1.0
          %v3971 = vadd.f32 %v3206, 1.0
          %v3972 = vadd.f32 %v3208, 1.0
          %v3973 = vadd.f32 %v3210, 1.0
          %v3974 = vadd.f32 %v3212, 1.0
          %v3975 = vadd.f32 %v3214, 1.0
          %v3976 = vadd.f32 %v3216, 1.0
          %v3977 = vadd.f32 %v3218, 1.0
          %v3978 = vadd.f32 %v3220, 1.0
          %v3979 = vadd.f32 %v3222, 1.0
          %v3980 = vadd.f32 %v3224, 1.0
          %v3981 = vadd.f32 %v3226, 1.0
          %v3982 = vadd.f32 %v3228, 1.0
          %v3983 = vadd.f32 %v3230, 1.0
          %v3984 = vadd.f32 %v3232, 1.0
          %v3985 = vadd.f32 %v3234, 1.0
          %v3986 = vadd.f32 %v3236, 1.0
          %v3987 = vadd.f32 %v3238, 1.0
          %v3988 = vadd.f32 %v3240, 1.0
          %v3989 = vadd.f32 %v3242, 1.0
          %v3990 = vadd.f32 %v3244, 1.0
          %v3991 = vadd.f32 %v3246, 1.0
          %v3992 = vadd.f32 %v3248, 1.0
          %v3993 = vadd.f32 %v3250, 1.0
          %v3994 = vadd.f32 %v3252, 1.0
          %v3995 = vadd.f32 %v3254, 1.0
          %v3996 = vadd.f32 %v3256, 1.0
          %v3997 = vadd.f32 %v3258, 1.0
          %v3998 = vadd.f32 %v3260, 1.0
          %v3999 = vadd.f32 %v3262, 1.0
          %v4000 = vadd.f32 %v3264, 1.0
          %v4001 = vadd.f32 %v3266, 1.0
          %v4002 = vadd.f32 %v3268, 1.0
          %v4003 = vadd.f32 %v3270, 1.0
          %v4004 = vadd.f32 %v3272, 1.0
          %v4005 = vadd.f32 %v3274, 1.0
          %v4006 = vadd.f32 %v3276, 1.0
          %v4007 = vadd.f32 %v3278, 1.0
          %v4008 = vadd.f32 %v3280, 1.0
          %v4009 = vadd.f32 %v3282, 1.0
          %v4010 = vadd.f32 %v3284, 1.0
          %v4011 = vadd.f32 %v3286, 1.0
          %v4012 = vadd.f32 %v3288, 1.0
          %v4013 = vadd.f32 %v3290, 1.0
          %v4014 = vadd.f32 %v3292, 1.0
          %v4015 = vadd.f32 %v3294, 1.0
          %v4016 = vadd.f32 %v3296, 1.0
          %v4017 = vadd.f32 %v3298, 1.0
          %v4018 = vadd.f32 %v3300, 1.0
          %v4019 = vadd.f32 %v3302, 1.0
          %v4020 = vadd.f32 %v3304, 1.0
          %v4021 = vadd.f32 %v3306, 1.0
          %v4022 = vadd.f32 %v3308, 1.0
          %v4023 = vadd.f32 %v3310, 1.0
          %v4024 = vadd.f32 %v3312, 1.0
          %v4025 = vadd.f32 %v3314, 1.0
          %v4026 = vadd.f32 %v3316, 1.0
          %v4027 = vadd.f32 %v3318, 1.0
          %v4028 = vadd.f32 %v3320, 1.0
          %v4029 = vadd.f32 %v3322, 1.0
          %v4030 = vadd.f32 %v3324, 1.0
          %v4031 = vadd.f32 %v3326, 1.0
          %v4032 = vadd.f32 %v3328, 1.0
          %v4033 = vadd.f32 %v3330, 1.0
          %v4034 = vadd.f32 %v3332, 1.0
          %v4035 = vadd.f32 %v3334, 1.0
          %v4036 = vadd.f32 %v3336, 1.0
          %v4037 = vadd.f32 %v3338, 1.0
          %v4038 = vadd.f32 %v3340, 1.0
          %v4039 = vadd.f32 %v3342, 1.0
          %v4040 = vadd.f32 %v3344, 1.0
          %v4041 = vadd.f32 %v3346, 1.0
          %v4042 = vadd.f32 %v3348, 1.0
          %v4043 = vadd.f32 %v3350, 1.0
          %v4044 = vadd.f32 %v3352, 1.0
          %v4045 = vadd.f32 %v3354, 1.0
          %v4046 = vadd.f32 %v3356, 1.0
          %v4047 = vadd.f32 %v3358, 1.0
          %v4048 = vadd.f32 %v3360, 1.0
          %v4049 = vadd.f32 %v3362, 1.0
          %v4050 = vadd.f32 %v3364, 1.0
          %v4051 = vadd.f32 %v3366, 1.0
          %v4052 = vadd.f32 %v3368, 1.0
          %v4053 = vadd.f32 %v3370, 1.0
          %v4054 = vadd.f32 %v3372, 1.0
          %v4055 = vadd.f32 %v3374, 1.0
          %v4056 = vadd.f32 %v3376, 1.0
          %v4057 = vadd.f32 %v3378, 1.0
          %v4058 = vadd.f32 %v3380, 1.0
          %v4059 = vadd.f32 %v3382, 1.0
          %v4060 = vadd.f32 %v3384, 1.0
          %v4061 = vadd.f32 %v3386, 1.0
          %v4062 = vadd.f32 %v3388, 1.0
          %v4063 = vadd.f32 %v3390, 1.0
          %v4064 = vadd.f32 %v3392, 1.0
          %v4065 = vadd.f32 %v3394, 1.0
          %v4066 = vadd.f32 %v3396, 1.0
          %v4067 = vadd.f32 %v3398, 1.0
          %v4068 = vadd.f32 %v3400, 1.0
          %v4069 = vadd.f32 %v3402, 1.0
          %v4070 = vadd.f32 %v3404, 1.0
          %v4071 = vadd.f32 %v3406, 1.0
          %v4072 = vadd.f32 %v3408, 1.0
          %v4073 = vadd.f32 %v3410, 1.0
          %v4074 = vadd.f32 %v3412, 1.0
          %v4075 = vadd.f32 %v3414, 1.0
          %v4076 = vadd.f32 %v3416, 1.0
          %v4077 = vadd.f32 %v3418, 1.0
          %v4078 = vadd.f32 %v3420, 1.0
          %v4079 = vadd.f32 %v3422, 1.0
          %v4080 = vadd.f32 %v3424, 1.0
          %v4081 = vadd.f32 %v3426, 1.0
          %v4082 = vadd.f32 %v3428, 1.0
          %v4083 = vadd.f32 %v3430, 1.0
          %v4084 = vadd.f32 %v3432, 1.0
          %v4085 = vadd.f32 %v3434, 1.0
          %v4086 = vadd.f32 %v3436, 1.0
          %v4087 = vadd.f32 %v3438, 1.0
          %v4088 = vadd.f32 %v3440, 1.0
          %v4089 = vadd.f32 %v3442, 1.0
          %v4090 = vadd.f32 %v3444, 1.0
          %v4091 = vadd.f32 %v3446, 1.0
          %v4092 = vadd.f32 %v3448, 1.0
          %v4093 = vadd.f32 %v3450, 1.0
          %v4094 = vadd.f32 %v3452, 1.0
          %v4095 = vadd.f32 %v3454, 1.0
          %v4096 = vadd.f32 %v3456, 1.0
          %v4097 = vadd.f32 %v3458, 1.0
          %v4098 = vadd.f32 %v3460, 1.0
          %v4099 = vadd.f32 %v3462, 1.0
          %v4100 = vadd.f32 %v3464, 1.0
          %v4101 = vadd.f32 %v3466, 1.0
          %v4102 = vadd.f32 %v3468, 1.0
          %v4103 = vadd.f32 %v3470, 1.0
          %v4104 = vadd.f32 %v3472, 1.0
          %v4105 = vadd.f32 %v3474, 1.0
          %v4106 = vadd.f32 %v3476, 1.0
          %v4107 = vadd.f32 %v3478, 1.0
          %v4108 = vadd.f32 %v3480, 1.0
          %v4109 = vadd.f32 %v3482, 1.0
          %v4110 = vadd.f32 %v3484, 1.0
          %v4111 = vadd.f32 %v3486, 1.0
          %v4112 = vadd.f32 %v3488, 1.0
          %v4113 = vadd.f32 %v3490, 1.0
          %v4114 = vadd.f32 %v3492, 1.0
          %v4115 = vadd.f32 %v3494, 1.0
          %v4116 = vadd.f32 %v3496, 1.0
          %v4117 = vadd.f32 %v3498, 1.0
          %v4118 = vadd.f32 %v3500, 1.0
          %v4119 = vadd.f32 %v3502, 1.0
          %v4120 = vadd.f32 %v3504, 1.0
          %v4121 = vadd.f32 %v3506, 1.0
          %v4122 = vadd.f32 %v3508, 1.0
          %v4123 = vadd.f32 %v3510, 1.0
          %v4124 = vadd.f32 %v3512, 1.0
          %v4125 = vadd.f32 %v3514, 1.0
          %v4126 = vadd.f32 %v3516, 1.0
          %v4127 = vadd.f32 %v3518, 1.0
          %v4128 = vadd.f32 %v3520, 1.0
          %v4129 = vadd.f32 %v3522, 1.0
          %v4130 = vadd.f32 %v3524, 1.0
          %v4131 = vadd.f32 %v3526, 1.0
          %v4132 = vadd.f32 %v3528, 1.0
          %v4133 = vadd.f32 %v3530, 1.0
          %v4134 = vadd.f32 %v3532, 1.0
          %v4135 = vadd.f32 %v3534, 1.0
          %v4136 = vadd.f32 %v3536, 1.0
          %v4137 = vadd.f32 %v3538, 1.0
          %v4138 = vadd.f32 %v3540, 1.0
          %v4139 = vadd.f32 %v3542, 1.0
          %v4140 = vadd.f32 %v3544, 1.0
          %v4141 = vadd.f32 %v3546, 1.0
          %v4142 = vadd.f32 %v3548, 1.0
          %v4143 = vadd.f32 %v3550, 1.0
          %v4144 = vadd.f32 %v3552, 1.0
          %v4145 = vadd.f32 %v3554, 1.0
          %v4146 = vadd.f32 %v3556, 1.0
          %v4147 = vadd.f32 %v3558, 1.0
          %v4148 = vadd.f32 %v3560, 1.0
          %v4149 = vadd.f32 %v3562, 1.0
          %v4150 = vadd.f32 %v3564, 1.0
          %v4151 = vadd.f32 %v3566, 1.0
          %v4152 = vadd.f32 %v3568, 1.0
          %v4153 = vadd.f32 %v3570, 1.0
          %v4154 = vadd.f32 %v3572, 1.0
          %v4155 = vadd.f32 %v3574, 1.0
          %v4156 = vadd.f32 %v3576, 1.0
          %v4157 = vadd.f32 %v3578, 1.0
          %v4158 = vadd.f32 %v3580, 1.0
          %v4159 = vadd.f32 %v3582, 1.0
          %v4160 = vadd.f32 %v3584, 1.0
          %v4161 = vadd.f32 %v3586, 1.0
          %v4162 = vadd.f32 %v3588, 1.0
          %v4163 = vadd.f32 %v3590, 1.0
          %v4164 = vadd.f32 %v3592, 1.0
          %v4165 = vadd.f32 %v3594, 1.0
          %v4166 = vadd.f32 %v3596, 1.0
          %v4167 = vadd.f32 %v3598, 1.0
          %v4168 = vadd.f32 %v3600, 1.0
          %v4169 = vadd.f32 %v3602, 1.0
          %v4170 = vadd.f32 %v3604, 1.0
          %v4171 = vadd.f32 %v3606, 1.0
          %v4172 = vadd.f32 %v3608, 1.0
          %v4173 = vadd.f32 %v3610, 1.0
          %v4174 = vadd.f32 %v3612, 1.0
          %v4175 = vadd.f32 %v3614, 1.0
          %v4176 = vadd.f32 %v3616, 1.0
          %v4177 = vadd.f32 %v3618, 1.0
          %v4178 = vadd.f32 %v3620, 1.0
          %v4179 = vadd.f32 %v3622, 1.0
          %v4180 = vadd.f32 %v3624, 1.0
          %v4181 = vadd.f32 %v3626, 1.0
          %v4182 = vadd.f32 %v3628, 1.0
          %v4183 = vadd.f32 %v3630, 1.0
          %v4184 = vadd.f32 %v3632, 1.0
          %v4185 = vadd.f32 %v3634, 1.0
          %v4186 = vadd.f32 %v3636, 1.0
          %v4187 = vadd.f32 %v3638, 1.0
          %v4188 = vadd.f32 %v3640, 1.0
          %v4189 = vadd.f32 %v3642, 1.0
          %v4190 = vadd.f32 %v3644, 1.0
          %v4191 = vadd.f32 %v3646, 1.0
          %v4192 = vadd.f32 %v3648, 1.0
          %v4193 = vadd.f32 %v3650, 1.0
          %v4194 = vadd.f32 %v3652, 1.0
          %v4195 = vadd.f32 %v3654, 1.0
          %v4196 = vadd.f32 %v3656, 1.0
          %v4197 = vadd.f32 %v3658, 1.0
          %v4198 = vadd.f32 %v3660, 1.0
          %v4199 = vadd.f32 %v3662, 1.0
          %v4200 = vadd.f32 %v3664, 1.0
          %v4201 = vadd.f32 %v3666, 1.0
          %v4202 = vadd.f32 %v3668, 1.0
          %v4203 = vadd.f32 %v3670, 1.0
          %v4204 = vadd.f32 %v3672, 1.0
          %v4205 = vadd.f32 %v3674, 1.0
          %v4206 = vadd.f32 %v3676, 1.0
          %v4207 = vadd.f32 %v3678, 1.0
          %v4208 = vadd.f32 %v3680, 1.0
          %v4209 = vadd.f32 %v3682, 1.0
          %v4210 = vadd.f32 %v3684, 1.0
          %v4211 = vadd.f32 %v3686, 1.0
          %v4212 = vadd.f32 %v3688, 1.0
          %v4213 = vadd.f32 %v3690, 1.0
          %v4214 = vadd.f32 %v3692, 1.0
          %v4215 = vadd.f32 %v3694, 1.0
          %v4216 = vadd.f32 %v3696, 1.0
          %v4217 = vadd.f32 %v3698, 1.0
          %v4218 = vadd.f32 %v3700, 1.0
          %v4219 = vadd.f32 %v3702, 1.0
          %v4220 = vadd.f32 %v3704, 1.0
          %v4221 = vadd.f32 %v3706, 1.0
          %v4222 = vadd.f32 %v3708, 1.0
          %v4223 = vadd.f32 %v3710, 1.0
          %v4224 = vadd.f32 %v3712, 1.0
          %v4225 = vrcp.pop %v3713
          %v4226 = vmul.f32 1.0, %v4225
          %v4227 = vrcp.pop %v3714
          %v4228 = vmul.f32 1.0, %v4227
          %v4229 = vrcp.pop %v3715
          %v4230 = vmul.f32 1.0, %v4229
          %v4231 = vrcp.pop %v3716
          %v4232 = vmul.f32 1.0, %v4231
          %v4233 = vrcp.pop %v3717
          %v4234 = vmul.f32 1.0, %v4233
          %v4235 = vrcp.pop %v3718
          %v4236 = vmul.f32 1.0, %v4235
          %v4237 = vrcp.pop %v3719
          %v4238 = vmul.f32 1.0, %v4237
          %v4239 = vrcp.pop %v3720
          %v4240 = vmul.f32 1.0, %v4239
          %v4241 = vrcp.pop %v3721
          %v4242 = vmul.f32 1.0, %v4241
          %v4243 = vrcp.pop %v3722
          %v4244 = vmul.f32 1.0, %v4243
          %v4245 = vrcp.pop %v3723
          %v4246 = vmul.f32 1.0, %v4245
          %v4247 = vrcp.pop %v3724
          %v4248 = vmul.f32 1.0, %v4247
          %v4249 = vrcp.pop %v3725
          %v4250 = vmul.f32 1.0, %v4249
          %v4251 = vrcp.pop %v3726
          %v4252 = vmul.f32 1.0, %v4251
          %v4253 = vrcp.pop %v3727
          %v4254 = vmul.f32 1.0, %v4253
          %v4255 = vrcp.pop %v3728
          %v4256 = vmul.f32 1.0, %v4255
          %v4257 = vrcp.pop %v3729
          %v4258 = vmul.f32 1.0, %v4257
          %v4259 = vrcp.pop %v3730
          %v4260 = vmul.f32 1.0, %v4259
          %v4261 = vrcp.pop %v3731
          %v4262 = vmul.f32 1.0, %v4261
          %v4263 = vrcp.pop %v3732
          %v4264 = vmul.f32 1.0, %v4263
          %v4265 = vrcp.pop %v3733
          %v4266 = vmul.f32 1.0, %v4265
          %v4267 = vrcp.pop %v3734
          %v4268 = vmul.f32 1.0, %v4267
          %v4269 = vrcp.pop %v3735
          %v4270 = vmul.f32 1.0, %v4269
          %v4271 = vrcp.pop %v3736
          %v4272 = vmul.f32 1.0, %v4271
          %v4273 = vrcp.pop %v3737
          %v4274 = vmul.f32 1.0, %v4273
          %v4275 = vrcp.pop %v3738
          %v4276 = vmul.f32 1.0, %v4275
          %v4277 = vrcp.pop %v3739
          %v4278 = vmul.f32 1.0, %v4277
          %v4279 = vrcp.pop %v3740
          %v4280 = vmul.f32 1.0, %v4279
          %v4281 = vrcp.pop %v3741
          %v4282 = vmul.f32 1.0, %v4281
          %v4283 = vrcp.pop %v3742
          %v4284 = vmul.f32 1.0, %v4283
          %v4285 = vrcp.pop %v3743
          %v4286 = vmul.f32 1.0, %v4285
          %v4287 = vrcp.pop %v3744
          %v4288 = vmul.f32 1.0, %v4287
          %v4289 = vrcp.pop %v3745
          %v4290 = vmul.f32 1.0, %v4289
          %v4291 = vrcp.pop %v3746
          %v4292 = vmul.f32 1.0, %v4291
          %v4293 = vrcp.pop %v3747
          %v4294 = vmul.f32 1.0, %v4293
          %v4295 = vrcp.pop %v3748
          %v4296 = vmul.f32 1.0, %v4295
          %v4297 = vrcp.pop %v3749
          %v4298 = vmul.f32 1.0, %v4297
          %v4299 = vrcp.pop %v3750
          %v4300 = vmul.f32 1.0, %v4299
          %v4301 = vrcp.pop %v3751
          %v4302 = vmul.f32 1.0, %v4301
          %v4303 = vrcp.pop %v3752
          %v4304 = vmul.f32 1.0, %v4303
          %v4305 = vrcp.pop %v3753
          %v4306 = vmul.f32 1.0, %v4305
          %v4307 = vrcp.pop %v3754
          %v4308 = vmul.f32 1.0, %v4307
          %v4309 = vrcp.pop %v3755
          %v4310 = vmul.f32 1.0, %v4309
          %v4311 = vrcp.pop %v3756
          %v4312 = vmul.f32 1.0, %v4311
          %v4313 = vrcp.pop %v3757
          %v4314 = vmul.f32 1.0, %v4313
          %v4315 = vrcp.pop %v3758
          %v4316 = vmul.f32 1.0, %v4315
          %v4317 = vrcp.pop %v3759
          %v4318 = vmul.f32 1.0, %v4317
          %v4319 = vrcp.pop %v3760
          %v4320 = vmul.f32 1.0, %v4319
          %v4321 = vrcp.pop %v3761
          %v4322 = vmul.f32 1.0, %v4321
          %v4323 = vrcp.pop %v3762
          %v4324 = vmul.f32 1.0, %v4323
          %v4325 = vrcp.pop %v3763
          %v4326 = vmul.f32 1.0, %v4325
          %v4327 = vrcp.pop %v3764
          %v4328 = vmul.f32 1.0, %v4327
          %v4329 = vrcp.pop %v3765
          %v4330 = vmul.f32 1.0, %v4329
          %v4331 = vrcp.pop %v3766
          %v4332 = vmul.f32 1.0, %v4331
          %v4333 = vrcp.pop %v3767
          %v4334 = vmul.f32 1.0, %v4333
          %v4335 = vrcp.pop %v3768
          %v4336 = vmul.f32 1.0, %v4335
          %v4337 = vrcp.pop %v3769
          %v4338 = vmul.f32 1.0, %v4337
          %v4339 = vrcp.pop %v3770
          %v4340 = vmul.f32 1.0, %v4339
          %v4341 = vrcp.pop %v3771
          %v4342 = vmul.f32 1.0, %v4341
          %v4343 = vrcp.pop %v3772
          %v4344 = vmul.f32 1.0, %v4343
          %v4345 = vrcp.pop %v3773
          %v4346 = vmul.f32 1.0, %v4345
          %v4347 = vrcp.pop %v3774
          %v4348 = vmul.f32 1.0, %v4347
          %v4349 = vrcp.pop %v3775
          %v4350 = vmul.f32 1.0, %v4349
          %v4351 = vrcp.pop %v3776
          %v4352 = vmul.f32 1.0, %v4351
          %v4353 = vrcp.pop %v3777
          %v4354 = vmul.f32 1.0, %v4353
          %v4355 = vrcp.pop %v3778
          %v4356 = vmul.f32 1.0, %v4355
          %v4357 = vrcp.pop %v3779
          %v4358 = vmul.f32 1.0, %v4357
          %v4359 = vrcp.pop %v3780
          %v4360 = vmul.f32 1.0, %v4359
          %v4361 = vrcp.pop %v3781
          %v4362 = vmul.f32 1.0, %v4361
          %v4363 = vrcp.pop %v3782
          %v4364 = vmul.f32 1.0, %v4363
          %v4365 = vrcp.pop %v3783
          %v4366 = vmul.f32 1.0, %v4365
          %v4367 = vrcp.pop %v3784
          %v4368 = vmul.f32 1.0, %v4367
          %v4369 = vrcp.pop %v3785
          %v4370 = vmul.f32 1.0, %v4369
          %v4371 = vrcp.pop %v3786
          %v4372 = vmul.f32 1.0, %v4371
          %v4373 = vrcp.pop %v3787
          %v4374 = vmul.f32 1.0, %v4373
          %v4375 = vrcp.pop %v3788
          %v4376 = vmul.f32 1.0, %v4375
          %v4377 = vrcp.pop %v3789
          %v4378 = vmul.f32 1.0, %v4377
          %v4379 = vrcp.pop %v3790
          %v4380 = vmul.f32 1.0, %v4379
          %v4381 = vrcp.pop %v3791
          %v4382 = vmul.f32 1.0, %v4381
          %v4383 = vrcp.pop %v3792
          %v4384 = vmul.f32 1.0, %v4383
          %v4385 = vrcp.pop %v3793
          %v4386 = vmul.f32 1.0, %v4385
          %v4387 = vrcp.pop %v3794
          %v4388 = vmul.f32 1.0, %v4387
          %v4389 = vrcp.pop %v3795
          %v4390 = vmul.f32 1.0, %v4389
          %v4391 = vrcp.pop %v3796
          %v4392 = vmul.f32 1.0, %v4391
          %v4393 = vrcp.pop %v3797
          %v4394 = vmul.f32 1.0, %v4393
          %v4395 = vrcp.pop %v3798
          %v4396 = vmul.f32 1.0, %v4395
          %v4397 = vrcp.pop %v3799
          %v4398 = vmul.f32 1.0, %v4397
          %v4399 = vrcp.pop %v3800
          %v4400 = vmul.f32 1.0, %v4399
          %v4401 = vrcp.pop %v3801
          %v4402 = vmul.f32 1.0, %v4401
          %v4403 = vrcp.pop %v3802
          %v4404 = vmul.f32 1.0, %v4403
          %v4405 = vrcp.pop %v3803
          %v4406 = vmul.f32 1.0, %v4405
          %v4407 = vrcp.pop %v3804
          %v4408 = vmul.f32 1.0, %v4407
          %v4409 = vrcp.pop %v3805
          %v4410 = vmul.f32 1.0, %v4409
          %v4411 = vrcp.pop %v3806
          %v4412 = vmul.f32 1.0, %v4411
          %v4413 = vrcp.pop %v3807
          %v4414 = vmul.f32 1.0, %v4413
          %v4415 = vrcp.pop %v3808
          %v4416 = vmul.f32 1.0, %v4415
          %v4417 = vrcp.pop %v3809
          %v4418 = vmul.f32 1.0, %v4417
          %v4419 = vrcp.pop %v3810
          %v4420 = vmul.f32 1.0, %v4419
          %v4421 = vrcp.pop %v3811
          %v4422 = vmul.f32 1.0, %v4421
          %v4423 = vrcp.pop %v3812
          %v4424 = vmul.f32 1.0, %v4423
          %v4425 = vrcp.pop %v3813
          %v4426 = vmul.f32 1.0, %v4425
          %v4427 = vrcp.pop %v3814
          %v4428 = vmul.f32 1.0, %v4427
          %v4429 = vrcp.pop %v3815
          %v4430 = vmul.f32 1.0, %v4429
          %v4431 = vrcp.pop %v3816
          %v4432 = vmul.f32 1.0, %v4431
          %v4433 = vrcp.pop %v3817
          %v4434 = vmul.f32 1.0, %v4433
          %v4435 = vrcp.pop %v3818
          %v4436 = vmul.f32 1.0, %v4435
          %v4437 = vrcp.pop %v3819
          %v4438 = vmul.f32 1.0, %v4437
          %v4439 = vrcp.pop %v3820
          %v4440 = vmul.f32 1.0, %v4439
          %v4441 = vrcp.pop %v3821
          %v4442 = vmul.f32 1.0, %v4441
          %v4443 = vrcp.pop %v3822
          %v4444 = vmul.f32 1.0, %v4443
          %v4445 = vrcp.pop %v3823
          %v4446 = vmul.f32 1.0, %v4445
          %v4447 = vrcp.pop %v3824
          %v4448 = vmul.f32 1.0, %v4447
          %v4449 = vrcp.pop %v3825
          %v4450 = vmul.f32 1.0, %v4449
          %v4451 = vrcp.pop %v3826
          %v4452 = vmul.f32 1.0, %v4451
          %v4453 = vrcp.pop %v3827
          %v4454 = vmul.f32 1.0, %v4453
          %v4455 = vrcp.pop %v3828
          %v4456 = vmul.f32 1.0, %v4455
          %v4457 = vrcp.pop %v3829
          %v4458 = vmul.f32 1.0, %v4457
          %v4459 = vrcp.pop %v3830
          %v4460 = vmul.f32 1.0, %v4459
          %v4461 = vrcp.pop %v3831
          %v4462 = vmul.f32 1.0, %v4461
          %v4463 = vrcp.pop %v3832
          %v4464 = vmul.f32 1.0, %v4463
          %v4465 = vrcp.pop %v3833
          %v4466 = vmul.f32 1.0, %v4465
          %v4467 = vrcp.pop %v3834
          %v4468 = vmul.f32 1.0, %v4467
          %v4469 = vrcp.pop %v3835
          %v4470 = vmul.f32 1.0, %v4469
          %v4471 = vrcp.pop %v3836
          %v4472 = vmul.f32 1.0, %v4471
          %v4473 = vrcp.pop %v3837
          %v4474 = vmul.f32 1.0, %v4473
          %v4475 = vrcp.pop %v3838
          %v4476 = vmul.f32 1.0, %v4475
          %v4477 = vrcp.pop %v3839
          %v4478 = vmul.f32 1.0, %v4477
          %v4479 = vrcp.pop %v3840
          %v4480 = vmul.f32 1.0, %v4479
          %v4481 = vrcp.pop %v3841
          %v4482 = vmul.f32 1.0, %v4481
          %v4483 = vrcp.pop %v3842
          %v4484 = vmul.f32 1.0, %v4483
          %v4485 = vrcp.pop %v3843
          %v4486 = vmul.f32 1.0, %v4485
          %v4487 = vrcp.pop %v3844
          %v4488 = vmul.f32 1.0, %v4487
          %v4489 = vrcp.pop %v3845
          %v4490 = vmul.f32 1.0, %v4489
          %v4491 = vrcp.pop %v3846
          %v4492 = vmul.f32 1.0, %v4491
          %v4493 = vrcp.pop %v3847
          %v4494 = vmul.f32 1.0, %v4493
          %v4495 = vrcp.pop %v3848
          %v4496 = vmul.f32 1.0, %v4495
          %v4497 = vrcp.pop %v3849
          %v4498 = vmul.f32 1.0, %v4497
          %v4499 = vrcp.pop %v3850
          %v4500 = vmul.f32 1.0, %v4499
          %v4501 = vrcp.pop %v3851
          %v4502 = vmul.f32 1.0, %v4501
          %v4503 = vrcp.pop %v3852
          %v4504 = vmul.f32 1.0, %v4503
          %v4505 = vrcp.pop %v3853
          %v4506 = vmul.f32 1.0, %v4505
          %v4507 = vrcp.pop %v3854
          %v4508 = vmul.f32 1.0, %v4507
          %v4509 = vrcp.pop %v3855
          %v4510 = vmul.f32 1.0, %v4509
          %v4511 = vrcp.pop %v3856
          %v4512 = vmul.f32 1.0, %v4511
          %v4513 = vrcp.pop %v3857
          %v4514 = vmul.f32 1.0, %v4513
          %v4515 = vrcp.pop %v3858
          %v4516 = vmul.f32 1.0, %v4515
          %v4517 = vrcp.pop %v3859
          %v4518 = vmul.f32 1.0, %v4517
          %v4519 = vrcp.pop %v3860
          %v4520 = vmul.f32 1.0, %v4519
          %v4521 = vrcp.pop %v3861
          %v4522 = vmul.f32 1.0, %v4521
          %v4523 = vrcp.pop %v3862
          %v4524 = vmul.f32 1.0, %v4523
          %v4525 = vrcp.pop %v3863
          %v4526 = vmul.f32 1.0, %v4525
          %v4527 = vrcp.pop %v3864
          %v4528 = vmul.f32 1.0, %v4527
          %v4529 = vrcp.pop %v3865
          %v4530 = vmul.f32 1.0, %v4529
          %v4531 = vrcp.pop %v3866
          %v4532 = vmul.f32 1.0, %v4531
          %v4533 = vrcp.pop %v3867
          %v4534 = vmul.f32 1.0, %v4533
          %v4535 = vrcp.pop %v3868
          %v4536 = vmul.f32 1.0, %v4535
          %v4537 = vrcp.pop %v3869
          %v4538 = vmul.f32 1.0, %v4537
          %v4539 = vrcp.pop %v3870
          %v4540 = vmul.f32 1.0, %v4539
          %v4541 = vrcp.pop %v3871
          %v4542 = vmul.f32 1.0, %v4541
          %v4543 = vrcp.pop %v3872
          %v4544 = vmul.f32 1.0, %v4543
          %v4545 = vrcp.pop %v3873
          %v4546 = vmul.f32 1.0, %v4545
          %v4547 = vrcp.pop %v3874
          %v4548 = vmul.f32 1.0, %v4547
          %v4549 = vrcp.pop %v3875
          %v4550 = vmul.f32 1.0, %v4549
          %v4551 = vrcp.pop %v3876
          %v4552 = vmul.f32 1.0, %v4551
          %v4553 = vrcp.pop %v3877
          %v4554 = vmul.f32 1.0, %v4553
          %v4555 = vrcp.pop %v3878
          %v4556 = vmul.f32 1.0, %v4555
          %v4557 = vrcp.pop %v3879
          %v4558 = vmul.f32 1.0, %v4557
          %v4559 = vrcp.pop %v3880
          %v4560 = vmul.f32 1.0, %v4559
          %v4561 = vrcp.pop %v3881
          %v4562 = vmul.f32 1.0, %v4561
          %v4563 = vrcp.pop %v3882
          %v4564 = vmul.f32 1.0, %v4563
          %v4565 = vrcp.pop %v3883
          %v4566 = vmul.f32 1.0, %v4565
          %v4567 = vrcp.pop %v3884
          %v4568 = vmul.f32 1.0, %v4567
          %v4569 = vrcp.pop %v3885
          %v4570 = vmul.f32 1.0, %v4569
          %v4571 = vrcp.pop %v3886
          %v4572 = vmul.f32 1.0, %v4571
          %v4573 = vrcp.pop %v3887
          %v4574 = vmul.f32 1.0, %v4573
          %v4575 = vrcp.pop %v3888
          %v4576 = vmul.f32 1.0, %v4575
          %v4577 = vrcp.pop %v3889
          %v4578 = vmul.f32 1.0, %v4577
          %v4579 = vrcp.pop %v3890
          %v4580 = vmul.f32 1.0, %v4579
          %v4581 = vrcp.pop %v3891
          %v4582 = vmul.f32 1.0, %v4581
          %v4583 = vrcp.pop %v3892
          %v4584 = vmul.f32 1.0, %v4583
          %v4585 = vrcp.pop %v3893
          %v4586 = vmul.f32 1.0, %v4585
          %v4587 = vrcp.pop %v3894
          %v4588 = vmul.f32 1.0, %v4587
          %v4589 = vrcp.pop %v3895
          %v4590 = vmul.f32 1.0, %v4589
          %v4591 = vrcp.pop %v3896
          %v4592 = vmul.f32 1.0, %v4591
          %v4593 = vrcp.pop %v3897
          %v4594 = vmul.f32 1.0, %v4593
          %v4595 = vrcp.pop %v3898
          %v4596 = vmul.f32 1.0, %v4595
          %v4597 = vrcp.pop %v3899
          %v4598 = vmul.f32 1.0, %v4597
          %v4599 = vrcp.pop %v3900
          %v4600 = vmul.f32 1.0, %v4599
          %v4601 = vrcp.pop %v3901
          %v4602 = vmul.f32 1.0, %v4601
          %v4603 = vrcp.pop %v3902
          %v4604 = vmul.f32 1.0, %v4603
          %v4605 = vrcp.pop %v3903
          %v4606 = vmul.f32 1.0, %v4605
          %v4607 = vrcp.pop %v3904
          %v4608 = vmul.f32 1.0, %v4607
          %v4609 = vrcp.pop %v3905
          %v4610 = vmul.f32 1.0, %v4609
          %v4611 = vrcp.pop %v3906
          %v4612 = vmul.f32 1.0, %v4611
          %v4613 = vrcp.pop %v3907
          %v4614 = vmul.f32 1.0, %v4613
          %v4615 = vrcp.pop %v3908
          %v4616 = vmul.f32 1.0, %v4615
          %v4617 = vrcp.pop %v3909
          %v4618 = vmul.f32 1.0, %v4617
          %v4619 = vrcp.pop %v3910
          %v4620 = vmul.f32 1.0, %v4619
          %v4621 = vrcp.pop %v3911
          %v4622 = vmul.f32 1.0, %v4621
          %v4623 = vrcp.pop %v3912
          %v4624 = vmul.f32 1.0, %v4623
          %v4625 = vrcp.pop %v3913
          %v4626 = vmul.f32 1.0, %v4625
          %v4627 = vrcp.pop %v3914
          %v4628 = vmul.f32 1.0, %v4627
          %v4629 = vrcp.pop %v3915
          %v4630 = vmul.f32 1.0, %v4629
          %v4631 = vrcp.pop %v3916
          %v4632 = vmul.f32 1.0, %v4631
          %v4633 = vrcp.pop %v3917
          %v4634 = vmul.f32 1.0, %v4633
          %v4635 = vrcp.pop %v3918
          %v4636 = vmul.f32 1.0, %v4635
          %v4637 = vrcp.pop %v3919
          %v4638 = vmul.f32 1.0, %v4637
          %v4639 = vrcp.pop %v3920
          %v4640 = vmul.f32 1.0, %v4639
          %v4641 = vrcp.pop %v3921
          %v4642 = vmul.f32 1.0, %v4641
          %v4643 = vrcp.pop %v3922
          %v4644 = vmul.f32 1.0, %v4643
          %v4645 = vrcp.pop %v3923
          %v4646 = vmul.f32 1.0, %v4645
          %v4647 = vrcp.pop %v3924
          %v4648 = vmul.f32 1.0, %v4647
          %v4649 = vrcp.pop %v3925
          %v4650 = vmul.f32 1.0, %v4649
          %v4651 = vrcp.pop %v3926
          %v4652 = vmul.f32 1.0, %v4651
          %v4653 = vrcp.pop %v3927
          %v4654 = vmul.f32 1.0, %v4653
          %v4655 = vrcp.pop %v3928
          %v4656 = vmul.f32 1.0, %v4655
          %v4657 = vrcp.pop %v3929
          %v4658 = vmul.f32 1.0, %v4657
          %v4659 = vrcp.pop %v3930
          %v4660 = vmul.f32 1.0, %v4659
          %v4661 = vrcp.pop %v3931
          %v4662 = vmul.f32 1.0, %v4661
          %v4663 = vrcp.pop %v3932
          %v4664 = vmul.f32 1.0, %v4663
          %v4665 = vrcp.pop %v3933
          %v4666 = vmul.f32 1.0, %v4665
          %v4667 = vrcp.pop %v3934
          %v4668 = vmul.f32 1.0, %v4667
          %v4669 = vrcp.pop %v3935
          %v4670 = vmul.f32 1.0, %v4669
          %v4671 = vrcp.pop %v3936
          %v4672 = vmul.f32 1.0, %v4671
          %v4673 = vrcp.pop %v3937
          %v4674 = vmul.f32 1.0, %v4673
          %v4675 = vrcp.pop %v3938
          %v4676 = vmul.f32 1.0, %v4675
          %v4677 = vrcp.pop %v3939
          %v4678 = vmul.f32 1.0, %v4677
          %v4679 = vrcp.pop %v3940
          %v4680 = vmul.f32 1.0, %v4679
          %v4681 = vrcp.pop %v3941
          %v4682 = vmul.f32 1.0, %v4681
          %v4683 = vrcp.pop %v3942
          %v4684 = vmul.f32 1.0, %v4683
          %v4685 = vrcp.pop %v3943
          %v4686 = vmul.f32 1.0, %v4685
          %v4687 = vrcp.pop %v3944
          %v4688 = vmul.f32 1.0, %v4687
          %v4689 = vrcp.pop %v3945
          %v4690 = vmul.f32 1.0, %v4689
          %v4691 = vrcp.pop %v3946
          %v4692 = vmul.f32 1.0, %v4691
          %v4693 = vrcp.pop %v3947
          %v4694 = vmul.f32 1.0, %v4693
          %v4695 = vrcp.pop %v3948
          %v4696 = vmul.f32 1.0, %v4695
          %v4697 = vrcp.pop %v3949
          %v4698 = vmul.f32 1.0, %v4697
          %v4699 = vrcp.pop %v3950
          %v4700 = vmul.f32 1.0, %v4699
          %v4701 = vrcp.pop %v3951
          %v4702 = vmul.f32 1.0, %v4701
          %v4703 = vrcp.pop %v3952
          %v4704 = vmul.f32 1.0, %v4703
          %v4705 = vrcp.pop %v3953
          %v4706 = vmul.f32 1.0, %v4705
          %v4707 = vrcp.pop %v3954
          %v4708 = vmul.f32 1.0, %v4707
          %v4709 = vrcp.pop %v3955
          %v4710 = vmul.f32 1.0, %v4709
          %v4711 = vrcp.pop %v3956
          %v4712 = vmul.f32 1.0, %v4711
          %v4713 = vrcp.pop %v3957
          %v4714 = vmul.f32 1.0, %v4713
          %v4715 = vrcp.pop %v3958
          %v4716 = vmul.f32 1.0, %v4715
          %v4717 = vrcp.pop %v3959
          %v4718 = vmul.f32 1.0, %v4717
          %v4719 = vrcp.pop %v3960
          %v4720 = vmul.f32 1.0, %v4719
          %v4721 = vrcp.pop %v3961
          %v4722 = vmul.f32 1.0, %v4721
          %v4723 = vrcp.pop %v3962
          %v4724 = vmul.f32 1.0, %v4723
          %v4725 = vrcp.pop %v3963
          %v4726 = vmul.f32 1.0, %v4725
          %v4727 = vrcp.pop %v3964
          %v4728 = vmul.f32 1.0, %v4727
          %v4729 = vrcp.pop %v3965
          %v4730 = vmul.f32 1.0, %v4729
          %v4731 = vrcp.pop %v3966
          %v4732 = vmul.f32 1.0, %v4731
          %v4733 = vrcp.pop %v3967
          %v4734 = vmul.f32 1.0, %v4733
          %v4735 = vrcp.pop %v3968
          %v4736 = vmul.f32 1.0, %v4735
          %v4737 = vrcp.pop %v3969
          %v4738 = vmul.f32 1.0, %v4737
          %v4739 = vrcp.pop %v3970
          %v4740 = vmul.f32 1.0, %v4739
          %v4741 = vrcp.pop %v3971
          %v4742 = vmul.f32 1.0, %v4741
          %v4743 = vrcp.pop %v3972
          %v4744 = vmul.f32 1.0, %v4743
          %v4745 = vrcp.pop %v3973
          %v4746 = vmul.f32 1.0, %v4745
          %v4747 = vrcp.pop %v3974
          %v4748 = vmul.f32 1.0, %v4747
          %v4749 = vrcp.pop %v3975
          %v4750 = vmul.f32 1.0, %v4749
          %v4751 = vrcp.pop %v3976
          %v4752 = vmul.f32 1.0, %v4751
          %v4753 = vrcp.pop %v3977
          %v4754 = vmul.f32 1.0, %v4753
          %v4755 = vrcp.pop %v3978
          %v4756 = vmul.f32 1.0, %v4755
          %v4757 = vrcp.pop %v3979
          %v4758 = vmul.f32 1.0, %v4757
          %v4759 = vrcp.pop %v3980
          %v4760 = vmul.f32 1.0, %v4759
          %v4761 = vrcp.pop %v3981
          %v4762 = vmul.f32 1.0, %v4761
          %v4763 = vrcp.pop %v3982
          %v4764 = vmul.f32 1.0, %v4763
          %v4765 = vrcp.pop %v3983
          %v4766 = vmul.f32 1.0, %v4765
          %v4767 = vrcp.pop %v3984
          %v4768 = vmul.f32 1.0, %v4767
          %v4769 = vrcp.pop %v3985
          %v4770 = vmul.f32 1.0, %v4769
          %v4771 = vrcp.pop %v3986
          %v4772 = vmul.f32 1.0, %v4771
          %v4773 = vrcp.pop %v3987
          %v4774 = vmul.f32 1.0, %v4773
          %v4775 = vrcp.pop %v3988
          %v4776 = vmul.f32 1.0, %v4775
          %v4777 = vrcp.pop %v3989
          %v4778 = vmul.f32 1.0, %v4777
          %v4779 = vrcp.pop %v3990
          %v4780 = vmul.f32 1.0, %v4779
          %v4781 = vrcp.pop %v3991
          %v4782 = vmul.f32 1.0, %v4781
          %v4783 = vrcp.pop %v3992
          %v4784 = vmul.f32 1.0, %v4783
          %v4785 = vrcp.pop %v3993
          %v4786 = vmul.f32 1.0, %v4785
          %v4787 = vrcp.pop %v3994
          %v4788 = vmul.f32 1.0, %v4787
          %v4789 = vrcp.pop %v3995
          %v4790 = vmul.f32 1.0, %v4789
          %v4791 = vrcp.pop %v3996
          %v4792 = vmul.f32 1.0, %v4791
          %v4793 = vrcp.pop %v3997
          %v4794 = vmul.f32 1.0, %v4793
          %v4795 = vrcp.pop %v3998
          %v4796 = vmul.f32 1.0, %v4795
          %v4797 = vrcp.pop %v3999
          %v4798 = vmul.f32 1.0, %v4797
          %v4799 = vrcp.pop %v4000
          %v4800 = vmul.f32 1.0, %v4799
          %v4801 = vrcp.pop %v4001
          %v4802 = vmul.f32 1.0, %v4801
          %v4803 = vrcp.pop %v4002
          %v4804 = vmul.f32 1.0, %v4803
          %v4805 = vrcp.pop %v4003
          %v4806 = vmul.f32 1.0, %v4805
          %v4807 = vrcp.pop %v4004
          %v4808 = vmul.f32 1.0, %v4807
          %v4809 = vrcp.pop %v4005
          %v4810 = vmul.f32 1.0, %v4809
          %v4811 = vrcp.pop %v4006
          %v4812 = vmul.f32 1.0, %v4811
          %v4813 = vrcp.pop %v4007
          %v4814 = vmul.f32 1.0, %v4813
          %v4815 = vrcp.pop %v4008
          %v4816 = vmul.f32 1.0, %v4815
          %v4817 = vrcp.pop %v4009
          %v4818 = vmul.f32 1.0, %v4817
          %v4819 = vrcp.pop %v4010
          %v4820 = vmul.f32 1.0, %v4819
          %v4821 = vrcp.pop %v4011
          %v4822 = vmul.f32 1.0, %v4821
          %v4823 = vrcp.pop %v4012
          %v4824 = vmul.f32 1.0, %v4823
          %v4825 = vrcp.pop %v4013
          %v4826 = vmul.f32 1.0, %v4825
          %v4827 = vrcp.pop %v4014
          %v4828 = vmul.f32 1.0, %v4827
          %v4829 = vrcp.pop %v4015
          %v4830 = vmul.f32 1.0, %v4829
          %v4831 = vrcp.pop %v4016
          %v4832 = vmul.f32 1.0, %v4831
          %v4833 = vrcp.pop %v4017
          %v4834 = vmul.f32 1.0, %v4833
          %v4835 = vrcp.pop %v4018
          %v4836 = vmul.f32 1.0, %v4835
          %v4837 = vrcp.pop %v4019
          %v4838 = vmul.f32 1.0, %v4837
          %v4839 = vrcp.pop %v4020
          %v4840 = vmul.f32 1.0, %v4839
          %v4841 = vrcp.pop %v4021
          %v4842 = vmul.f32 1.0, %v4841
          %v4843 = vrcp.pop %v4022
          %v4844 = vmul.f32 1.0, %v4843
          %v4845 = vrcp.pop %v4023
          %v4846 = vmul.f32 1.0, %v4845
          %v4847 = vrcp.pop %v4024
          %v4848 = vmul.f32 1.0, %v4847
          %v4849 = vrcp.pop %v4025
          %v4850 = vmul.f32 1.0, %v4849
          %v4851 = vrcp.pop %v4026
          %v4852 = vmul.f32 1.0, %v4851
          %v4853 = vrcp.pop %v4027
          %v4854 = vmul.f32 1.0, %v4853
          %v4855 = vrcp.pop %v4028
          %v4856 = vmul.f32 1.0, %v4855
          %v4857 = vrcp.pop %v4029
          %v4858 = vmul.f32 1.0, %v4857
          %v4859 = vrcp.pop %v4030
          %v4860 = vmul.f32 1.0, %v4859
          %v4861 = vrcp.pop %v4031
          %v4862 = vmul.f32 1.0, %v4861
          %v4863 = vrcp.pop %v4032
          %v4864 = vmul.f32 1.0, %v4863
          %v4865 = vrcp.pop %v4033
          %v4866 = vmul.f32 1.0, %v4865
          %v4867 = vrcp.pop %v4034
          %v4868 = vmul.f32 1.0, %v4867
          %v4869 = vrcp.pop %v4035
          %v4870 = vmul.f32 1.0, %v4869
          %v4871 = vrcp.pop %v4036
          %v4872 = vmul.f32 1.0, %v4871
          %v4873 = vrcp.pop %v4037
          %v4874 = vmul.f32 1.0, %v4873
          %v4875 = vrcp.pop %v4038
          %v4876 = vmul.f32 1.0, %v4875
          %v4877 = vrcp.pop %v4039
          %v4878 = vmul.f32 1.0, %v4877
          %v4879 = vrcp.pop %v4040
          %v4880 = vmul.f32 1.0, %v4879
          %v4881 = vrcp.pop %v4041
          %v4882 = vmul.f32 1.0, %v4881
          %v4883 = vrcp.pop %v4042
          %v4884 = vmul.f32 1.0, %v4883
          %v4885 = vrcp.pop %v4043
          %v4886 = vmul.f32 1.0, %v4885
          %v4887 = vrcp.pop %v4044
          %v4888 = vmul.f32 1.0, %v4887
          %v4889 = vrcp.pop %v4045
          %v4890 = vmul.f32 1.0, %v4889
          %v4891 = vrcp.pop %v4046
          %v4892 = vmul.f32 1.0, %v4891
          %v4893 = vrcp.pop %v4047
          %v4894 = vmul.f32 1.0, %v4893
          %v4895 = vrcp.pop %v4048
          %v4896 = vmul.f32 1.0, %v4895
          %v4897 = vrcp.pop %v4049
          %v4898 = vmul.f32 1.0, %v4897
          %v4899 = vrcp.pop %v4050
          %v4900 = vmul.f32 1.0, %v4899
          %v4901 = vrcp.pop %v4051
          %v4902 = vmul.f32 1.0, %v4901
          %v4903 = vrcp.pop %v4052
          %v4904 = vmul.f32 1.0, %v4903
          %v4905 = vrcp.pop %v4053
          %v4906 = vmul.f32 1.0, %v4905
          %v4907 = vrcp.pop %v4054
          %v4908 = vmul.f32 1.0, %v4907
          %v4909 = vrcp.pop %v4055
          %v4910 = vmul.f32 1.0, %v4909
          %v4911 = vrcp.pop %v4056
          %v4912 = vmul.f32 1.0, %v4911
          %v4913 = vrcp.pop %v4057
          %v4914 = vmul.f32 1.0, %v4913
          %v4915 = vrcp.pop %v4058
          %v4916 = vmul.f32 1.0, %v4915
          %v4917 = vrcp.pop %v4059
          %v4918 = vmul.f32 1.0, %v4917
          %v4919 = vrcp.pop %v4060
          %v4920 = vmul.f32 1.0, %v4919
          %v4921 = vrcp.pop %v4061
          %v4922 = vmul.f32 1.0, %v4921
          %v4923 = vrcp.pop %v4062
          %v4924 = vmul.f32 1.0, %v4923
          %v4925 = vrcp.pop %v4063
          %v4926 = vmul.f32 1.0, %v4925
          %v4927 = vrcp.pop %v4064
          %v4928 = vmul.f32 1.0, %v4927
          %v4929 = vrcp.pop %v4065
          %v4930 = vmul.f32 1.0, %v4929
          %v4931 = vrcp.pop %v4066
          %v4932 = vmul.f32 1.0, %v4931
          %v4933 = vrcp.pop %v4067
          %v4934 = vmul.f32 1.0, %v4933
          %v4935 = vrcp.pop %v4068
          %v4936 = vmul.f32 1.0, %v4935
          %v4937 = vrcp.pop %v4069
          %v4938 = vmul.f32 1.0, %v4937
          %v4939 = vrcp.pop %v4070
          %v4940 = vmul.f32 1.0, %v4939
          %v4941 = vrcp.pop %v4071
          %v4942 = vmul.f32 1.0, %v4941
          %v4943 = vrcp.pop %v4072
          %v4944 = vmul.f32 1.0, %v4943
          %v4945 = vrcp.pop %v4073
          %v4946 = vmul.f32 1.0, %v4945
          %v4947 = vrcp.pop %v4074
          %v4948 = vmul.f32 1.0, %v4947
          %v4949 = vrcp.pop %v4075
          %v4950 = vmul.f32 1.0, %v4949
          %v4951 = vrcp.pop %v4076
          %v4952 = vmul.f32 1.0, %v4951
          %v4953 = vrcp.pop %v4077
          %v4954 = vmul.f32 1.0, %v4953
          %v4955 = vrcp.pop %v4078
          %v4956 = vmul.f32 1.0, %v4955
          %v4957 = vrcp.pop %v4079
          %v4958 = vmul.f32 1.0, %v4957
          %v4959 = vrcp.pop %v4080
          %v4960 = vmul.f32 1.0, %v4959
          %v4961 = vrcp.pop %v4081
          %v4962 = vmul.f32 1.0, %v4961
          %v4963 = vrcp.pop %v4082
          %v4964 = vmul.f32 1.0, %v4963
          %v4965 = vrcp.pop %v4083
          %v4966 = vmul.f32 1.0, %v4965
          %v4967 = vrcp.pop %v4084
          %v4968 = vmul.f32 1.0, %v4967
          %v4969 = vrcp.pop %v4085
          %v4970 = vmul.f32 1.0, %v4969
          %v4971 = vrcp.pop %v4086
          %v4972 = vmul.f32 1.0, %v4971
          %v4973 = vrcp.pop %v4087
          %v4974 = vmul.f32 1.0, %v4973
          %v4975 = vrcp.pop %v4088
          %v4976 = vmul.f32 1.0, %v4975
          %v4977 = vrcp.pop %v4089
          %v4978 = vmul.f32 1.0, %v4977
          %v4979 = vrcp.pop %v4090
          %v4980 = vmul.f32 1.0, %v4979
          %v4981 = vrcp.pop %v4091
          %v4982 = vmul.f32 1.0, %v4981
          %v4983 = vrcp.pop %v4092
          %v4984 = vmul.f32 1.0, %v4983
          %v4985 = vrcp.pop %v4093
          %v4986 = vmul.f32 1.0, %v4985
          %v4987 = vrcp.pop %v4094
          %v4988 = vmul.f32 1.0, %v4987
          %v4989 = vrcp.pop %v4095
          %v4990 = vmul.f32 1.0, %v4989
          %v4991 = vrcp.pop %v4096
          %v4992 = vmul.f32 1.0, %v4991
          %v4993 = vrcp.pop %v4097
          %v4994 = vmul.f32 1.0, %v4993
          %v4995 = vrcp.pop %v4098
          %v4996 = vmul.f32 1.0, %v4995
          %v4997 = vrcp.pop %v4099
          %v4998 = vmul.f32 1.0, %v4997
          %v4999 = vrcp.pop %v4100
          %v5000 = vmul.f32 1.0, %v4999
          %v5001 = vrcp.pop %v4101
          %v5002 = vmul.f32 1.0, %v5001
          %v5003 = vrcp.pop %v4102
          %v5004 = vmul.f32 1.0, %v5003
          %v5005 = vrcp.pop %v4103
          %v5006 = vmul.f32 1.0, %v5005
          %v5007 = vrcp.pop %v4104
          %v5008 = vmul.f32 1.0, %v5007
          %v5009 = vrcp.pop %v4105
          %v5010 = vmul.f32 1.0, %v5009
          %v5011 = vrcp.pop %v4106
          %v5012 = vmul.f32 1.0, %v5011
          %v5013 = vrcp.pop %v4107
          %v5014 = vmul.f32 1.0, %v5013
          %v5015 = vrcp.pop %v4108
          %v5016 = vmul.f32 1.0, %v5015
          %v5017 = vrcp.pop %v4109
          %v5018 = vmul.f32 1.0, %v5017
          %v5019 = vrcp.pop %v4110
          %v5020 = vmul.f32 1.0, %v5019
          %v5021 = vrcp.pop %v4111
          %v5022 = vmul.f32 1.0, %v5021
          %v5023 = vrcp.pop %v4112
          %v5024 = vmul.f32 1.0, %v5023
          %v5025 = vrcp.pop %v4113
          %v5026 = vmul.f32 1.0, %v5025
          %v5027 = vrcp.pop %v4114
          %v5028 = vmul.f32 1.0, %v5027
          %v5029 = vrcp.pop %v4115
          %v5030 = vmul.f32 1.0, %v5029
          %v5031 = vrcp.pop %v4116
          %v5032 = vmul.f32 1.0, %v5031
          %v5033 = vrcp.pop %v4117
          %v5034 = vmul.f32 1.0, %v5033
          %v5035 = vrcp.pop %v4118
          %v5036 = vmul.f32 1.0, %v5035
          %v5037 = vrcp.pop %v4119
          %v5038 = vmul.f32 1.0, %v5037
          %v5039 = vrcp.pop %v4120
          %v5040 = vmul.f32 1.0, %v5039
          %v5041 = vrcp.pop %v4121
          %v5042 = vmul.f32 1.0, %v5041
          %v5043 = vrcp.pop %v4122
          %v5044 = vmul.f32 1.0, %v5043
          %v5045 = vrcp.pop %v4123
          %v5046 = vmul.f32 1.0, %v5045
          %v5047 = vrcp.pop %v4124
          %v5048 = vmul.f32 1.0, %v5047
          %v5049 = vrcp.pop %v4125
          %v5050 = vmul.f32 1.0, %v5049
          %v5051 = vrcp.pop %v4126
          %v5052 = vmul.f32 1.0, %v5051
          %v5053 = vrcp.pop %v4127
          %v5054 = vmul.f32 1.0, %v5053
          %v5055 = vrcp.pop %v4128
          %v5056 = vmul.f32 1.0, %v5055
          %v5057 = vrcp.pop %v4129
          %v5058 = vmul.f32 1.0, %v5057
          %v5059 = vrcp.pop %v4130
          %v5060 = vmul.f32 1.0, %v5059
          %v5061 = vrcp.pop %v4131
          %v5062 = vmul.f32 1.0, %v5061
          %v5063 = vrcp.pop %v4132
          %v5064 = vmul.f32 1.0, %v5063
          %v5065 = vrcp.pop %v4133
          %v5066 = vmul.f32 1.0, %v5065
          %v5067 = vrcp.pop %v4134
          %v5068 = vmul.f32 1.0, %v5067
          %v5069 = vrcp.pop %v4135
          %v5070 = vmul.f32 1.0, %v5069
          %v5071 = vrcp.pop %v4136
          %v5072 = vmul.f32 1.0, %v5071
          %v5073 = vrcp.pop %v4137
          %v5074 = vmul.f32 1.0, %v5073
          %v5075 = vrcp.pop %v4138
          %v5076 = vmul.f32 1.0, %v5075
          %v5077 = vrcp.pop %v4139
          %v5078 = vmul.f32 1.0, %v5077
          %v5079 = vrcp.pop %v4140
          %v5080 = vmul.f32 1.0, %v5079
          %v5081 = vrcp.pop %v4141
          %v5082 = vmul.f32 1.0, %v5081
          %v5083 = vrcp.pop %v4142
          %v5084 = vmul.f32 1.0, %v5083
          %v5085 = vrcp.pop %v4143
          %v5086 = vmul.f32 1.0, %v5085
          %v5087 = vrcp.pop %v4144
          %v5088 = vmul.f32 1.0, %v5087
          %v5089 = vrcp.pop %v4145
          %v5090 = vmul.f32 1.0, %v5089
          %v5091 = vrcp.pop %v4146
          %v5092 = vmul.f32 1.0, %v5091
          %v5093 = vrcp.pop %v4147
          %v5094 = vmul.f32 1.0, %v5093
          %v5095 = vrcp.pop %v4148
          %v5096 = vmul.f32 1.0, %v5095
          %v5097 = vrcp.pop %v4149
          %v5098 = vmul.f32 1.0, %v5097
          %v5099 = vrcp.pop %v4150
          %v5100 = vmul.f32 1.0, %v5099
          %v5101 = vrcp.pop %v4151
          %v5102 = vmul.f32 1.0, %v5101
          %v5103 = vrcp.pop %v4152
          %v5104 = vmul.f32 1.0, %v5103
          %v5105 = vrcp.pop %v4153
          %v5106 = vmul.f32 1.0, %v5105
          %v5107 = vrcp.pop %v4154
          %v5108 = vmul.f32 1.0, %v5107
          %v5109 = vrcp.pop %v4155
          %v5110 = vmul.f32 1.0, %v5109
          %v5111 = vrcp.pop %v4156
          %v5112 = vmul.f32 1.0, %v5111
          %v5113 = vrcp.pop %v4157
          %v5114 = vmul.f32 1.0, %v5113
          %v5115 = vrcp.pop %v4158
          %v5116 = vmul.f32 1.0, %v5115
          %v5117 = vrcp.pop %v4159
          %v5118 = vmul.f32 1.0, %v5117
          %v5119 = vrcp.pop %v4160
          %v5120 = vmul.f32 1.0, %v5119
          %v5121 = vrcp.pop %v4161
          %v5122 = vmul.f32 1.0, %v5121
          %v5123 = vrcp.pop %v4162
          %v5124 = vmul.f32 1.0, %v5123
          %v5125 = vrcp.pop %v4163
          %v5126 = vmul.f32 1.0, %v5125
          %v5127 = vrcp.pop %v4164
          %v5128 = vmul.f32 1.0, %v5127
          %v5129 = vrcp.pop %v4165
          %v5130 = vmul.f32 1.0, %v5129
          %v5131 = vrcp.pop %v4166
          %v5132 = vmul.f32 1.0, %v5131
          %v5133 = vrcp.pop %v4167
          %v5134 = vmul.f32 1.0, %v5133
          %v5135 = vrcp.pop %v4168
          %v5136 = vmul.f32 1.0, %v5135
          %v5137 = vrcp.pop %v4169
          %v5138 = vmul.f32 1.0, %v5137
          %v5139 = vrcp.pop %v4170
          %v5140 = vmul.f32 1.0, %v5139
          %v5141 = vrcp.pop %v4171
          %v5142 = vmul.f32 1.0, %v5141
          %v5143 = vrcp.pop %v4172
          %v5144 = vmul.f32 1.0, %v5143
          %v5145 = vrcp.pop %v4173
          %v5146 = vmul.f32 1.0, %v5145
          %v5147 = vrcp.pop %v4174
          %v5148 = vmul.f32 1.0, %v5147
          %v5149 = vrcp.pop %v4175
          %v5150 = vmul.f32 1.0, %v5149
          %v5151 = vrcp.pop %v4176
          %v5152 = vmul.f32 1.0, %v5151
          %v5153 = vrcp.pop %v4177
          %v5154 = vmul.f32 1.0, %v5153
          %v5155 = vrcp.pop %v4178
          %v5156 = vmul.f32 1.0, %v5155
          %v5157 = vrcp.pop %v4179
          %v5158 = vmul.f32 1.0, %v5157
          %v5159 = vrcp.pop %v4180
          %v5160 = vmul.f32 1.0, %v5159
          %v5161 = vrcp.pop %v4181
          %v5162 = vmul.f32 1.0, %v5161
          %v5163 = vrcp.pop %v4182
          %v5164 = vmul.f32 1.0, %v5163
          %v5165 = vrcp.pop %v4183
          %v5166 = vmul.f32 1.0, %v5165
          %v5167 = vrcp.pop %v4184
          %v5168 = vmul.f32 1.0, %v5167
          %v5169 = vrcp.pop %v4185
          %v5170 = vmul.f32 1.0, %v5169
          %v5171 = vrcp.pop %v4186
          %v5172 = vmul.f32 1.0, %v5171
          %v5173 = vrcp.pop %v4187
          %v5174 = vmul.f32 1.0, %v5173
          %v5175 = vrcp.pop %v4188
          %v5176 = vmul.f32 1.0, %v5175
          %v5177 = vrcp.pop %v4189
          %v5178 = vmul.f32 1.0, %v5177
          %v5179 = vrcp.pop %v4190
          %v5180 = vmul.f32 1.0, %v5179
          %v5181 = vrcp.pop %v4191
          %v5182 = vmul.f32 1.0, %v5181
          %v5183 = vrcp.pop %v4192
          %v5184 = vmul.f32 1.0, %v5183
          %v5185 = vrcp.pop %v4193
          %v5186 = vmul.f32 1.0, %v5185
          %v5187 = vrcp.pop %v4194
          %v5188 = vmul.f32 1.0, %v5187
          %v5189 = vrcp.pop %v4195
          %v5190 = vmul.f32 1.0, %v5189
          %v5191 = vrcp.pop %v4196
          %v5192 = vmul.f32 1.0, %v5191
          %v5193 = vrcp.pop %v4197
          %v5194 = vmul.f32 1.0, %v5193
          %v5195 = vrcp.pop %v4198
          %v5196 = vmul.f32 1.0, %v5195
          %v5197 = vrcp.pop %v4199
          %v5198 = vmul.f32 1.0, %v5197
          %v5199 = vrcp.pop %v4200
          %v5200 = vmul.f32 1.0, %v5199
          %v5201 = vrcp.pop %v4201
          %v5202 = vmul.f32 1.0, %v5201
          %v5203 = vrcp.pop %v4202
          %v5204 = vmul.f32 1.0, %v5203
          %v5205 = vrcp.pop %v4203
          %v5206 = vmul.f32 1.0, %v5205
          %v5207 = vrcp.pop %v4204
          %v5208 = vmul.f32 1.0, %v5207
          %v5209 = vrcp.pop %v4205
          %v5210 = vmul.f32 1.0, %v5209
          %v5211 = vrcp.pop %v4206
          %v5212 = vmul.f32 1.0, %v5211
          %v5213 = vrcp.pop %v4207
          %v5214 = vmul.f32 1.0, %v5213
          %v5215 = vrcp.pop %v4208
          %v5216 = vmul.f32 1.0, %v5215
          %v5217 = vrcp.pop %v4209
          %v5218 = vmul.f32 1.0, %v5217
          %v5219 = vrcp.pop %v4210
          %v5220 = vmul.f32 1.0, %v5219
          %v5221 = vrcp.pop %v4211
          %v5222 = vmul.f32 1.0, %v5221
          %v5223 = vrcp.pop %v4212
          %v5224 = vmul.f32 1.0, %v5223
          %v5225 = vrcp.pop %v4213
          %v5226 = vmul.f32 1.0, %v5225
          %v5227 = vrcp.pop %v4214
          %v5228 = vmul.f32 1.0, %v5227
          %v5229 = vrcp.pop %v4215
          %v5230 = vmul.f32 1.0, %v5229
          %v5231 = vrcp.pop %v4216
          %v5232 = vmul.f32 1.0, %v5231
          %v5233 = vrcp.pop %v4217
          %v5234 = vmul.f32 1.0, %v5233
          %v5235 = vrcp.pop %v4218
          %v5236 = vmul.f32 1.0, %v5235
          %v5237 = vrcp.pop %v4219
          %v5238 = vmul.f32 1.0, %v5237
          %v5239 = vrcp.pop %v4220
          %v5240 = vmul.f32 1.0, %v5239
          %v5241 = vrcp.pop %v4221
          %v5242 = vmul.f32 1.0, %v5241
          %v5243 = vrcp.pop %v4222
          %v5244 = vmul.f32 1.0, %v5243
          %v5245 = vrcp.pop %v4223
          %v5246 = vmul.f32 1.0, %v5245
          %v5247 = vrcp.pop %v4224
          %v5248 = vmul.f32 1.0, %v5247
          %v5249 = vld [vmem:[%s784] sm:$0x1]
          %v5251 = vlaneseq
          %v5252 = vshrl.u32 %v5251, 7
          %v5253 = vsub.s32 0, %v5252
          %v5254 = vrot.slane %v5249, %v5253
          %v5256 = vmul.f32 %v4226, %v5254
          %v5257 = vmul.f32 %v4228, %v5254
          %v5258 = vmul.f32 %v4230, %v5254
          %v5259 = vmul.f32 %v4232, %v5254
          %v5260 = vmul.f32 %v4234, %v5254
          %v5261 = vmul.f32 %v4236, %v5254
          %v5262 = vmul.f32 %v4238, %v5254
          %v5263 = vmul.f32 %v4240, %v5254
          %v5264 = vmul.f32 %v4242, %v5254
          %v5265 = vmul.f32 %v4244, %v5254
          %v5266 = vmul.f32 %v4246, %v5254
          %v5267 = vmul.f32 %v4248, %v5254
          %v5268 = vmul.f32 %v4250, %v5254
          %v5269 = vmul.f32 %v4252, %v5254
          %v5270 = vmul.f32 %v4254, %v5254
          %v5271 = vmul.f32 %v4256, %v5254
          %v5272 = vmul.f32 %v4258, %v5254
          %v5273 = vmul.f32 %v4260, %v5254
          %v5274 = vmul.f32 %v4262, %v5254
          %v5275 = vmul.f32 %v4264, %v5254
          %v5276 = vmul.f32 %v4266, %v5254
          %v5277 = vmul.f32 %v4268, %v5254
          %v5278 = vmul.f32 %v4270, %v5254
          %v5279 = vmul.f32 %v4272, %v5254
          %v5280 = vmul.f32 %v4274, %v5254
          %v5281 = vmul.f32 %v4276, %v5254
          %v5282 = vmul.f32 %v4278, %v5254
          %v5283 = vmul.f32 %v4280, %v5254
          %v5284 = vmul.f32 %v4282, %v5254
          %v5285 = vmul.f32 %v4284, %v5254
          %v5286 = vmul.f32 %v4286, %v5254
          %v5287 = vmul.f32 %v4288, %v5254
          %v5288 = vmul.f32 %v4290, %v5254
          %v5289 = vmul.f32 %v4292, %v5254
          %v5290 = vmul.f32 %v4294, %v5254
          %v5291 = vmul.f32 %v4296, %v5254
          %v5292 = vmul.f32 %v4298, %v5254
          %v5293 = vmul.f32 %v4300, %v5254
          %v5294 = vmul.f32 %v4302, %v5254
          %v5295 = vmul.f32 %v4304, %v5254
          %v5296 = vmul.f32 %v4306, %v5254
          %v5297 = vmul.f32 %v4308, %v5254
          %v5298 = vmul.f32 %v4310, %v5254
          %v5299 = vmul.f32 %v4312, %v5254
          %v5300 = vmul.f32 %v4314, %v5254
          %v5301 = vmul.f32 %v4316, %v5254
          %v5302 = vmul.f32 %v4318, %v5254
          %v5303 = vmul.f32 %v4320, %v5254
          %v5304 = vmul.f32 %v4322, %v5254
          %v5305 = vmul.f32 %v4324, %v5254
          %v5306 = vmul.f32 %v4326, %v5254
          %v5307 = vmul.f32 %v4328, %v5254
          %v5308 = vmul.f32 %v4330, %v5254
          %v5309 = vmul.f32 %v4332, %v5254
          %v5310 = vmul.f32 %v4334, %v5254
          %v5311 = vmul.f32 %v4336, %v5254
          %v5312 = vmul.f32 %v4338, %v5254
          %v5313 = vmul.f32 %v4340, %v5254
          %v5314 = vmul.f32 %v4342, %v5254
          %v5315 = vmul.f32 %v4344, %v5254
          %v5316 = vmul.f32 %v4346, %v5254
          %v5317 = vmul.f32 %v4348, %v5254
          %v5318 = vmul.f32 %v4350, %v5254
          %v5319 = vmul.f32 %v4352, %v5254
          %v5320 = vmul.f32 %v4354, %v5254
          %v5321 = vmul.f32 %v4356, %v5254
          %v5322 = vmul.f32 %v4358, %v5254
          %v5323 = vmul.f32 %v4360, %v5254
          %v5324 = vmul.f32 %v4362, %v5254
          %v5325 = vmul.f32 %v4364, %v5254
          %v5326 = vmul.f32 %v4366, %v5254
          %v5327 = vmul.f32 %v4368, %v5254
          %v5328 = vmul.f32 %v4370, %v5254
          %v5329 = vmul.f32 %v4372, %v5254
          %v5330 = vmul.f32 %v4374, %v5254
          %v5331 = vmul.f32 %v4376, %v5254
          %v5332 = vmul.f32 %v4378, %v5254
          %v5333 = vmul.f32 %v4380, %v5254
          %v5334 = vmul.f32 %v4382, %v5254
          %v5335 = vmul.f32 %v4384, %v5254
          %v5336 = vmul.f32 %v4386, %v5254
          %v5337 = vmul.f32 %v4388, %v5254
          %v5338 = vmul.f32 %v4390, %v5254
          %v5339 = vmul.f32 %v4392, %v5254
          %v5340 = vmul.f32 %v4394, %v5254
          %v5341 = vmul.f32 %v4396, %v5254
          %v5342 = vmul.f32 %v4398, %v5254
          %v5343 = vmul.f32 %v4400, %v5254
          %v5344 = vmul.f32 %v4402, %v5254
          %v5345 = vmul.f32 %v4404, %v5254
          %v5346 = vmul.f32 %v4406, %v5254
          %v5347 = vmul.f32 %v4408, %v5254
          %v5348 = vmul.f32 %v4410, %v5254
          %v5349 = vmul.f32 %v4412, %v5254
          %v5350 = vmul.f32 %v4414, %v5254
          %v5351 = vmul.f32 %v4416, %v5254
          %v5352 = vmul.f32 %v4418, %v5254
          %v5353 = vmul.f32 %v4420, %v5254
          %v5354 = vmul.f32 %v4422, %v5254
          %v5355 = vmul.f32 %v4424, %v5254
          %v5356 = vmul.f32 %v4426, %v5254
          %v5357 = vmul.f32 %v4428, %v5254
          %v5358 = vmul.f32 %v4430, %v5254
          %v5359 = vmul.f32 %v4432, %v5254
          %v5360 = vmul.f32 %v4434, %v5254
          %v5361 = vmul.f32 %v4436, %v5254
          %v5362 = vmul.f32 %v4438, %v5254
          %v5363 = vmul.f32 %v4440, %v5254
          %v5364 = vmul.f32 %v4442, %v5254
          %v5365 = vmul.f32 %v4444, %v5254
          %v5366 = vmul.f32 %v4446, %v5254
          %v5367 = vmul.f32 %v4448, %v5254
          %v5368 = vmul.f32 %v4450, %v5254
          %v5369 = vmul.f32 %v4452, %v5254
          %v5370 = vmul.f32 %v4454, %v5254
          %v5371 = vmul.f32 %v4456, %v5254
          %v5372 = vmul.f32 %v4458, %v5254
          %v5373 = vmul.f32 %v4460, %v5254
          %v5374 = vmul.f32 %v4462, %v5254
          %v5375 = vmul.f32 %v4464, %v5254
          %v5376 = vmul.f32 %v4466, %v5254
          %v5377 = vmul.f32 %v4468, %v5254
          %v5378 = vmul.f32 %v4470, %v5254
          %v5379 = vmul.f32 %v4472, %v5254
          %v5380 = vmul.f32 %v4474, %v5254
          %v5381 = vmul.f32 %v4476, %v5254
          %v5382 = vmul.f32 %v4478, %v5254
          %v5383 = vmul.f32 %v4480, %v5254
          %v5384 = vmul.f32 %v4482, %v5254
          %v5385 = vmul.f32 %v4484, %v5254
          %v5386 = vmul.f32 %v4486, %v5254
          %v5387 = vmul.f32 %v4488, %v5254
          %v5388 = vmul.f32 %v4490, %v5254
          %v5389 = vmul.f32 %v4492, %v5254
          %v5390 = vmul.f32 %v4494, %v5254
          %v5391 = vmul.f32 %v4496, %v5254
          %v5392 = vmul.f32 %v4498, %v5254
          %v5393 = vmul.f32 %v4500, %v5254
          %v5394 = vmul.f32 %v4502, %v5254
          %v5395 = vmul.f32 %v4504, %v5254
          %v5396 = vmul.f32 %v4506, %v5254
          %v5397 = vmul.f32 %v4508, %v5254
          %v5398 = vmul.f32 %v4510, %v5254
          %v5399 = vmul.f32 %v4512, %v5254
          %v5400 = vmul.f32 %v4514, %v5254
          %v5401 = vmul.f32 %v4516, %v5254
          %v5402 = vmul.f32 %v4518, %v5254
          %v5403 = vmul.f32 %v4520, %v5254
          %v5404 = vmul.f32 %v4522, %v5254
          %v5405 = vmul.f32 %v4524, %v5254
          %v5406 = vmul.f32 %v4526, %v5254
          %v5407 = vmul.f32 %v4528, %v5254
          %v5408 = vmul.f32 %v4530, %v5254
          %v5409 = vmul.f32 %v4532, %v5254
          %v5410 = vmul.f32 %v4534, %v5254
          %v5411 = vmul.f32 %v4536, %v5254
          %v5412 = vmul.f32 %v4538, %v5254
          %v5413 = vmul.f32 %v4540, %v5254
          %v5414 = vmul.f32 %v4542, %v5254
          %v5415 = vmul.f32 %v4544, %v5254
          %v5416 = vmul.f32 %v4546, %v5254
          %v5417 = vmul.f32 %v4548, %v5254
          %v5418 = vmul.f32 %v4550, %v5254
          %v5419 = vmul.f32 %v4552, %v5254
          %v5420 = vmul.f32 %v4554, %v5254
          %v5421 = vmul.f32 %v4556, %v5254
          %v5422 = vmul.f32 %v4558, %v5254
          %v5423 = vmul.f32 %v4560, %v5254
          %v5424 = vmul.f32 %v4562, %v5254
          %v5425 = vmul.f32 %v4564, %v5254
          %v5426 = vmul.f32 %v4566, %v5254
          %v5427 = vmul.f32 %v4568, %v5254
          %v5428 = vmul.f32 %v4570, %v5254
          %v5429 = vmul.f32 %v4572, %v5254
          %v5430 = vmul.f32 %v4574, %v5254
          %v5431 = vmul.f32 %v4576, %v5254
          %v5432 = vmul.f32 %v4578, %v5254
          %v5433 = vmul.f32 %v4580, %v5254
          %v5434 = vmul.f32 %v4582, %v5254
          %v5435 = vmul.f32 %v4584, %v5254
          %v5436 = vmul.f32 %v4586, %v5254
          %v5437 = vmul.f32 %v4588, %v5254
          %v5438 = vmul.f32 %v4590, %v5254
          %v5439 = vmul.f32 %v4592, %v5254
          %v5440 = vmul.f32 %v4594, %v5254
          %v5441 = vmul.f32 %v4596, %v5254
          %v5442 = vmul.f32 %v4598, %v5254
          %v5443 = vmul.f32 %v4600, %v5254
          %v5444 = vmul.f32 %v4602, %v5254
          %v5445 = vmul.f32 %v4604, %v5254
          %v5446 = vmul.f32 %v4606, %v5254
          %v5447 = vmul.f32 %v4608, %v5254
          %v5448 = vmul.f32 %v4610, %v5254
          %v5449 = vmul.f32 %v4612, %v5254
          %v5450 = vmul.f32 %v4614, %v5254
          %v5451 = vmul.f32 %v4616, %v5254
          %v5452 = vmul.f32 %v4618, %v5254
          %v5453 = vmul.f32 %v4620, %v5254
          %v5454 = vmul.f32 %v4622, %v5254
          %v5455 = vmul.f32 %v4624, %v5254
          %v5456 = vmul.f32 %v4626, %v5254
          %v5457 = vmul.f32 %v4628, %v5254
          %v5458 = vmul.f32 %v4630, %v5254
          %v5459 = vmul.f32 %v4632, %v5254
          %v5460 = vmul.f32 %v4634, %v5254
          %v5461 = vmul.f32 %v4636, %v5254
          %v5462 = vmul.f32 %v4638, %v5254
          %v5463 = vmul.f32 %v4640, %v5254
          %v5464 = vmul.f32 %v4642, %v5254
          %v5465 = vmul.f32 %v4644, %v5254
          %v5466 = vmul.f32 %v4646, %v5254
          %v5467 = vmul.f32 %v4648, %v5254
          %v5468 = vmul.f32 %v4650, %v5254
          %v5469 = vmul.f32 %v4652, %v5254
          %v5470 = vmul.f32 %v4654, %v5254
          %v5471 = vmul.f32 %v4656, %v5254
          %v5472 = vmul.f32 %v4658, %v5254
          %v5473 = vmul.f32 %v4660, %v5254
          %v5474 = vmul.f32 %v4662, %v5254
          %v5475 = vmul.f32 %v4664, %v5254
          %v5476 = vmul.f32 %v4666, %v5254
          %v5477 = vmul.f32 %v4668, %v5254
          %v5478 = vmul.f32 %v4670, %v5254
          %v5479 = vmul.f32 %v4672, %v5254
          %v5480 = vmul.f32 %v4674, %v5254
          %v5481 = vmul.f32 %v4676, %v5254
          %v5482 = vmul.f32 %v4678, %v5254
          %v5483 = vmul.f32 %v4680, %v5254
          %v5484 = vmul.f32 %v4682, %v5254
          %v5485 = vmul.f32 %v4684, %v5254
          %v5486 = vmul.f32 %v4686, %v5254
          %v5487 = vmul.f32 %v4688, %v5254
          %v5488 = vmul.f32 %v4690, %v5254
          %v5489 = vmul.f32 %v4692, %v5254
          %v5490 = vmul.f32 %v4694, %v5254
          %v5491 = vmul.f32 %v4696, %v5254
          %v5492 = vmul.f32 %v4698, %v5254
          %v5493 = vmul.f32 %v4700, %v5254
          %v5494 = vmul.f32 %v4702, %v5254
          %v5495 = vmul.f32 %v4704, %v5254
          %v5496 = vmul.f32 %v4706, %v5254
          %v5497 = vmul.f32 %v4708, %v5254
          %v5498 = vmul.f32 %v4710, %v5254
          %v5499 = vmul.f32 %v4712, %v5254
          %v5500 = vmul.f32 %v4714, %v5254
          %v5501 = vmul.f32 %v4716, %v5254
          %v5502 = vmul.f32 %v4718, %v5254
          %v5503 = vmul.f32 %v4720, %v5254
          %v5504 = vmul.f32 %v4722, %v5254
          %v5505 = vmul.f32 %v4724, %v5254
          %v5506 = vmul.f32 %v4726, %v5254
          %v5507 = vmul.f32 %v4728, %v5254
          %v5508 = vmul.f32 %v4730, %v5254
          %v5509 = vmul.f32 %v4732, %v5254
          %v5510 = vmul.f32 %v4734, %v5254
          %v5511 = vmul.f32 %v4736, %v5254
          %v5512 = vmul.f32 %v4738, %v5254
          %v5513 = vmul.f32 %v4740, %v5254
          %v5514 = vmul.f32 %v4742, %v5254
          %v5515 = vmul.f32 %v4744, %v5254
          %v5516 = vmul.f32 %v4746, %v5254
          %v5517 = vmul.f32 %v4748, %v5254
          %v5518 = vmul.f32 %v4750, %v5254
          %v5519 = vmul.f32 %v4752, %v5254
          %v5520 = vmul.f32 %v4754, %v5254
          %v5521 = vmul.f32 %v4756, %v5254
          %v5522 = vmul.f32 %v4758, %v5254
          %v5523 = vmul.f32 %v4760, %v5254
          %v5524 = vmul.f32 %v4762, %v5254
          %v5525 = vmul.f32 %v4764, %v5254
          %v5526 = vmul.f32 %v4766, %v5254
          %v5527 = vmul.f32 %v4768, %v5254
          %v5528 = vmul.f32 %v4770, %v5254
          %v5529 = vmul.f32 %v4772, %v5254
          %v5530 = vmul.f32 %v4774, %v5254
          %v5531 = vmul.f32 %v4776, %v5254
          %v5532 = vmul.f32 %v4778, %v5254
          %v5533 = vmul.f32 %v4780, %v5254
          %v5534 = vmul.f32 %v4782, %v5254
          %v5535 = vmul.f32 %v4784, %v5254
          %v5536 = vmul.f32 %v4786, %v5254
          %v5537 = vmul.f32 %v4788, %v5254
          %v5538 = vmul.f32 %v4790, %v5254
          %v5539 = vmul.f32 %v4792, %v5254
          %v5540 = vmul.f32 %v4794, %v5254
          %v5541 = vmul.f32 %v4796, %v5254
          %v5542 = vmul.f32 %v4798, %v5254
          %v5543 = vmul.f32 %v4800, %v5254
          %v5544 = vmul.f32 %v4802, %v5254
          %v5545 = vmul.f32 %v4804, %v5254
          %v5546 = vmul.f32 %v4806, %v5254
          %v5547 = vmul.f32 %v4808, %v5254
          %v5548 = vmul.f32 %v4810, %v5254
          %v5549 = vmul.f32 %v4812, %v5254
          %v5550 = vmul.f32 %v4814, %v5254
          %v5551 = vmul.f32 %v4816, %v5254
          %v5552 = vmul.f32 %v4818, %v5254
          %v5553 = vmul.f32 %v4820, %v5254
          %v5554 = vmul.f32 %v4822, %v5254
          %v5555 = vmul.f32 %v4824, %v5254
          %v5556 = vmul.f32 %v4826, %v5254
          %v5557 = vmul.f32 %v4828, %v5254
          %v5558 = vmul.f32 %v4830, %v5254
          %v5559 = vmul.f32 %v4832, %v5254
          %v5560 = vmul.f32 %v4834, %v5254
          %v5561 = vmul.f32 %v4836, %v5254
          %v5562 = vmul.f32 %v4838, %v5254
          %v5563 = vmul.f32 %v4840, %v5254
          %v5564 = vmul.f32 %v4842, %v5254
          %v5565 = vmul.f32 %v4844, %v5254
          %v5566 = vmul.f32 %v4846, %v5254
          %v5567 = vmul.f32 %v4848, %v5254
          %v5568 = vmul.f32 %v4850, %v5254
          %v5569 = vmul.f32 %v4852, %v5254
          %v5570 = vmul.f32 %v4854, %v5254
          %v5571 = vmul.f32 %v4856, %v5254
          %v5572 = vmul.f32 %v4858, %v5254
          %v5573 = vmul.f32 %v4860, %v5254
          %v5574 = vmul.f32 %v4862, %v5254
          %v5575 = vmul.f32 %v4864, %v5254
          %v5576 = vmul.f32 %v4866, %v5254
          %v5577 = vmul.f32 %v4868, %v5254
          %v5578 = vmul.f32 %v4870, %v5254
          %v5579 = vmul.f32 %v4872, %v5254
          %v5580 = vmul.f32 %v4874, %v5254
          %v5581 = vmul.f32 %v4876, %v5254
          %v5582 = vmul.f32 %v4878, %v5254
          %v5583 = vmul.f32 %v4880, %v5254
          %v5584 = vmul.f32 %v4882, %v5254
          %v5585 = vmul.f32 %v4884, %v5254
          %v5586 = vmul.f32 %v4886, %v5254
          %v5587 = vmul.f32 %v4888, %v5254
          %v5588 = vmul.f32 %v4890, %v5254
          %v5589 = vmul.f32 %v4892, %v5254
          %v5590 = vmul.f32 %v4894, %v5254
          %v5591 = vmul.f32 %v4896, %v5254
          %v5592 = vmul.f32 %v4898, %v5254
          %v5593 = vmul.f32 %v4900, %v5254
          %v5594 = vmul.f32 %v4902, %v5254
          %v5595 = vmul.f32 %v4904, %v5254
          %v5596 = vmul.f32 %v4906, %v5254
          %v5597 = vmul.f32 %v4908, %v5254
          %v5598 = vmul.f32 %v4910, %v5254
          %v5599 = vmul.f32 %v4912, %v5254
          %v5600 = vmul.f32 %v4914, %v5254
          %v5601 = vmul.f32 %v4916, %v5254
          %v5602 = vmul.f32 %v4918, %v5254
          %v5603 = vmul.f32 %v4920, %v5254
          %v5604 = vmul.f32 %v4922, %v5254
          %v5605 = vmul.f32 %v4924, %v5254
          %v5606 = vmul.f32 %v4926, %v5254
          %v5607 = vmul.f32 %v4928, %v5254
          %v5608 = vmul.f32 %v4930, %v5254
          %v5609 = vmul.f32 %v4932, %v5254
          %v5610 = vmul.f32 %v4934, %v5254
          %v5611 = vmul.f32 %v4936, %v5254
          %v5612 = vmul.f32 %v4938, %v5254
          %v5613 = vmul.f32 %v4940, %v5254
          %v5614 = vmul.f32 %v4942, %v5254
          %v5615 = vmul.f32 %v4944, %v5254
          %v5616 = vmul.f32 %v4946, %v5254
          %v5617 = vmul.f32 %v4948, %v5254
          %v5618 = vmul.f32 %v4950, %v5254
          %v5619 = vmul.f32 %v4952, %v5254
          %v5620 = vmul.f32 %v4954, %v5254
          %v5621 = vmul.f32 %v4956, %v5254
          %v5622 = vmul.f32 %v4958, %v5254
          %v5623 = vmul.f32 %v4960, %v5254
          %v5624 = vmul.f32 %v4962, %v5254
          %v5625 = vmul.f32 %v4964, %v5254
          %v5626 = vmul.f32 %v4966, %v5254
          %v5627 = vmul.f32 %v4968, %v5254
          %v5628 = vmul.f32 %v4970, %v5254
          %v5629 = vmul.f32 %v4972, %v5254
          %v5630 = vmul.f32 %v4974, %v5254
          %v5631 = vmul.f32 %v4976, %v5254
          %v5632 = vmul.f32 %v4978, %v5254
          %v5633 = vmul.f32 %v4980, %v5254
          %v5634 = vmul.f32 %v4982, %v5254
          %v5635 = vmul.f32 %v4984, %v5254
          %v5636 = vmul.f32 %v4986, %v5254
          %v5637 = vmul.f32 %v4988, %v5254
          %v5638 = vmul.f32 %v4990, %v5254
          %v5639 = vmul.f32 %v4992, %v5254
          %v5640 = vmul.f32 %v4994, %v5254
          %v5641 = vmul.f32 %v4996, %v5254
          %v5642 = vmul.f32 %v4998, %v5254
          %v5643 = vmul.f32 %v5000, %v5254
          %v5644 = vmul.f32 %v5002, %v5254
          %v5645 = vmul.f32 %v5004, %v5254
          %v5646 = vmul.f32 %v5006, %v5254
          %v5647 = vmul.f32 %v5008, %v5254
          %v5648 = vmul.f32 %v5010, %v5254
          %v5649 = vmul.f32 %v5012, %v5254
          %v5650 = vmul.f32 %v5014, %v5254
          %v5651 = vmul.f32 %v5016, %v5254
          %v5652 = vmul.f32 %v5018, %v5254
          %v5653 = vmul.f32 %v5020, %v5254
          %v5654 = vmul.f32 %v5022, %v5254
          %v5655 = vmul.f32 %v5024, %v5254
          %v5656 = vmul.f32 %v5026, %v5254
          %v5657 = vmul.f32 %v5028, %v5254
          %v5658 = vmul.f32 %v5030, %v5254
          %v5659 = vmul.f32 %v5032, %v5254
          %v5660 = vmul.f32 %v5034, %v5254
          %v5661 = vmul.f32 %v5036, %v5254
          %v5662 = vmul.f32 %v5038, %v5254
          %v5663 = vmul.f32 %v5040, %v5254
          %v5664 = vmul.f32 %v5042, %v5254
          %v5665 = vmul.f32 %v5044, %v5254
          %v5666 = vmul.f32 %v5046, %v5254
          %v5667 = vmul.f32 %v5048, %v5254
          %v5668 = vmul.f32 %v5050, %v5254
          %v5669 = vmul.f32 %v5052, %v5254
          %v5670 = vmul.f32 %v5054, %v5254
          %v5671 = vmul.f32 %v5056, %v5254
          %v5672 = vmul.f32 %v5058, %v5254
          %v5673 = vmul.f32 %v5060, %v5254
          %v5674 = vmul.f32 %v5062, %v5254
          %v5675 = vmul.f32 %v5064, %v5254
          %v5676 = vmul.f32 %v5066, %v5254
          %v5677 = vmul.f32 %v5068, %v5254
          %v5678 = vmul.f32 %v5070, %v5254
          %v5679 = vmul.f32 %v5072, %v5254
          %v5680 = vmul.f32 %v5074, %v5254
          %v5681 = vmul.f32 %v5076, %v5254
          %v5682 = vmul.f32 %v5078, %v5254
          %v5683 = vmul.f32 %v5080, %v5254
          %v5684 = vmul.f32 %v5082, %v5254
          %v5685 = vmul.f32 %v5084, %v5254
          %v5686 = vmul.f32 %v5086, %v5254
          %v5687 = vmul.f32 %v5088, %v5254
          %v5688 = vmul.f32 %v5090, %v5254
          %v5689 = vmul.f32 %v5092, %v5254
          %v5690 = vmul.f32 %v5094, %v5254
          %v5691 = vmul.f32 %v5096, %v5254
          %v5692 = vmul.f32 %v5098, %v5254
          %v5693 = vmul.f32 %v5100, %v5254
          %v5694 = vmul.f32 %v5102, %v5254
          %v5695 = vmul.f32 %v5104, %v5254
          %v5696 = vmul.f32 %v5106, %v5254
          %v5697 = vmul.f32 %v5108, %v5254
          %v5698 = vmul.f32 %v5110, %v5254
          %v5699 = vmul.f32 %v5112, %v5254
          %v5700 = vmul.f32 %v5114, %v5254
          %v5701 = vmul.f32 %v5116, %v5254
          %v5702 = vmul.f32 %v5118, %v5254
          %v5703 = vmul.f32 %v5120, %v5254
          %v5704 = vmul.f32 %v5122, %v5254
          %v5705 = vmul.f32 %v5124, %v5254
          %v5706 = vmul.f32 %v5126, %v5254
          %v5707 = vmul.f32 %v5128, %v5254
          %v5708 = vmul.f32 %v5130, %v5254
          %v5709 = vmul.f32 %v5132, %v5254
          %v5710 = vmul.f32 %v5134, %v5254
          %v5711 = vmul.f32 %v5136, %v5254
          %v5712 = vmul.f32 %v5138, %v5254
          %v5713 = vmul.f32 %v5140, %v5254
          %v5714 = vmul.f32 %v5142, %v5254
          %v5715 = vmul.f32 %v5144, %v5254
          %v5716 = vmul.f32 %v5146, %v5254
          %v5717 = vmul.f32 %v5148, %v5254
          %v5718 = vmul.f32 %v5150, %v5254
          %v5719 = vmul.f32 %v5152, %v5254
          %v5720 = vmul.f32 %v5154, %v5254
          %v5721 = vmul.f32 %v5156, %v5254
          %v5722 = vmul.f32 %v5158, %v5254
          %v5723 = vmul.f32 %v5160, %v5254
          %v5724 = vmul.f32 %v5162, %v5254
          %v5725 = vmul.f32 %v5164, %v5254
          %v5726 = vmul.f32 %v5166, %v5254
          %v5727 = vmul.f32 %v5168, %v5254
          %v5728 = vmul.f32 %v5170, %v5254
          %v5729 = vmul.f32 %v5172, %v5254
          %v5730 = vmul.f32 %v5174, %v5254
          %v5731 = vmul.f32 %v5176, %v5254
          %v5732 = vmul.f32 %v5178, %v5254
          %v5733 = vmul.f32 %v5180, %v5254
          %v5734 = vmul.f32 %v5182, %v5254
          %v5735 = vmul.f32 %v5184, %v5254
          %v5736 = vmul.f32 %v5186, %v5254
          %v5737 = vmul.f32 %v5188, %v5254
          %v5738 = vmul.f32 %v5190, %v5254
          %v5739 = vmul.f32 %v5192, %v5254
          %v5740 = vmul.f32 %v5194, %v5254
          %v5741 = vmul.f32 %v5196, %v5254
          %v5742 = vmul.f32 %v5198, %v5254
          %v5743 = vmul.f32 %v5200, %v5254
          %v5744 = vmul.f32 %v5202, %v5254
          %v5745 = vmul.f32 %v5204, %v5254
          %v5746 = vmul.f32 %v5206, %v5254
          %v5747 = vmul.f32 %v5208, %v5254
          %v5748 = vmul.f32 %v5210, %v5254
          %v5749 = vmul.f32 %v5212, %v5254
          %v5750 = vmul.f32 %v5214, %v5254
          %v5751 = vmul.f32 %v5216, %v5254
          %v5752 = vmul.f32 %v5218, %v5254
          %v5753 = vmul.f32 %v5220, %v5254
          %v5754 = vmul.f32 %v5222, %v5254
          %v5755 = vmul.f32 %v5224, %v5254
          %v5756 = vmul.f32 %v5226, %v5254
          %v5757 = vmul.f32 %v5228, %v5254
          %v5758 = vmul.f32 %v5230, %v5254
          %v5759 = vmul.f32 %v5232, %v5254
          %v5760 = vmul.f32 %v5234, %v5254
          %v5761 = vmul.f32 %v5236, %v5254
          %v5762 = vmul.f32 %v5238, %v5254
          %v5763 = vmul.f32 %v5240, %v5254
          %v5764 = vmul.f32 %v5242, %v5254
          %v5765 = vmul.f32 %v5244, %v5254
          %v5766 = vmul.f32 %v5246, %v5254
          %v5767 = vmul.f32 %v5248, %v5254
          %5768 = vadd.xlane.f32.xlu0 %v5256
          %v5769 = vpop.xlane.xlu0 %5768
          %5770 = vadd.xlane.f32.xlu0 %v5257
          %v5771 = vpop.xlane.xlu0 %5770
          %5772 = vadd.xlane.f32.xlu0 %v5258
          %v5773 = vpop.xlane.xlu0 %5772
          %5774 = vadd.xlane.f32.xlu0 %v5259
          %v5775 = vpop.xlane.xlu0 %5774
          %5776 = vadd.xlane.f32.xlu0 %v5260
          %v5777 = vpop.xlane.xlu0 %5776
          %5778 = vadd.xlane.f32.xlu0 %v5261
          %v5779 = vpop.xlane.xlu0 %5778
          %5780 = vadd.xlane.f32.xlu0 %v5262
          %v5781 = vpop.xlane.xlu0 %5780
          %5782 = vadd.xlane.f32.xlu0 %v5263
          %v5783 = vpop.xlane.xlu0 %5782
          %5784 = vadd.xlane.f32.xlu0 %v5264
          %v5785 = vpop.xlane.xlu0 %5784
          %5786 = vadd.xlane.f32.xlu0 %v5265
          %v5787 = vpop.xlane.xlu0 %5786
          %5788 = vadd.xlane.f32.xlu0 %v5266
          %v5789 = vpop.xlane.xlu0 %5788
          %5790 = vadd.xlane.f32.xlu0 %v5267
          %v5791 = vpop.xlane.xlu0 %5790
          %5792 = vadd.xlane.f32.xlu0 %v5268
          %v5793 = vpop.xlane.xlu0 %5792
          %5794 = vadd.xlane.f32.xlu0 %v5269
          %v5795 = vpop.xlane.xlu0 %5794
          %5796 = vadd.xlane.f32.xlu0 %v5270
          %v5797 = vpop.xlane.xlu0 %5796
          %5798 = vadd.xlane.f32.xlu0 %v5271
          %v5799 = vpop.xlane.xlu0 %5798
          %5800 = vadd.xlane.f32.xlu0 %v5272
          %v5801 = vpop.xlane.xlu0 %5800
          %5802 = vadd.xlane.f32.xlu0 %v5273
          %v5803 = vpop.xlane.xlu0 %5802
          %5804 = vadd.xlane.f32.xlu0 %v5274
          %v5805 = vpop.xlane.xlu0 %5804
          %5806 = vadd.xlane.f32.xlu0 %v5275
          %v5807 = vpop.xlane.xlu0 %5806
          %5808 = vadd.xlane.f32.xlu0 %v5276
          %v5809 = vpop.xlane.xlu0 %5808
          %5810 = vadd.xlane.f32.xlu0 %v5277
          %v5811 = vpop.xlane.xlu0 %5810
          %5812 = vadd.xlane.f32.xlu0 %v5278
          %v5813 = vpop.xlane.xlu0 %5812
          %5814 = vadd.xlane.f32.xlu0 %v5279
          %v5815 = vpop.xlane.xlu0 %5814
          %5816 = vadd.xlane.f32.xlu0 %v5280
          %v5817 = vpop.xlane.xlu0 %5816
          %5818 = vadd.xlane.f32.xlu0 %v5281
          %v5819 = vpop.xlane.xlu0 %5818
          %5820 = vadd.xlane.f32.xlu0 %v5282
          %v5821 = vpop.xlane.xlu0 %5820
          %5822 = vadd.xlane.f32.xlu0 %v5283
          %v5823 = vpop.xlane.xlu0 %5822
          %5824 = vadd.xlane.f32.xlu0 %v5284
          %v5825 = vpop.xlane.xlu0 %5824
          %5826 = vadd.xlane.f32.xlu0 %v5285
          %v5827 = vpop.xlane.xlu0 %5826
          %5828 = vadd.xlane.f32.xlu0 %v5286
          %v5829 = vpop.xlane.xlu0 %5828
          %5830 = vadd.xlane.f32.xlu0 %v5287
          %v5831 = vpop.xlane.xlu0 %5830
          %5832 = vadd.xlane.f32.xlu0 %v5288
          %v5833 = vpop.xlane.xlu0 %5832
          %5834 = vadd.xlane.f32.xlu0 %v5289
          %v5835 = vpop.xlane.xlu0 %5834
          %5836 = vadd.xlane.f32.xlu0 %v5290
          %v5837 = vpop.xlane.xlu0 %5836
          %5838 = vadd.xlane.f32.xlu0 %v5291
          %v5839 = vpop.xlane.xlu0 %5838
          %5840 = vadd.xlane.f32.xlu0 %v5292
          %v5841 = vpop.xlane.xlu0 %5840
          %5842 = vadd.xlane.f32.xlu0 %v5293
          %v5843 = vpop.xlane.xlu0 %5842
          %5844 = vadd.xlane.f32.xlu0 %v5294
          %v5845 = vpop.xlane.xlu0 %5844
          %5846 = vadd.xlane.f32.xlu0 %v5295
          %v5847 = vpop.xlane.xlu0 %5846
          %5848 = vadd.xlane.f32.xlu0 %v5296
          %v5849 = vpop.xlane.xlu0 %5848
          %5850 = vadd.xlane.f32.xlu0 %v5297
          %v5851 = vpop.xlane.xlu0 %5850
          %5852 = vadd.xlane.f32.xlu0 %v5298
          %v5853 = vpop.xlane.xlu0 %5852
          %5854 = vadd.xlane.f32.xlu0 %v5299
          %v5855 = vpop.xlane.xlu0 %5854
          %5856 = vadd.xlane.f32.xlu0 %v5300
          %v5857 = vpop.xlane.xlu0 %5856
          %5858 = vadd.xlane.f32.xlu0 %v5301
          %v5859 = vpop.xlane.xlu0 %5858
          %5860 = vadd.xlane.f32.xlu0 %v5302
          %v5861 = vpop.xlane.xlu0 %5860
          %5862 = vadd.xlane.f32.xlu0 %v5303
          %v5863 = vpop.xlane.xlu0 %5862
          %5864 = vadd.xlane.f32.xlu0 %v5304
          %v5865 = vpop.xlane.xlu0 %5864
          %5866 = vadd.xlane.f32.xlu0 %v5305
          %v5867 = vpop.xlane.xlu0 %5866
          %5868 = vadd.xlane.f32.xlu0 %v5306
          %v5869 = vpop.xlane.xlu0 %5868
          %5870 = vadd.xlane.f32.xlu0 %v5307
          %v5871 = vpop.xlane.xlu0 %5870
          %5872 = vadd.xlane.f32.xlu0 %v5308
          %v5873 = vpop.xlane.xlu0 %5872
          %5874 = vadd.xlane.f32.xlu0 %v5309
          %v5875 = vpop.xlane.xlu0 %5874
          %5876 = vadd.xlane.f32.xlu0 %v5310
          %v5877 = vpop.xlane.xlu0 %5876
          %5878 = vadd.xlane.f32.xlu0 %v5311
          %v5879 = vpop.xlane.xlu0 %5878
          %5880 = vadd.xlane.f32.xlu0 %v5312
          %v5881 = vpop.xlane.xlu0 %5880
          %5882 = vadd.xlane.f32.xlu0 %v5313
          %v5883 = vpop.xlane.xlu0 %5882
          %5884 = vadd.xlane.f32.xlu0 %v5314
          %v5885 = vpop.xlane.xlu0 %5884
          %5886 = vadd.xlane.f32.xlu0 %v5315
          %v5887 = vpop.xlane.xlu0 %5886
          %5888 = vadd.xlane.f32.xlu0 %v5316
          %v5889 = vpop.xlane.xlu0 %5888
          %5890 = vadd.xlane.f32.xlu0 %v5317
          %v5891 = vpop.xlane.xlu0 %5890
          %5892 = vadd.xlane.f32.xlu0 %v5318
          %v5893 = vpop.xlane.xlu0 %5892
          %5894 = vadd.xlane.f32.xlu0 %v5319
          %v5895 = vpop.xlane.xlu0 %5894
          %5896 = vadd.xlane.f32.xlu0 %v5320
          %v5897 = vpop.xlane.xlu0 %5896
          %5898 = vadd.xlane.f32.xlu0 %v5321
          %v5899 = vpop.xlane.xlu0 %5898
          %5900 = vadd.xlane.f32.xlu0 %v5322
          %v5901 = vpop.xlane.xlu0 %5900
          %5902 = vadd.xlane.f32.xlu0 %v5323
          %v5903 = vpop.xlane.xlu0 %5902
          %5904 = vadd.xlane.f32.xlu0 %v5324
          %v5905 = vpop.xlane.xlu0 %5904
          %5906 = vadd.xlane.f32.xlu0 %v5325
          %v5907 = vpop.xlane.xlu0 %5906
          %5908 = vadd.xlane.f32.xlu0 %v5326
          %v5909 = vpop.xlane.xlu0 %5908
          %5910 = vadd.xlane.f32.xlu0 %v5327
          %v5911 = vpop.xlane.xlu0 %5910
          %5912 = vadd.xlane.f32.xlu0 %v5328
          %v5913 = vpop.xlane.xlu0 %5912
          %5914 = vadd.xlane.f32.xlu0 %v5329
          %v5915 = vpop.xlane.xlu0 %5914
          %5916 = vadd.xlane.f32.xlu0 %v5330
          %v5917 = vpop.xlane.xlu0 %5916
          %5918 = vadd.xlane.f32.xlu0 %v5331
          %v5919 = vpop.xlane.xlu0 %5918
          %5920 = vadd.xlane.f32.xlu0 %v5332
          %v5921 = vpop.xlane.xlu0 %5920
          %5922 = vadd.xlane.f32.xlu0 %v5333
          %v5923 = vpop.xlane.xlu0 %5922
          %5924 = vadd.xlane.f32.xlu0 %v5334
          %v5925 = vpop.xlane.xlu0 %5924
          %5926 = vadd.xlane.f32.xlu0 %v5335
          %v5927 = vpop.xlane.xlu0 %5926
          %5928 = vadd.xlane.f32.xlu0 %v5336
          %v5929 = vpop.xlane.xlu0 %5928
          %5930 = vadd.xlane.f32.xlu0 %v5337
          %v5931 = vpop.xlane.xlu0 %5930
          %5932 = vadd.xlane.f32.xlu0 %v5338
          %v5933 = vpop.xlane.xlu0 %5932
          %5934 = vadd.xlane.f32.xlu0 %v5339
          %v5935 = vpop.xlane.xlu0 %5934
          %5936 = vadd.xlane.f32.xlu0 %v5340
          %v5937 = vpop.xlane.xlu0 %5936
          %5938 = vadd.xlane.f32.xlu0 %v5341
          %v5939 = vpop.xlane.xlu0 %5938
          %5940 = vadd.xlane.f32.xlu0 %v5342
          %v5941 = vpop.xlane.xlu0 %5940
          %5942 = vadd.xlane.f32.xlu0 %v5343
          %v5943 = vpop.xlane.xlu0 %5942
          %5944 = vadd.xlane.f32.xlu0 %v5344
          %v5945 = vpop.xlane.xlu0 %5944
          %5946 = vadd.xlane.f32.xlu0 %v5345
          %v5947 = vpop.xlane.xlu0 %5946
          %5948 = vadd.xlane.f32.xlu0 %v5346
          %v5949 = vpop.xlane.xlu0 %5948
          %5950 = vadd.xlane.f32.xlu0 %v5347
          %v5951 = vpop.xlane.xlu0 %5950
          %5952 = vadd.xlane.f32.xlu0 %v5348
          %v5953 = vpop.xlane.xlu0 %5952
          %5954 = vadd.xlane.f32.xlu0 %v5349
          %v5955 = vpop.xlane.xlu0 %5954
          %5956 = vadd.xlane.f32.xlu0 %v5350
          %v5957 = vpop.xlane.xlu0 %5956
          %5958 = vadd.xlane.f32.xlu0 %v5351
          %v5959 = vpop.xlane.xlu0 %5958
          %5960 = vadd.xlane.f32.xlu0 %v5352
          %v5961 = vpop.xlane.xlu0 %5960
          %5962 = vadd.xlane.f32.xlu0 %v5353
          %v5963 = vpop.xlane.xlu0 %5962
          %5964 = vadd.xlane.f32.xlu0 %v5354
          %v5965 = vpop.xlane.xlu0 %5964
          %5966 = vadd.xlane.f32.xlu0 %v5355
          %v5967 = vpop.xlane.xlu0 %5966
          %5968 = vadd.xlane.f32.xlu0 %v5356
          %v5969 = vpop.xlane.xlu0 %5968
          %5970 = vadd.xlane.f32.xlu0 %v5357
          %v5971 = vpop.xlane.xlu0 %5970
          %5972 = vadd.xlane.f32.xlu0 %v5358
          %v5973 = vpop.xlane.xlu0 %5972
          %5974 = vadd.xlane.f32.xlu0 %v5359
          %v5975 = vpop.xlane.xlu0 %5974
          %5976 = vadd.xlane.f32.xlu0 %v5360
          %v5977 = vpop.xlane.xlu0 %5976
          %5978 = vadd.xlane.f32.xlu0 %v5361
          %v5979 = vpop.xlane.xlu0 %5978
          %5980 = vadd.xlane.f32.xlu0 %v5362
          %v5981 = vpop.xlane.xlu0 %5980
          %5982 = vadd.xlane.f32.xlu0 %v5363
          %v5983 = vpop.xlane.xlu0 %5982
          %5984 = vadd.xlane.f32.xlu0 %v5364
          %v5985 = vpop.xlane.xlu0 %5984
          %5986 = vadd.xlane.f32.xlu0 %v5365
          %v5987 = vpop.xlane.xlu0 %5986
          %5988 = vadd.xlane.f32.xlu0 %v5366
          %v5989 = vpop.xlane.xlu0 %5988
          %5990 = vadd.xlane.f32.xlu0 %v5367
          %v5991 = vpop.xlane.xlu0 %5990
          %5992 = vadd.xlane.f32.xlu0 %v5368
          %v5993 = vpop.xlane.xlu0 %5992
          %5994 = vadd.xlane.f32.xlu0 %v5369
          %v5995 = vpop.xlane.xlu0 %5994
          %5996 = vadd.xlane.f32.xlu0 %v5370
          %v5997 = vpop.xlane.xlu0 %5996
          %5998 = vadd.xlane.f32.xlu0 %v5371
          %v5999 = vpop.xlane.xlu0 %5998
          %6000 = vadd.xlane.f32.xlu0 %v5372
          %v6001 = vpop.xlane.xlu0 %6000
          %6002 = vadd.xlane.f32.xlu0 %v5373
          %v6003 = vpop.xlane.xlu0 %6002
          %6004 = vadd.xlane.f32.xlu0 %v5374
          %v6005 = vpop.xlane.xlu0 %6004
          %6006 = vadd.xlane.f32.xlu0 %v5375
          %v6007 = vpop.xlane.xlu0 %6006
          %6008 = vadd.xlane.f32.xlu0 %v5376
          %v6009 = vpop.xlane.xlu0 %6008
          %6010 = vadd.xlane.f32.xlu0 %v5377
          %v6011 = vpop.xlane.xlu0 %6010
          %6012 = vadd.xlane.f32.xlu0 %v5378
          %v6013 = vpop.xlane.xlu0 %6012
          %6014 = vadd.xlane.f32.xlu0 %v5379
          %v6015 = vpop.xlane.xlu0 %6014
          %6016 = vadd.xlane.f32.xlu0 %v5380
          %v6017 = vpop.xlane.xlu0 %6016
          %6018 = vadd.xlane.f32.xlu0 %v5381
          %v6019 = vpop.xlane.xlu0 %6018
          %6020 = vadd.xlane.f32.xlu0 %v5382
          %v6021 = vpop.xlane.xlu0 %6020
          %6022 = vadd.xlane.f32.xlu0 %v5383
          %v6023 = vpop.xlane.xlu0 %6022
          %6024 = vadd.xlane.f32.xlu0 %v5384
          %v6025 = vpop.xlane.xlu0 %6024
          %6026 = vadd.xlane.f32.xlu0 %v5385
          %v6027 = vpop.xlane.xlu0 %6026
          %6028 = vadd.xlane.f32.xlu0 %v5386
          %v6029 = vpop.xlane.xlu0 %6028
          %6030 = vadd.xlane.f32.xlu0 %v5387
          %v6031 = vpop.xlane.xlu0 %6030
          %6032 = vadd.xlane.f32.xlu0 %v5388
          %v6033 = vpop.xlane.xlu0 %6032
          %6034 = vadd.xlane.f32.xlu0 %v5389
          %v6035 = vpop.xlane.xlu0 %6034
          %6036 = vadd.xlane.f32.xlu0 %v5390
          %v6037 = vpop.xlane.xlu0 %6036
          %6038 = vadd.xlane.f32.xlu0 %v5391
          %v6039 = vpop.xlane.xlu0 %6038
          %6040 = vadd.xlane.f32.xlu0 %v5392
          %v6041 = vpop.xlane.xlu0 %6040
          %6042 = vadd.xlane.f32.xlu0 %v5393
          %v6043 = vpop.xlane.xlu0 %6042
          %6044 = vadd.xlane.f32.xlu0 %v5394
          %v6045 = vpop.xlane.xlu0 %6044
          %6046 = vadd.xlane.f32.xlu0 %v5395
          %v6047 = vpop.xlane.xlu0 %6046
          %6048 = vadd.xlane.f32.xlu0 %v5396
          %v6049 = vpop.xlane.xlu0 %6048
          %6050 = vadd.xlane.f32.xlu0 %v5397
          %v6051 = vpop.xlane.xlu0 %6050
          %6052 = vadd.xlane.f32.xlu0 %v5398
          %v6053 = vpop.xlane.xlu0 %6052
          %6054 = vadd.xlane.f32.xlu0 %v5399
          %v6055 = vpop.xlane.xlu0 %6054
          %6056 = vadd.xlane.f32.xlu0 %v5400
          %v6057 = vpop.xlane.xlu0 %6056
          %6058 = vadd.xlane.f32.xlu0 %v5401
          %v6059 = vpop.xlane.xlu0 %6058
          %6060 = vadd.xlane.f32.xlu0 %v5402
          %v6061 = vpop.xlane.xlu0 %6060
          %6062 = vadd.xlane.f32.xlu0 %v5403
          %v6063 = vpop.xlane.xlu0 %6062
          %6064 = vadd.xlane.f32.xlu0 %v5404
          %v6065 = vpop.xlane.xlu0 %6064
          %6066 = vadd.xlane.f32.xlu0 %v5405
          %v6067 = vpop.xlane.xlu0 %6066
          %6068 = vadd.xlane.f32.xlu0 %v5406
          %v6069 = vpop.xlane.xlu0 %6068
          %6070 = vadd.xlane.f32.xlu0 %v5407
          %v6071 = vpop.xlane.xlu0 %6070
          %6072 = vadd.xlane.f32.xlu0 %v5408
          %v6073 = vpop.xlane.xlu0 %6072
          %6074 = vadd.xlane.f32.xlu0 %v5409
          %v6075 = vpop.xlane.xlu0 %6074
          %6076 = vadd.xlane.f32.xlu0 %v5410
          %v6077 = vpop.xlane.xlu0 %6076
          %6078 = vadd.xlane.f32.xlu0 %v5411
          %v6079 = vpop.xlane.xlu0 %6078
          %6080 = vadd.xlane.f32.xlu0 %v5412
          %v6081 = vpop.xlane.xlu0 %6080
          %6082 = vadd.xlane.f32.xlu0 %v5413
          %v6083 = vpop.xlane.xlu0 %6082
          %6084 = vadd.xlane.f32.xlu0 %v5414
          %v6085 = vpop.xlane.xlu0 %6084
          %6086 = vadd.xlane.f32.xlu0 %v5415
          %v6087 = vpop.xlane.xlu0 %6086
          %6088 = vadd.xlane.f32.xlu0 %v5416
          %v6089 = vpop.xlane.xlu0 %6088
          %6090 = vadd.xlane.f32.xlu0 %v5417
          %v6091 = vpop.xlane.xlu0 %6090
          %6092 = vadd.xlane.f32.xlu0 %v5418
          %v6093 = vpop.xlane.xlu0 %6092
          %6094 = vadd.xlane.f32.xlu0 %v5419
          %v6095 = vpop.xlane.xlu0 %6094
          %6096 = vadd.xlane.f32.xlu0 %v5420
          %v6097 = vpop.xlane.xlu0 %6096
          %6098 = vadd.xlane.f32.xlu0 %v5421
          %v6099 = vpop.xlane.xlu0 %6098
          %6100 = vadd.xlane.f32.xlu0 %v5422
          %v6101 = vpop.xlane.xlu0 %6100
          %6102 = vadd.xlane.f32.xlu0 %v5423
          %v6103 = vpop.xlane.xlu0 %6102
          %6104 = vadd.xlane.f32.xlu0 %v5424
          %v6105 = vpop.xlane.xlu0 %6104
          %6106 = vadd.xlane.f32.xlu0 %v5425
          %v6107 = vpop.xlane.xlu0 %6106
          %6108 = vadd.xlane.f32.xlu0 %v5426
          %v6109 = vpop.xlane.xlu0 %6108
          %6110 = vadd.xlane.f32.xlu0 %v5427
          %v6111 = vpop.xlane.xlu0 %6110
          %6112 = vadd.xlane.f32.xlu0 %v5428
          %v6113 = vpop.xlane.xlu0 %6112
          %6114 = vadd.xlane.f32.xlu0 %v5429
          %v6115 = vpop.xlane.xlu0 %6114
          %6116 = vadd.xlane.f32.xlu0 %v5430
          %v6117 = vpop.xlane.xlu0 %6116
          %6118 = vadd.xlane.f32.xlu0 %v5431
          %v6119 = vpop.xlane.xlu0 %6118
          %6120 = vadd.xlane.f32.xlu0 %v5432
          %v6121 = vpop.xlane.xlu0 %6120
          %6122 = vadd.xlane.f32.xlu0 %v5433
          %v6123 = vpop.xlane.xlu0 %6122
          %6124 = vadd.xlane.f32.xlu0 %v5434
          %v6125 = vpop.xlane.xlu0 %6124
          %6126 = vadd.xlane.f32.xlu0 %v5435
          %v6127 = vpop.xlane.xlu0 %6126
          %6128 = vadd.xlane.f32.xlu0 %v5436
          %v6129 = vpop.xlane.xlu0 %6128
          %6130 = vadd.xlane.f32.xlu0 %v5437
          %v6131 = vpop.xlane.xlu0 %6130
          %6132 = vadd.xlane.f32.xlu0 %v5438
          %v6133 = vpop.xlane.xlu0 %6132
          %6134 = vadd.xlane.f32.xlu0 %v5439
          %v6135 = vpop.xlane.xlu0 %6134
          %6136 = vadd.xlane.f32.xlu0 %v5440
          %v6137 = vpop.xlane.xlu0 %6136
          %6138 = vadd.xlane.f32.xlu0 %v5441
          %v6139 = vpop.xlane.xlu0 %6138
          %6140 = vadd.xlane.f32.xlu0 %v5442
          %v6141 = vpop.xlane.xlu0 %6140
          %6142 = vadd.xlane.f32.xlu0 %v5443
          %v6143 = vpop.xlane.xlu0 %6142
          %6144 = vadd.xlane.f32.xlu0 %v5444
          %v6145 = vpop.xlane.xlu0 %6144
          %6146 = vadd.xlane.f32.xlu0 %v5445
          %v6147 = vpop.xlane.xlu0 %6146
          %6148 = vadd.xlane.f32.xlu0 %v5446
          %v6149 = vpop.xlane.xlu0 %6148
          %6150 = vadd.xlane.f32.xlu0 %v5447
          %v6151 = vpop.xlane.xlu0 %6150
          %6152 = vadd.xlane.f32.xlu0 %v5448
          %v6153 = vpop.xlane.xlu0 %6152
          %6154 = vadd.xlane.f32.xlu0 %v5449
          %v6155 = vpop.xlane.xlu0 %6154
          %6156 = vadd.xlane.f32.xlu0 %v5450
          %v6157 = vpop.xlane.xlu0 %6156
          %6158 = vadd.xlane.f32.xlu0 %v5451
          %v6159 = vpop.xlane.xlu0 %6158
          %6160 = vadd.xlane.f32.xlu0 %v5452
          %v6161 = vpop.xlane.xlu0 %6160
          %6162 = vadd.xlane.f32.xlu0 %v5453
          %v6163 = vpop.xlane.xlu0 %6162
          %6164 = vadd.xlane.f32.xlu0 %v5454
          %v6165 = vpop.xlane.xlu0 %6164
          %6166 = vadd.xlane.f32.xlu0 %v5455
          %v6167 = vpop.xlane.xlu0 %6166
          %6168 = vadd.xlane.f32.xlu0 %v5456
          %v6169 = vpop.xlane.xlu0 %6168
          %6170 = vadd.xlane.f32.xlu0 %v5457
          %v6171 = vpop.xlane.xlu0 %6170
          %6172 = vadd.xlane.f32.xlu0 %v5458
          %v6173 = vpop.xlane.xlu0 %6172
          %6174 = vadd.xlane.f32.xlu0 %v5459
          %v6175 = vpop.xlane.xlu0 %6174
          %6176 = vadd.xlane.f32.xlu0 %v5460
          %v6177 = vpop.xlane.xlu0 %6176
          %6178 = vadd.xlane.f32.xlu0 %v5461
          %v6179 = vpop.xlane.xlu0 %6178
          %6180 = vadd.xlane.f32.xlu0 %v5462
          %v6181 = vpop.xlane.xlu0 %6180
          %6182 = vadd.xlane.f32.xlu0 %v5463
          %v6183 = vpop.xlane.xlu0 %6182
          %6184 = vadd.xlane.f32.xlu0 %v5464
          %v6185 = vpop.xlane.xlu0 %6184
          %6186 = vadd.xlane.f32.xlu0 %v5465
          %v6187 = vpop.xlane.xlu0 %6186
          %6188 = vadd.xlane.f32.xlu0 %v5466
          %v6189 = vpop.xlane.xlu0 %6188
          %6190 = vadd.xlane.f32.xlu0 %v5467
          %v6191 = vpop.xlane.xlu0 %6190
          %6192 = vadd.xlane.f32.xlu0 %v5468
          %v6193 = vpop.xlane.xlu0 %6192
          %6194 = vadd.xlane.f32.xlu0 %v5469
          %v6195 = vpop.xlane.xlu0 %6194
          %6196 = vadd.xlane.f32.xlu0 %v5470
          %v6197 = vpop.xlane.xlu0 %6196
          %6198 = vadd.xlane.f32.xlu0 %v5471
          %v6199 = vpop.xlane.xlu0 %6198
          %6200 = vadd.xlane.f32.xlu0 %v5472
          %v6201 = vpop.xlane.xlu0 %6200
          %6202 = vadd.xlane.f32.xlu0 %v5473
          %v6203 = vpop.xlane.xlu0 %6202
          %6204 = vadd.xlane.f32.xlu0 %v5474
          %v6205 = vpop.xlane.xlu0 %6204
          %6206 = vadd.xlane.f32.xlu0 %v5475
          %v6207 = vpop.xlane.xlu0 %6206
          %6208 = vadd.xlane.f32.xlu0 %v5476
          %v6209 = vpop.xlane.xlu0 %6208
          %6210 = vadd.xlane.f32.xlu0 %v5477
          %v6211 = vpop.xlane.xlu0 %6210
          %6212 = vadd.xlane.f32.xlu0 %v5478
          %v6213 = vpop.xlane.xlu0 %6212
          %6214 = vadd.xlane.f32.xlu0 %v5479
          %v6215 = vpop.xlane.xlu0 %6214
          %6216 = vadd.xlane.f32.xlu0 %v5480
          %v6217 = vpop.xlane.xlu0 %6216
          %6218 = vadd.xlane.f32.xlu0 %v5481
          %v6219 = vpop.xlane.xlu0 %6218
          %6220 = vadd.xlane.f32.xlu0 %v5482
          %v6221 = vpop.xlane.xlu0 %6220
          %6222 = vadd.xlane.f32.xlu0 %v5483
          %v6223 = vpop.xlane.xlu0 %6222
          %6224 = vadd.xlane.f32.xlu0 %v5484
          %v6225 = vpop.xlane.xlu0 %6224
          %6226 = vadd.xlane.f32.xlu0 %v5485
          %v6227 = vpop.xlane.xlu0 %6226
          %6228 = vadd.xlane.f32.xlu0 %v5486
          %v6229 = vpop.xlane.xlu0 %6228
          %6230 = vadd.xlane.f32.xlu0 %v5487
          %v6231 = vpop.xlane.xlu0 %6230
          %6232 = vadd.xlane.f32.xlu0 %v5488
          %v6233 = vpop.xlane.xlu0 %6232
          %6234 = vadd.xlane.f32.xlu0 %v5489
          %v6235 = vpop.xlane.xlu0 %6234
          %6236 = vadd.xlane.f32.xlu0 %v5490
          %v6237 = vpop.xlane.xlu0 %6236
          %6238 = vadd.xlane.f32.xlu0 %v5491
          %v6239 = vpop.xlane.xlu0 %6238
          %6240 = vadd.xlane.f32.xlu0 %v5492
          %v6241 = vpop.xlane.xlu0 %6240
          %6242 = vadd.xlane.f32.xlu0 %v5493
          %v6243 = vpop.xlane.xlu0 %6242
          %6244 = vadd.xlane.f32.xlu0 %v5494
          %v6245 = vpop.xlane.xlu0 %6244
          %6246 = vadd.xlane.f32.xlu0 %v5495
          %v6247 = vpop.xlane.xlu0 %6246
          %6248 = vadd.xlane.f32.xlu0 %v5496
          %v6249 = vpop.xlane.xlu0 %6248
          %6250 = vadd.xlane.f32.xlu0 %v5497
          %v6251 = vpop.xlane.xlu0 %6250
          %6252 = vadd.xlane.f32.xlu0 %v5498
          %v6253 = vpop.xlane.xlu0 %6252
          %6254 = vadd.xlane.f32.xlu0 %v5499
          %v6255 = vpop.xlane.xlu0 %6254
          %6256 = vadd.xlane.f32.xlu0 %v5500
          %v6257 = vpop.xlane.xlu0 %6256
          %6258 = vadd.xlane.f32.xlu0 %v5501
          %v6259 = vpop.xlane.xlu0 %6258
          %6260 = vadd.xlane.f32.xlu0 %v5502
          %v6261 = vpop.xlane.xlu0 %6260
          %6262 = vadd.xlane.f32.xlu0 %v5503
          %v6263 = vpop.xlane.xlu0 %6262
          %6264 = vadd.xlane.f32.xlu0 %v5504
          %v6265 = vpop.xlane.xlu0 %6264
          %6266 = vadd.xlane.f32.xlu0 %v5505
          %v6267 = vpop.xlane.xlu0 %6266
          %6268 = vadd.xlane.f32.xlu0 %v5506
          %v6269 = vpop.xlane.xlu0 %6268
          %6270 = vadd.xlane.f32.xlu0 %v5507
          %v6271 = vpop.xlane.xlu0 %6270
          %6272 = vadd.xlane.f32.xlu0 %v5508
          %v6273 = vpop.xlane.xlu0 %6272
          %6274 = vadd.xlane.f32.xlu0 %v5509
          %v6275 = vpop.xlane.xlu0 %6274
          %6276 = vadd.xlane.f32.xlu0 %v5510
          %v6277 = vpop.xlane.xlu0 %6276
          %6278 = vadd.xlane.f32.xlu0 %v5511
          %v6279 = vpop.xlane.xlu0 %6278
          %6280 = vadd.xlane.f32.xlu0 %v5512
          %v6281 = vpop.xlane.xlu0 %6280
          %6282 = vadd.xlane.f32.xlu0 %v5513
          %v6283 = vpop.xlane.xlu0 %6282
          %6284 = vadd.xlane.f32.xlu0 %v5514
          %v6285 = vpop.xlane.xlu0 %6284
          %6286 = vadd.xlane.f32.xlu0 %v5515
          %v6287 = vpop.xlane.xlu0 %6286
          %6288 = vadd.xlane.f32.xlu0 %v5516
          %v6289 = vpop.xlane.xlu0 %6288
          %6290 = vadd.xlane.f32.xlu0 %v5517
          %v6291 = vpop.xlane.xlu0 %6290
          %6292 = vadd.xlane.f32.xlu0 %v5518
          %v6293 = vpop.xlane.xlu0 %6292
          %6294 = vadd.xlane.f32.xlu0 %v5519
          %v6295 = vpop.xlane.xlu0 %6294
          %6296 = vadd.xlane.f32.xlu0 %v5520
          %v6297 = vpop.xlane.xlu0 %6296
          %6298 = vadd.xlane.f32.xlu0 %v5521
          %v6299 = vpop.xlane.xlu0 %6298
          %6300 = vadd.xlane.f32.xlu0 %v5522
          %v6301 = vpop.xlane.xlu0 %6300
          %6302 = vadd.xlane.f32.xlu0 %v5523
          %v6303 = vpop.xlane.xlu0 %6302
          %6304 = vadd.xlane.f32.xlu0 %v5524
          %v6305 = vpop.xlane.xlu0 %6304
          %6306 = vadd.xlane.f32.xlu0 %v5525
          %v6307 = vpop.xlane.xlu0 %6306
          %6308 = vadd.xlane.f32.xlu0 %v5526
          %v6309 = vpop.xlane.xlu0 %6308
          %6310 = vadd.xlane.f32.xlu0 %v5527
          %v6311 = vpop.xlane.xlu0 %6310
          %6312 = vadd.xlane.f32.xlu0 %v5528
          %v6313 = vpop.xlane.xlu0 %6312
          %6314 = vadd.xlane.f32.xlu0 %v5529
          %v6315 = vpop.xlane.xlu0 %6314
          %6316 = vadd.xlane.f32.xlu0 %v5530
          %v6317 = vpop.xlane.xlu0 %6316
          %6318 = vadd.xlane.f32.xlu0 %v5531
          %v6319 = vpop.xlane.xlu0 %6318
          %6320 = vadd.xlane.f32.xlu0 %v5532
          %v6321 = vpop.xlane.xlu0 %6320
          %6322 = vadd.xlane.f32.xlu0 %v5533
          %v6323 = vpop.xlane.xlu0 %6322
          %6324 = vadd.xlane.f32.xlu0 %v5534
          %v6325 = vpop.xlane.xlu0 %6324
          %6326 = vadd.xlane.f32.xlu0 %v5535
          %v6327 = vpop.xlane.xlu0 %6326
          %6328 = vadd.xlane.f32.xlu0 %v5536
          %v6329 = vpop.xlane.xlu0 %6328
          %6330 = vadd.xlane.f32.xlu0 %v5537
          %v6331 = vpop.xlane.xlu0 %6330
          %6332 = vadd.xlane.f32.xlu0 %v5538
          %v6333 = vpop.xlane.xlu0 %6332
          %6334 = vadd.xlane.f32.xlu0 %v5539
          %v6335 = vpop.xlane.xlu0 %6334
          %6336 = vadd.xlane.f32.xlu0 %v5540
          %v6337 = vpop.xlane.xlu0 %6336
          %6338 = vadd.xlane.f32.xlu0 %v5541
          %v6339 = vpop.xlane.xlu0 %6338
          %6340 = vadd.xlane.f32.xlu0 %v5542
          %v6341 = vpop.xlane.xlu0 %6340
          %6342 = vadd.xlane.f32.xlu0 %v5543
          %v6343 = vpop.xlane.xlu0 %6342
          %6344 = vadd.xlane.f32.xlu0 %v5544
          %v6345 = vpop.xlane.xlu0 %6344
          %6346 = vadd.xlane.f32.xlu0 %v5545
          %v6347 = vpop.xlane.xlu0 %6346
          %6348 = vadd.xlane.f32.xlu0 %v5546
          %v6349 = vpop.xlane.xlu0 %6348
          %6350 = vadd.xlane.f32.xlu0 %v5547
          %v6351 = vpop.xlane.xlu0 %6350
          %6352 = vadd.xlane.f32.xlu0 %v5548
          %v6353 = vpop.xlane.xlu0 %6352
          %6354 = vadd.xlane.f32.xlu0 %v5549
          %v6355 = vpop.xlane.xlu0 %6354
          %6356 = vadd.xlane.f32.xlu0 %v5550
          %v6357 = vpop.xlane.xlu0 %6356
          %6358 = vadd.xlane.f32.xlu0 %v5551
          %v6359 = vpop.xlane.xlu0 %6358
          %6360 = vadd.xlane.f32.xlu0 %v5552
          %v6361 = vpop.xlane.xlu0 %6360
          %6362 = vadd.xlane.f32.xlu0 %v5553
          %v6363 = vpop.xlane.xlu0 %6362
          %6364 = vadd.xlane.f32.xlu0 %v5554
          %v6365 = vpop.xlane.xlu0 %6364
          %6366 = vadd.xlane.f32.xlu0 %v5555
          %v6367 = vpop.xlane.xlu0 %6366
          %6368 = vadd.xlane.f32.xlu0 %v5556
          %v6369 = vpop.xlane.xlu0 %6368
          %6370 = vadd.xlane.f32.xlu0 %v5557
          %v6371 = vpop.xlane.xlu0 %6370
          %6372 = vadd.xlane.f32.xlu0 %v5558
          %v6373 = vpop.xlane.xlu0 %6372
          %6374 = vadd.xlane.f32.xlu0 %v5559
          %v6375 = vpop.xlane.xlu0 %6374
          %6376 = vadd.xlane.f32.xlu0 %v5560
          %v6377 = vpop.xlane.xlu0 %6376
          %6378 = vadd.xlane.f32.xlu0 %v5561
          %v6379 = vpop.xlane.xlu0 %6378
          %6380 = vadd.xlane.f32.xlu0 %v5562
          %v6381 = vpop.xlane.xlu0 %6380
          %6382 = vadd.xlane.f32.xlu0 %v5563
          %v6383 = vpop.xlane.xlu0 %6382
          %6384 = vadd.xlane.f32.xlu0 %v5564
          %v6385 = vpop.xlane.xlu0 %6384
          %6386 = vadd.xlane.f32.xlu0 %v5565
          %v6387 = vpop.xlane.xlu0 %6386
          %6388 = vadd.xlane.f32.xlu0 %v5566
          %v6389 = vpop.xlane.xlu0 %6388
          %6390 = vadd.xlane.f32.xlu0 %v5567
          %v6391 = vpop.xlane.xlu0 %6390
          %6392 = vadd.xlane.f32.xlu0 %v5568
          %v6393 = vpop.xlane.xlu0 %6392
          %6394 = vadd.xlane.f32.xlu0 %v5569
          %v6395 = vpop.xlane.xlu0 %6394
          %6396 = vadd.xlane.f32.xlu0 %v5570
          %v6397 = vpop.xlane.xlu0 %6396
          %6398 = vadd.xlane.f32.xlu0 %v5571
          %v6399 = vpop.xlane.xlu0 %6398
          %6400 = vadd.xlane.f32.xlu0 %v5572
          %v6401 = vpop.xlane.xlu0 %6400
          %6402 = vadd.xlane.f32.xlu0 %v5573
          %v6403 = vpop.xlane.xlu0 %6402
          %6404 = vadd.xlane.f32.xlu0 %v5574
          %v6405 = vpop.xlane.xlu0 %6404
          %6406 = vadd.xlane.f32.xlu0 %v5575
          %v6407 = vpop.xlane.xlu0 %6406
          %6408 = vadd.xlane.f32.xlu0 %v5576
          %v6409 = vpop.xlane.xlu0 %6408
          %6410 = vadd.xlane.f32.xlu0 %v5577
          %v6411 = vpop.xlane.xlu0 %6410
          %6412 = vadd.xlane.f32.xlu0 %v5578
          %v6413 = vpop.xlane.xlu0 %6412
          %6414 = vadd.xlane.f32.xlu0 %v5579
          %v6415 = vpop.xlane.xlu0 %6414
          %6416 = vadd.xlane.f32.xlu0 %v5580
          %v6417 = vpop.xlane.xlu0 %6416
          %6418 = vadd.xlane.f32.xlu0 %v5581
          %v6419 = vpop.xlane.xlu0 %6418
          %6420 = vadd.xlane.f32.xlu0 %v5582
          %v6421 = vpop.xlane.xlu0 %6420
          %6422 = vadd.xlane.f32.xlu0 %v5583
          %v6423 = vpop.xlane.xlu0 %6422
          %6424 = vadd.xlane.f32.xlu0 %v5584
          %v6425 = vpop.xlane.xlu0 %6424
          %6426 = vadd.xlane.f32.xlu0 %v5585
          %v6427 = vpop.xlane.xlu0 %6426
          %6428 = vadd.xlane.f32.xlu0 %v5586
          %v6429 = vpop.xlane.xlu0 %6428
          %6430 = vadd.xlane.f32.xlu0 %v5587
          %v6431 = vpop.xlane.xlu0 %6430
          %6432 = vadd.xlane.f32.xlu0 %v5588
          %v6433 = vpop.xlane.xlu0 %6432
          %6434 = vadd.xlane.f32.xlu0 %v5589
          %v6435 = vpop.xlane.xlu0 %6434
          %6436 = vadd.xlane.f32.xlu0 %v5590
          %v6437 = vpop.xlane.xlu0 %6436
          %6438 = vadd.xlane.f32.xlu0 %v5591
          %v6439 = vpop.xlane.xlu0 %6438
          %6440 = vadd.xlane.f32.xlu0 %v5592
          %v6441 = vpop.xlane.xlu0 %6440
          %6442 = vadd.xlane.f32.xlu0 %v5593
          %v6443 = vpop.xlane.xlu0 %6442
          %6444 = vadd.xlane.f32.xlu0 %v5594
          %v6445 = vpop.xlane.xlu0 %6444
          %6446 = vadd.xlane.f32.xlu0 %v5595
          %v6447 = vpop.xlane.xlu0 %6446
          %6448 = vadd.xlane.f32.xlu0 %v5596
          %v6449 = vpop.xlane.xlu0 %6448
          %6450 = vadd.xlane.f32.xlu0 %v5597
          %v6451 = vpop.xlane.xlu0 %6450
          %6452 = vadd.xlane.f32.xlu0 %v5598
          %v6453 = vpop.xlane.xlu0 %6452
          %6454 = vadd.xlane.f32.xlu0 %v5599
          %v6455 = vpop.xlane.xlu0 %6454
          %6456 = vadd.xlane.f32.xlu0 %v5600
          %v6457 = vpop.xlane.xlu0 %6456
          %6458 = vadd.xlane.f32.xlu0 %v5601
          %v6459 = vpop.xlane.xlu0 %6458
          %6460 = vadd.xlane.f32.xlu0 %v5602
          %v6461 = vpop.xlane.xlu0 %6460
          %6462 = vadd.xlane.f32.xlu0 %v5603
          %v6463 = vpop.xlane.xlu0 %6462
          %6464 = vadd.xlane.f32.xlu0 %v5604
          %v6465 = vpop.xlane.xlu0 %6464
          %6466 = vadd.xlane.f32.xlu0 %v5605
          %v6467 = vpop.xlane.xlu0 %6466
          %6468 = vadd.xlane.f32.xlu0 %v5606
          %v6469 = vpop.xlane.xlu0 %6468
          %6470 = vadd.xlane.f32.xlu0 %v5607
          %v6471 = vpop.xlane.xlu0 %6470
          %6472 = vadd.xlane.f32.xlu0 %v5608
          %v6473 = vpop.xlane.xlu0 %6472
          %6474 = vadd.xlane.f32.xlu0 %v5609
          %v6475 = vpop.xlane.xlu0 %6474
          %6476 = vadd.xlane.f32.xlu0 %v5610
          %v6477 = vpop.xlane.xlu0 %6476
          %6478 = vadd.xlane.f32.xlu0 %v5611
          %v6479 = vpop.xlane.xlu0 %6478
          %6480 = vadd.xlane.f32.xlu0 %v5612
          %v6481 = vpop.xlane.xlu0 %6480
          %6482 = vadd.xlane.f32.xlu0 %v5613
          %v6483 = vpop.xlane.xlu0 %6482
          %6484 = vadd.xlane.f32.xlu0 %v5614
          %v6485 = vpop.xlane.xlu0 %6484
          %6486 = vadd.xlane.f32.xlu0 %v5615
          %v6487 = vpop.xlane.xlu0 %6486
          %6488 = vadd.xlane.f32.xlu0 %v5616
          %v6489 = vpop.xlane.xlu0 %6488
          %6490 = vadd.xlane.f32.xlu0 %v5617
          %v6491 = vpop.xlane.xlu0 %6490
          %6492 = vadd.xlane.f32.xlu0 %v5618
          %v6493 = vpop.xlane.xlu0 %6492
          %6494 = vadd.xlane.f32.xlu0 %v5619
          %v6495 = vpop.xlane.xlu0 %6494
          %6496 = vadd.xlane.f32.xlu0 %v5620
          %v6497 = vpop.xlane.xlu0 %6496
          %6498 = vadd.xlane.f32.xlu0 %v5621
          %v6499 = vpop.xlane.xlu0 %6498
          %6500 = vadd.xlane.f32.xlu0 %v5622
          %v6501 = vpop.xlane.xlu0 %6500
          %6502 = vadd.xlane.f32.xlu0 %v5623
          %v6503 = vpop.xlane.xlu0 %6502
          %6504 = vadd.xlane.f32.xlu0 %v5624
          %v6505 = vpop.xlane.xlu0 %6504
          %6506 = vadd.xlane.f32.xlu0 %v5625
          %v6507 = vpop.xlane.xlu0 %6506
          %6508 = vadd.xlane.f32.xlu0 %v5626
          %v6509 = vpop.xlane.xlu0 %6508
          %6510 = vadd.xlane.f32.xlu0 %v5627
          %v6511 = vpop.xlane.xlu0 %6510
          %6512 = vadd.xlane.f32.xlu0 %v5628
          %v6513 = vpop.xlane.xlu0 %6512
          %6514 = vadd.xlane.f32.xlu0 %v5629
          %v6515 = vpop.xlane.xlu0 %6514
          %6516 = vadd.xlane.f32.xlu0 %v5630
          %v6517 = vpop.xlane.xlu0 %6516
          %6518 = vadd.xlane.f32.xlu0 %v5631
          %v6519 = vpop.xlane.xlu0 %6518
          %6520 = vadd.xlane.f32.xlu0 %v5632
          %v6521 = vpop.xlane.xlu0 %6520
          %6522 = vadd.xlane.f32.xlu0 %v5633
          %v6523 = vpop.xlane.xlu0 %6522
          %6524 = vadd.xlane.f32.xlu0 %v5634
          %v6525 = vpop.xlane.xlu0 %6524
          %6526 = vadd.xlane.f32.xlu0 %v5635
          %v6527 = vpop.xlane.xlu0 %6526
          %6528 = vadd.xlane.f32.xlu0 %v5636
          %v6529 = vpop.xlane.xlu0 %6528
          %6530 = vadd.xlane.f32.xlu0 %v5637
          %v6531 = vpop.xlane.xlu0 %6530
          %6532 = vadd.xlane.f32.xlu0 %v5638
          %v6533 = vpop.xlane.xlu0 %6532
          %6534 = vadd.xlane.f32.xlu0 %v5639
          %v6535 = vpop.xlane.xlu0 %6534
          %6536 = vadd.xlane.f32.xlu0 %v5640
          %v6537 = vpop.xlane.xlu0 %6536
          %6538 = vadd.xlane.f32.xlu0 %v5641
          %v6539 = vpop.xlane.xlu0 %6538
          %6540 = vadd.xlane.f32.xlu0 %v5642
          %v6541 = vpop.xlane.xlu0 %6540
          %6542 = vadd.xlane.f32.xlu0 %v5643
          %v6543 = vpop.xlane.xlu0 %6542
          %6544 = vadd.xlane.f32.xlu0 %v5644
          %v6545 = vpop.xlane.xlu0 %6544
          %6546 = vadd.xlane.f32.xlu0 %v5645
          %v6547 = vpop.xlane.xlu0 %6546
          %6548 = vadd.xlane.f32.xlu0 %v5646
          %v6549 = vpop.xlane.xlu0 %6548
          %6550 = vadd.xlane.f32.xlu0 %v5647
          %v6551 = vpop.xlane.xlu0 %6550
          %6552 = vadd.xlane.f32.xlu0 %v5648
          %v6553 = vpop.xlane.xlu0 %6552
          %6554 = vadd.xlane.f32.xlu0 %v5649
          %v6555 = vpop.xlane.xlu0 %6554
          %6556 = vadd.xlane.f32.xlu0 %v5650
          %v6557 = vpop.xlane.xlu0 %6556
          %6558 = vadd.xlane.f32.xlu0 %v5651
          %v6559 = vpop.xlane.xlu0 %6558
          %6560 = vadd.xlane.f32.xlu0 %v5652
          %v6561 = vpop.xlane.xlu0 %6560
          %6562 = vadd.xlane.f32.xlu0 %v5653
          %v6563 = vpop.xlane.xlu0 %6562
          %6564 = vadd.xlane.f32.xlu0 %v5654
          %v6565 = vpop.xlane.xlu0 %6564
          %6566 = vadd.xlane.f32.xlu0 %v5655
          %v6567 = vpop.xlane.xlu0 %6566
          %6568 = vadd.xlane.f32.xlu0 %v5656
          %v6569 = vpop.xlane.xlu0 %6568
          %6570 = vadd.xlane.f32.xlu0 %v5657
          %v6571 = vpop.xlane.xlu0 %6570
          %6572 = vadd.xlane.f32.xlu0 %v5658
          %v6573 = vpop.xlane.xlu0 %6572
          %6574 = vadd.xlane.f32.xlu0 %v5659
          %v6575 = vpop.xlane.xlu0 %6574
          %6576 = vadd.xlane.f32.xlu0 %v5660
          %v6577 = vpop.xlane.xlu0 %6576
          %6578 = vadd.xlane.f32.xlu0 %v5661
          %v6579 = vpop.xlane.xlu0 %6578
          %6580 = vadd.xlane.f32.xlu0 %v5662
          %v6581 = vpop.xlane.xlu0 %6580
          %6582 = vadd.xlane.f32.xlu0 %v5663
          %v6583 = vpop.xlane.xlu0 %6582
          %6584 = vadd.xlane.f32.xlu0 %v5664
          %v6585 = vpop.xlane.xlu0 %6584
          %6586 = vadd.xlane.f32.xlu0 %v5665
          %v6587 = vpop.xlane.xlu0 %6586
          %6588 = vadd.xlane.f32.xlu0 %v5666
          %v6589 = vpop.xlane.xlu0 %6588
          %6590 = vadd.xlane.f32.xlu0 %v5667
          %v6591 = vpop.xlane.xlu0 %6590
          %6592 = vadd.xlane.f32.xlu0 %v5668
          %v6593 = vpop.xlane.xlu0 %6592
          %6594 = vadd.xlane.f32.xlu0 %v5669
          %v6595 = vpop.xlane.xlu0 %6594
          %6596 = vadd.xlane.f32.xlu0 %v5670
          %v6597 = vpop.xlane.xlu0 %6596
          %6598 = vadd.xlane.f32.xlu0 %v5671
          %v6599 = vpop.xlane.xlu0 %6598
          %6600 = vadd.xlane.f32.xlu0 %v5672
          %v6601 = vpop.xlane.xlu0 %6600
          %6602 = vadd.xlane.f32.xlu0 %v5673
          %v6603 = vpop.xlane.xlu0 %6602
          %6604 = vadd.xlane.f32.xlu0 %v5674
          %v6605 = vpop.xlane.xlu0 %6604
          %6606 = vadd.xlane.f32.xlu0 %v5675
          %v6607 = vpop.xlane.xlu0 %6606
          %6608 = vadd.xlane.f32.xlu0 %v5676
          %v6609 = vpop.xlane.xlu0 %6608
          %6610 = vadd.xlane.f32.xlu0 %v5677
          %v6611 = vpop.xlane.xlu0 %6610
          %6612 = vadd.xlane.f32.xlu0 %v5678
          %v6613 = vpop.xlane.xlu0 %6612
          %6614 = vadd.xlane.f32.xlu0 %v5679
          %v6615 = vpop.xlane.xlu0 %6614
          %6616 = vadd.xlane.f32.xlu0 %v5680
          %v6617 = vpop.xlane.xlu0 %6616
          %6618 = vadd.xlane.f32.xlu0 %v5681
          %v6619 = vpop.xlane.xlu0 %6618
          %6620 = vadd.xlane.f32.xlu0 %v5682
          %v6621 = vpop.xlane.xlu0 %6620
          %6622 = vadd.xlane.f32.xlu0 %v5683
          %v6623 = vpop.xlane.xlu0 %6622
          %6624 = vadd.xlane.f32.xlu0 %v5684
          %v6625 = vpop.xlane.xlu0 %6624
          %6626 = vadd.xlane.f32.xlu0 %v5685
          %v6627 = vpop.xlane.xlu0 %6626
          %6628 = vadd.xlane.f32.xlu0 %v5686
          %v6629 = vpop.xlane.xlu0 %6628
          %6630 = vadd.xlane.f32.xlu0 %v5687
          %v6631 = vpop.xlane.xlu0 %6630
          %6632 = vadd.xlane.f32.xlu0 %v5688
          %v6633 = vpop.xlane.xlu0 %6632
          %6634 = vadd.xlane.f32.xlu0 %v5689
          %v6635 = vpop.xlane.xlu0 %6634
          %6636 = vadd.xlane.f32.xlu0 %v5690
          %v6637 = vpop.xlane.xlu0 %6636
          %6638 = vadd.xlane.f32.xlu0 %v5691
          %v6639 = vpop.xlane.xlu0 %6638
          %6640 = vadd.xlane.f32.xlu0 %v5692
          %v6641 = vpop.xlane.xlu0 %6640
          %6642 = vadd.xlane.f32.xlu0 %v5693
          %v6643 = vpop.xlane.xlu0 %6642
          %6644 = vadd.xlane.f32.xlu0 %v5694
          %v6645 = vpop.xlane.xlu0 %6644
          %6646 = vadd.xlane.f32.xlu0 %v5695
          %v6647 = vpop.xlane.xlu0 %6646
          %6648 = vadd.xlane.f32.xlu0 %v5696
          %v6649 = vpop.xlane.xlu0 %6648
          %6650 = vadd.xlane.f32.xlu0 %v5697
          %v6651 = vpop.xlane.xlu0 %6650
          %6652 = vadd.xlane.f32.xlu0 %v5698
          %v6653 = vpop.xlane.xlu0 %6652
          %6654 = vadd.xlane.f32.xlu0 %v5699
          %v6655 = vpop.xlane.xlu0 %6654
          %6656 = vadd.xlane.f32.xlu0 %v5700
          %v6657 = vpop.xlane.xlu0 %6656
          %6658 = vadd.xlane.f32.xlu0 %v5701
          %v6659 = vpop.xlane.xlu0 %6658
          %6660 = vadd.xlane.f32.xlu0 %v5702
          %v6661 = vpop.xlane.xlu0 %6660
          %6662 = vadd.xlane.f32.xlu0 %v5703
          %v6663 = vpop.xlane.xlu0 %6662
          %6664 = vadd.xlane.f32.xlu0 %v5704
          %v6665 = vpop.xlane.xlu0 %6664
          %6666 = vadd.xlane.f32.xlu0 %v5705
          %v6667 = vpop.xlane.xlu0 %6666
          %6668 = vadd.xlane.f32.xlu0 %v5706
          %v6669 = vpop.xlane.xlu0 %6668
          %6670 = vadd.xlane.f32.xlu0 %v5707
          %v6671 = vpop.xlane.xlu0 %6670
          %6672 = vadd.xlane.f32.xlu0 %v5708
          %v6673 = vpop.xlane.xlu0 %6672
          %6674 = vadd.xlane.f32.xlu0 %v5709
          %v6675 = vpop.xlane.xlu0 %6674
          %6676 = vadd.xlane.f32.xlu0 %v5710
          %v6677 = vpop.xlane.xlu0 %6676
          %6678 = vadd.xlane.f32.xlu0 %v5711
          %v6679 = vpop.xlane.xlu0 %6678
          %6680 = vadd.xlane.f32.xlu0 %v5712
          %v6681 = vpop.xlane.xlu0 %6680
          %6682 = vadd.xlane.f32.xlu0 %v5713
          %v6683 = vpop.xlane.xlu0 %6682
          %6684 = vadd.xlane.f32.xlu0 %v5714
          %v6685 = vpop.xlane.xlu0 %6684
          %6686 = vadd.xlane.f32.xlu0 %v5715
          %v6687 = vpop.xlane.xlu0 %6686
          %6688 = vadd.xlane.f32.xlu0 %v5716
          %v6689 = vpop.xlane.xlu0 %6688
          %6690 = vadd.xlane.f32.xlu0 %v5717
          %v6691 = vpop.xlane.xlu0 %6690
          %6692 = vadd.xlane.f32.xlu0 %v5718
          %v6693 = vpop.xlane.xlu0 %6692
          %6694 = vadd.xlane.f32.xlu0 %v5719
          %v6695 = vpop.xlane.xlu0 %6694
          %6696 = vadd.xlane.f32.xlu0 %v5720
          %v6697 = vpop.xlane.xlu0 %6696
          %6698 = vadd.xlane.f32.xlu0 %v5721
          %v6699 = vpop.xlane.xlu0 %6698
          %6700 = vadd.xlane.f32.xlu0 %v5722
          %v6701 = vpop.xlane.xlu0 %6700
          %6702 = vadd.xlane.f32.xlu0 %v5723
          %v6703 = vpop.xlane.xlu0 %6702
          %6704 = vadd.xlane.f32.xlu0 %v5724
          %v6705 = vpop.xlane.xlu0 %6704
          %6706 = vadd.xlane.f32.xlu0 %v5725
          %v6707 = vpop.xlane.xlu0 %6706
          %6708 = vadd.xlane.f32.xlu0 %v5726
          %v6709 = vpop.xlane.xlu0 %6708
          %6710 = vadd.xlane.f32.xlu0 %v5727
          %v6711 = vpop.xlane.xlu0 %6710
          %6712 = vadd.xlane.f32.xlu0 %v5728
          %v6713 = vpop.xlane.xlu0 %6712
          %6714 = vadd.xlane.f32.xlu0 %v5729
          %v6715 = vpop.xlane.xlu0 %6714
          %6716 = vadd.xlane.f32.xlu0 %v5730
          %v6717 = vpop.xlane.xlu0 %6716
          %6718 = vadd.xlane.f32.xlu0 %v5731
          %v6719 = vpop.xlane.xlu0 %6718
          %6720 = vadd.xlane.f32.xlu0 %v5732
          %v6721 = vpop.xlane.xlu0 %6720
          %6722 = vadd.xlane.f32.xlu0 %v5733
          %v6723 = vpop.xlane.xlu0 %6722
          %6724 = vadd.xlane.f32.xlu0 %v5734
          %v6725 = vpop.xlane.xlu0 %6724
          %6726 = vadd.xlane.f32.xlu0 %v5735
          %v6727 = vpop.xlane.xlu0 %6726
          %6728 = vadd.xlane.f32.xlu0 %v5736
          %v6729 = vpop.xlane.xlu0 %6728
          %6730 = vadd.xlane.f32.xlu0 %v5737
          %v6731 = vpop.xlane.xlu0 %6730
          %6732 = vadd.xlane.f32.xlu0 %v5738
          %v6733 = vpop.xlane.xlu0 %6732
          %6734 = vadd.xlane.f32.xlu0 %v5739
          %v6735 = vpop.xlane.xlu0 %6734
          %6736 = vadd.xlane.f32.xlu0 %v5740
          %v6737 = vpop.xlane.xlu0 %6736
          %6738 = vadd.xlane.f32.xlu0 %v5741
          %v6739 = vpop.xlane.xlu0 %6738
          %6740 = vadd.xlane.f32.xlu0 %v5742
          %v6741 = vpop.xlane.xlu0 %6740
          %6742 = vadd.xlane.f32.xlu0 %v5743
          %v6743 = vpop.xlane.xlu0 %6742
          %6744 = vadd.xlane.f32.xlu0 %v5744
          %v6745 = vpop.xlane.xlu0 %6744
          %6746 = vadd.xlane.f32.xlu0 %v5745
          %v6747 = vpop.xlane.xlu0 %6746
          %6748 = vadd.xlane.f32.xlu0 %v5746
          %v6749 = vpop.xlane.xlu0 %6748
          %6750 = vadd.xlane.f32.xlu0 %v5747
          %v6751 = vpop.xlane.xlu0 %6750
          %6752 = vadd.xlane.f32.xlu0 %v5748
          %v6753 = vpop.xlane.xlu0 %6752
          %6754 = vadd.xlane.f32.xlu0 %v5749
          %v6755 = vpop.xlane.xlu0 %6754
          %6756 = vadd.xlane.f32.xlu0 %v5750
          %v6757 = vpop.xlane.xlu0 %6756
          %6758 = vadd.xlane.f32.xlu0 %v5751
          %v6759 = vpop.xlane.xlu0 %6758
          %6760 = vadd.xlane.f32.xlu0 %v5752
          %v6761 = vpop.xlane.xlu0 %6760
          %6762 = vadd.xlane.f32.xlu0 %v5753
          %v6763 = vpop.xlane.xlu0 %6762
          %6764 = vadd.xlane.f32.xlu0 %v5754
          %v6765 = vpop.xlane.xlu0 %6764
          %6766 = vadd.xlane.f32.xlu0 %v5755
          %v6767 = vpop.xlane.xlu0 %6766
          %6768 = vadd.xlane.f32.xlu0 %v5756
          %v6769 = vpop.xlane.xlu0 %6768
          %6770 = vadd.xlane.f32.xlu0 %v5757
          %v6771 = vpop.xlane.xlu0 %6770
          %6772 = vadd.xlane.f32.xlu0 %v5758
          %v6773 = vpop.xlane.xlu0 %6772
          %6774 = vadd.xlane.f32.xlu0 %v5759
          %v6775 = vpop.xlane.xlu0 %6774
          %6776 = vadd.xlane.f32.xlu0 %v5760
          %v6777 = vpop.xlane.xlu0 %6776
          %6778 = vadd.xlane.f32.xlu0 %v5761
          %v6779 = vpop.xlane.xlu0 %6778
          %6780 = vadd.xlane.f32.xlu0 %v5762
          %v6781 = vpop.xlane.xlu0 %6780
          %6782 = vadd.xlane.f32.xlu0 %v5763
          %v6783 = vpop.xlane.xlu0 %6782
          %6784 = vadd.xlane.f32.xlu0 %v5764
          %v6785 = vpop.xlane.xlu0 %6784
          %6786 = vadd.xlane.f32.xlu0 %v5765
          %v6787 = vpop.xlane.xlu0 %6786
          %6788 = vadd.xlane.f32.xlu0 %v5766
          %v6789 = vpop.xlane.xlu0 %6788
          %6790 = vadd.xlane.f32.xlu0 %v5767
          %v6791 = vpop.xlane.xlu0 %6790
          %v6792 = vld [vmem:[%s632] sm:$0xff]
          %v6793 = vld [vmem:[%s632 + $0x8] sm:$0xff]
          %v6794 = vld [vmem:[%s632 + $0x10] sm:$0xff]
          %v6795 = vld [vmem:[%s632 + $0x18] sm:$0xff]
          %vm6796 = vcmp.gt.f32.partialorder %v6792, 0.0
          %vm6797 = vcmp.gt.f32.partialorder %v6793, 0.0
          %vm6798 = vcmp.gt.f32.partialorder %v6794, 0.0
          %vm6799 = vcmp.gt.f32.partialorder %v6795, 0.0
          %v7312 = vlaneseq
          %v7313 = vand.u32 %v7312, 127
          %v7314 = vlaneseq
          %v7315 = vshrl.u32 %v7314, 7
          %v7316 = vsub.s32 %v7313, %v7315
          %v7317 = vrot.slane %v5769, %v7316
          %v7318 = vadd.s32 %v7313, 4294967288
          %v7319 = vlaneseq
          %v7320 = vshrl.u32 %v7319, 7
          %v7321 = vsub.s32 %v7318, %v7320
          %v7322 = vrot.slane %v5771, %v7321
          %vm7323 = vcmask 130112
          %v7324 = vsel %vm7323, %v7322, %v7317
          %v7325 = vadd.s32 %v7313, 4294967280
          %v7326 = vlaneseq
          %v7327 = vshrl.u32 %v7326, 7
          %v7328 = vsub.s32 %v7325, %v7327
          %v7329 = vrot.slane %v5773, %v7328
          %vm7330 = vcmask 195712
          %v7331 = vsel %vm7330, %v7329, %v7324
          %v7332 = vadd.s32 %v7313, 4294967272
          %v7333 = vlaneseq
          %v7334 = vshrl.u32 %v7333, 7
          %v7335 = vsub.s32 %v7332, %v7334
          %v7336 = vrot.slane %v5775, %v7335
          %vm7337 = vcmask 261312
          %v7338 = vsel %vm7337, %v7336, %v7331
          %v7339 = vadd.s32 %v7313, 4294967264
          %v7340 = vlaneseq
          %v7341 = vshrl.u32 %v7340, 7
          %v7342 = vsub.s32 %v7339, %v7341
          %v7343 = vrot.slane %v5777, %v7342
          %vm7344 = vcmask 326912
          %v7345 = vsel %vm7344, %v7343, %v7338
          %v7346 = vadd.s32 %v7313, 4294967256
          %v7347 = vlaneseq
          %v7348 = vshrl.u32 %v7347, 7
          %v7349 = vsub.s32 %v7346, %v7348
          %v7350 = vrot.slane %v5779, %v7349
          %vm7351 = vcmask 392512
          %v7352 = vsel %vm7351, %v7350, %v7345
          %v7353 = vadd.s32 %v7313, 4294967248
          %v7354 = vlaneseq
          %v7355 = vshrl.u32 %v7354, 7
          %v7356 = vsub.s32 %v7353, %v7355
          %v7357 = vrot.slane %v5781, %v7356
          %vm7358 = vcmask 458112
          %v7359 = vsel %vm7358, %v7357, %v7352
          %v7360 = vadd.s32 %v7313, 4294967240
          %v7361 = vlaneseq
          %v7362 = vshrl.u32 %v7361, 7
          %v7363 = vsub.s32 %v7360, %v7362
          %v7364 = vrot.slane %v5783, %v7363
          %vm7365 = vcmask 523712
          %v7366 = vsel %vm7365, %v7364, %v7359
          %v7367 = vadd.s32 %v7313, 4294967232
          %v7368 = vlaneseq
          %v7369 = vshrl.u32 %v7368, 7
          %v7370 = vsub.s32 %v7367, %v7369
          %v7371 = vrot.slane %v5785, %v7370
          %vm7372 = vcmask 589312
          %v7373 = vsel %vm7372, %v7371, %v7366
          %v7374 = vadd.s32 %v7313, 4294967224
          %v7375 = vlaneseq
          %v7376 = vshrl.u32 %v7375, 7
          %v7377 = vsub.s32 %v7374, %v7376
          %v7378 = vrot.slane %v5787, %v7377
          %vm7379 = vcmask 654912
          %v7380 = vsel %vm7379, %v7378, %v7373
          %v7381 = vadd.s32 %v7313, 4294967216
          %v7382 = vlaneseq
          %v7383 = vshrl.u32 %v7382, 7
          %v7384 = vsub.s32 %v7381, %v7383
          %v7385 = vrot.slane %v5789, %v7384
          %vm7386 = vcmask 720512
          %v7387 = vsel %vm7386, %v7385, %v7380
          %v7388 = vadd.s32 %v7313, 4294967208
          %v7389 = vlaneseq
          %v7390 = vshrl.u32 %v7389, 7
          %v7391 = vsub.s32 %v7388, %v7390
          %v7392 = vrot.slane %v5791, %v7391
          %vm7393 = vcmask 786112
          %v7394 = vsel %vm7393, %v7392, %v7387
          %v7395 = vadd.s32 %v7313, 4294967200
          %v7396 = vlaneseq
          %v7397 = vshrl.u32 %v7396, 7
          %v7398 = vsub.s32 %v7395, %v7397
          %v7399 = vrot.slane %v5793, %v7398
          %vm7400 = vcmask 851712
          %v7401 = vsel %vm7400, %v7399, %v7394
          %v7402 = vadd.s32 %v7313, 4294967192
          %v7403 = vlaneseq
          %v7404 = vshrl.u32 %v7403, 7
          %v7405 = vsub.s32 %v7402, %v7404
          %v7406 = vrot.slane %v5795, %v7405
          %vm7407 = vcmask 917312
          %v7408 = vsel %vm7407, %v7406, %v7401
          %v7409 = vadd.s32 %v7313, 4294967184
          %v7410 = vlaneseq
          %v7411 = vshrl.u32 %v7410, 7
          %v7412 = vsub.s32 %v7409, %v7411
          %v7413 = vrot.slane %v5797, %v7412
          %vm7414 = vcmask 982912
          %v7415 = vsel %vm7414, %v7413, %v7408
          %v7416 = vadd.s32 %v7313, 4294967176
          %v7417 = vlaneseq
          %v7418 = vshrl.u32 %v7417, 7
          %v7419 = vsub.s32 %v7416, %v7418
          %v7420 = vrot.slane %v5799, %v7419
          %vm7421 = vcmask 1048512
          %v7422 = vsel %vm7421, %v7420, %v7415
          %v7423 = vlaneseq
          %v7424 = vshrl.u32 %v7423, 7
          %v7425 = vsub.s32 %v7313, %v7424
          %v7426 = vrot.slane %v5801, %v7425
          %v7427 = vlaneseq
          %v7428 = vshrl.u32 %v7427, 7
          %v7429 = vsub.s32 %v7318, %v7428
          %v7430 = vrot.slane %v5803, %v7429
          %v7431 = vsel %vm7323, %v7430, %v7426
          %v7432 = vlaneseq
          %v7433 = vshrl.u32 %v7432, 7
          %v7434 = vsub.s32 %v7325, %v7433
          %v7435 = vrot.slane %v5805, %v7434
          %v7436 = vsel %vm7330, %v7435, %v7431
          %v7437 = vlaneseq
          %v7438 = vshrl.u32 %v7437, 7
          %v7439 = vsub.s32 %v7332, %v7438
          %v7440 = vrot.slane %v5807, %v7439
          %v7441 = vsel %vm7337, %v7440, %v7436
          %v7442 = vlaneseq
          %v7443 = vshrl.u32 %v7442, 7
          %v7444 = vsub.s32 %v7339, %v7443
          %v7445 = vrot.slane %v5809, %v7444
          %v7446 = vsel %vm7344, %v7445, %v7441
          %v7447 = vlaneseq
          %v7448 = vshrl.u32 %v7447, 7
          %v7449 = vsub.s32 %v7346, %v7448
          %v7450 = vrot.slane %v5811, %v7449
          %v7451 = vsel %vm7351, %v7450, %v7446
          %v7452 = vlaneseq
          %v7453 = vshrl.u32 %v7452, 7
          %v7454 = vsub.s32 %v7353, %v7453
          %v7455 = vrot.slane %v5813, %v7454
          %v7456 = vsel %vm7358, %v7455, %v7451
          %v7457 = vlaneseq
          %v7458 = vshrl.u32 %v7457, 7
          %v7459 = vsub.s32 %v7360, %v7458
          %v7460 = vrot.slane %v5815, %v7459
          %v7461 = vsel %vm7365, %v7460, %v7456
          %v7462 = vlaneseq
          %v7463 = vshrl.u32 %v7462, 7
          %v7464 = vsub.s32 %v7367, %v7463
          %v7465 = vrot.slane %v5817, %v7464
          %v7466 = vsel %vm7372, %v7465, %v7461
          %v7467 = vlaneseq
          %v7468 = vshrl.u32 %v7467, 7
          %v7469 = vsub.s32 %v7374, %v7468
          %v7470 = vrot.slane %v5819, %v7469
          %v7471 = vsel %vm7379, %v7470, %v7466
          %v7472 = vlaneseq
          %v7473 = vshrl.u32 %v7472, 7
          %v7474 = vsub.s32 %v7381, %v7473
          %v7475 = vrot.slane %v5821, %v7474
          %v7476 = vsel %vm7386, %v7475, %v7471
          %v7477 = vlaneseq
          %v7478 = vshrl.u32 %v7477, 7
          %v7479 = vsub.s32 %v7388, %v7478
          %v7480 = vrot.slane %v5823, %v7479
          %v7481 = vsel %vm7393, %v7480, %v7476
          %v7482 = vlaneseq
          %v7483 = vshrl.u32 %v7482, 7
          %v7484 = vsub.s32 %v7395, %v7483
          %v7485 = vrot.slane %v5825, %v7484
          %v7486 = vsel %vm7400, %v7485, %v7481
          %v7487 = vlaneseq
          %v7488 = vshrl.u32 %v7487, 7
          %v7489 = vsub.s32 %v7402, %v7488
          %v7490 = vrot.slane %v5827, %v7489
          %v7491 = vsel %vm7407, %v7490, %v7486
          %v7492 = vlaneseq
          %v7493 = vshrl.u32 %v7492, 7
          %v7494 = vsub.s32 %v7409, %v7493
          %v7495 = vrot.slane %v5829, %v7494
          %v7496 = vsel %vm7414, %v7495, %v7491
          %v7497 = vlaneseq
          %v7498 = vshrl.u32 %v7497, 7
          %v7499 = vsub.s32 %v7416, %v7498
          %v7500 = vrot.slane %v5831, %v7499
          %v7501 = vsel %vm7421, %v7500, %v7496
          %v7502 = vlaneseq
          %v7503 = vshrl.u32 %v7502, 7
          %v7504 = vsub.s32 %v7313, %v7503
          %v7505 = vrot.slane %v5833, %v7504
          %v7506 = vlaneseq
          %v7507 = vshrl.u32 %v7506, 7
          %v7508 = vsub.s32 %v7318, %v7507
          %v7509 = vrot.slane %v5835, %v7508
          %v7510 = vsel %vm7323, %v7509, %v7505
          %v7511 = vlaneseq
          %v7512 = vshrl.u32 %v7511, 7
          %v7513 = vsub.s32 %v7325, %v7512
          %v7514 = vrot.slane %v5837, %v7513
          %v7515 = vsel %vm7330, %v7514, %v7510
          %v7516 = vlaneseq
          %v7517 = vshrl.u32 %v7516, 7
          %v7518 = vsub.s32 %v7332, %v7517
          %v7519 = vrot.slane %v5839, %v7518
          %v7520 = vsel %vm7337, %v7519, %v7515
          %v7521 = vlaneseq
          %v7522 = vshrl.u32 %v7521, 7
          %v7523 = vsub.s32 %v7339, %v7522
          %v7524 = vrot.slane %v5841, %v7523
          %v7525 = vsel %vm7344, %v7524, %v7520
          %v7526 = vlaneseq
          %v7527 = vshrl.u32 %v7526, 7
          %v7528 = vsub.s32 %v7346, %v7527
          %v7529 = vrot.slane %v5843, %v7528
          %v7530 = vsel %vm7351, %v7529, %v7525
          %v7531 = vlaneseq
          %v7532 = vshrl.u32 %v7531, 7
          %v7533 = vsub.s32 %v7353, %v7532
          %v7534 = vrot.slane %v5845, %v7533
          %v7535 = vsel %vm7358, %v7534, %v7530
          %v7536 = vlaneseq
          %v7537 = vshrl.u32 %v7536, 7
          %v7538 = vsub.s32 %v7360, %v7537
          %v7539 = vrot.slane %v5847, %v7538
          %v7540 = vsel %vm7365, %v7539, %v7535
          %v7541 = vlaneseq
          %v7542 = vshrl.u32 %v7541, 7
          %v7543 = vsub.s32 %v7367, %v7542
          %v7544 = vrot.slane %v5849, %v7543
          %v7545 = vsel %vm7372, %v7544, %v7540
          %v7546 = vlaneseq
          %v7547 = vshrl.u32 %v7546, 7
          %v7548 = vsub.s32 %v7374, %v7547
          %v7549 = vrot.slane %v5851, %v7548
          %v7550 = vsel %vm7379, %v7549, %v7545
          %v7551 = vlaneseq
          %v7552 = vshrl.u32 %v7551, 7
          %v7553 = vsub.s32 %v7381, %v7552
          %v7554 = vrot.slane %v5853, %v7553
          %v7555 = vsel %vm7386, %v7554, %v7550
          %v7556 = vlaneseq
          %v7557 = vshrl.u32 %v7556, 7
          %v7558 = vsub.s32 %v7388, %v7557
          %v7559 = vrot.slane %v5855, %v7558
          %v7560 = vsel %vm7393, %v7559, %v7555
          %v7561 = vlaneseq
          %v7562 = vshrl.u32 %v7561, 7
          %v7563 = vsub.s32 %v7395, %v7562
          %v7564 = vrot.slane %v5857, %v7563
          %v7565 = vsel %vm7400, %v7564, %v7560
          %v7566 = vlaneseq
          %v7567 = vshrl.u32 %v7566, 7
          %v7568 = vsub.s32 %v7402, %v7567
          %v7569 = vrot.slane %v5859, %v7568
          %v7570 = vsel %vm7407, %v7569, %v7565
          %v7571 = vlaneseq
          %v7572 = vshrl.u32 %v7571, 7
          %v7573 = vsub.s32 %v7409, %v7572
          %v7574 = vrot.slane %v5861, %v7573
          %v7575 = vsel %vm7414, %v7574, %v7570
          %v7576 = vlaneseq
          %v7577 = vshrl.u32 %v7576, 7
          %v7578 = vsub.s32 %v7416, %v7577
          %v7579 = vrot.slane %v5863, %v7578
          %v7580 = vsel %vm7421, %v7579, %v7575
          %v7581 = vlaneseq
          %v7582 = vshrl.u32 %v7581, 7
          %v7583 = vsub.s32 %v7313, %v7582
          %v7584 = vrot.slane %v5865, %v7583
          %v7585 = vlaneseq
          %v7586 = vshrl.u32 %v7585, 7
          %v7587 = vsub.s32 %v7318, %v7586
          %v7588 = vrot.slane %v5867, %v7587
          %v7589 = vsel %vm7323, %v7588, %v7584
          %v7590 = vlaneseq
          %v7591 = vshrl.u32 %v7590, 7
          %v7592 = vsub.s32 %v7325, %v7591
          %v7593 = vrot.slane %v5869, %v7592
          %v7594 = vsel %vm7330, %v7593, %v7589
          %v7595 = vlaneseq
          %v7596 = vshrl.u32 %v7595, 7
          %v7597 = vsub.s32 %v7332, %v7596
          %v7598 = vrot.slane %v5871, %v7597
          %v7599 = vsel %vm7337, %v7598, %v7594
          %v7600 = vlaneseq
          %v7601 = vshrl.u32 %v7600, 7
          %v7602 = vsub.s32 %v7339, %v7601
          %v7603 = vrot.slane %v5873, %v7602
          %v7604 = vsel %vm7344, %v7603, %v7599
          %v7605 = vlaneseq
          %v7606 = vshrl.u32 %v7605, 7
          %v7607 = vsub.s32 %v7346, %v7606
          %v7608 = vrot.slane %v5875, %v7607
          %v7609 = vsel %vm7351, %v7608, %v7604
          %v7610 = vlaneseq
          %v7611 = vshrl.u32 %v7610, 7
          %v7612 = vsub.s32 %v7353, %v7611
          %v7613 = vrot.slane %v5877, %v7612
          %v7614 = vsel %vm7358, %v7613, %v7609
          %v7615 = vlaneseq
          %v7616 = vshrl.u32 %v7615, 7
          %v7617 = vsub.s32 %v7360, %v7616
          %v7618 = vrot.slane %v5879, %v7617
          %v7619 = vsel %vm7365, %v7618, %v7614
          %v7620 = vlaneseq
          %v7621 = vshrl.u32 %v7620, 7
          %v7622 = vsub.s32 %v7367, %v7621
          %v7623 = vrot.slane %v5881, %v7622
          %v7624 = vsel %vm7372, %v7623, %v7619
          %v7625 = vlaneseq
          %v7626 = vshrl.u32 %v7625, 7
          %v7627 = vsub.s32 %v7374, %v7626
          %v7628 = vrot.slane %v5883, %v7627
          %v7629 = vsel %vm7379, %v7628, %v7624
          %v7630 = vlaneseq
          %v7631 = vshrl.u32 %v7630, 7
          %v7632 = vsub.s32 %v7381, %v7631
          %v7633 = vrot.slane %v5885, %v7632
          %v7634 = vsel %vm7386, %v7633, %v7629
          %v7635 = vlaneseq
          %v7636 = vshrl.u32 %v7635, 7
          %v7637 = vsub.s32 %v7388, %v7636
          %v7638 = vrot.slane %v5887, %v7637
          %v7639 = vsel %vm7393, %v7638, %v7634
          %v7640 = vlaneseq
          %v7641 = vshrl.u32 %v7640, 7
          %v7642 = vsub.s32 %v7395, %v7641
          %v7643 = vrot.slane %v5889, %v7642
          %v7644 = vsel %vm7400, %v7643, %v7639
          %v7645 = vlaneseq
          %v7646 = vshrl.u32 %v7645, 7
          %v7647 = vsub.s32 %v7402, %v7646
          %v7648 = vrot.slane %v5891, %v7647
          %v7649 = vsel %vm7407, %v7648, %v7644
          %v7650 = vlaneseq
          %v7651 = vshrl.u32 %v7650, 7
          %v7652 = vsub.s32 %v7409, %v7651
          %v7653 = vrot.slane %v5893, %v7652
          %v7654 = vsel %vm7414, %v7653, %v7649
          %v7655 = vlaneseq
          %v7656 = vshrl.u32 %v7655, 7
          %v7657 = vsub.s32 %v7416, %v7656
          %v7658 = vrot.slane %v5895, %v7657
          %v7659 = vsel %vm7421, %v7658, %v7654
          %v7660 = vlaneseq
          %v7661 = vshrl.u32 %v7660, 7
          %v7662 = vsub.s32 %v7313, %v7661
          %v7663 = vrot.slane %v5897, %v7662
          %v7664 = vlaneseq
          %v7665 = vshrl.u32 %v7664, 7
          %v7666 = vsub.s32 %v7318, %v7665
          %v7667 = vrot.slane %v5899, %v7666
          %v7668 = vsel %vm7323, %v7667, %v7663
          %v7669 = vlaneseq
          %v7670 = vshrl.u32 %v7669, 7
          %v7671 = vsub.s32 %v7325, %v7670
          %v7672 = vrot.slane %v5901, %v7671
          %v7673 = vsel %vm7330, %v7672, %v7668
          %v7674 = vlaneseq
          %v7675 = vshrl.u32 %v7674, 7
          %v7676 = vsub.s32 %v7332, %v7675
          %v7677 = vrot.slane %v5903, %v7676
          %v7678 = vsel %vm7337, %v7677, %v7673
          %v7679 = vlaneseq
          %v7680 = vshrl.u32 %v7679, 7
          %v7681 = vsub.s32 %v7339, %v7680
          %v7682 = vrot.slane %v5905, %v7681
          %v7683 = vsel %vm7344, %v7682, %v7678
          %v7684 = vlaneseq
          %v7685 = vshrl.u32 %v7684, 7
          %v7686 = vsub.s32 %v7346, %v7685
          %v7687 = vrot.slane %v5907, %v7686
          %v7688 = vsel %vm7351, %v7687, %v7683
          %v7689 = vlaneseq
          %v7690 = vshrl.u32 %v7689, 7
          %v7691 = vsub.s32 %v7353, %v7690
          %v7692 = vrot.slane %v5909, %v7691
          %v7693 = vsel %vm7358, %v7692, %v7688
          %v7694 = vlaneseq
          %v7695 = vshrl.u32 %v7694, 7
          %v7696 = vsub.s32 %v7360, %v7695
          %v7697 = vrot.slane %v5911, %v7696
          %v7698 = vsel %vm7365, %v7697, %v7693
          %v7699 = vlaneseq
          %v7700 = vshrl.u32 %v7699, 7
          %v7701 = vsub.s32 %v7367, %v7700
          %v7702 = vrot.slane %v5913, %v7701
          %v7703 = vsel %vm7372, %v7702, %v7698
          %v7704 = vlaneseq
          %v7705 = vshrl.u32 %v7704, 7
          %v7706 = vsub.s32 %v7374, %v7705
          %v7707 = vrot.slane %v5915, %v7706
          %v7708 = vsel %vm7379, %v7707, %v7703
          %v7709 = vlaneseq
          %v7710 = vshrl.u32 %v7709, 7
          %v7711 = vsub.s32 %v7381, %v7710
          %v7712 = vrot.slane %v5917, %v7711
          %v7713 = vsel %vm7386, %v7712, %v7708
          %v7714 = vlaneseq
          %v7715 = vshrl.u32 %v7714, 7
          %v7716 = vsub.s32 %v7388, %v7715
          %v7717 = vrot.slane %v5919, %v7716
          %v7718 = vsel %vm7393, %v7717, %v7713
          %v7719 = vlaneseq
          %v7720 = vshrl.u32 %v7719, 7
          %v7721 = vsub.s32 %v7395, %v7720
          %v7722 = vrot.slane %v5921, %v7721
          %v7723 = vsel %vm7400, %v7722, %v7718
          %v7724 = vlaneseq
          %v7725 = vshrl.u32 %v7724, 7
          %v7726 = vsub.s32 %v7402, %v7725
          %v7727 = vrot.slane %v5923, %v7726
          %v7728 = vsel %vm7407, %v7727, %v7723
          %v7729 = vlaneseq
          %v7730 = vshrl.u32 %v7729, 7
          %v7731 = vsub.s32 %v7409, %v7730
          %v7732 = vrot.slane %v5925, %v7731
          %v7733 = vsel %vm7414, %v7732, %v7728
          %v7734 = vlaneseq
          %v7735 = vshrl.u32 %v7734, 7
          %v7736 = vsub.s32 %v7416, %v7735
          %v7737 = vrot.slane %v5927, %v7736
          %v7738 = vsel %vm7421, %v7737, %v7733
          %v7739 = vlaneseq
          %v7740 = vshrl.u32 %v7739, 7
          %v7741 = vsub.s32 %v7313, %v7740
          %v7742 = vrot.slane %v5929, %v7741
          %v7743 = vlaneseq
          %v7744 = vshrl.u32 %v7743, 7
          %v7745 = vsub.s32 %v7318, %v7744
          %v7746 = vrot.slane %v5931, %v7745
          %v7747 = vsel %vm7323, %v7746, %v7742
          %v7748 = vlaneseq
          %v7749 = vshrl.u32 %v7748, 7
          %v7750 = vsub.s32 %v7325, %v7749
          %v7751 = vrot.slane %v5933, %v7750
          %v7752 = vsel %vm7330, %v7751, %v7747
          %v7753 = vlaneseq
          %v7754 = vshrl.u32 %v7753, 7
          %v7755 = vsub.s32 %v7332, %v7754
          %v7756 = vrot.slane %v5935, %v7755
          %v7757 = vsel %vm7337, %v7756, %v7752
          %v7758 = vlaneseq
          %v7759 = vshrl.u32 %v7758, 7
          %v7760 = vsub.s32 %v7339, %v7759
          %v7761 = vrot.slane %v5937, %v7760
          %v7762 = vsel %vm7344, %v7761, %v7757
          %v7763 = vlaneseq
          %v7764 = vshrl.u32 %v7763, 7
          %v7765 = vsub.s32 %v7346, %v7764
          %v7766 = vrot.slane %v5939, %v7765
          %v7767 = vsel %vm7351, %v7766, %v7762
          %v7768 = vlaneseq
          %v7769 = vshrl.u32 %v7768, 7
          %v7770 = vsub.s32 %v7353, %v7769
          %v7771 = vrot.slane %v5941, %v7770
          %v7772 = vsel %vm7358, %v7771, %v7767
          %v7773 = vlaneseq
          %v7774 = vshrl.u32 %v7773, 7
          %v7775 = vsub.s32 %v7360, %v7774
          %v7776 = vrot.slane %v5943, %v7775
          %v7777 = vsel %vm7365, %v7776, %v7772
          %v7778 = vlaneseq
          %v7779 = vshrl.u32 %v7778, 7
          %v7780 = vsub.s32 %v7367, %v7779
          %v7781 = vrot.slane %v5945, %v7780
          %v7782 = vsel %vm7372, %v7781, %v7777
          %v7783 = vlaneseq
          %v7784 = vshrl.u32 %v7783, 7
          %v7785 = vsub.s32 %v7374, %v7784
          %v7786 = vrot.slane %v5947, %v7785
          %v7787 = vsel %vm7379, %v7786, %v7782
          %v7788 = vlaneseq
          %v7789 = vshrl.u32 %v7788, 7
          %v7790 = vsub.s32 %v7381, %v7789
          %v7791 = vrot.slane %v5949, %v7790
          %v7792 = vsel %vm7386, %v7791, %v7787
          %v7793 = vlaneseq
          %v7794 = vshrl.u32 %v7793, 7
          %v7795 = vsub.s32 %v7388, %v7794
          %v7796 = vrot.slane %v5951, %v7795
          %v7797 = vsel %vm7393, %v7796, %v7792
          %v7798 = vlaneseq
          %v7799 = vshrl.u32 %v7798, 7
          %v7800 = vsub.s32 %v7395, %v7799
          %v7801 = vrot.slane %v5953, %v7800
          %v7802 = vsel %vm7400, %v7801, %v7797
          %v7803 = vlaneseq
          %v7804 = vshrl.u32 %v7803, 7
          %v7805 = vsub.s32 %v7402, %v7804
          %v7806 = vrot.slane %v5955, %v7805
          %v7807 = vsel %vm7407, %v7806, %v7802
          %v7808 = vlaneseq
          %v7809 = vshrl.u32 %v7808, 7
          %v7810 = vsub.s32 %v7409, %v7809
          %v7811 = vrot.slane %v5957, %v7810
          %v7812 = vsel %vm7414, %v7811, %v7807
          %v7813 = vlaneseq
          %v7814 = vshrl.u32 %v7813, 7
          %v7815 = vsub.s32 %v7416, %v7814
          %v7816 = vrot.slane %v5959, %v7815
          %v7817 = vsel %vm7421, %v7816, %v7812
          %v7818 = vlaneseq
          %v7819 = vshrl.u32 %v7818, 7
          %v7820 = vsub.s32 %v7313, %v7819
          %v7821 = vrot.slane %v5961, %v7820
          %v7822 = vlaneseq
          %v7823 = vshrl.u32 %v7822, 7
          %v7824 = vsub.s32 %v7318, %v7823
          %v7825 = vrot.slane %v5963, %v7824
          %v7826 = vsel %vm7323, %v7825, %v7821
          %v7827 = vlaneseq
          %v7828 = vshrl.u32 %v7827, 7
          %v7829 = vsub.s32 %v7325, %v7828
          %v7830 = vrot.slane %v5965, %v7829
          %v7831 = vsel %vm7330, %v7830, %v7826
          %v7832 = vlaneseq
          %v7833 = vshrl.u32 %v7832, 7
          %v7834 = vsub.s32 %v7332, %v7833
          %v7835 = vrot.slane %v5967, %v7834
          %v7836 = vsel %vm7337, %v7835, %v7831
          %v7837 = vlaneseq
          %v7838 = vshrl.u32 %v7837, 7
          %v7839 = vsub.s32 %v7339, %v7838
          %v7840 = vrot.slane %v5969, %v7839
          %v7841 = vsel %vm7344, %v7840, %v7836
          %v7842 = vlaneseq
          %v7843 = vshrl.u32 %v7842, 7
          %v7844 = vsub.s32 %v7346, %v7843
          %v7845 = vrot.slane %v5971, %v7844
          %v7846 = vsel %vm7351, %v7845, %v7841
          %v7847 = vlaneseq
          %v7848 = vshrl.u32 %v7847, 7
          %v7849 = vsub.s32 %v7353, %v7848
          %v7850 = vrot.slane %v5973, %v7849
          %v7851 = vsel %vm7358, %v7850, %v7846
          %v7852 = vlaneseq
          %v7853 = vshrl.u32 %v7852, 7
          %v7854 = vsub.s32 %v7360, %v7853
          %v7855 = vrot.slane %v5975, %v7854
          %v7856 = vsel %vm7365, %v7855, %v7851
          %v7857 = vlaneseq
          %v7858 = vshrl.u32 %v7857, 7
          %v7859 = vsub.s32 %v7367, %v7858
          %v7860 = vrot.slane %v5977, %v7859
          %v7861 = vsel %vm7372, %v7860, %v7856
          %v7862 = vlaneseq
          %v7863 = vshrl.u32 %v7862, 7
          %v7864 = vsub.s32 %v7374, %v7863
          %v7865 = vrot.slane %v5979, %v7864
          %v7866 = vsel %vm7379, %v7865, %v7861
          %v7867 = vlaneseq
          %v7868 = vshrl.u32 %v7867, 7
          %v7869 = vsub.s32 %v7381, %v7868
          %v7870 = vrot.slane %v5981, %v7869
          %v7871 = vsel %vm7386, %v7870, %v7866
          %v7872 = vlaneseq
          %v7873 = vshrl.u32 %v7872, 7
          %v7874 = vsub.s32 %v7388, %v7873
          %v7875 = vrot.slane %v5983, %v7874
          %v7876 = vsel %vm7393, %v7875, %v7871
          %v7877 = vlaneseq
          %v7878 = vshrl.u32 %v7877, 7
          %v7879 = vsub.s32 %v7395, %v7878
          %v7880 = vrot.slane %v5985, %v7879
          %v7881 = vsel %vm7400, %v7880, %v7876
          %v7882 = vlaneseq
          %v7883 = vshrl.u32 %v7882, 7
          %v7884 = vsub.s32 %v7402, %v7883
          %v7885 = vrot.slane %v5987, %v7884
          %v7886 = vsel %vm7407, %v7885, %v7881
          %v7887 = vlaneseq
          %v7888 = vshrl.u32 %v7887, 7
          %v7889 = vsub.s32 %v7409, %v7888
          %v7890 = vrot.slane %v5989, %v7889
          %v7891 = vsel %vm7414, %v7890, %v7886
          %v7892 = vlaneseq
          %v7893 = vshrl.u32 %v7892, 7
          %v7894 = vsub.s32 %v7416, %v7893
          %v7895 = vrot.slane %v5991, %v7894
          %v7896 = vsel %vm7421, %v7895, %v7891
          %v7897 = vlaneseq
          %v7898 = vshrl.u32 %v7897, 7
          %v7899 = vsub.s32 %v7313, %v7898
          %v7900 = vrot.slane %v5993, %v7899
          %v7901 = vlaneseq
          %v7902 = vshrl.u32 %v7901, 7
          %v7903 = vsub.s32 %v7318, %v7902
          %v7904 = vrot.slane %v5995, %v7903
          %v7905 = vsel %vm7323, %v7904, %v7900
          %v7906 = vlaneseq
          %v7907 = vshrl.u32 %v7906, 7
          %v7908 = vsub.s32 %v7325, %v7907
          %v7909 = vrot.slane %v5997, %v7908
          %v7910 = vsel %vm7330, %v7909, %v7905
          %v7911 = vlaneseq
          %v7912 = vshrl.u32 %v7911, 7
          %v7913 = vsub.s32 %v7332, %v7912
          %v7914 = vrot.slane %v5999, %v7913
          %v7915 = vsel %vm7337, %v7914, %v7910
          %v7916 = vlaneseq
          %v7917 = vshrl.u32 %v7916, 7
          %v7918 = vsub.s32 %v7339, %v7917
          %v7919 = vrot.slane %v6001, %v7918
          %v7920 = vsel %vm7344, %v7919, %v7915
          %v7921 = vlaneseq
          %v7922 = vshrl.u32 %v7921, 7
          %v7923 = vsub.s32 %v7346, %v7922
          %v7924 = vrot.slane %v6003, %v7923
          %v7925 = vsel %vm7351, %v7924, %v7920
          %v7926 = vlaneseq
          %v7927 = vshrl.u32 %v7926, 7
          %v7928 = vsub.s32 %v7353, %v7927
          %v7929 = vrot.slane %v6005, %v7928
          %v7930 = vsel %vm7358, %v7929, %v7925
          %v7931 = vlaneseq
          %v7932 = vshrl.u32 %v7931, 7
          %v7933 = vsub.s32 %v7360, %v7932
          %v7934 = vrot.slane %v6007, %v7933
          %v7935 = vsel %vm7365, %v7934, %v7930
          %v7936 = vlaneseq
          %v7937 = vshrl.u32 %v7936, 7
          %v7938 = vsub.s32 %v7367, %v7937
          %v7939 = vrot.slane %v6009, %v7938
          %v7940 = vsel %vm7372, %v7939, %v7935
          %v7941 = vlaneseq
          %v7942 = vshrl.u32 %v7941, 7
          %v7943 = vsub.s32 %v7374, %v7942
          %v7944 = vrot.slane %v6011, %v7943
          %v7945 = vsel %vm7379, %v7944, %v7940
          %v7946 = vlaneseq
          %v7947 = vshrl.u32 %v7946, 7
          %v7948 = vsub.s32 %v7381, %v7947
          %v7949 = vrot.slane %v6013, %v7948
          %v7950 = vsel %vm7386, %v7949, %v7945
          %v7951 = vlaneseq
          %v7952 = vshrl.u32 %v7951, 7
          %v7953 = vsub.s32 %v7388, %v7952
          %v7954 = vrot.slane %v6015, %v7953
          %v7955 = vsel %vm7393, %v7954, %v7950
          %v7956 = vlaneseq
          %v7957 = vshrl.u32 %v7956, 7
          %v7958 = vsub.s32 %v7395, %v7957
          %v7959 = vrot.slane %v6017, %v7958
          %v7960 = vsel %vm7400, %v7959, %v7955
          %v7961 = vlaneseq
          %v7962 = vshrl.u32 %v7961, 7
          %v7963 = vsub.s32 %v7402, %v7962
          %v7964 = vrot.slane %v6019, %v7963
          %v7965 = vsel %vm7407, %v7964, %v7960
          %v7966 = vlaneseq
          %v7967 = vshrl.u32 %v7966, 7
          %v7968 = vsub.s32 %v7409, %v7967
          %v7969 = vrot.slane %v6021, %v7968
          %v7970 = vsel %vm7414, %v7969, %v7965
          %v7971 = vlaneseq
          %v7972 = vshrl.u32 %v7971, 7
          %v7973 = vsub.s32 %v7416, %v7972
          %v7974 = vrot.slane %v6023, %v7973
          %v7975 = vsel %vm7421, %v7974, %v7970
          %v7976 = vlaneseq
          %v7977 = vshrl.u32 %v7976, 7
          %v7978 = vsub.s32 %v7313, %v7977
          %v7979 = vrot.slane %v6025, %v7978
          %v7980 = vlaneseq
          %v7981 = vshrl.u32 %v7980, 7
          %v7982 = vsub.s32 %v7318, %v7981
          %v7983 = vrot.slane %v6027, %v7982
          %v7984 = vsel %vm7323, %v7983, %v7979
          %v7985 = vlaneseq
          %v7986 = vshrl.u32 %v7985, 7
          %v7987 = vsub.s32 %v7325, %v7986
          %v7988 = vrot.slane %v6029, %v7987
          %v7989 = vsel %vm7330, %v7988, %v7984
          %v7990 = vlaneseq
          %v7991 = vshrl.u32 %v7990, 7
          %v7992 = vsub.s32 %v7332, %v7991
          %v7993 = vrot.slane %v6031, %v7992
          %v7994 = vsel %vm7337, %v7993, %v7989
          %v7995 = vlaneseq
          %v7996 = vshrl.u32 %v7995, 7
          %v7997 = vsub.s32 %v7339, %v7996
          %v7998 = vrot.slane %v6033, %v7997
          %v7999 = vsel %vm7344, %v7998, %v7994
          %v8000 = vlaneseq
          %v8001 = vshrl.u32 %v8000, 7
          %v8002 = vsub.s32 %v7346, %v8001
          %v8003 = vrot.slane %v6035, %v8002
          %v8004 = vsel %vm7351, %v8003, %v7999
          %v8005 = vlaneseq
          %v8006 = vshrl.u32 %v8005, 7
          %v8007 = vsub.s32 %v7353, %v8006
          %v8008 = vrot.slane %v6037, %v8007
          %v8009 = vsel %vm7358, %v8008, %v8004
          %v8010 = vlaneseq
          %v8011 = vshrl.u32 %v8010, 7
          %v8012 = vsub.s32 %v7360, %v8011
          %v8013 = vrot.slane %v6039, %v8012
          %v8014 = vsel %vm7365, %v8013, %v8009
          %v8015 = vlaneseq
          %v8016 = vshrl.u32 %v8015, 7
          %v8017 = vsub.s32 %v7367, %v8016
          %v8018 = vrot.slane %v6041, %v8017
          %v8019 = vsel %vm7372, %v8018, %v8014
          %v8020 = vlaneseq
          %v8021 = vshrl.u32 %v8020, 7
          %v8022 = vsub.s32 %v7374, %v8021
          %v8023 = vrot.slane %v6043, %v8022
          %v8024 = vsel %vm7379, %v8023, %v8019
          %v8025 = vlaneseq
          %v8026 = vshrl.u32 %v8025, 7
          %v8027 = vsub.s32 %v7381, %v8026
          %v8028 = vrot.slane %v6045, %v8027
          %v8029 = vsel %vm7386, %v8028, %v8024
          %v8030 = vlaneseq
          %v8031 = vshrl.u32 %v8030, 7
          %v8032 = vsub.s32 %v7388, %v8031
          %v8033 = vrot.slane %v6047, %v8032
          %v8034 = vsel %vm7393, %v8033, %v8029
          %v8035 = vlaneseq
          %v8036 = vshrl.u32 %v8035, 7
          %v8037 = vsub.s32 %v7395, %v8036
          %v8038 = vrot.slane %v6049, %v8037
          %v8039 = vsel %vm7400, %v8038, %v8034
          %v8040 = vlaneseq
          %v8041 = vshrl.u32 %v8040, 7
          %v8042 = vsub.s32 %v7402, %v8041
          %v8043 = vrot.slane %v6051, %v8042
          %v8044 = vsel %vm7407, %v8043, %v8039
          %v8045 = vlaneseq
          %v8046 = vshrl.u32 %v8045, 7
          %v8047 = vsub.s32 %v7409, %v8046
          %v8048 = vrot.slane %v6053, %v8047
          %v8049 = vsel %vm7414, %v8048, %v8044
          %v8050 = vlaneseq
          %v8051 = vshrl.u32 %v8050, 7
          %v8052 = vsub.s32 %v7416, %v8051
          %v8053 = vrot.slane %v6055, %v8052
          %v8054 = vsel %vm7421, %v8053, %v8049
          %v8055 = vlaneseq
          %v8056 = vshrl.u32 %v8055, 7
          %v8057 = vsub.s32 %v7313, %v8056
          %v8058 = vrot.slane %v6057, %v8057
          %v8059 = vlaneseq
          %v8060 = vshrl.u32 %v8059, 7
          %v8061 = vsub.s32 %v7318, %v8060
          %v8062 = vrot.slane %v6059, %v8061
          %v8063 = vsel %vm7323, %v8062, %v8058
          %v8064 = vlaneseq
          %v8065 = vshrl.u32 %v8064, 7
          %v8066 = vsub.s32 %v7325, %v8065
          %v8067 = vrot.slane %v6061, %v8066
          %v8068 = vsel %vm7330, %v8067, %v8063
          %v8069 = vlaneseq
          %v8070 = vshrl.u32 %v8069, 7
          %v8071 = vsub.s32 %v7332, %v8070
          %v8072 = vrot.slane %v6063, %v8071
          %v8073 = vsel %vm7337, %v8072, %v8068
          %v8074 = vlaneseq
          %v8075 = vshrl.u32 %v8074, 7
          %v8076 = vsub.s32 %v7339, %v8075
          %v8077 = vrot.slane %v6065, %v8076
          %v8078 = vsel %vm7344, %v8077, %v8073
          %v8079 = vlaneseq
          %v8080 = vshrl.u32 %v8079, 7
          %v8081 = vsub.s32 %v7346, %v8080
          %v8082 = vrot.slane %v6067, %v8081
          %v8083 = vsel %vm7351, %v8082, %v8078
          %v8084 = vlaneseq
          %v8085 = vshrl.u32 %v8084, 7
          %v8086 = vsub.s32 %v7353, %v8085
          %v8087 = vrot.slane %v6069, %v8086
          %v8088 = vsel %vm7358, %v8087, %v8083
          %v8089 = vlaneseq
          %v8090 = vshrl.u32 %v8089, 7
          %v8091 = vsub.s32 %v7360, %v8090
          %v8092 = vrot.slane %v6071, %v8091
          %v8093 = vsel %vm7365, %v8092, %v8088
          %v8094 = vlaneseq
          %v8095 = vshrl.u32 %v8094, 7
          %v8096 = vsub.s32 %v7367, %v8095
          %v8097 = vrot.slane %v6073, %v8096
          %v8098 = vsel %vm7372, %v8097, %v8093
          %v8099 = vlaneseq
          %v8100 = vshrl.u32 %v8099, 7
          %v8101 = vsub.s32 %v7374, %v8100
          %v8102 = vrot.slane %v6075, %v8101
          %v8103 = vsel %vm7379, %v8102, %v8098
          %v8104 = vlaneseq
          %v8105 = vshrl.u32 %v8104, 7
          %v8106 = vsub.s32 %v7381, %v8105
          %v8107 = vrot.slane %v6077, %v8106
          %v8108 = vsel %vm7386, %v8107, %v8103
          %v8109 = vlaneseq
          %v8110 = vshrl.u32 %v8109, 7
          %v8111 = vsub.s32 %v7388, %v8110
          %v8112 = vrot.slane %v6079, %v8111
          %v8113 = vsel %vm7393, %v8112, %v8108
          %v8114 = vlaneseq
          %v8115 = vshrl.u32 %v8114, 7
          %v8116 = vsub.s32 %v7395, %v8115
          %v8117 = vrot.slane %v6081, %v8116
          %v8118 = vsel %vm7400, %v8117, %v8113
          %v8119 = vlaneseq
          %v8120 = vshrl.u32 %v8119, 7
          %v8121 = vsub.s32 %v7402, %v8120
          %v8122 = vrot.slane %v6083, %v8121
          %v8123 = vsel %vm7407, %v8122, %v8118
          %v8124 = vlaneseq
          %v8125 = vshrl.u32 %v8124, 7
          %v8126 = vsub.s32 %v7409, %v8125
          %v8127 = vrot.slane %v6085, %v8126
          %v8128 = vsel %vm7414, %v8127, %v8123
          %v8129 = vlaneseq
          %v8130 = vshrl.u32 %v8129, 7
          %v8131 = vsub.s32 %v7416, %v8130
          %v8132 = vrot.slane %v6087, %v8131
          %v8133 = vsel %vm7421, %v8132, %v8128
          %v8134 = vlaneseq
          %v8135 = vshrl.u32 %v8134, 7
          %v8136 = vsub.s32 %v7313, %v8135
          %v8137 = vrot.slane %v6089, %v8136
          %v8138 = vlaneseq
          %v8139 = vshrl.u32 %v8138, 7
          %v8140 = vsub.s32 %v7318, %v8139
          %v8141 = vrot.slane %v6091, %v8140
          %v8142 = vsel %vm7323, %v8141, %v8137
          %v8143 = vlaneseq
          %v8144 = vshrl.u32 %v8143, 7
          %v8145 = vsub.s32 %v7325, %v8144
          %v8146 = vrot.slane %v6093, %v8145
          %v8147 = vsel %vm7330, %v8146, %v8142
          %v8148 = vlaneseq
          %v8149 = vshrl.u32 %v8148, 7
          %v8150 = vsub.s32 %v7332, %v8149
          %v8151 = vrot.slane %v6095, %v8150
          %v8152 = vsel %vm7337, %v8151, %v8147
          %v8153 = vlaneseq
          %v8154 = vshrl.u32 %v8153, 7
          %v8155 = vsub.s32 %v7339, %v8154
          %v8156 = vrot.slane %v6097, %v8155
          %v8157 = vsel %vm7344, %v8156, %v8152
          %v8158 = vlaneseq
          %v8159 = vshrl.u32 %v8158, 7
          %v8160 = vsub.s32 %v7346, %v8159
          %v8161 = vrot.slane %v6099, %v8160
          %v8162 = vsel %vm7351, %v8161, %v8157
          %v8163 = vlaneseq
          %v8164 = vshrl.u32 %v8163, 7
          %v8165 = vsub.s32 %v7353, %v8164
          %v8166 = vrot.slane %v6101, %v8165
          %v8167 = vsel %vm7358, %v8166, %v8162
          %v8168 = vlaneseq
          %v8169 = vshrl.u32 %v8168, 7
          %v8170 = vsub.s32 %v7360, %v8169
          %v8171 = vrot.slane %v6103, %v8170
          %v8172 = vsel %vm7365, %v8171, %v8167
          %v8173 = vlaneseq
          %v8174 = vshrl.u32 %v8173, 7
          %v8175 = vsub.s32 %v7367, %v8174
          %v8176 = vrot.slane %v6105, %v8175
          %v8177 = vsel %vm7372, %v8176, %v8172
          %v8178 = vlaneseq
          %v8179 = vshrl.u32 %v8178, 7
          %v8180 = vsub.s32 %v7374, %v8179
          %v8181 = vrot.slane %v6107, %v8180
          %v8182 = vsel %vm7379, %v8181, %v8177
          %v8183 = vlaneseq
          %v8184 = vshrl.u32 %v8183, 7
          %v8185 = vsub.s32 %v7381, %v8184
          %v8186 = vrot.slane %v6109, %v8185
          %v8187 = vsel %vm7386, %v8186, %v8182
          %v8188 = vlaneseq
          %v8189 = vshrl.u32 %v8188, 7
          %v8190 = vsub.s32 %v7388, %v8189
          %v8191 = vrot.slane %v6111, %v8190
          %v8192 = vsel %vm7393, %v8191, %v8187
          %v8193 = vlaneseq
          %v8194 = vshrl.u32 %v8193, 7
          %v8195 = vsub.s32 %v7395, %v8194
          %v8196 = vrot.slane %v6113, %v8195
          %v8197 = vsel %vm7400, %v8196, %v8192
          %v8198 = vlaneseq
          %v8199 = vshrl.u32 %v8198, 7
          %v8200 = vsub.s32 %v7402, %v8199
          %v8201 = vrot.slane %v6115, %v8200
          %v8202 = vsel %vm7407, %v8201, %v8197
          %v8203 = vlaneseq
          %v8204 = vshrl.u32 %v8203, 7
          %v8205 = vsub.s32 %v7409, %v8204
          %v8206 = vrot.slane %v6117, %v8205
          %v8207 = vsel %vm7414, %v8206, %v8202
          %v8208 = vlaneseq
          %v8209 = vshrl.u32 %v8208, 7
          %v8210 = vsub.s32 %v7416, %v8209
          %v8211 = vrot.slane %v6119, %v8210
          %v8212 = vsel %vm7421, %v8211, %v8207
          %v8213 = vlaneseq
          %v8214 = vshrl.u32 %v8213, 7
          %v8215 = vsub.s32 %v7313, %v8214
          %v8216 = vrot.slane %v6121, %v8215
          %v8217 = vlaneseq
          %v8218 = vshrl.u32 %v8217, 7
          %v8219 = vsub.s32 %v7318, %v8218
          %v8220 = vrot.slane %v6123, %v8219
          %v8221 = vsel %vm7323, %v8220, %v8216
          %v8222 = vlaneseq
          %v8223 = vshrl.u32 %v8222, 7
          %v8224 = vsub.s32 %v7325, %v8223
          %v8225 = vrot.slane %v6125, %v8224
          %v8226 = vsel %vm7330, %v8225, %v8221
          %v8227 = vlaneseq
          %v8228 = vshrl.u32 %v8227, 7
          %v8229 = vsub.s32 %v7332, %v8228
          %v8230 = vrot.slane %v6127, %v8229
          %v8231 = vsel %vm7337, %v8230, %v8226
          %v8232 = vlaneseq
          %v8233 = vshrl.u32 %v8232, 7
          %v8234 = vsub.s32 %v7339, %v8233
          %v8235 = vrot.slane %v6129, %v8234
          %v8236 = vsel %vm7344, %v8235, %v8231
          %v8237 = vlaneseq
          %v8238 = vshrl.u32 %v8237, 7
          %v8239 = vsub.s32 %v7346, %v8238
          %v8240 = vrot.slane %v6131, %v8239
          %v8241 = vsel %vm7351, %v8240, %v8236
          %v8242 = vlaneseq
          %v8243 = vshrl.u32 %v8242, 7
          %v8244 = vsub.s32 %v7353, %v8243
          %v8245 = vrot.slane %v6133, %v8244
          %v8246 = vsel %vm7358, %v8245, %v8241
          %v8247 = vlaneseq
          %v8248 = vshrl.u32 %v8247, 7
          %v8249 = vsub.s32 %v7360, %v8248
          %v8250 = vrot.slane %v6135, %v8249
          %v8251 = vsel %vm7365, %v8250, %v8246
          %v8252 = vlaneseq
          %v8253 = vshrl.u32 %v8252, 7
          %v8254 = vsub.s32 %v7367, %v8253
          %v8255 = vrot.slane %v6137, %v8254
          %v8256 = vsel %vm7372, %v8255, %v8251
          %v8257 = vlaneseq
          %v8258 = vshrl.u32 %v8257, 7
          %v8259 = vsub.s32 %v7374, %v8258
          %v8260 = vrot.slane %v6139, %v8259
          %v8261 = vsel %vm7379, %v8260, %v8256
          %v8262 = vlaneseq
          %v8263 = vshrl.u32 %v8262, 7
          %v8264 = vsub.s32 %v7381, %v8263
          %v8265 = vrot.slane %v6141, %v8264
          %v8266 = vsel %vm7386, %v8265, %v8261
          %v8267 = vlaneseq
          %v8268 = vshrl.u32 %v8267, 7
          %v8269 = vsub.s32 %v7388, %v8268
          %v8270 = vrot.slane %v6143, %v8269
          %v8271 = vsel %vm7393, %v8270, %v8266
          %v8272 = vlaneseq
          %v8273 = vshrl.u32 %v8272, 7
          %v8274 = vsub.s32 %v7395, %v8273
          %v8275 = vrot.slane %v6145, %v8274
          %v8276 = vsel %vm7400, %v8275, %v8271
          %v8277 = vlaneseq
          %v8278 = vshrl.u32 %v8277, 7
          %v8279 = vsub.s32 %v7402, %v8278
          %v8280 = vrot.slane %v6147, %v8279
          %v8281 = vsel %vm7407, %v8280, %v8276
          %v8282 = vlaneseq
          %v8283 = vshrl.u32 %v8282, 7
          %v8284 = vsub.s32 %v7409, %v8283
          %v8285 = vrot.slane %v6149, %v8284
          %v8286 = vsel %vm7414, %v8285, %v8281
          %v8287 = vlaneseq
          %v8288 = vshrl.u32 %v8287, 7
          %v8289 = vsub.s32 %v7416, %v8288
          %v8290 = vrot.slane %v6151, %v8289
          %v8291 = vsel %vm7421, %v8290, %v8286
          %v8292 = vlaneseq
          %v8293 = vshrl.u32 %v8292, 7
          %v8294 = vsub.s32 %v7313, %v8293
          %v8295 = vrot.slane %v6153, %v8294
          %v8296 = vlaneseq
          %v8297 = vshrl.u32 %v8296, 7
          %v8298 = vsub.s32 %v7318, %v8297
          %v8299 = vrot.slane %v6155, %v8298
          %v8300 = vsel %vm7323, %v8299, %v8295
          %v8301 = vlaneseq
          %v8302 = vshrl.u32 %v8301, 7
          %v8303 = vsub.s32 %v7325, %v8302
          %v8304 = vrot.slane %v6157, %v8303
          %v8305 = vsel %vm7330, %v8304, %v8300
          %v8306 = vlaneseq
          %v8307 = vshrl.u32 %v8306, 7
          %v8308 = vsub.s32 %v7332, %v8307
          %v8309 = vrot.slane %v6159, %v8308
          %v8310 = vsel %vm7337, %v8309, %v8305
          %v8311 = vlaneseq
          %v8312 = vshrl.u32 %v8311, 7
          %v8313 = vsub.s32 %v7339, %v8312
          %v8314 = vrot.slane %v6161, %v8313
          %v8315 = vsel %vm7344, %v8314, %v8310
          %v8316 = vlaneseq
          %v8317 = vshrl.u32 %v8316, 7
          %v8318 = vsub.s32 %v7346, %v8317
          %v8319 = vrot.slane %v6163, %v8318
          %v8320 = vsel %vm7351, %v8319, %v8315
          %v8321 = vlaneseq
          %v8322 = vshrl.u32 %v8321, 7
          %v8323 = vsub.s32 %v7353, %v8322
          %v8324 = vrot.slane %v6165, %v8323
          %v8325 = vsel %vm7358, %v8324, %v8320
          %v8326 = vlaneseq
          %v8327 = vshrl.u32 %v8326, 7
          %v8328 = vsub.s32 %v7360, %v8327
          %v8329 = vrot.slane %v6167, %v8328
          %v8330 = vsel %vm7365, %v8329, %v8325
          %v8331 = vlaneseq
          %v8332 = vshrl.u32 %v8331, 7
          %v8333 = vsub.s32 %v7367, %v8332
          %v8334 = vrot.slane %v6169, %v8333
          %v8335 = vsel %vm7372, %v8334, %v8330
          %v8336 = vlaneseq
          %v8337 = vshrl.u32 %v8336, 7
          %v8338 = vsub.s32 %v7374, %v8337
          %v8339 = vrot.slane %v6171, %v8338
          %v8340 = vsel %vm7379, %v8339, %v8335
          %v8341 = vlaneseq
          %v8342 = vshrl.u32 %v8341, 7
          %v8343 = vsub.s32 %v7381, %v8342
          %v8344 = vrot.slane %v6173, %v8343
          %v8345 = vsel %vm7386, %v8344, %v8340
          %v8346 = vlaneseq
          %v8347 = vshrl.u32 %v8346, 7
          %v8348 = vsub.s32 %v7388, %v8347
          %v8349 = vrot.slane %v6175, %v8348
          %v8350 = vsel %vm7393, %v8349, %v8345
          %v8351 = vlaneseq
          %v8352 = vshrl.u32 %v8351, 7
          %v8353 = vsub.s32 %v7395, %v8352
          %v8354 = vrot.slane %v6177, %v8353
          %v8355 = vsel %vm7400, %v8354, %v8350
          %v8356 = vlaneseq
          %v8357 = vshrl.u32 %v8356, 7
          %v8358 = vsub.s32 %v7402, %v8357
          %v8359 = vrot.slane %v6179, %v8358
          %v8360 = vsel %vm7407, %v8359, %v8355
          %v8361 = vlaneseq
          %v8362 = vshrl.u32 %v8361, 7
          %v8363 = vsub.s32 %v7409, %v8362
          %v8364 = vrot.slane %v6181, %v8363
          %v8365 = vsel %vm7414, %v8364, %v8360
          %v8366 = vlaneseq
          %v8367 = vshrl.u32 %v8366, 7
          %v8368 = vsub.s32 %v7416, %v8367
          %v8369 = vrot.slane %v6183, %v8368
          %v8370 = vsel %vm7421, %v8369, %v8365
          %v8371 = vlaneseq
          %v8372 = vshrl.u32 %v8371, 7
          %v8373 = vsub.s32 %v7313, %v8372
          %v8374 = vrot.slane %v6185, %v8373
          %v8375 = vlaneseq
          %v8376 = vshrl.u32 %v8375, 7
          %v8377 = vsub.s32 %v7318, %v8376
          %v8378 = vrot.slane %v6187, %v8377
          %v8379 = vsel %vm7323, %v8378, %v8374
          %v8380 = vlaneseq
          %v8381 = vshrl.u32 %v8380, 7
          %v8382 = vsub.s32 %v7325, %v8381
          %v8383 = vrot.slane %v6189, %v8382
          %v8384 = vsel %vm7330, %v8383, %v8379
          %v8385 = vlaneseq
          %v8386 = vshrl.u32 %v8385, 7
          %v8387 = vsub.s32 %v7332, %v8386
          %v8388 = vrot.slane %v6191, %v8387
          %v8389 = vsel %vm7337, %v8388, %v8384
          %v8390 = vlaneseq
          %v8391 = vshrl.u32 %v8390, 7
          %v8392 = vsub.s32 %v7339, %v8391
          %v8393 = vrot.slane %v6193, %v8392
          %v8394 = vsel %vm7344, %v8393, %v8389
          %v8395 = vlaneseq
          %v8396 = vshrl.u32 %v8395, 7
          %v8397 = vsub.s32 %v7346, %v8396
          %v8398 = vrot.slane %v6195, %v8397
          %v8399 = vsel %vm7351, %v8398, %v8394
          %v8400 = vlaneseq
          %v8401 = vshrl.u32 %v8400, 7
          %v8402 = vsub.s32 %v7353, %v8401
          %v8403 = vrot.slane %v6197, %v8402
          %v8404 = vsel %vm7358, %v8403, %v8399
          %v8405 = vlaneseq
          %v8406 = vshrl.u32 %v8405, 7
          %v8407 = vsub.s32 %v7360, %v8406
          %v8408 = vrot.slane %v6199, %v8407
          %v8409 = vsel %vm7365, %v8408, %v8404
          %v8410 = vlaneseq
          %v8411 = vshrl.u32 %v8410, 7
          %v8412 = vsub.s32 %v7367, %v8411
          %v8413 = vrot.slane %v6201, %v8412
          %v8414 = vsel %vm7372, %v8413, %v8409
          %v8415 = vlaneseq
          %v8416 = vshrl.u32 %v8415, 7
          %v8417 = vsub.s32 %v7374, %v8416
          %v8418 = vrot.slane %v6203, %v8417
          %v8419 = vsel %vm7379, %v8418, %v8414
          %v8420 = vlaneseq
          %v8421 = vshrl.u32 %v8420, 7
          %v8422 = vsub.s32 %v7381, %v8421
          %v8423 = vrot.slane %v6205, %v8422
          %v8424 = vsel %vm7386, %v8423, %v8419
          %v8425 = vlaneseq
          %v8426 = vshrl.u32 %v8425, 7
          %v8427 = vsub.s32 %v7388, %v8426
          %v8428 = vrot.slane %v6207, %v8427
          %v8429 = vsel %vm7393, %v8428, %v8424
          %v8430 = vlaneseq
          %v8431 = vshrl.u32 %v8430, 7
          %v8432 = vsub.s32 %v7395, %v8431
          %v8433 = vrot.slane %v6209, %v8432
          %v8434 = vsel %vm7400, %v8433, %v8429
          %v8435 = vlaneseq
          %v8436 = vshrl.u32 %v8435, 7
          %v8437 = vsub.s32 %v7402, %v8436
          %v8438 = vrot.slane %v6211, %v8437
          %v8439 = vsel %vm7407, %v8438, %v8434
          %v8440 = vlaneseq
          %v8441 = vshrl.u32 %v8440, 7
          %v8442 = vsub.s32 %v7409, %v8441
          %v8443 = vrot.slane %v6213, %v8442
          %v8444 = vsel %vm7414, %v8443, %v8439
          %v8445 = vlaneseq
          %v8446 = vshrl.u32 %v8445, 7
          %v8447 = vsub.s32 %v7416, %v8446
          %v8448 = vrot.slane %v6215, %v8447
          %v8449 = vsel %vm7421, %v8448, %v8444
          %v8450 = vlaneseq
          %v8451 = vshrl.u32 %v8450, 7
          %v8452 = vsub.s32 %v7313, %v8451
          %v8453 = vrot.slane %v6217, %v8452
          %v8454 = vlaneseq
          %v8455 = vshrl.u32 %v8454, 7
          %v8456 = vsub.s32 %v7318, %v8455
          %v8457 = vrot.slane %v6219, %v8456
          %v8458 = vsel %vm7323, %v8457, %v8453
          %v8459 = vlaneseq
          %v8460 = vshrl.u32 %v8459, 7
          %v8461 = vsub.s32 %v7325, %v8460
          %v8462 = vrot.slane %v6221, %v8461
          %v8463 = vsel %vm7330, %v8462, %v8458
          %v8464 = vlaneseq
          %v8465 = vshrl.u32 %v8464, 7
          %v8466 = vsub.s32 %v7332, %v8465
          %v8467 = vrot.slane %v6223, %v8466
          %v8468 = vsel %vm7337, %v8467, %v8463
          %v8469 = vlaneseq
          %v8470 = vshrl.u32 %v8469, 7
          %v8471 = vsub.s32 %v7339, %v8470
          %v8472 = vrot.slane %v6225, %v8471
          %v8473 = vsel %vm7344, %v8472, %v8468
          %v8474 = vlaneseq
          %v8475 = vshrl.u32 %v8474, 7
          %v8476 = vsub.s32 %v7346, %v8475
          %v8477 = vrot.slane %v6227, %v8476
          %v8478 = vsel %vm7351, %v8477, %v8473
          %v8479 = vlaneseq
          %v8480 = vshrl.u32 %v8479, 7
          %v8481 = vsub.s32 %v7353, %v8480
          %v8482 = vrot.slane %v6229, %v8481
          %v8483 = vsel %vm7358, %v8482, %v8478
          %v8484 = vlaneseq
          %v8485 = vshrl.u32 %v8484, 7
          %v8486 = vsub.s32 %v7360, %v8485
          %v8487 = vrot.slane %v6231, %v8486
          %v8488 = vsel %vm7365, %v8487, %v8483
          %v8489 = vlaneseq
          %v8490 = vshrl.u32 %v8489, 7
          %v8491 = vsub.s32 %v7367, %v8490
          %v8492 = vrot.slane %v6233, %v8491
          %v8493 = vsel %vm7372, %v8492, %v8488
          %v8494 = vlaneseq
          %v8495 = vshrl.u32 %v8494, 7
          %v8496 = vsub.s32 %v7374, %v8495
          %v8497 = vrot.slane %v6235, %v8496
          %v8498 = vsel %vm7379, %v8497, %v8493
          %v8499 = vlaneseq
          %v8500 = vshrl.u32 %v8499, 7
          %v8501 = vsub.s32 %v7381, %v8500
          %v8502 = vrot.slane %v6237, %v8501
          %v8503 = vsel %vm7386, %v8502, %v8498
          %v8504 = vlaneseq
          %v8505 = vshrl.u32 %v8504, 7
          %v8506 = vsub.s32 %v7388, %v8505
          %v8507 = vrot.slane %v6239, %v8506
          %v8508 = vsel %vm7393, %v8507, %v8503
          %v8509 = vlaneseq
          %v8510 = vshrl.u32 %v8509, 7
          %v8511 = vsub.s32 %v7395, %v8510
          %v8512 = vrot.slane %v6241, %v8511
          %v8513 = vsel %vm7400, %v8512, %v8508
          %v8514 = vlaneseq
          %v8515 = vshrl.u32 %v8514, 7
          %v8516 = vsub.s32 %v7402, %v8515
          %v8517 = vrot.slane %v6243, %v8516
          %v8518 = vsel %vm7407, %v8517, %v8513
          %v8519 = vlaneseq
          %v8520 = vshrl.u32 %v8519, 7
          %v8521 = vsub.s32 %v7409, %v8520
          %v8522 = vrot.slane %v6245, %v8521
          %v8523 = vsel %vm7414, %v8522, %v8518
          %v8524 = vlaneseq
          %v8525 = vshrl.u32 %v8524, 7
          %v8526 = vsub.s32 %v7416, %v8525
          %v8527 = vrot.slane %v6247, %v8526
          %v8528 = vsel %vm7421, %v8527, %v8523
          %v8529 = vlaneseq
          %v8530 = vshrl.u32 %v8529, 7
          %v8531 = vsub.s32 %v7313, %v8530
          %v8532 = vrot.slane %v6249, %v8531
          %v8533 = vlaneseq
          %v8534 = vshrl.u32 %v8533, 7
          %v8535 = vsub.s32 %v7318, %v8534
          %v8536 = vrot.slane %v6251, %v8535
          %v8537 = vsel %vm7323, %v8536, %v8532
          %v8538 = vlaneseq
          %v8539 = vshrl.u32 %v8538, 7
          %v8540 = vsub.s32 %v7325, %v8539
          %v8541 = vrot.slane %v6253, %v8540
          %v8542 = vsel %vm7330, %v8541, %v8537
          %v8543 = vlaneseq
          %v8544 = vshrl.u32 %v8543, 7
          %v8545 = vsub.s32 %v7332, %v8544
          %v8546 = vrot.slane %v6255, %v8545
          %v8547 = vsel %vm7337, %v8546, %v8542
          %v8548 = vlaneseq
          %v8549 = vshrl.u32 %v8548, 7
          %v8550 = vsub.s32 %v7339, %v8549
          %v8551 = vrot.slane %v6257, %v8550
          %v8552 = vsel %vm7344, %v8551, %v8547
          %v8553 = vlaneseq
          %v8554 = vshrl.u32 %v8553, 7
          %v8555 = vsub.s32 %v7346, %v8554
          %v8556 = vrot.slane %v6259, %v8555
          %v8557 = vsel %vm7351, %v8556, %v8552
          %v8558 = vlaneseq
          %v8559 = vshrl.u32 %v8558, 7
          %v8560 = vsub.s32 %v7353, %v8559
          %v8561 = vrot.slane %v6261, %v8560
          %v8562 = vsel %vm7358, %v8561, %v8557
          %v8563 = vlaneseq
          %v8564 = vshrl.u32 %v8563, 7
          %v8565 = vsub.s32 %v7360, %v8564
          %v8566 = vrot.slane %v6263, %v8565
          %v8567 = vsel %vm7365, %v8566, %v8562
          %v8568 = vlaneseq
          %v8569 = vshrl.u32 %v8568, 7
          %v8570 = vsub.s32 %v7367, %v8569
          %v8571 = vrot.slane %v6265, %v8570
          %v8572 = vsel %vm7372, %v8571, %v8567
          %v8573 = vlaneseq
          %v8574 = vshrl.u32 %v8573, 7
          %v8575 = vsub.s32 %v7374, %v8574
          %v8576 = vrot.slane %v6267, %v8575
          %v8577 = vsel %vm7379, %v8576, %v8572
          %v8578 = vlaneseq
          %v8579 = vshrl.u32 %v8578, 7
          %v8580 = vsub.s32 %v7381, %v8579
          %v8581 = vrot.slane %v6269, %v8580
          %v8582 = vsel %vm7386, %v8581, %v8577
          %v8583 = vlaneseq
          %v8584 = vshrl.u32 %v8583, 7
          %v8585 = vsub.s32 %v7388, %v8584
          %v8586 = vrot.slane %v6271, %v8585
          %v8587 = vsel %vm7393, %v8586, %v8582
          %v8588 = vlaneseq
          %v8589 = vshrl.u32 %v8588, 7
          %v8590 = vsub.s32 %v7395, %v8589
          %v8591 = vrot.slane %v6273, %v8590
          %v8592 = vsel %vm7400, %v8591, %v8587
          %v8593 = vlaneseq
          %v8594 = vshrl.u32 %v8593, 7
          %v8595 = vsub.s32 %v7402, %v8594
          %v8596 = vrot.slane %v6275, %v8595
          %v8597 = vsel %vm7407, %v8596, %v8592
          %v8598 = vlaneseq
          %v8599 = vshrl.u32 %v8598, 7
          %v8600 = vsub.s32 %v7409, %v8599
          %v8601 = vrot.slane %v6277, %v8600
          %v8602 = vsel %vm7414, %v8601, %v8597
          %v8603 = vlaneseq
          %v8604 = vshrl.u32 %v8603, 7
          %v8605 = vsub.s32 %v7416, %v8604
          %v8606 = vrot.slane %v6279, %v8605
          %v8607 = vsel %vm7421, %v8606, %v8602
          %v8608 = vlaneseq
          %v8609 = vshrl.u32 %v8608, 7
          %v8610 = vsub.s32 %v7313, %v8609
          %v8611 = vrot.slane %v6281, %v8610
          %v8612 = vlaneseq
          %v8613 = vshrl.u32 %v8612, 7
          %v8614 = vsub.s32 %v7318, %v8613
          %v8615 = vrot.slane %v6283, %v8614
          %v8616 = vsel %vm7323, %v8615, %v8611
          %v8617 = vlaneseq
          %v8618 = vshrl.u32 %v8617, 7
          %v8619 = vsub.s32 %v7325, %v8618
          %v8620 = vrot.slane %v6285, %v8619
          %v8621 = vsel %vm7330, %v8620, %v8616
          %v8622 = vlaneseq
          %v8623 = vshrl.u32 %v8622, 7
          %v8624 = vsub.s32 %v7332, %v8623
          %v8625 = vrot.slane %v6287, %v8624
          %v8626 = vsel %vm7337, %v8625, %v8621
          %v8627 = vlaneseq
          %v8628 = vshrl.u32 %v8627, 7
          %v8629 = vsub.s32 %v7339, %v8628
          %v8630 = vrot.slane %v6289, %v8629
          %v8631 = vsel %vm7344, %v8630, %v8626
          %v8632 = vlaneseq
          %v8633 = vshrl.u32 %v8632, 7
          %v8634 = vsub.s32 %v7346, %v8633
          %v8635 = vrot.slane %v6291, %v8634
          %v8636 = vsel %vm7351, %v8635, %v8631
          %v8637 = vlaneseq
          %v8638 = vshrl.u32 %v8637, 7
          %v8639 = vsub.s32 %v7353, %v8638
          %v8640 = vrot.slane %v6293, %v8639
          %v8641 = vsel %vm7358, %v8640, %v8636
          %v8642 = vlaneseq
          %v8643 = vshrl.u32 %v8642, 7
          %v8644 = vsub.s32 %v7360, %v8643
          %v8645 = vrot.slane %v6295, %v8644
          %v8646 = vsel %vm7365, %v8645, %v8641
          %v8647 = vlaneseq
          %v8648 = vshrl.u32 %v8647, 7
          %v8649 = vsub.s32 %v7367, %v8648
          %v8650 = vrot.slane %v6297, %v8649
          %v8651 = vsel %vm7372, %v8650, %v8646
          %v8652 = vlaneseq
          %v8653 = vshrl.u32 %v8652, 7
          %v8654 = vsub.s32 %v7374, %v8653
          %v8655 = vrot.slane %v6299, %v8654
          %v8656 = vsel %vm7379, %v8655, %v8651
          %v8657 = vlaneseq
          %v8658 = vshrl.u32 %v8657, 7
          %v8659 = vsub.s32 %v7381, %v8658
          %v8660 = vrot.slane %v6301, %v8659
          %v8661 = vsel %vm7386, %v8660, %v8656
          %v8662 = vlaneseq
          %v8663 = vshrl.u32 %v8662, 7
          %v8664 = vsub.s32 %v7388, %v8663
          %v8665 = vrot.slane %v6303, %v8664
          %v8666 = vsel %vm7393, %v8665, %v8661
          %v8667 = vlaneseq
          %v8668 = vshrl.u32 %v8667, 7
          %v8669 = vsub.s32 %v7395, %v8668
          %v8670 = vrot.slane %v6305, %v8669
          %v8671 = vsel %vm7400, %v8670, %v8666
          %v8672 = vlaneseq
          %v8673 = vshrl.u32 %v8672, 7
          %v8674 = vsub.s32 %v7402, %v8673
          %v8675 = vrot.slane %v6307, %v8674
          %v8676 = vsel %vm7407, %v8675, %v8671
          %v8677 = vlaneseq
          %v8678 = vshrl.u32 %v8677, 7
          %v8679 = vsub.s32 %v7409, %v8678
          %v8680 = vrot.slane %v6309, %v8679
          %v8681 = vsel %vm7414, %v8680, %v8676
          %v8682 = vlaneseq
          %v8683 = vshrl.u32 %v8682, 7
          %v8684 = vsub.s32 %v7416, %v8683
          %v8685 = vrot.slane %v6311, %v8684
          %v8686 = vsel %vm7421, %v8685, %v8681
          %v8687 = vlaneseq
          %v8688 = vshrl.u32 %v8687, 7
          %v8689 = vsub.s32 %v7313, %v8688
          %v8690 = vrot.slane %v6313, %v8689
          %v8691 = vlaneseq
          %v8692 = vshrl.u32 %v8691, 7
          %v8693 = vsub.s32 %v7318, %v8692
          %v8694 = vrot.slane %v6315, %v8693
          %v8695 = vsel %vm7323, %v8694, %v8690
          %v8696 = vlaneseq
          %v8697 = vshrl.u32 %v8696, 7
          %v8698 = vsub.s32 %v7325, %v8697
          %v8699 = vrot.slane %v6317, %v8698
          %v8700 = vsel %vm7330, %v8699, %v8695
          %v8701 = vlaneseq
          %v8702 = vshrl.u32 %v8701, 7
          %v8703 = vsub.s32 %v7332, %v8702
          %v8704 = vrot.slane %v6319, %v8703
          %v8705 = vsel %vm7337, %v8704, %v8700
          %v8706 = vlaneseq
          %v8707 = vshrl.u32 %v8706, 7
          %v8708 = vsub.s32 %v7339, %v8707
          %v8709 = vrot.slane %v6321, %v8708
          %v8710 = vsel %vm7344, %v8709, %v8705
          %v8711 = vlaneseq
          %v8712 = vshrl.u32 %v8711, 7
          %v8713 = vsub.s32 %v7346, %v8712
          %v8714 = vrot.slane %v6323, %v8713
          %v8715 = vsel %vm7351, %v8714, %v8710
          %v8716 = vlaneseq
          %v8717 = vshrl.u32 %v8716, 7
          %v8718 = vsub.s32 %v7353, %v8717
          %v8719 = vrot.slane %v6325, %v8718
          %v8720 = vsel %vm7358, %v8719, %v8715
          %v8721 = vlaneseq
          %v8722 = vshrl.u32 %v8721, 7
          %v8723 = vsub.s32 %v7360, %v8722
          %v8724 = vrot.slane %v6327, %v8723
          %v8725 = vsel %vm7365, %v8724, %v8720
          %v8726 = vlaneseq
          %v8727 = vshrl.u32 %v8726, 7
          %v8728 = vsub.s32 %v7367, %v8727
          %v8729 = vrot.slane %v6329, %v8728
          %v8730 = vsel %vm7372, %v8729, %v8725
          %v8731 = vlaneseq
          %v8732 = vshrl.u32 %v8731, 7
          %v8733 = vsub.s32 %v7374, %v8732
          %v8734 = vrot.slane %v6331, %v8733
          %v8735 = vsel %vm7379, %v8734, %v8730
          %v8736 = vlaneseq
          %v8737 = vshrl.u32 %v8736, 7
          %v8738 = vsub.s32 %v7381, %v8737
          %v8739 = vrot.slane %v6333, %v8738
          %v8740 = vsel %vm7386, %v8739, %v8735
          %v8741 = vlaneseq
          %v8742 = vshrl.u32 %v8741, 7
          %v8743 = vsub.s32 %v7388, %v8742
          %v8744 = vrot.slane %v6335, %v8743
          %v8745 = vsel %vm7393, %v8744, %v8740
          %v8746 = vlaneseq
          %v8747 = vshrl.u32 %v8746, 7
          %v8748 = vsub.s32 %v7395, %v8747
          %v8749 = vrot.slane %v6337, %v8748
          %v8750 = vsel %vm7400, %v8749, %v8745
          %v8751 = vlaneseq
          %v8752 = vshrl.u32 %v8751, 7
          %v8753 = vsub.s32 %v7402, %v8752
          %v8754 = vrot.slane %v6339, %v8753
          %v8755 = vsel %vm7407, %v8754, %v8750
          %v8756 = vlaneseq
          %v8757 = vshrl.u32 %v8756, 7
          %v8758 = vsub.s32 %v7409, %v8757
          %v8759 = vrot.slane %v6341, %v8758
          %v8760 = vsel %vm7414, %v8759, %v8755
          %v8761 = vlaneseq
          %v8762 = vshrl.u32 %v8761, 7
          %v8763 = vsub.s32 %v7416, %v8762
          %v8764 = vrot.slane %v6343, %v8763
          %v8765 = vsel %vm7421, %v8764, %v8760
          %v8766 = vlaneseq
          %v8767 = vshrl.u32 %v8766, 7
          %v8768 = vsub.s32 %v7313, %v8767
          %v8769 = vrot.slane %v6345, %v8768
          %v8770 = vlaneseq
          %v8771 = vshrl.u32 %v8770, 7
          %v8772 = vsub.s32 %v7318, %v8771
          %v8773 = vrot.slane %v6347, %v8772
          %v8774 = vsel %vm7323, %v8773, %v8769
          %v8775 = vlaneseq
          %v8776 = vshrl.u32 %v8775, 7
          %v8777 = vsub.s32 %v7325, %v8776
          %v8778 = vrot.slane %v6349, %v8777
          %v8779 = vsel %vm7330, %v8778, %v8774
          %v8780 = vlaneseq
          %v8781 = vshrl.u32 %v8780, 7
          %v8782 = vsub.s32 %v7332, %v8781
          %v8783 = vrot.slane %v6351, %v8782
          %v8784 = vsel %vm7337, %v8783, %v8779
          %v8785 = vlaneseq
          %v8786 = vshrl.u32 %v8785, 7
          %v8787 = vsub.s32 %v7339, %v8786
          %v8788 = vrot.slane %v6353, %v8787
          %v8789 = vsel %vm7344, %v8788, %v8784
          %v8790 = vlaneseq
          %v8791 = vshrl.u32 %v8790, 7
          %v8792 = vsub.s32 %v7346, %v8791
          %v8793 = vrot.slane %v6355, %v8792
          %v8794 = vsel %vm7351, %v8793, %v8789
          %v8795 = vlaneseq
          %v8796 = vshrl.u32 %v8795, 7
          %v8797 = vsub.s32 %v7353, %v8796
          %v8798 = vrot.slane %v6357, %v8797
          %v8799 = vsel %vm7358, %v8798, %v8794
          %v8800 = vlaneseq
          %v8801 = vshrl.u32 %v8800, 7
          %v8802 = vsub.s32 %v7360, %v8801
          %v8803 = vrot.slane %v6359, %v8802
          %v8804 = vsel %vm7365, %v8803, %v8799
          %v8805 = vlaneseq
          %v8806 = vshrl.u32 %v8805, 7
          %v8807 = vsub.s32 %v7367, %v8806
          %v8808 = vrot.slane %v6361, %v8807
          %v8809 = vsel %vm7372, %v8808, %v8804
          %v8810 = vlaneseq
          %v8811 = vshrl.u32 %v8810, 7
          %v8812 = vsub.s32 %v7374, %v8811
          %v8813 = vrot.slane %v6363, %v8812
          %v8814 = vsel %vm7379, %v8813, %v8809
          %v8815 = vlaneseq
          %v8816 = vshrl.u32 %v8815, 7
          %v8817 = vsub.s32 %v7381, %v8816
          %v8818 = vrot.slane %v6365, %v8817
          %v8819 = vsel %vm7386, %v8818, %v8814
          %v8820 = vlaneseq
          %v8821 = vshrl.u32 %v8820, 7
          %v8822 = vsub.s32 %v7388, %v8821
          %v8823 = vrot.slane %v6367, %v8822
          %v8824 = vsel %vm7393, %v8823, %v8819
          %v8825 = vlaneseq
          %v8826 = vshrl.u32 %v8825, 7
          %v8827 = vsub.s32 %v7395, %v8826
          %v8828 = vrot.slane %v6369, %v8827
          %v8829 = vsel %vm7400, %v8828, %v8824
          %v8830 = vlaneseq
          %v8831 = vshrl.u32 %v8830, 7
          %v8832 = vsub.s32 %v7402, %v8831
          %v8833 = vrot.slane %v6371, %v8832
          %v8834 = vsel %vm7407, %v8833, %v8829
          %v8835 = vlaneseq
          %v8836 = vshrl.u32 %v8835, 7
          %v8837 = vsub.s32 %v7409, %v8836
          %v8838 = vrot.slane %v6373, %v8837
          %v8839 = vsel %vm7414, %v8838, %v8834
          %v8840 = vlaneseq
          %v8841 = vshrl.u32 %v8840, 7
          %v8842 = vsub.s32 %v7416, %v8841
          %v8843 = vrot.slane %v6375, %v8842
          %v8844 = vsel %vm7421, %v8843, %v8839
          %v8845 = vlaneseq
          %v8846 = vshrl.u32 %v8845, 7
          %v8847 = vsub.s32 %v7313, %v8846
          %v8848 = vrot.slane %v6377, %v8847
          %v8849 = vlaneseq
          %v8850 = vshrl.u32 %v8849, 7
          %v8851 = vsub.s32 %v7318, %v8850
          %v8852 = vrot.slane %v6379, %v8851
          %v8853 = vsel %vm7323, %v8852, %v8848
          %v8854 = vlaneseq
          %v8855 = vshrl.u32 %v8854, 7
          %v8856 = vsub.s32 %v7325, %v8855
          %v8857 = vrot.slane %v6381, %v8856
          %v8858 = vsel %vm7330, %v8857, %v8853
          %v8859 = vlaneseq
          %v8860 = vshrl.u32 %v8859, 7
          %v8861 = vsub.s32 %v7332, %v8860
          %v8862 = vrot.slane %v6383, %v8861
          %v8863 = vsel %vm7337, %v8862, %v8858
          %v8864 = vlaneseq
          %v8865 = vshrl.u32 %v8864, 7
          %v8866 = vsub.s32 %v7339, %v8865
          %v8867 = vrot.slane %v6385, %v8866
          %v8868 = vsel %vm7344, %v8867, %v8863
          %v8869 = vlaneseq
          %v8870 = vshrl.u32 %v8869, 7
          %v8871 = vsub.s32 %v7346, %v8870
          %v8872 = vrot.slane %v6387, %v8871
          %v8873 = vsel %vm7351, %v8872, %v8868
          %v8874 = vlaneseq
          %v8875 = vshrl.u32 %v8874, 7
          %v8876 = vsub.s32 %v7353, %v8875
          %v8877 = vrot.slane %v6389, %v8876
          %v8878 = vsel %vm7358, %v8877, %v8873
          %v8879 = vlaneseq
          %v8880 = vshrl.u32 %v8879, 7
          %v8881 = vsub.s32 %v7360, %v8880
          %v8882 = vrot.slane %v6391, %v8881
          %v8883 = vsel %vm7365, %v8882, %v8878
          %v8884 = vlaneseq
          %v8885 = vshrl.u32 %v8884, 7
          %v8886 = vsub.s32 %v7367, %v8885
          %v8887 = vrot.slane %v6393, %v8886
          %v8888 = vsel %vm7372, %v8887, %v8883
          %v8889 = vlaneseq
          %v8890 = vshrl.u32 %v8889, 7
          %v8891 = vsub.s32 %v7374, %v8890
          %v8892 = vrot.slane %v6395, %v8891
          %v8893 = vsel %vm7379, %v8892, %v8888
          %v8894 = vlaneseq
          %v8895 = vshrl.u32 %v8894, 7
          %v8896 = vsub.s32 %v7381, %v8895
          %v8897 = vrot.slane %v6397, %v8896
          %v8898 = vsel %vm7386, %v8897, %v8893
          %v8899 = vlaneseq
          %v8900 = vshrl.u32 %v8899, 7
          %v8901 = vsub.s32 %v7388, %v8900
          %v8902 = vrot.slane %v6399, %v8901
          %v8903 = vsel %vm7393, %v8902, %v8898
          %v8904 = vlaneseq
          %v8905 = vshrl.u32 %v8904, 7
          %v8906 = vsub.s32 %v7395, %v8905
          %v8907 = vrot.slane %v6401, %v8906
          %v8908 = vsel %vm7400, %v8907, %v8903
          %v8909 = vlaneseq
          %v8910 = vshrl.u32 %v8909, 7
          %v8911 = vsub.s32 %v7402, %v8910
          %v8912 = vrot.slane %v6403, %v8911
          %v8913 = vsel %vm7407, %v8912, %v8908
          %v8914 = vlaneseq
          %v8915 = vshrl.u32 %v8914, 7
          %v8916 = vsub.s32 %v7409, %v8915
          %v8917 = vrot.slane %v6405, %v8916
          %v8918 = vsel %vm7414, %v8917, %v8913
          %v8919 = vlaneseq
          %v8920 = vshrl.u32 %v8919, 7
          %v8921 = vsub.s32 %v7416, %v8920
          %v8922 = vrot.slane %v6407, %v8921
          %v8923 = vsel %vm7421, %v8922, %v8918
          %v8924 = vlaneseq
          %v8925 = vshrl.u32 %v8924, 7
          %v8926 = vsub.s32 %v7313, %v8925
          %v8927 = vrot.slane %v6409, %v8926
          %v8928 = vlaneseq
          %v8929 = vshrl.u32 %v8928, 7
          %v8930 = vsub.s32 %v7318, %v8929
          %v8931 = vrot.slane %v6411, %v8930
          %v8932 = vsel %vm7323, %v8931, %v8927
          %v8933 = vlaneseq
          %v8934 = vshrl.u32 %v8933, 7
          %v8935 = vsub.s32 %v7325, %v8934
          %v8936 = vrot.slane %v6413, %v8935
          %v8937 = vsel %vm7330, %v8936, %v8932
          %v8938 = vlaneseq
          %v8939 = vshrl.u32 %v8938, 7
          %v8940 = vsub.s32 %v7332, %v8939
          %v8941 = vrot.slane %v6415, %v8940
          %v8942 = vsel %vm7337, %v8941, %v8937
          %v8943 = vlaneseq
          %v8944 = vshrl.u32 %v8943, 7
          %v8945 = vsub.s32 %v7339, %v8944
          %v8946 = vrot.slane %v6417, %v8945
          %v8947 = vsel %vm7344, %v8946, %v8942
          %v8948 = vlaneseq
          %v8949 = vshrl.u32 %v8948, 7
          %v8950 = vsub.s32 %v7346, %v8949
          %v8951 = vrot.slane %v6419, %v8950
          %v8952 = vsel %vm7351, %v8951, %v8947
          %v8953 = vlaneseq
          %v8954 = vshrl.u32 %v8953, 7
          %v8955 = vsub.s32 %v7353, %v8954
          %v8956 = vrot.slane %v6421, %v8955
          %v8957 = vsel %vm7358, %v8956, %v8952
          %v8958 = vlaneseq
          %v8959 = vshrl.u32 %v8958, 7
          %v8960 = vsub.s32 %v7360, %v8959
          %v8961 = vrot.slane %v6423, %v8960
          %v8962 = vsel %vm7365, %v8961, %v8957
          %v8963 = vlaneseq
          %v8964 = vshrl.u32 %v8963, 7
          %v8965 = vsub.s32 %v7367, %v8964
          %v8966 = vrot.slane %v6425, %v8965
          %v8967 = vsel %vm7372, %v8966, %v8962
          %v8968 = vlaneseq
          %v8969 = vshrl.u32 %v8968, 7
          %v8970 = vsub.s32 %v7374, %v8969
          %v8971 = vrot.slane %v6427, %v8970
          %v8972 = vsel %vm7379, %v8971, %v8967
          %v8973 = vlaneseq
          %v8974 = vshrl.u32 %v8973, 7
          %v8975 = vsub.s32 %v7381, %v8974
          %v8976 = vrot.slane %v6429, %v8975
          %v8977 = vsel %vm7386, %v8976, %v8972
          %v8978 = vlaneseq
          %v8979 = vshrl.u32 %v8978, 7
          %v8980 = vsub.s32 %v7388, %v8979
          %v8981 = vrot.slane %v6431, %v8980
          %v8982 = vsel %vm7393, %v8981, %v8977
          %v8983 = vlaneseq
          %v8984 = vshrl.u32 %v8983, 7
          %v8985 = vsub.s32 %v7395, %v8984
          %v8986 = vrot.slane %v6433, %v8985
          %v8987 = vsel %vm7400, %v8986, %v8982
          %v8988 = vlaneseq
          %v8989 = vshrl.u32 %v8988, 7
          %v8990 = vsub.s32 %v7402, %v8989
          %v8991 = vrot.slane %v6435, %v8990
          %v8992 = vsel %vm7407, %v8991, %v8987
          %v8993 = vlaneseq
          %v8994 = vshrl.u32 %v8993, 7
          %v8995 = vsub.s32 %v7409, %v8994
          %v8996 = vrot.slane %v6437, %v8995
          %v8997 = vsel %vm7414, %v8996, %v8992
          %v8998 = vlaneseq
          %v8999 = vshrl.u32 %v8998, 7
          %v9000 = vsub.s32 %v7416, %v8999
          %v9001 = vrot.slane %v6439, %v9000
          %v9002 = vsel %vm7421, %v9001, %v8997
          %v9003 = vlaneseq
          %v9004 = vshrl.u32 %v9003, 7
          %v9005 = vsub.s32 %v7313, %v9004
          %v9006 = vrot.slane %v6441, %v9005
          %v9007 = vlaneseq
          %v9008 = vshrl.u32 %v9007, 7
          %v9009 = vsub.s32 %v7318, %v9008
          %v9010 = vrot.slane %v6443, %v9009
          %v9011 = vsel %vm7323, %v9010, %v9006
          %v9012 = vlaneseq
          %v9013 = vshrl.u32 %v9012, 7
          %v9014 = vsub.s32 %v7325, %v9013
          %v9015 = vrot.slane %v6445, %v9014
          %v9016 = vsel %vm7330, %v9015, %v9011
          %v9017 = vlaneseq
          %v9018 = vshrl.u32 %v9017, 7
          %v9019 = vsub.s32 %v7332, %v9018
          %v9020 = vrot.slane %v6447, %v9019
          %v9021 = vsel %vm7337, %v9020, %v9016
          %v9022 = vlaneseq
          %v9023 = vshrl.u32 %v9022, 7
          %v9024 = vsub.s32 %v7339, %v9023
          %v9025 = vrot.slane %v6449, %v9024
          %v9026 = vsel %vm7344, %v9025, %v9021
          %v9027 = vlaneseq
          %v9028 = vshrl.u32 %v9027, 7
          %v9029 = vsub.s32 %v7346, %v9028
          %v9030 = vrot.slane %v6451, %v9029
          %v9031 = vsel %vm7351, %v9030, %v9026
          %v9032 = vlaneseq
          %v9033 = vshrl.u32 %v9032, 7
          %v9034 = vsub.s32 %v7353, %v9033
          %v9035 = vrot.slane %v6453, %v9034
          %v9036 = vsel %vm7358, %v9035, %v9031
          %v9037 = vlaneseq
          %v9038 = vshrl.u32 %v9037, 7
          %v9039 = vsub.s32 %v7360, %v9038
          %v9040 = vrot.slane %v6455, %v9039
          %v9041 = vsel %vm7365, %v9040, %v9036
          %v9042 = vlaneseq
          %v9043 = vshrl.u32 %v9042, 7
          %v9044 = vsub.s32 %v7367, %v9043
          %v9045 = vrot.slane %v6457, %v9044
          %v9046 = vsel %vm7372, %v9045, %v9041
          %v9047 = vlaneseq
          %v9048 = vshrl.u32 %v9047, 7
          %v9049 = vsub.s32 %v7374, %v9048
          %v9050 = vrot.slane %v6459, %v9049
          %v9051 = vsel %vm7379, %v9050, %v9046
          %v9052 = vlaneseq
          %v9053 = vshrl.u32 %v9052, 7
          %v9054 = vsub.s32 %v7381, %v9053
          %v9055 = vrot.slane %v6461, %v9054
          %v9056 = vsel %vm7386, %v9055, %v9051
          %v9057 = vlaneseq
          %v9058 = vshrl.u32 %v9057, 7
          %v9059 = vsub.s32 %v7388, %v9058
          %v9060 = vrot.slane %v6463, %v9059
          %v9061 = vsel %vm7393, %v9060, %v9056
          %v9062 = vlaneseq
          %v9063 = vshrl.u32 %v9062, 7
          %v9064 = vsub.s32 %v7395, %v9063
          %v9065 = vrot.slane %v6465, %v9064
          %v9066 = vsel %vm7400, %v9065, %v9061
          %v9067 = vlaneseq
          %v9068 = vshrl.u32 %v9067, 7
          %v9069 = vsub.s32 %v7402, %v9068
          %v9070 = vrot.slane %v6467, %v9069
          %v9071 = vsel %vm7407, %v9070, %v9066
          %v9072 = vlaneseq
          %v9073 = vshrl.u32 %v9072, 7
          %v9074 = vsub.s32 %v7409, %v9073
          %v9075 = vrot.slane %v6469, %v9074
          %v9076 = vsel %vm7414, %v9075, %v9071
          %v9077 = vlaneseq
          %v9078 = vshrl.u32 %v9077, 7
          %v9079 = vsub.s32 %v7416, %v9078
          %v9080 = vrot.slane %v6471, %v9079
          %v9081 = vsel %vm7421, %v9080, %v9076
          %v9082 = vlaneseq
          %v9083 = vshrl.u32 %v9082, 7
          %v9084 = vsub.s32 %v7313, %v9083
          %v9085 = vrot.slane %v6473, %v9084
          %v9086 = vlaneseq
          %v9087 = vshrl.u32 %v9086, 7
          %v9088 = vsub.s32 %v7318, %v9087
          %v9089 = vrot.slane %v6475, %v9088
          %v9090 = vsel %vm7323, %v9089, %v9085
          %v9091 = vlaneseq
          %v9092 = vshrl.u32 %v9091, 7
          %v9093 = vsub.s32 %v7325, %v9092
          %v9094 = vrot.slane %v6477, %v9093
          %v9095 = vsel %vm7330, %v9094, %v9090
          %v9096 = vlaneseq
          %v9097 = vshrl.u32 %v9096, 7
          %v9098 = vsub.s32 %v7332, %v9097
          %v9099 = vrot.slane %v6479, %v9098
          %v9100 = vsel %vm7337, %v9099, %v9095
          %v9101 = vlaneseq
          %v9102 = vshrl.u32 %v9101, 7
          %v9103 = vsub.s32 %v7339, %v9102
          %v9104 = vrot.slane %v6481, %v9103
          %v9105 = vsel %vm7344, %v9104, %v9100
          %v9106 = vlaneseq
          %v9107 = vshrl.u32 %v9106, 7
          %v9108 = vsub.s32 %v7346, %v9107
          %v9109 = vrot.slane %v6483, %v9108
          %v9110 = vsel %vm7351, %v9109, %v9105
          %v9111 = vlaneseq
          %v9112 = vshrl.u32 %v9111, 7
          %v9113 = vsub.s32 %v7353, %v9112
          %v9114 = vrot.slane %v6485, %v9113
          %v9115 = vsel %vm7358, %v9114, %v9110
          %v9116 = vlaneseq
          %v9117 = vshrl.u32 %v9116, 7
          %v9118 = vsub.s32 %v7360, %v9117
          %v9119 = vrot.slane %v6487, %v9118
          %v9120 = vsel %vm7365, %v9119, %v9115
          %v9121 = vlaneseq
          %v9122 = vshrl.u32 %v9121, 7
          %v9123 = vsub.s32 %v7367, %v9122
          %v9124 = vrot.slane %v6489, %v9123
          %v9125 = vsel %vm7372, %v9124, %v9120
          %v9126 = vlaneseq
          %v9127 = vshrl.u32 %v9126, 7
          %v9128 = vsub.s32 %v7374, %v9127
          %v9129 = vrot.slane %v6491, %v9128
          %v9130 = vsel %vm7379, %v9129, %v9125
          %v9131 = vlaneseq
          %v9132 = vshrl.u32 %v9131, 7
          %v9133 = vsub.s32 %v7381, %v9132
          %v9134 = vrot.slane %v6493, %v9133
          %v9135 = vsel %vm7386, %v9134, %v9130
          %v9136 = vlaneseq
          %v9137 = vshrl.u32 %v9136, 7
          %v9138 = vsub.s32 %v7388, %v9137
          %v9139 = vrot.slane %v6495, %v9138
          %v9140 = vsel %vm7393, %v9139, %v9135
          %v9141 = vlaneseq
          %v9142 = vshrl.u32 %v9141, 7
          %v9143 = vsub.s32 %v7395, %v9142
          %v9144 = vrot.slane %v6497, %v9143
          %v9145 = vsel %vm7400, %v9144, %v9140
          %v9146 = vlaneseq
          %v9147 = vshrl.u32 %v9146, 7
          %v9148 = vsub.s32 %v7402, %v9147
          %v9149 = vrot.slane %v6499, %v9148
          %v9150 = vsel %vm7407, %v9149, %v9145
          %v9151 = vlaneseq
          %v9152 = vshrl.u32 %v9151, 7
          %v9153 = vsub.s32 %v7409, %v9152
          %v9154 = vrot.slane %v6501, %v9153
          %v9155 = vsel %vm7414, %v9154, %v9150
          %v9156 = vlaneseq
          %v9157 = vshrl.u32 %v9156, 7
          %v9158 = vsub.s32 %v7416, %v9157
          %v9159 = vrot.slane %v6503, %v9158
          %v9160 = vsel %vm7421, %v9159, %v9155
          %v9161 = vlaneseq
          %v9162 = vshrl.u32 %v9161, 7
          %v9163 = vsub.s32 %v7313, %v9162
          %v9164 = vrot.slane %v6505, %v9163
          %v9165 = vlaneseq
          %v9166 = vshrl.u32 %v9165, 7
          %v9167 = vsub.s32 %v7318, %v9166
          %v9168 = vrot.slane %v6507, %v9167
          %v9169 = vsel %vm7323, %v9168, %v9164
          %v9170 = vlaneseq
          %v9171 = vshrl.u32 %v9170, 7
          %v9172 = vsub.s32 %v7325, %v9171
          %v9173 = vrot.slane %v6509, %v9172
          %v9174 = vsel %vm7330, %v9173, %v9169
          %v9175 = vlaneseq
          %v9176 = vshrl.u32 %v9175, 7
          %v9177 = vsub.s32 %v7332, %v9176
          %v9178 = vrot.slane %v6511, %v9177
          %v9179 = vsel %vm7337, %v9178, %v9174
          %v9180 = vlaneseq
          %v9181 = vshrl.u32 %v9180, 7
          %v9182 = vsub.s32 %v7339, %v9181
          %v9183 = vrot.slane %v6513, %v9182
          %v9184 = vsel %vm7344, %v9183, %v9179
          %v9185 = vlaneseq
          %v9186 = vshrl.u32 %v9185, 7
          %v9187 = vsub.s32 %v7346, %v9186
          %v9188 = vrot.slane %v6515, %v9187
          %v9189 = vsel %vm7351, %v9188, %v9184
          %v9190 = vlaneseq
          %v9191 = vshrl.u32 %v9190, 7
          %v9192 = vsub.s32 %v7353, %v9191
          %v9193 = vrot.slane %v6517, %v9192
          %v9194 = vsel %vm7358, %v9193, %v9189
          %v9195 = vlaneseq
          %v9196 = vshrl.u32 %v9195, 7
          %v9197 = vsub.s32 %v7360, %v9196
          %v9198 = vrot.slane %v6519, %v9197
          %v9199 = vsel %vm7365, %v9198, %v9194
          %v9200 = vlaneseq
          %v9201 = vshrl.u32 %v9200, 7
          %v9202 = vsub.s32 %v7367, %v9201
          %v9203 = vrot.slane %v6521, %v9202
          %v9204 = vsel %vm7372, %v9203, %v9199
          %v9205 = vlaneseq
          %v9206 = vshrl.u32 %v9205, 7
          %v9207 = vsub.s32 %v7374, %v9206
          %v9208 = vrot.slane %v6523, %v9207
          %v9209 = vsel %vm7379, %v9208, %v9204
          %v9210 = vlaneseq
          %v9211 = vshrl.u32 %v9210, 7
          %v9212 = vsub.s32 %v7381, %v9211
          %v9213 = vrot.slane %v6525, %v9212
          %v9214 = vsel %vm7386, %v9213, %v9209
          %v9215 = vlaneseq
          %v9216 = vshrl.u32 %v9215, 7
          %v9217 = vsub.s32 %v7388, %v9216
          %v9218 = vrot.slane %v6527, %v9217
          %v9219 = vsel %vm7393, %v9218, %v9214
          %v9220 = vlaneseq
          %v9221 = vshrl.u32 %v9220, 7
          %v9222 = vsub.s32 %v7395, %v9221
          %v9223 = vrot.slane %v6529, %v9222
          %v9224 = vsel %vm7400, %v9223, %v9219
          %v9225 = vlaneseq
          %v9226 = vshrl.u32 %v9225, 7
          %v9227 = vsub.s32 %v7402, %v9226
          %v9228 = vrot.slane %v6531, %v9227
          %v9229 = vsel %vm7407, %v9228, %v9224
          %v9230 = vlaneseq
          %v9231 = vshrl.u32 %v9230, 7
          %v9232 = vsub.s32 %v7409, %v9231
          %v9233 = vrot.slane %v6533, %v9232
          %v9234 = vsel %vm7414, %v9233, %v9229
          %v9235 = vlaneseq
          %v9236 = vshrl.u32 %v9235, 7
          %v9237 = vsub.s32 %v7416, %v9236
          %v9238 = vrot.slane %v6535, %v9237
          %v9239 = vsel %vm7421, %v9238, %v9234
          %v9240 = vlaneseq
          %v9241 = vshrl.u32 %v9240, 7
          %v9242 = vsub.s32 %v7313, %v9241
          %v9243 = vrot.slane %v6537, %v9242
          %v9244 = vlaneseq
          %v9245 = vshrl.u32 %v9244, 7
          %v9246 = vsub.s32 %v7318, %v9245
          %v9247 = vrot.slane %v6539, %v9246
          %v9248 = vsel %vm7323, %v9247, %v9243
          %v9249 = vlaneseq
          %v9250 = vshrl.u32 %v9249, 7
          %v9251 = vsub.s32 %v7325, %v9250
          %v9252 = vrot.slane %v6541, %v9251
          %v9253 = vsel %vm7330, %v9252, %v9248
          %v9254 = vlaneseq
          %v9255 = vshrl.u32 %v9254, 7
          %v9256 = vsub.s32 %v7332, %v9255
          %v9257 = vrot.slane %v6543, %v9256
          %v9258 = vsel %vm7337, %v9257, %v9253
          %v9259 = vlaneseq
          %v9260 = vshrl.u32 %v9259, 7
          %v9261 = vsub.s32 %v7339, %v9260
          %v9262 = vrot.slane %v6545, %v9261
          %v9263 = vsel %vm7344, %v9262, %v9258
          %v9264 = vlaneseq
          %v9265 = vshrl.u32 %v9264, 7
          %v9266 = vsub.s32 %v7346, %v9265
          %v9267 = vrot.slane %v6547, %v9266
          %v9268 = vsel %vm7351, %v9267, %v9263
          %v9269 = vlaneseq
          %v9270 = vshrl.u32 %v9269, 7
          %v9271 = vsub.s32 %v7353, %v9270
          %v9272 = vrot.slane %v6549, %v9271
          %v9273 = vsel %vm7358, %v9272, %v9268
          %v9274 = vlaneseq
          %v9275 = vshrl.u32 %v9274, 7
          %v9276 = vsub.s32 %v7360, %v9275
          %v9277 = vrot.slane %v6551, %v9276
          %v9278 = vsel %vm7365, %v9277, %v9273
          %v9279 = vlaneseq
          %v9280 = vshrl.u32 %v9279, 7
          %v9281 = vsub.s32 %v7367, %v9280
          %v9282 = vrot.slane %v6553, %v9281
          %v9283 = vsel %vm7372, %v9282, %v9278
          %v9284 = vlaneseq
          %v9285 = vshrl.u32 %v9284, 7
          %v9286 = vsub.s32 %v7374, %v9285
          %v9287 = vrot.slane %v6555, %v9286
          %v9288 = vsel %vm7379, %v9287, %v9283
          %v9289 = vlaneseq
          %v9290 = vshrl.u32 %v9289, 7
          %v9291 = vsub.s32 %v7381, %v9290
          %v9292 = vrot.slane %v6557, %v9291
          %v9293 = vsel %vm7386, %v9292, %v9288
          %v9294 = vlaneseq
          %v9295 = vshrl.u32 %v9294, 7
          %v9296 = vsub.s32 %v7388, %v9295
          %v9297 = vrot.slane %v6559, %v9296
          %v9298 = vsel %vm7393, %v9297, %v9293
          %v9299 = vlaneseq
          %v9300 = vshrl.u32 %v9299, 7
          %v9301 = vsub.s32 %v7395, %v9300
          %v9302 = vrot.slane %v6561, %v9301
          %v9303 = vsel %vm7400, %v9302, %v9298
          %v9304 = vlaneseq
          %v9305 = vshrl.u32 %v9304, 7
          %v9306 = vsub.s32 %v7402, %v9305
          %v9307 = vrot.slane %v6563, %v9306
          %v9308 = vsel %vm7407, %v9307, %v9303
          %v9309 = vlaneseq
          %v9310 = vshrl.u32 %v9309, 7
          %v9311 = vsub.s32 %v7409, %v9310
          %v9312 = vrot.slane %v6565, %v9311
          %v9313 = vsel %vm7414, %v9312, %v9308
          %v9314 = vlaneseq
          %v9315 = vshrl.u32 %v9314, 7
          %v9316 = vsub.s32 %v7416, %v9315
          %v9317 = vrot.slane %v6567, %v9316
          %v9318 = vsel %vm7421, %v9317, %v9313
          %v9319 = vlaneseq
          %v9320 = vshrl.u32 %v9319, 7
          %v9321 = vsub.s32 %v7313, %v9320
          %v9322 = vrot.slane %v6569, %v9321
          %v9323 = vlaneseq
          %v9324 = vshrl.u32 %v9323, 7
          %v9325 = vsub.s32 %v7318, %v9324
          %v9326 = vrot.slane %v6571, %v9325
          %v9327 = vsel %vm7323, %v9326, %v9322
          %v9328 = vlaneseq
          %v9329 = vshrl.u32 %v9328, 7
          %v9330 = vsub.s32 %v7325, %v9329
          %v9331 = vrot.slane %v6573, %v9330
          %v9332 = vsel %vm7330, %v9331, %v9327
          %v9333 = vlaneseq
          %v9334 = vshrl.u32 %v9333, 7
          %v9335 = vsub.s32 %v7332, %v9334
          %v9336 = vrot.slane %v6575, %v9335
          %v9337 = vsel %vm7337, %v9336, %v9332
          %v9338 = vlaneseq
          %v9339 = vshrl.u32 %v9338, 7
          %v9340 = vsub.s32 %v7339, %v9339
          %v9341 = vrot.slane %v6577, %v9340
          %v9342 = vsel %vm7344, %v9341, %v9337
          %v9343 = vlaneseq
          %v9344 = vshrl.u32 %v9343, 7
          %v9345 = vsub.s32 %v7346, %v9344
          %v9346 = vrot.slane %v6579, %v9345
          %v9347 = vsel %vm7351, %v9346, %v9342
          %v9348 = vlaneseq
          %v9349 = vshrl.u32 %v9348, 7
          %v9350 = vsub.s32 %v7353, %v9349
          %v9351 = vrot.slane %v6581, %v9350
          %v9352 = vsel %vm7358, %v9351, %v9347
          %v9353 = vlaneseq
          %v9354 = vshrl.u32 %v9353, 7
          %v9355 = vsub.s32 %v7360, %v9354
          %v9356 = vrot.slane %v6583, %v9355
          %v9357 = vsel %vm7365, %v9356, %v9352
          %v9358 = vlaneseq
          %v9359 = vshrl.u32 %v9358, 7
          %v9360 = vsub.s32 %v7367, %v9359
          %v9361 = vrot.slane %v6585, %v9360
          %v9362 = vsel %vm7372, %v9361, %v9357
          %v9363 = vlaneseq
          %v9364 = vshrl.u32 %v9363, 7
          %v9365 = vsub.s32 %v7374, %v9364
          %v9366 = vrot.slane %v6587, %v9365
          %v9367 = vsel %vm7379, %v9366, %v9362
          %v9368 = vlaneseq
          %v9369 = vshrl.u32 %v9368, 7
          %v9370 = vsub.s32 %v7381, %v9369
          %v9371 = vrot.slane %v6589, %v9370
          %v9372 = vsel %vm7386, %v9371, %v9367
          %v9373 = vlaneseq
          %v9374 = vshrl.u32 %v9373, 7
          %v9375 = vsub.s32 %v7388, %v9374
          %v9376 = vrot.slane %v6591, %v9375
          %v9377 = vsel %vm7393, %v9376, %v9372
          %v9378 = vlaneseq
          %v9379 = vshrl.u32 %v9378, 7
          %v9380 = vsub.s32 %v7395, %v9379
          %v9381 = vrot.slane %v6593, %v9380
          %v9382 = vsel %vm7400, %v9381, %v9377
          %v9383 = vlaneseq
          %v9384 = vshrl.u32 %v9383, 7
          %v9385 = vsub.s32 %v7402, %v9384
          %v9386 = vrot.slane %v6595, %v9385
          %v9387 = vsel %vm7407, %v9386, %v9382
          %v9388 = vlaneseq
          %v9389 = vshrl.u32 %v9388, 7
          %v9390 = vsub.s32 %v7409, %v9389
          %v9391 = vrot.slane %v6597, %v9390
          %v9392 = vsel %vm7414, %v9391, %v9387
          %v9393 = vlaneseq
          %v9394 = vshrl.u32 %v9393, 7
          %v9395 = vsub.s32 %v7416, %v9394
          %v9396 = vrot.slane %v6599, %v9395
          %v9397 = vsel %vm7421, %v9396, %v9392
          %v9398 = vlaneseq
          %v9399 = vshrl.u32 %v9398, 7
          %v9400 = vsub.s32 %v7313, %v9399
          %v9401 = vrot.slane %v6601, %v9400
          %v9402 = vlaneseq
          %v9403 = vshrl.u32 %v9402, 7
          %v9404 = vsub.s32 %v7318, %v9403
          %v9405 = vrot.slane %v6603, %v9404
          %v9406 = vsel %vm7323, %v9405, %v9401
          %v9407 = vlaneseq
          %v9408 = vshrl.u32 %v9407, 7
          %v9409 = vsub.s32 %v7325, %v9408
          %v9410 = vrot.slane %v6605, %v9409
          %v9411 = vsel %vm7330, %v9410, %v9406
          %v9412 = vlaneseq
          %v9413 = vshrl.u32 %v9412, 7
          %v9414 = vsub.s32 %v7332, %v9413
          %v9415 = vrot.slane %v6607, %v9414
          %v9416 = vsel %vm7337, %v9415, %v9411
          %v9417 = vlaneseq
          %v9418 = vshrl.u32 %v9417, 7
          %v9419 = vsub.s32 %v7339, %v9418
          %v9420 = vrot.slane %v6609, %v9419
          %v9421 = vsel %vm7344, %v9420, %v9416
          %v9422 = vlaneseq
          %v9423 = vshrl.u32 %v9422, 7
          %v9424 = vsub.s32 %v7346, %v9423
          %v9425 = vrot.slane %v6611, %v9424
          %v9426 = vsel %vm7351, %v9425, %v9421
          %v9427 = vlaneseq
          %v9428 = vshrl.u32 %v9427, 7
          %v9429 = vsub.s32 %v7353, %v9428
          %v9430 = vrot.slane %v6613, %v9429
          %v9431 = vsel %vm7358, %v9430, %v9426
          %v9432 = vlaneseq
          %v9433 = vshrl.u32 %v9432, 7
          %v9434 = vsub.s32 %v7360, %v9433
          %v9435 = vrot.slane %v6615, %v9434
          %v9436 = vsel %vm7365, %v9435, %v9431
          %v9437 = vlaneseq
          %v9438 = vshrl.u32 %v9437, 7
          %v9439 = vsub.s32 %v7367, %v9438
          %v9440 = vrot.slane %v6617, %v9439
          %v9441 = vsel %vm7372, %v9440, %v9436
          %v9442 = vlaneseq
          %v9443 = vshrl.u32 %v9442, 7
          %v9444 = vsub.s32 %v7374, %v9443
          %v9445 = vrot.slane %v6619, %v9444
          %v9446 = vsel %vm7379, %v9445, %v9441
          %v9447 = vlaneseq
          %v9448 = vshrl.u32 %v9447, 7
          %v9449 = vsub.s32 %v7381, %v9448
          %v9450 = vrot.slane %v6621, %v9449
          %v9451 = vsel %vm7386, %v9450, %v9446
          %v9452 = vlaneseq
          %v9453 = vshrl.u32 %v9452, 7
          %v9454 = vsub.s32 %v7388, %v9453
          %v9455 = vrot.slane %v6623, %v9454
          %v9456 = vsel %vm7393, %v9455, %v9451
          %v9457 = vlaneseq
          %v9458 = vshrl.u32 %v9457, 7
          %v9459 = vsub.s32 %v7395, %v9458
          %v9460 = vrot.slane %v6625, %v9459
          %v9461 = vsel %vm7400, %v9460, %v9456
          %v9462 = vlaneseq
          %v9463 = vshrl.u32 %v9462, 7
          %v9464 = vsub.s32 %v7402, %v9463
          %v9465 = vrot.slane %v6627, %v9464
          %v9466 = vsel %vm7407, %v9465, %v9461
          %v9467 = vlaneseq
          %v9468 = vshrl.u32 %v9467, 7
          %v9469 = vsub.s32 %v7409, %v9468
          %v9470 = vrot.slane %v6629, %v9469
          %v9471 = vsel %vm7414, %v9470, %v9466
          %v9472 = vlaneseq
          %v9473 = vshrl.u32 %v9472, 7
          %v9474 = vsub.s32 %v7416, %v9473
          %v9475 = vrot.slane %v6631, %v9474
          %v9476 = vsel %vm7421, %v9475, %v9471
          %v9477 = vlaneseq
          %v9478 = vshrl.u32 %v9477, 7
          %v9479 = vsub.s32 %v7313, %v9478
          %v9480 = vrot.slane %v6633, %v9479
          %v9481 = vlaneseq
          %v9482 = vshrl.u32 %v9481, 7
          %v9483 = vsub.s32 %v7318, %v9482
          %v9484 = vrot.slane %v6635, %v9483
          %v9485 = vsel %vm7323, %v9484, %v9480
          %v9486 = vlaneseq
          %v9487 = vshrl.u32 %v9486, 7
          %v9488 = vsub.s32 %v7325, %v9487
          %v9489 = vrot.slane %v6637, %v9488
          %v9490 = vsel %vm7330, %v9489, %v9485
          %v9491 = vlaneseq
          %v9492 = vshrl.u32 %v9491, 7
          %v9493 = vsub.s32 %v7332, %v9492
          %v9494 = vrot.slane %v6639, %v9493
          %v9495 = vsel %vm7337, %v9494, %v9490
          %v9496 = vlaneseq
          %v9497 = vshrl.u32 %v9496, 7
          %v9498 = vsub.s32 %v7339, %v9497
          %v9499 = vrot.slane %v6641, %v9498
          %v9500 = vsel %vm7344, %v9499, %v9495
          %v9501 = vlaneseq
          %v9502 = vshrl.u32 %v9501, 7
          %v9503 = vsub.s32 %v7346, %v9502
          %v9504 = vrot.slane %v6643, %v9503
          %v9505 = vsel %vm7351, %v9504, %v9500
          %v9506 = vlaneseq
          %v9507 = vshrl.u32 %v9506, 7
          %v9508 = vsub.s32 %v7353, %v9507
          %v9509 = vrot.slane %v6645, %v9508
          %v9510 = vsel %vm7358, %v9509, %v9505
          %v9511 = vlaneseq
          %v9512 = vshrl.u32 %v9511, 7
          %v9513 = vsub.s32 %v7360, %v9512
          %v9514 = vrot.slane %v6647, %v9513
          %v9515 = vsel %vm7365, %v9514, %v9510
          %v9516 = vlaneseq
          %v9517 = vshrl.u32 %v9516, 7
          %v9518 = vsub.s32 %v7367, %v9517
          %v9519 = vrot.slane %v6649, %v9518
          %v9520 = vsel %vm7372, %v9519, %v9515
          %v9521 = vlaneseq
          %v9522 = vshrl.u32 %v9521, 7
          %v9523 = vsub.s32 %v7374, %v9522
          %v9524 = vrot.slane %v6651, %v9523
          %v9525 = vsel %vm7379, %v9524, %v9520
          %v9526 = vlaneseq
          %v9527 = vshrl.u32 %v9526, 7
          %v9528 = vsub.s32 %v7381, %v9527
          %v9529 = vrot.slane %v6653, %v9528
          %v9530 = vsel %vm7386, %v9529, %v9525
          %v9531 = vlaneseq
          %v9532 = vshrl.u32 %v9531, 7
          %v9533 = vsub.s32 %v7388, %v9532
          %v9534 = vrot.slane %v6655, %v9533
          %v9535 = vsel %vm7393, %v9534, %v9530
          %v9536 = vlaneseq
          %v9537 = vshrl.u32 %v9536, 7
          %v9538 = vsub.s32 %v7395, %v9537
          %v9539 = vrot.slane %v6657, %v9538
          %v9540 = vsel %vm7400, %v9539, %v9535
          %v9541 = vlaneseq
          %v9542 = vshrl.u32 %v9541, 7
          %v9543 = vsub.s32 %v7402, %v9542
          %v9544 = vrot.slane %v6659, %v9543
          %v9545 = vsel %vm7407, %v9544, %v9540
          %v9546 = vlaneseq
          %v9547 = vshrl.u32 %v9546, 7
          %v9548 = vsub.s32 %v7409, %v9547
          %v9549 = vrot.slane %v6661, %v9548
          %v9550 = vsel %vm7414, %v9549, %v9545
          %v9551 = vlaneseq
          %v9552 = vshrl.u32 %v9551, 7
          %v9553 = vsub.s32 %v7416, %v9552
          %v9554 = vrot.slane %v6663, %v9553
          %v9555 = vsel %vm7421, %v9554, %v9550
          %v9556 = vlaneseq
          %v9557 = vshrl.u32 %v9556, 7
          %v9558 = vsub.s32 %v7313, %v9557
          %v9559 = vrot.slane %v6665, %v9558
          %v9560 = vlaneseq
          %v9561 = vshrl.u32 %v9560, 7
          %v9562 = vsub.s32 %v7318, %v9561
          %v9563 = vrot.slane %v6667, %v9562
          %v9564 = vsel %vm7323, %v9563, %v9559
          %v9565 = vlaneseq
          %v9566 = vshrl.u32 %v9565, 7
          %v9567 = vsub.s32 %v7325, %v9566
          %v9568 = vrot.slane %v6669, %v9567
          %v9569 = vsel %vm7330, %v9568, %v9564
          %v9570 = vlaneseq
          %v9571 = vshrl.u32 %v9570, 7
          %v9572 = vsub.s32 %v7332, %v9571
          %v9573 = vrot.slane %v6671, %v9572
          %v9574 = vsel %vm7337, %v9573, %v9569
          %v9575 = vlaneseq
          %v9576 = vshrl.u32 %v9575, 7
          %v9577 = vsub.s32 %v7339, %v9576
          %v9578 = vrot.slane %v6673, %v9577
          %v9579 = vsel %vm7344, %v9578, %v9574
          %v9580 = vlaneseq
          %v9581 = vshrl.u32 %v9580, 7
          %v9582 = vsub.s32 %v7346, %v9581
          %v9583 = vrot.slane %v6675, %v9582
          %v9584 = vsel %vm7351, %v9583, %v9579
          %v9585 = vlaneseq
          %v9586 = vshrl.u32 %v9585, 7
          %v9587 = vsub.s32 %v7353, %v9586
          %v9588 = vrot.slane %v6677, %v9587
          %v9589 = vsel %vm7358, %v9588, %v9584
          %v9590 = vlaneseq
          %v9591 = vshrl.u32 %v9590, 7
          %v9592 = vsub.s32 %v7360, %v9591
          %v9593 = vrot.slane %v6679, %v9592
          %v9594 = vsel %vm7365, %v9593, %v9589
          %v9595 = vlaneseq
          %v9596 = vshrl.u32 %v9595, 7
          %v9597 = vsub.s32 %v7367, %v9596
          %v9598 = vrot.slane %v6681, %v9597
          %v9599 = vsel %vm7372, %v9598, %v9594
          %v9600 = vlaneseq
          %v9601 = vshrl.u32 %v9600, 7
          %v9602 = vsub.s32 %v7374, %v9601
          %v9603 = vrot.slane %v6683, %v9602
          %v9604 = vsel %vm7379, %v9603, %v9599
          %v9605 = vlaneseq
          %v9606 = vshrl.u32 %v9605, 7
          %v9607 = vsub.s32 %v7381, %v9606
          %v9608 = vrot.slane %v6685, %v9607
          %v9609 = vsel %vm7386, %v9608, %v9604
          %v9610 = vlaneseq
          %v9611 = vshrl.u32 %v9610, 7
          %v9612 = vsub.s32 %v7388, %v9611
          %v9613 = vrot.slane %v6687, %v9612
          %v9614 = vsel %vm7393, %v9613, %v9609
          %v9615 = vlaneseq
          %v9616 = vshrl.u32 %v9615, 7
          %v9617 = vsub.s32 %v7395, %v9616
          %v9618 = vrot.slane %v6689, %v9617
          %v9619 = vsel %vm7400, %v9618, %v9614
          %v9620 = vlaneseq
          %v9621 = vshrl.u32 %v9620, 7
          %v9622 = vsub.s32 %v7402, %v9621
          %v9623 = vrot.slane %v6691, %v9622
          %v9624 = vsel %vm7407, %v9623, %v9619
          %v9625 = vlaneseq
          %v9626 = vshrl.u32 %v9625, 7
          %v9627 = vsub.s32 %v7409, %v9626
          %v9628 = vrot.slane %v6693, %v9627
          %v9629 = vsel %vm7414, %v9628, %v9624
          %v9630 = vlaneseq
          %v9631 = vshrl.u32 %v9630, 7
          %v9632 = vsub.s32 %v7416, %v9631
          %v9633 = vrot.slane %v6695, %v9632
          %v9634 = vsel %vm7421, %v9633, %v9629
          %v9635 = vlaneseq
          %v9636 = vshrl.u32 %v9635, 7
          %v9637 = vsub.s32 %v7313, %v9636
          %v9638 = vrot.slane %v6697, %v9637
          %v9639 = vlaneseq
          %v9640 = vshrl.u32 %v9639, 7
          %v9641 = vsub.s32 %v7318, %v9640
          %v9642 = vrot.slane %v6699, %v9641
          %v9643 = vsel %vm7323, %v9642, %v9638
          %v9644 = vlaneseq
          %v9645 = vshrl.u32 %v9644, 7
          %v9646 = vsub.s32 %v7325, %v9645
          %v9647 = vrot.slane %v6701, %v9646
          %v9648 = vsel %vm7330, %v9647, %v9643
          %v9649 = vlaneseq
          %v9650 = vshrl.u32 %v9649, 7
          %v9651 = vsub.s32 %v7332, %v9650
          %v9652 = vrot.slane %v6703, %v9651
          %v9653 = vsel %vm7337, %v9652, %v9648
          %v9654 = vlaneseq
          %v9655 = vshrl.u32 %v9654, 7
          %v9656 = vsub.s32 %v7339, %v9655
          %v9657 = vrot.slane %v6705, %v9656
          %v9658 = vsel %vm7344, %v9657, %v9653
          %v9659 = vlaneseq
          %v9660 = vshrl.u32 %v9659, 7
          %v9661 = vsub.s32 %v7346, %v9660
          %v9662 = vrot.slane %v6707, %v9661
          %v9663 = vsel %vm7351, %v9662, %v9658
          %v9664 = vlaneseq
          %v9665 = vshrl.u32 %v9664, 7
          %v9666 = vsub.s32 %v7353, %v9665
          %v9667 = vrot.slane %v6709, %v9666
          %v9668 = vsel %vm7358, %v9667, %v9663
          %v9669 = vlaneseq
          %v9670 = vshrl.u32 %v9669, 7
          %v9671 = vsub.s32 %v7360, %v9670
          %v9672 = vrot.slane %v6711, %v9671
          %v9673 = vsel %vm7365, %v9672, %v9668
          %v9674 = vlaneseq
          %v9675 = vshrl.u32 %v9674, 7
          %v9676 = vsub.s32 %v7367, %v9675
          %v9677 = vrot.slane %v6713, %v9676
          %v9678 = vsel %vm7372, %v9677, %v9673
          %v9679 = vlaneseq
          %v9680 = vshrl.u32 %v9679, 7
          %v9681 = vsub.s32 %v7374, %v9680
          %v9682 = vrot.slane %v6715, %v9681
          %v9683 = vsel %vm7379, %v9682, %v9678
          %v9684 = vlaneseq
          %v9685 = vshrl.u32 %v9684, 7
          %v9686 = vsub.s32 %v7381, %v9685
          %v9687 = vrot.slane %v6717, %v9686
          %v9688 = vsel %vm7386, %v9687, %v9683
          %v9689 = vlaneseq
          %v9690 = vshrl.u32 %v9689, 7
          %v9691 = vsub.s32 %v7388, %v9690
          %v9692 = vrot.slane %v6719, %v9691
          %v9693 = vsel %vm7393, %v9692, %v9688
          %v9694 = vlaneseq
          %v9695 = vshrl.u32 %v9694, 7
          %v9696 = vsub.s32 %v7395, %v9695
          %v9697 = vrot.slane %v6721, %v9696
          %v9698 = vsel %vm7400, %v9697, %v9693
          %v9699 = vlaneseq
          %v9700 = vshrl.u32 %v9699, 7
          %v9701 = vsub.s32 %v7402, %v9700
          %v9702 = vrot.slane %v6723, %v9701
          %v9703 = vsel %vm7407, %v9702, %v9698
          %v9704 = vlaneseq
          %v9705 = vshrl.u32 %v9704, 7
          %v9706 = vsub.s32 %v7409, %v9705
          %v9707 = vrot.slane %v6725, %v9706
          %v9708 = vsel %vm7414, %v9707, %v9703
          %v9709 = vlaneseq
          %v9710 = vshrl.u32 %v9709, 7
          %v9711 = vsub.s32 %v7416, %v9710
          %v9712 = vrot.slane %v6727, %v9711
          %v9713 = vsel %vm7421, %v9712, %v9708
          %v9714 = vlaneseq
          %v9715 = vshrl.u32 %v9714, 7
          %v9716 = vsub.s32 %v7313, %v9715
          %v9717 = vrot.slane %v6729, %v9716
          %v9718 = vlaneseq
          %v9719 = vshrl.u32 %v9718, 7
          %v9720 = vsub.s32 %v7318, %v9719
          %v9721 = vrot.slane %v6731, %v9720
          %v9722 = vsel %vm7323, %v9721, %v9717
          %v9723 = vlaneseq
          %v9724 = vshrl.u32 %v9723, 7
          %v9725 = vsub.s32 %v7325, %v9724
          %v9726 = vrot.slane %v6733, %v9725
          %v9727 = vsel %vm7330, %v9726, %v9722
          %v9728 = vlaneseq
          %v9729 = vshrl.u32 %v9728, 7
          %v9730 = vsub.s32 %v7332, %v9729
          %v9731 = vrot.slane %v6735, %v9730
          %v9732 = vsel %vm7337, %v9731, %v9727
          %v9733 = vlaneseq
          %v9734 = vshrl.u32 %v9733, 7
          %v9735 = vsub.s32 %v7339, %v9734
          %v9736 = vrot.slane %v6737, %v9735
          %v9737 = vsel %vm7344, %v9736, %v9732
          %v9738 = vlaneseq
          %v9739 = vshrl.u32 %v9738, 7
          %v9740 = vsub.s32 %v7346, %v9739
          %v9741 = vrot.slane %v6739, %v9740
          %v9742 = vsel %vm7351, %v9741, %v9737
          %v9743 = vlaneseq
          %v9744 = vshrl.u32 %v9743, 7
          %v9745 = vsub.s32 %v7353, %v9744
          %v9746 = vrot.slane %v6741, %v9745
          %v9747 = vsel %vm7358, %v9746, %v9742
          %v9748 = vlaneseq
          %v9749 = vshrl.u32 %v9748, 7
          %v9750 = vsub.s32 %v7360, %v9749
          %v9751 = vrot.slane %v6743, %v9750
          %v9752 = vsel %vm7365, %v9751, %v9747
          %v9753 = vlaneseq
          %v9754 = vshrl.u32 %v9753, 7
          %v9755 = vsub.s32 %v7367, %v9754
          %v9756 = vrot.slane %v6745, %v9755
          %v9757 = vsel %vm7372, %v9756, %v9752
          %v9758 = vlaneseq
          %v9759 = vshrl.u32 %v9758, 7
          %v9760 = vsub.s32 %v7374, %v9759
          %v9761 = vrot.slane %v6747, %v9760
          %v9762 = vsel %vm7379, %v9761, %v9757
          %v9763 = vlaneseq
          %v9764 = vshrl.u32 %v9763, 7
          %v9765 = vsub.s32 %v7381, %v9764
          %v9766 = vrot.slane %v6749, %v9765
          %v9767 = vsel %vm7386, %v9766, %v9762
          %v9768 = vlaneseq
          %v9769 = vshrl.u32 %v9768, 7
          %v9770 = vsub.s32 %v7388, %v9769
          %v9771 = vrot.slane %v6751, %v9770
          %v9772 = vsel %vm7393, %v9771, %v9767
          %v9773 = vlaneseq
          %v9774 = vshrl.u32 %v9773, 7
          %v9775 = vsub.s32 %v7395, %v9774
          %v9776 = vrot.slane %v6753, %v9775
          %v9777 = vsel %vm7400, %v9776, %v9772
          %v9778 = vlaneseq
          %v9779 = vshrl.u32 %v9778, 7
          %v9780 = vsub.s32 %v7402, %v9779
          %v9781 = vrot.slane %v6755, %v9780
          %v9782 = vsel %vm7407, %v9781, %v9777
          %v9783 = vlaneseq
          %v9784 = vshrl.u32 %v9783, 7
          %v9785 = vsub.s32 %v7409, %v9784
          %v9786 = vrot.slane %v6757, %v9785
          %v9787 = vsel %vm7414, %v9786, %v9782
          %v9788 = vlaneseq
          %v9789 = vshrl.u32 %v9788, 7
          %v9790 = vsub.s32 %v7416, %v9789
          %v9791 = vrot.slane %v6759, %v9790
          %v9792 = vsel %vm7421, %v9791, %v9787
          %v9793 = vlaneseq
          %v9794 = vshrl.u32 %v9793, 7
          %v9795 = vsub.s32 %v7313, %v9794
          %v9796 = vrot.slane %v6761, %v9795
          %v9797 = vlaneseq
          %v9798 = vshrl.u32 %v9797, 7
          %v9799 = vsub.s32 %v7318, %v9798
          %v9800 = vrot.slane %v6763, %v9799
          %v9801 = vsel %vm7323, %v9800, %v9796
          %v9802 = vlaneseq
          %v9803 = vshrl.u32 %v9802, 7
          %v9804 = vsub.s32 %v7325, %v9803
          %v9805 = vrot.slane %v6765, %v9804
          %v9806 = vsel %vm7330, %v9805, %v9801
          %v9807 = vlaneseq
          %v9808 = vshrl.u32 %v9807, 7
          %v9809 = vsub.s32 %v7332, %v9808
          %v9810 = vrot.slane %v6767, %v9809
          %v9811 = vsel %vm7337, %v9810, %v9806
          %v9812 = vlaneseq
          %v9813 = vshrl.u32 %v9812, 7
          %v9814 = vsub.s32 %v7339, %v9813
          %v9815 = vrot.slane %v6769, %v9814
          %v9816 = vsel %vm7344, %v9815, %v9811
          %v9817 = vlaneseq
          %v9818 = vshrl.u32 %v9817, 7
          %v9819 = vsub.s32 %v7346, %v9818
          %v9820 = vrot.slane %v6771, %v9819
          %v9821 = vsel %vm7351, %v9820, %v9816
          %v9822 = vlaneseq
          %v9823 = vshrl.u32 %v9822, 7
          %v9824 = vsub.s32 %v7353, %v9823
          %v9825 = vrot.slane %v6773, %v9824
          %v9826 = vsel %vm7358, %v9825, %v9821
          %v9827 = vlaneseq
          %v9828 = vshrl.u32 %v9827, 7
          %v9829 = vsub.s32 %v7360, %v9828
          %v9830 = vrot.slane %v6775, %v9829
          %v9831 = vsel %vm7365, %v9830, %v9826
          %v9832 = vlaneseq
          %v9833 = vshrl.u32 %v9832, 7
          %v9834 = vsub.s32 %v7367, %v9833
          %v9835 = vrot.slane %v6777, %v9834
          %v9836 = vsel %vm7372, %v9835, %v9831
          %v9837 = vlaneseq
          %v9838 = vshrl.u32 %v9837, 7
          %v9839 = vsub.s32 %v7374, %v9838
          %v9840 = vrot.slane %v6779, %v9839
          %v9841 = vsel %vm7379, %v9840, %v9836
          %v9842 = vlaneseq
          %v9843 = vshrl.u32 %v9842, 7
          %v9844 = vsub.s32 %v7381, %v9843
          %v9845 = vrot.slane %v6781, %v9844
          %v9846 = vsel %vm7386, %v9845, %v9841
          %v9847 = vlaneseq
          %v9848 = vshrl.u32 %v9847, 7
          %v9849 = vsub.s32 %v7388, %v9848
          %v9850 = vrot.slane %v6783, %v9849
          %v9851 = vsel %vm7393, %v9850, %v9846
          %v9852 = vlaneseq
          %v9853 = vshrl.u32 %v9852, 7
          %v9854 = vsub.s32 %v7395, %v9853
          %v9855 = vrot.slane %v6785, %v9854
          %v9856 = vsel %vm7400, %v9855, %v9851
          %v9857 = vlaneseq
          %v9858 = vshrl.u32 %v9857, 7
          %v9859 = vsub.s32 %v7402, %v9858
          %v9860 = vrot.slane %v6787, %v9859
          %v9861 = vsel %vm7407, %v9860, %v9856
          %v9862 = vlaneseq
          %v9863 = vshrl.u32 %v9862, 7
          %v9864 = vsub.s32 %v7409, %v9863
          %v9865 = vrot.slane %v6789, %v9864
          %v9866 = vsel %vm7414, %v9865, %v9861
          %v9867 = vlaneseq
          %v9868 = vshrl.u32 %v9867, 7
          %v9869 = vsub.s32 %v7416, %v9868
          %v9870 = vrot.slane %v6791, %v9869
          %v9871 = vsel %vm7421, %v9870, %v9866
          %vm9872 = vcmask 1041409
          %v9873 = vsel %vm9872, %v7501, %v7422
          %vm9874 = vcmask 1042434
          %v9875 = vsel %vm9874, %v7580, %v9873
          %vm9876 = vcmask 1043459
          %v9877 = vsel %vm9876, %v7659, %v9875
          %vm9878 = vcmask 1044484
          %v9879 = vsel %vm9878, %v7738, %v9877
          %vm9880 = vcmask 1045509
          %v9881 = vsel %vm9880, %v7817, %v9879
          %vm9882 = vcmask 1046534
          %v9883 = vsel %vm9882, %v7896, %v9881
          %vm9884 = vcmask 1047559
          %v9885 = vsel %vm9884, %v7975, %v9883
          %v9886 = vsel %vm9872, %v8133, %v8054
          %v9887 = vsel %vm9874, %v8212, %v9886
          %v9888 = vsel %vm9876, %v8291, %v9887
          %v9889 = vsel %vm9878, %v8370, %v9888
          %v9890 = vsel %vm9880, %v8449, %v9889
          %v9891 = vsel %vm9882, %v8528, %v9890
          %v9892 = vsel %vm9884, %v8607, %v9891
          %v9893 = vsel %vm9872, %v8765, %v8686
          %v9894 = vsel %vm9874, %v8844, %v9893
          %v9895 = vsel %vm9876, %v8923, %v9894
          %v9896 = vsel %vm9878, %v9002, %v9895
          %v9897 = vsel %vm9880, %v9081, %v9896
          %v9898 = vsel %vm9882, %v9160, %v9897
          %v9899 = vsel %vm9884, %v9239, %v9898
          %v9900 = vsel %vm9872, %v9397, %v9318
          %v9901 = vsel %vm9874, %v9476, %v9900
          %v9902 = vsel %vm9876, %v9555, %v9901
          %v9903 = vsel %vm9878, %v9634, %v9902
          %v9904 = vsel %vm9880, %v9713, %v9903
          %v9905 = vsel %vm9882, %v9792, %v9904
          %v9906 = vsel %vm9884, %v9871, %v9905
          %v9911 = vsel %vm6796, %v9885, -1e+30
          %v9912 = vsel %vm6797, %v9892, -1e+30
          %v9913 = vsel %vm6798, %v9899, -1e+30
          %v9914 = vsel %vm6799, %v9906, -1e+30
          %v9915 = vld [vmem:[#allocation3] sm:$0xff]
          %v9916 = vld [vmem:[#allocation3 + $0x8] sm:$0xff]
          %v9917 = vld [vmem:[#allocation3 + $0x10] sm:$0xff]
          %v9918 = vld [vmem:[#allocation3 + $0x18] sm:$0xff]
          %9919 = vmax.xlane.f32.xlu0 %v9911
          %v9920 = vpop.xlane.xlu0 %9919
          %9921 = vmax.xlane.f32.xlu0 %v9912
          %v9922 = vpop.xlane.xlu0 %9921
          %9923 = vmax.xlane.f32.xlu0 %v9913
          %v9924 = vpop.xlane.xlu0 %9923
          %9925 = vmax.xlane.f32.xlu0 %v9914
          %v9926 = vpop.xlane.xlu0 %9925
          %v9927 = vmax.f32 %v9915, %v9920
          %v9928 = vmax.f32 %v9916, %v9922
          %v9929 = vmax.f32 %v9917, %v9924
          %v9930 = vmax.f32 %v9918, %v9926
          %v9931 = vsub.f32 %v9915, %v9927
          %v9932 = vsub.f32 %v9916, %v9928
          %v9933 = vsub.f32 %v9917, %v9929
          %v9934 = vsub.f32 %v9918, %v9930
          %v9935 = vmul.f32 %v9931, 1.442695
          %v9936 = vpow.pop %v9935
          %v9937 = vmul.f32 %v9932, 1.442695
          %v9938 = vpow.pop %v9937
          %v9939 = vmul.f32 %v9933, 1.442695
          %v9940 = vpow.pop %v9939
          %v9941 = vmul.f32 %v9934, 1.442695
          %v9942 = vpow.pop %v9941
          %9944 = vset.pattern.permute.xlu0 0
          %9945 = vperm.xlu0 %9944, %v9927
          %v9946 = vpop.permute.xlu0 %9945
          %9949 = vset.pattern.permute.xlu0 0
          %9950 = vperm.xlu0 %9949, %v9928
          %v9951 = vpop.permute.xlu0 %9950
          %9954 = vset.pattern.permute.xlu0 0
          %9955 = vperm.xlu0 %9954, %v9929
          %v9956 = vpop.permute.xlu0 %9955
          %9959 = vset.pattern.permute.xlu0 0
          %9960 = vperm.xlu0 %9959, %v9930
          %v9961 = vpop.permute.xlu0 %9960
          %v9963 = vsub.f32 %v9911, %v9946
          %v9964 = vsub.f32 %v9912, %v9951
          %v9965 = vsub.f32 %v9913, %v9956
          %v9966 = vsub.f32 %v9914, %v9961
          %v9967 = vmul.f32 %v9963, 1.442695
          %v9968 = vpow.pop %v9967
          %v9969 = vmul.f32 %v9964, 1.442695
          %v9970 = vpow.pop %v9969
          %v9971 = vmul.f32 %v9965, 1.442695
          %v9972 = vpow.pop %v9971
          %v9973 = vmul.f32 %v9966, 1.442695
          %v9974 = vpow.pop %v9973
          %v9975 = vmul.f32 %v9968, %v6792
          %v9976 = vmul.f32 %v9970, %v6793
          %v9977 = vmul.f32 %v9972, %v6794
          %v9978 = vmul.f32 %v9974, %v6795
          %v9979 = vld [vmem:[#allocation4] sm:$0xff]
          %v9980 = vld [vmem:[#allocation4 + $0x8] sm:$0xff]
          %v9981 = vld [vmem:[#allocation4 + $0x10] sm:$0xff]
          %v9982 = vld [vmem:[#allocation4 + $0x18] sm:$0xff]
          %v9983 = vmul.f32 %v9936, %v9979
          %v9984 = vmul.f32 %v9938, %v9980
          %v9985 = vmul.f32 %v9940, %v9981
          %v9986 = vmul.f32 %v9942, %v9982
          %9987 = vadd.xlane.f32.xlu0 %v9975
          %v9988 = vpop.xlane.xlu0 %9987
          %9989 = vadd.xlane.f32.xlu0 %v9976
          %v9990 = vpop.xlane.xlu0 %9989
          %9991 = vadd.xlane.f32.xlu0 %v9977
          %v9992 = vpop.xlane.xlu0 %9991
          %9993 = vadd.xlane.f32.xlu0 %v9978
          %v9994 = vpop.xlane.xlu0 %9993
          %v9995 = vadd.f32 %v9983, %v9988
          %v9996 = vadd.f32 %v9984, %v9990
          %v9997 = vadd.f32 %v9985, %v9992
          %v9998 = vadd.f32 %v9986, %v9994
          %vm9999 = vcmask 7168
          %10000 = vst.msk [vmem:[#allocation4] sm:$0xff] %vm9999, %v9995
          %10001 = vst.msk [vmem:[#allocation4 + $0x8] sm:$0xff] %vm9999, %v9996
          %10002 = vst.msk [vmem:[#allocation4 + $0x10] sm:$0xff] %vm9999, %v9997
          %10003 = vst.msk [vmem:[#allocation4 + $0x18] sm:$0xff] %vm9999, %v9998
          %v10004 = vld [vmem:[#allocation5] sm:$0xff]
          %v10005 = vld [vmem:[#allocation5 + $0x8] sm:$0xff]
          %v10006 = vld [vmem:[#allocation5 + $0x10] sm:$0xff]
          %v10007 = vld [vmem:[#allocation5 + $0x18] sm:$0xff]
          %10009 = vset.pattern.permute.xlu0 0
          %10010 = vperm.xlu0 %10009, %v9936
          %v10011 = vpop.permute.xlu0 %10010
          %10014 = vset.pattern.permute.xlu0 0
          %10015 = vperm.xlu0 %10014, %v9938
          %v10016 = vpop.permute.xlu0 %10015
          %10019 = vset.pattern.permute.xlu0 0
          %10020 = vperm.xlu0 %10019, %v9940
          %v10021 = vpop.permute.xlu0 %10020
          %10024 = vset.pattern.permute.xlu0 0
          %10025 = vperm.xlu0 %10024, %v9942
          %v10026 = vpop.permute.xlu0 %10025
          %v10028 = vmul.f32 %v10011, %v10004
          %v10029 = vmul.f32 %v10016, %v10005
          %v10030 = vmul.f32 %v10021, %v10006
          %v10031 = vmul.f32 %v10026, %v10007
          %v10032 = vpack.c.bf16 %v9976, %v9975
          %v10033 = vpack.c.bf16 %v9978, %v9977
          %v10034 = vpack.c.bf16 %v1206, %v1202
          %v10035 = vpack.c.bf16 %v1216, %v1212
          %v10036 = vpack.c.bf16 %v1226, %v1222
          %v10037 = vpack.c.bf16 %v1236, %v1232
          %v10038 = vpack.c.bf16 %v1246, %v1242
          %v10039 = vpack.c.bf16 %v1256, %v1252
          %v10040 = vpack.c.bf16 %v1266, %v1262
          %v10041 = vpack.c.bf16 %v1276, %v1272
          %10042 = vmatprep.subr.bf16.mxu0 0
          %10043 = vmatpush1.bf16.msra.mxu0 %v10041
          %10044 = vmatprep.subr.bf16.mxu0 0
          %10045 = vmatpush1.bf16.msra.mxu0 %v10040
          %10046 = vmatprep.subr.bf16.mxu0 0
          %10047 = vmatpush1.bf16.msra.mxu0 %v10039
          %10048 = vmatprep.subr.bf16.mxu0 0
          %10049 = vmatpush1.bf16.msra.mxu0 %v10038
          %10050 = vmatprep.subr.bf16.mxu0 0
          %10051 = vmatpush1.bf16.msra.mxu0 %v10037
          %10052 = vmatprep.subr.bf16.mxu0 0
          %10053 = vmatpush1.bf16.msra.mxu0 %v10036
          %10054 = vmatprep.subr.bf16.mxu0 0
          %10055 = vmatpush1.bf16.msra.mxu0 %v10035
          %10056 = vmatprep.subr.bf16.mxu0 0
          %10057 = vmatpush1.bf16.msra.mxu0 %v10034
          %10058 = vmatprep.subr.bf16.mxu0 0
          %10059 = vmatpush2.bf16.msra.mxu0 0
          %10060 = vmatprep.subr.bf16.mxu0 0
          %10061 = vmatpush2.bf16.msra.mxu0 0
          %10062 = vmatprep.subr.bf16.mxu0 0
          %10063 = vmatpush2.bf16.msra.mxu0 0
          %10064 = vmatprep.subr.bf16.mxu0 0
          %10065 = vmatpush2.bf16.msra.mxu0 0
          %10066 = vmatprep.subr.bf16.mxu0 0
          %10067 = vmatpush2.bf16.msra.mxu0 0
          %10068 = vmatprep.subr.bf16.mxu0 0
          %10069 = vmatpush2.bf16.msra.mxu0 0
          %10070 = vmatprep.subr.bf16.mxu0 0
          %10071 = vmatpush2.bf16.msra.mxu0 0
          %10072 = vmatprep.subr.bf16.mxu0 0
          %10073 = vmatpush2.bf16.msra.mxu0 0
          %10074 = vmatprep.mubr.bf16.mxu0 0
          %10075 = vmatmul.mubr.bf16.gmra.mxu0 %v10032
          %v10076 = vpop.f32.mrf.mxu0
          %v10077 = vadd.f32 0.0, %v10076
          %v10078 = vpop.f32.mrf.mxu0
          %v10079 = vpop.f32.mrf.mxu0
          %v10080 = vadd.f32 0.0, %v10079
          %v10081 = vpop.f32.mrf.mxu0
          %10082 = vmatprep.mubr.bf16.mxu0 0
          %10083 = vmatmul.mubr.bf16.gmra.mxu0 %v10033
          %v10084 = vpop.f32.mrf.mxu0
          %v10085 = vadd.f32 0.0, %v10084
          %v10086 = vpop.f32.mrf.mxu0
          %v10087 = vpop.f32.mrf.mxu0
          %v10088 = vadd.f32 0.0, %v10087
          %v10089 = vpop.f32.mrf.mxu0
          %10090 = vdwg.mxu0
          %v10091 = vadd.f32 %v10028, %v10077
          %v10092 = vadd.f32 %v10029, %v10080
          %v10093 = vadd.f32 %v10030, %v10085
          %v10094 = vadd.f32 %v10031, %v10088
          %10095 = vst [vmem:[#allocation5] sm:$0xff] %v10091
          %10096 = vst [vmem:[#allocation5 + $0x8] sm:$0xff] %v10092
          %10097 = vst [vmem:[#allocation5 + $0x10] sm:$0xff] %v10093
          %10098 = vst [vmem:[#allocation5 + $0x18] sm:$0xff] %v10094
          %10099 = vst.msk [vmem:[#allocation3] sm:$0xff] %vm9999, %v9927
          %10100 = vst.msk [vmem:[#allocation3 + $0x8] sm:$0xff] %vm9999, %v9928
          %10101 = vst.msk [vmem:[#allocation3 + $0x10] sm:$0xff] %vm9999, %v9929
          %10102 = vst.msk [vmem:[#allocation3 + $0x18] sm:$0xff] %vm9999, %v9930
        $region122: #{seframe_forward.2} parent=109 // pred_fallthru
          _
        %p10103 = scmp.eq.s32.totalorder %s39, 1
        // Predicated region
        $region123: #{seframe_forward.2} parent=109 // pred_check
          %p10104 = pneg %p10103
        $region124: #{seframe_forward.2} parent=109 // pred_check_branch
          %10106 = sbr.rel (%p10104) target = $region126
        $region125: #{seframe_forward.2} parent=109 // pred_region
          %v10107 = vld [vmem:[#allocation4] sm:$0xff]
          %v10108 = vld [vmem:[#allocation4 + $0x8] sm:$0xff]
          %v10109 = vld [vmem:[#allocation4 + $0x10] sm:$0xff]
          %v10110 = vld [vmem:[#allocation4 + $0x18] sm:$0xff]
          %v10111 = vmax.f32 %v10107, 1e-06
          %v10112 = vmax.f32 %v10108, 1e-06
          %v10113 = vmax.f32 %v10109, 1e-06
          %v10114 = vmax.f32 %v10110, 1e-06
          %v10115 = vrcp.pop %v10111
          %v10116 = vrcp.pop %v10112
          %v10117 = vrcp.pop %v10113
          %v10118 = vrcp.pop %v10114
          %v10119 = vld [vmem:[#allocation5] sm:$0xff]
          %v10120 = vld [vmem:[#allocation5 + $0x8] sm:$0xff]
          %v10121 = vld [vmem:[#allocation5 + $0x10] sm:$0xff]
          %v10122 = vld [vmem:[#allocation5 + $0x18] sm:$0xff]
          %10124 = vset.pattern.permute.xlu0 0
          %10125 = vperm.xlu0 %10124, %v10115
          %v10126 = vpop.permute.xlu0 %10125
          %10129 = vset.pattern.permute.xlu0 0
          %10130 = vperm.xlu0 %10129, %v10116
          %v10131 = vpop.permute.xlu0 %10130
          %10134 = vset.pattern.permute.xlu0 0
          %10135 = vperm.xlu0 %10134, %v10117
          %v10136 = vpop.permute.xlu0 %10135
          %10139 = vset.pattern.permute.xlu0 0
          %10140 = vperm.xlu0 %10139, %v10118
          %v10141 = vpop.permute.xlu0 %10140
          %v10143 = vmul.f32 %v10119, %v10126
          %v10144 = vmul.f32 %v10120, %v10131
          %v10145 = vmul.f32 %v10121, %v10136
          %v10146 = vmul.f32 %v10122, %v10141
          %v10147 = vld [vmem:[%s754] sm:$0xff]
          %v10148 = vld [vmem:[%s754 + $0x8] sm:$0xff]
          %v10149 = vld [vmem:[%s754 + $0x10] sm:$0xff]
          %v10150 = vld [vmem:[%s754 + $0x18] sm:$0xff]
          %v10151 = vld [vmem:[%s765] sm:$0x1]
          %v10153 = vlaneseq
          %v10154 = vshrl.u32 %v10153, 7
          %v10155 = vsub.s32 0, %v10154
          %v10156 = vrot.slane %v10151, %v10155
          %v10158 = vmul.f32 %v10147, %v10156
          %v10159 = vmul.f32 %v10148, %v10156
          %v10160 = vmul.f32 %v10149, %v10156
          %v10161 = vmul.f32 %v10150, %v10156
          %v10162 = vld [vmem:[%s768] sm:$0x1]
          %v10164 = vlaneseq
          %v10165 = vshrl.u32 %v10164, 7
          %v10166 = vsub.s32 0, %v10165
          %v10167 = vrot.slane %v10162, %v10166
          %v10169 = vadd.f32 %v10158, %v10167
          %v10170 = vadd.f32 %v10159, %v10167
          %v10171 = vadd.f32 %v10160, %v10167
          %v10172 = vadd.f32 %v10161, %v10167
          %v10173 = vpack.c.bf16 %v10144, %v10143
          %v10174 = vpack.c.bf16 %v10146, %v10145
          %v10175 = vpack.c.bf16 %v10170, %v10169
          %v10176 = vpack.c.bf16 %v10172, %v10171
          %v10177 = vld [vmem:[%s789] sm:$0xf]
          %v10178 = vld [vmem:[%s789 + $0x4] sm:$0xf]
          %v10179 = vld [vmem:[%s789 + $0x8] sm:$0xf]
          %v10180 = vld [vmem:[%s789 + $0xc] sm:$0xf]
          %v10181 = vld [vmem:[%s789 + $0x10] sm:$0xf]
          %v10182 = vld [vmem:[%s789 + $0x14] sm:$0xf]
          %v10183 = vld [vmem:[%s789 + $0x18] sm:$0xf]
          %v10184 = vld [vmem:[%s789 + $0x1c] sm:$0xf]
          %v10185 = vld [vmem:[%s789 + $0x20] sm:$0xf]
          %v10186 = vld [vmem:[%s789 + $0x24] sm:$0xf]
          %v10187 = vld [vmem:[%s789 + $0x28] sm:$0xf]
          %v10188 = vld [vmem:[%s789 + $0x2c] sm:$0xf]
          %v10189 = vld [vmem:[%s789 + $0x30] sm:$0xf]
          %v10190 = vld [vmem:[%s789 + $0x34] sm:$0xf]
          %v10191 = vld [vmem:[%s789 + $0x38] sm:$0xf]
          %v10192 = vld [vmem:[%s789 + $0x3c] sm:$0xf]
          %v10193 = vld [vmem:[%s789 + $0x40] sm:$0xf]
          %v10194 = vld [vmem:[%s789 + $0x44] sm:$0xf]
          %v10195 = vld [vmem:[%s789 + $0x48] sm:$0xf]
          %v10196 = vld [vmem:[%s789 + $0x4c] sm:$0xf]
          %v10197 = vld [vmem:[%s789 + $0x50] sm:$0xf]
          %v10198 = vld [vmem:[%s789 + $0x54] sm:$0xf]
          %v10199 = vld [vmem:[%s789 + $0x58] sm:$0xf]
          %v10200 = vld [vmem:[%s789 + $0x5c] sm:$0xf]
          %v10201 = vld [vmem:[%s789 + $0x60] sm:$0xf]
          %v10202 = vld [vmem:[%s789 + $0x64] sm:$0xf]
          %v10203 = vld [vmem:[%s789 + $0x68] sm:$0xf]
          %v10204 = vld [vmem:[%s789 + $0x6c] sm:$0xf]
          %v10205 = vld [vmem:[%s789 + $0x70] sm:$0xf]
          %v10206 = vld [vmem:[%s789 + $0x74] sm:$0xf]
          %v10207 = vld [vmem:[%s789 + $0x78] sm:$0xf]
          %v10208 = vld [vmem:[%s789 + $0x7c] sm:$0xf]
          %v10209 = vld [vmem:[%s792] sm:$0x1]
          %v10211 = vlaneseq
          %v10212 = vshrl.u32 %v10211, 7
          %v10213 = vsub.s32 0, %v10212
          %v10214 = vrot.slane %v10209, %v10213
          %v10248 = vunpack.c.l.b16 %v10177
          %v10249 = vunpack.c.l.b16 %v10178
          %v10250 = vunpack.c.l.b16 %v10179
          %v10251 = vunpack.c.l.b16 %v10180
          %v10252 = vunpack.c.l.b16 %v10181
          %v10253 = vunpack.c.l.b16 %v10182
          %v10254 = vunpack.c.l.b16 %v10183
          %v10255 = vunpack.c.l.b16 %v10184
          %v10256 = vunpack.c.l.b16 %v10185
          %v10257 = vunpack.c.l.b16 %v10186
          %v10258 = vunpack.c.l.b16 %v10187
          %v10259 = vunpack.c.l.b16 %v10188
          %v10260 = vunpack.c.l.b16 %v10189
          %v10261 = vunpack.c.l.b16 %v10190
          %v10262 = vunpack.c.l.b16 %v10191
          %v10263 = vunpack.c.l.b16 %v10192
          %v10264 = vunpack.c.l.b16 %v10193
          %v10265 = vunpack.c.l.b16 %v10194
          %v10266 = vunpack.c.l.b16 %v10195
          %v10267 = vunpack.c.l.b16 %v10196
          %v10268 = vunpack.c.l.b16 %v10197
          %v10269 = vunpack.c.l.b16 %v10198
          %v10270 = vunpack.c.l.b16 %v10199
          %v10271 = vunpack.c.l.b16 %v10200
          %v10272 = vunpack.c.l.b16 %v10201
          %v10273 = vunpack.c.l.b16 %v10202
          %v10274 = vunpack.c.l.b16 %v10203
          %v10275 = vunpack.c.l.b16 %v10204
          %v10276 = vunpack.c.l.b16 %v10205
          %v10277 = vunpack.c.l.b16 %v10206
          %v10278 = vunpack.c.l.b16 %v10207
          %v10279 = vunpack.c.l.b16 %v10208
          %v10280 = vpack.c.b16 %v10249, %v10248
          %v10281 = vpack.c.b16 %v10251, %v10250
          %v10282 = vpack.c.b16 %v10253, %v10252
          %v10283 = vpack.c.b16 %v10255, %v10254
          %v10284 = vpack.c.b16 %v10257, %v10256
          %v10285 = vpack.c.b16 %v10259, %v10258
          %v10286 = vpack.c.b16 %v10261, %v10260
          %v10287 = vpack.c.b16 %v10263, %v10262
          %v10288 = vpack.c.b16 %v10265, %v10264
          %v10289 = vpack.c.b16 %v10267, %v10266
          %v10290 = vpack.c.b16 %v10269, %v10268
          %v10291 = vpack.c.b16 %v10271, %v10270
          %v10292 = vpack.c.b16 %v10273, %v10272
          %v10293 = vpack.c.b16 %v10275, %v10274
          %v10294 = vpack.c.b16 %v10277, %v10276
          %v10295 = vpack.c.b16 %v10279, %v10278
          %10312 = vmatprep.subr.bf16.mxu0 0
          %10313 = vmatpush1.bf16.msra.mxu0 %v10287
          %10314 = vmatprep.subr.bf16.mxu0 0
          %10315 = vmatpush1.bf16.msra.mxu0 %v10286
          %10316 = vmatprep.subr.bf16.mxu0 0
          %10317 = vmatpush1.bf16.msra.mxu0 %v10285
          %10318 = vmatprep.subr.bf16.mxu0 0
          %10319 = vmatpush1.bf16.msra.mxu0 %v10284
          %10320 = vmatprep.subr.bf16.mxu0 0
          %10321 = vmatpush1.bf16.msra.mxu0 %v10283
          %10322 = vmatprep.subr.bf16.mxu0 0
          %10323 = vmatpush1.bf16.msra.mxu0 %v10282
          %10324 = vmatprep.subr.bf16.mxu0 0
          %10325 = vmatpush1.bf16.msra.mxu0 %v10281
          %10326 = vmatprep.subr.bf16.mxu0 0
          %10327 = vmatpush1.bf16.msra.mxu0 %v10280
          %10328 = vmatprep.subr.bf16.mxu0 0
          %10329 = vmatpush2.bf16.msra.mxu0 %v10295
          %10330 = vmatprep.subr.bf16.mxu0 0
          %10331 = vmatpush2.bf16.msra.mxu0 %v10294
          %10332 = vmatprep.subr.bf16.mxu0 0
          %10333 = vmatpush2.bf16.msra.mxu0 %v10293
          %10334 = vmatprep.subr.bf16.mxu0 0
          %10335 = vmatpush2.bf16.msra.mxu0 %v10292
          %10336 = vmatprep.subr.bf16.mxu0 0
          %10337 = vmatpush2.bf16.msra.mxu0 %v10291
          %10338 = vmatprep.subr.bf16.mxu0 0
          %10339 = vmatpush2.bf16.msra.mxu0 %v10290
          %10340 = vmatprep.subr.bf16.mxu0 0
          %10341 = vmatpush2.bf16.msra.mxu0 %v10289
          %10342 = vmatprep.subr.bf16.mxu0 0
          %10343 = vmatpush2.bf16.msra.mxu0 %v10288
          %10344 = vmatprep.mubr.bf16.mxu0 %v10175
          %10345 = vmatmul.mubr.bf16.gmra.mxu0 %v10173
          %v10346 = vpop.f32.mrf.mxu0
          %v10347 = vadd.f32 %v10214, %v10346
          %v10348 = vpop.f32.mrf.mxu0
          %v10349 = vpop.f32.mrf.mxu0
          %v10350 = vadd.f32 %v10214, %v10349
          %v10351 = vpop.f32.mrf.mxu0
          %10352 = vmatprep.mubr.bf16.mxu0 %v10176
          %10353 = vmatmul.mubr.bf16.gmra.mxu0 %v10174
          %v10354 = vpop.f32.mrf.mxu0
          %v10355 = vadd.f32 %v10214, %v10354
          %v10356 = vpop.f32.mrf.mxu0
          %v10357 = vpop.f32.mrf.mxu0
          %v10358 = vadd.f32 %v10214, %v10357
          %v10359 = vpop.f32.mrf.mxu0
          %10360 = vdwg.mxu0
          %vm10361 = vcmp.ge.f32.partialorder %v10347, 0.0
          %vm10362 = vcmp.ge.f32.partialorder %v10350, 0.0
          %vm10363 = vcmp.ge.f32.partialorder %v10355, 0.0
          %vm10364 = vcmp.ge.f32.partialorder %v10358, 0.0
          %v10365 = vld [vmem:[%s795] sm:$0x1]
          %v10367 = vlaneseq
          %v10368 = vshrl.u32 %v10367, 7
          %v10369 = vsub.s32 0, %v10368
          %v10370 = vrot.slane %v10365, %v10369
          %v10372 = vmul.f32 %v10370, %v10347
          %v10373 = vmul.f32 %v10370, %v10350
          %v10374 = vmul.f32 %v10370, %v10355
          %v10375 = vmul.f32 %v10370, %v10358
          %v10376 = vsel %vm10361, %v10347, %v10372
          %v10377 = vsel %vm10362, %v10350, %v10373
          %v10378 = vsel %vm10363, %v10355, %v10374
          %v10379 = vsel %vm10364, %v10358, %v10375
          %v10380 = vadd.f32 %v10376, %v10147
          %v10381 = vadd.f32 %v10377, %v10148
          %v10382 = vadd.f32 %v10378, %v10149
          %v10383 = vadd.f32 %v10379, %v10150
          %10384 = vst [vmem:[%s804] sm:$0xff] %v10380
          %10385 = vst [vmem:[%s804 + $0x8] sm:$0xff] %v10381
          %10386 = vst [vmem:[%s804 + $0x10] sm:$0xff] %v10382
          %10387 = vst [vmem:[%s804 + $0x18] sm:$0xff] %v10383
        $region126: #{seframe_forward.2} parent=109 // pred_fallthru
          _
        %s10388 = smul.u32 4, %s38
        %p10389 = scmp.lt.s32.totalorder %s37, 1
        %s10390 = scalar_select %p10389, %s37, 1
        %p10391 = scmp.lt.s32.totalorder %s10388, 19
        %s10392 = scalar_select %p10391, %s10388, 19
        %s10393 = smul.addr %s10390, 20
        %s10394 = sadd.s32 %s10392, %s10393
        %s10395 = smul.addr %s10394, 8
        %s10396 = scalar_lea.vmem %s15, %s10395
        // Predicated region
        $region127: #{seframe_forward.2} parent=109 // pred_check
          %p10397 = pneg %p443
        $region128: #{seframe_forward.2} parent=109 // pred_check_branch
          %10399 = sbr.rel (%p10397) target = $region130
        $region129: #{seframe_forward.2} parent=109 // pred_region
          %s10400 = smul.u32 4, %s38
        $region130: #{seframe_forward.2} parent=109 // pred_fallthru
          _
      $region110: #{seframe_forward.2} parent=5 // pred_fallthru
        _
      %p10401 = scmp.le.s32.totalorder 2, %s27
      // Predicated region
      $region131: #{seframe_forward.2} parent=5 // pred_check
        %p10402 = pneg %p10401
      $region132: #{seframe_forward.2} parent=5 // pred_check_branch
        %10404 = sbr.rel (%p10402) target = $region134
      $region133: #{seframe_forward.2} parent=5 // pred_region
        %s10405 = ssub.s32 %s27, 2
        // Predicated region
        $region135: #{seframe_forward.2} parent=133 // pred_check
          %p10406 = pneg %p449
        $region136: #{seframe_forward.2} parent=133 // pred_check_branch
          %10408 = sbr.rel (%p10406) target = $region138
        $region137: #{seframe_forward.2} parent=133 // pred_region
          %s10409 = smul.u32 4, %s41
          %p10410 = scmp.lt.s32.totalorder %s40, 1
          %s10411 = scalar_select %p10410, %s40, 1
          %p10412 = scmp.lt.s32.totalorder %s10409, 19
          %s10413 = scalar_select %p10412, %s10409, 19
          %s10414 = smul.addr %s10411, 20
          %s10415 = sadd.s32 %s10413, %s10414
          %s10416 = smul.addr %s10415, 8
          %s10417 = scalar_lea.vmem %s15, %s10416
        $region138: #{seframe_forward.2} parent=133 // pred_fallthru
          _
      $region134: #{seframe_forward.2} parent=5 // pred_fallthru
        _
    $region6: #{seframe_forward.2} parent=1 // loop_footer
      %s31 = sadd.s32 1, %s27
    $region7: #{seframe_forward.2} parent=1 // loop_footer_branch
      %26 = sbr.rel target = $region3
    $region8: #{seframe_forward.2} parent=1 // loop_exit
      _

</llo_original>
